<compile_context>
chip_gen: v5e
topology: v5e:2x2
jax: 0.10.0
libtpu: 0.0.40
codegen_flags: <defaults>
</compile_context>

<pallas_src>
import math
import functools

import jax
import jax.numpy as jnp
from jax.experimental import pallas as pl
from jax.experimental.pallas import tpu as pltpu


_HEAD_PAD = 128                  # lane-dense padded width for the stacked heads
_SQRT1_2 = 1.0 / math.sqrt(2.0)

# Execution order of the forward pass: (output name, layer name, input names).
LAYER_PLAN = (
    ("x1_0", "conv1_0", ("x0_0",)),
    ("x0_1", "conv0_1", ("x0_0", "x1_0")),
    ("x2_0", "conv2_0", ("x1_0",)),
    ("x1_1", "conv1_1", ("x1_0", "x2_0")),
    ("x0_2", "conv0_2", ("x0_0", "x0_1", "x1_1")),
    ("x3_0", "conv3_0", ("x2_0",)),
    ("x2_1", "conv2_1", ("x2_0", "x3_0")),
    ("x1_2", "conv1_2", ("x1_0", "x1_1", "x2_1")),
    ("x0_3", "conv0_3", ("x0_0", "x0_1", "x0_2", "x1_2")),
    ("x4_0", "conv4_0", ("x3_0",)),
    ("x3_1", "conv3_1", ("x3_0", "x4_0")),
    ("x2_2", "conv2_2", ("x2_0", "x2_1", "x3_1")),
    ("x1_3", "conv1_3", ("x1_0", "x1_1", "x1_2", "x2_2")),
    ("x0_4", "conv0_4", ("x0_0", "x0_1", "x0_2", "x0_3", "x1_3")),
    ("x5_0", "conv5_0", ("x4_0",)),
    ("x4_1", "conv4_1", ("x4_0", "x5_0")),
    ("x3_2", "conv3_2", ("x3_0", "x3_1", "x4_1")),
    ("x2_3", "conv2_3", ("x2_0", "x2_1", "x2_2", "x3_2")),
    ("x1_4", "conv1_4", ("x1_0", "x1_1", "x1_2", "x1_3", "x2_3")),
    ("x0_5", "conv0_5", ("x0_0", "x0_1", "x0_2", "x0_3", "x0_4", "x1_4")),
)
RESULT_NAMES = ("x0_5", "x0_4", "x0_3", "x0_2")   # forward's `result` order


def _gelu_exact(v):
    # exact erf-based GELU (matches ACT2FN['gelu']); erf runs on the EUP slot.
    return 0.5 * v * (1.0 + jax.lax.erf(v * _SQRT1_2))


def _w_dtype(din, dout, compute_dtype):
    # Tiny layers keep f32 weights: no MXU benefit at K,N << MXU tile and it
    # avoids sub-16-sublane bf16 slices; all production layers (>=24) go bf16.
    return compute_dtype if min(int(din), int(dout)) >= 16 else jnp.float32


# ---------------------------------------------------------------------------
# The single fused kernel
# ---------------------------------------------------------------------------
def _fused_kernel(*refs, num_layers, with_final, s0, bias_slices, compute_dtype):
    # ---- unpack refs (inputs, outputs, scratch) ---------------------------
    x_ref = refs[0]
    bias_ref = refs[1]
    idx = 2
    if with_final:
        head_b_ref = refs[idx]; idx += 1
    w_hbm = refs[idx:idx + num_layers]; idx += num_layers          # raw HBM
    if with_final:
        head_w_hbm = refs[idx]; idx += 1
    res_ref = refs[idx]; idx += 1
    if with_final:
        logits_ref = refs[idx]; idx += 1
    w_vmem = refs[idx:idx + num_layers]; idx += num_layers         # scratch
    if with_final:
        head_w_vmem = refs[idx]; idx += 1
    dma_sem = refs[idx]

    # ---- one-time weight load: HBM -> single-buffered VMEM scratch --------
    @pl.when(pl.program_id(0) == 0)
    def _load_weights():
        copies = [pltpu.make_async_copy(w_hbm[li], w_vmem[li], dma_sem.at[li])
                  for li in range(num_layers)]
        if with_final:
            copies.append(pltpu.make_async_copy(head_w_hbm, head_w_vmem,
                                                dma_sem.at[num_layers]))
        for c in copies:
            c.start()
        for c in copies:
            c.wait()

    # ---- fused 20-layer forward; all intermediates stay on-chip -----------
    x_f32 = x_ref[...].astype(jnp.float32)
    acts_c = {"x0_0": x_f32.astype(compute_dtype)}   # matmul-operand copies
    res_f32 = {}                                     # f32 copies of results
    for li, (out_name, _, in_names) in enumerate(LAYER_PLAN):
        w = w_vmem[li][...]                          # (sum_k din_k, dout)
        boff, dout = bias_slices[li]
        acc = bias_ref[:, boff:boff + dout].astype(jnp.float32)   # (1, dout)
        off = 0
        for name in in_names:                        # concat -> accumulation
            xin = acts_c[name]
            din = xin.shape[-1]
            # NOTE: the extra f32 VPU adds here are MXU-drain filler; revisit
            # only if the bundle shows VALU as the saturated slot.
            acc = acc + jnp.dot(xin, w[off:off + din, :],
                                preferred_element_type=jnp.float32)
            off += din
        a = _gelu_exact(acc)                         # f32 GELU
        acts_c[out_name] = a.astype(compute_dtype)
        if out_name in RESULT_NAMES:
            res_f32[out_name] = a

    # direct sliced stores into the lane-dense (tile_n, 4*s0) result slab
    for i, name in enumerate(RESULT_NAMES):
        res_ref[:, i * s0:(i + 1) * s0] = res_f32[name].astype(res_ref.dtype)

    if with_final:
        # one fused K=4*s0 head matmul against the zero-padded (4*s0,128) W
        slab = jnp.concatenate([acts_c[n] for n in RESULT_NAMES], axis=-1)
        logits = jnp.dot(slab, head_w_vmem[...],
                         preferred_element_type=jnp.float32)
        logits = logits + head_b_ref[...].astype(jnp.float32)
        logits_ref[...] = logits.astype(logits_ref.dtype)    # (tile_n, 128)


# ---------------------------------------------------------------------------
# Host wrapper
# ---------------------------------------------------------------------------
def _round_up(v, m):
    return ((v + m - 1) // m) * m


def model_nest_split_forward(params, x0_0, final=False, tile_n=256,
                             compute_dtype=jnp.bfloat16):
    orig_shape = x0_0.shape
    s0 = int(orig_shape[-1])
    x2d = x0_0.reshape(-1, s0)
    n = x2d.shape[0]

    # row tile: tile_n rows at production sizes, else round N up to mult of 8
    tn = tile_n if n >= tile_n else _round_up(max(n, 8), 8)
    n_pad = _round_up(n, tn)
    if n_pad != n:
        x2d = jnp.pad(x2d, ((0, n_pad - n), (0, 0)))

    num_layers = len(LAYER_PLAN)

    # Pack the 20 biases into one lane-dense (1, sum_dout) f32 input.
    bias_slices, biases, boff = [], [], 0
    for _, lname, _ in LAYER_PLAN:
        b = params[lname][1]
        dout = int(b.shape[0])
        bias_slices.append((boff, dout))
        biases.append(b.astype(jnp.float32))
        boff += dout
    bias_total = boff
    bias_pack = jnp.concatenate(biases).reshape(1, bias_total)

    # Weights: compute dtype (bf16 by default, f32 for tiny layers), passed as
    # raw HBM refs and DMA'd once into single-buffered VMEM scratch.
    weights = [params[lname][0].astype(
                   _w_dtype(params[lname][0].shape[0],
                            params[lname][0].shape[1], compute_dtype))
               for _, lname, _ in LAYER_PLAN]

    inputs = [x2d, bias_pack]
    in_specs = [pl.BlockSpec((tn, s0), lambda i: (i, 0)),
                pl.BlockSpec((1, bias_total), lambda i: (0, 0))]

    if final:
        # Pack the 4 used heads into one lane-dense zero-padded weight/bias.
        head_w = jnp.zeros((4 * s0, _HEAD_PAD), jnp.float32)
        head_b = jnp.zeros((1, _HEAD_PAD), jnp.float32)
        for i in range(4):
            w, b = params[f"final_{i}"]
            head_w = head_w.at[i * s0:(i + 1) * s0, 2 * i:2 * i + 2].set(w)
            head_b = head_b.at[0, 2 * i:2 * i + 2].set(b)
        head_w = head_w.astype(compute_dtype)
        inputs.append(head_b)
        in_specs.append(pl.BlockSpec((1, _HEAD_PAD), lambda i: (0, 0)))

    inputs += weights
    in_specs += [pl.BlockSpec(memory_space=pl.ANY)] * num_layers
    if final:
        inputs.append(head_w)
        in_specs.append(pl.BlockSpec(memory_space=pl.ANY))

    out_shapes = [jax.ShapeDtypeStruct((n_pad, 4 * s0), x2d.dtype)]
    out_specs = [pl.BlockSpec((tn, 4 * s0), lambda i: (i, 0))]
    if final:
        out_shapes.append(jax.ShapeDtypeStruct((n_pad, _HEAD_PAD), x2d.dtype))
        out_specs.append(pl.BlockSpec((tn, _HEAD_PAD), lambda i: (i, 0)))

    scratch_shapes = [pltpu.VMEM(tuple(w.shape), w.dtype) for w in weights]
    if final:
        scratch_shapes.append(pltpu.VMEM((4 * s0, _HEAD_PAD), compute_dtype))
    scratch_shapes.append(pltpu.SemaphoreType.DMA((num_layers + 1,)))

    # Scoped-VMEM budget: single-buffered weights + live activations + I/O
    # tile double-buffers, with headroom.
    w_bytes = sum(int(w.size) * jnp.dtype(w.dtype).itemsize for w in weights)
    if final:
        w_bytes += 4 * s0 * _HEAD_PAD * jnp.dtype(compute_dtype).itemsize
    feat = s0 + bias_total                                # live features / row
    act_bytes = tn * feat * (jnp.dtype(compute_dtype).itemsize + 4)
    io_bytes = 2 * tn * (s0 + 4 * s0 + (_HEAD_PAD if final else 0)) * 4
    vmem_limit = int(1.25 * (w_bytes + act_bytes + io_bytes)) + (2 << 20)
    vmem_limit = min(max(vmem_limit, 32 << 20), 100 << 20)

    kernel = functools.partial(
        _fused_kernel, num_layers=num_layers, with_final=final, s0=s0,
        bias_slices=tuple(bias_slices), compute_dtype=compute_dtype)

    outs = pl.pallas_call(
        kernel,
        grid=(n_pad // tn,),
        out_shape=tuple(out_shapes),
        in_specs=in_specs,
        out_specs=tuple(out_specs),
        scratch_shapes=scratch_shapes,
        compiler_params=pltpu.CompilerParams(
            dimension_semantics=("arbitrary",),
            vmem_limit_bytes=vmem_limit),
    )(*inputs)

    res_slab = outs[0][:n]                                       # (n, 4*s0)
    results = [res_slab[:, i * s0:(i + 1) * s0].reshape(*orig_shape[:-1], s0)
               for i in range(4)]
    if final:
        logit_slab = outs[1][:n, :8]                             # (n, 8)
        split_logits = [logit_slab[:, 2 * i:2 * i + 2]
                        .reshape(*orig_shape[:-1], 2) for i in range(4)]
        return results, split_logits
    return results


# ---------------------------------------------------------------------------
# Parameter construction (deterministic, PyTorch-Linear-style uniform init)
# ---------------------------------------------------------------------------
def layer_defs(size1, num):
    s = [size1 // (2 ** i) for i in range(num)]
    defs = {
        "conv1_0": (s[0], s[1]), "conv2_0": (s[1], s[2]),
        "conv3_0": (s[2], s[3]), "conv4_0": (s[3], s[4]),
        "conv5_0": (s[4], s[5]),
        "conv0_1": (s[0] + s[1], s[0]), "conv1_1": (s[1] + s[2], s[1]),
        "conv2_1": (s[2] + s[3], s[2]), "conv3_1": (s[3] + s[4], s[3]),
        "conv4_1": (s[4] + s[5], s[4]),
        "conv0_2": (s[0] * 2 + s[1], s[0]), "conv1_2": (s[1] * 2 + s[2], s[1]),
        "conv2_2": (s[2] * 2 + s[3], s[2]), "conv3_2": (s[3] * 2 + s[4], s[3]),
        "conv0_3": (s[0] * 3 + s[1], s[0]), "conv1_3": (s[1] * 3 + s[2], s[1]),
        "conv2_3": (s[2] * 3 + s[3], s[2]),
        "conv0_4": (s[0] * 4 + s[1], s[0]), "conv1_4": (s[1] * 4 + s[2], s[1]),
        "conv0_5": (s[0] * 5 + s[1], s[0]),
    }
    for i in range(5):                     # module creates 5 heads, uses 4
        defs[f"final_{i}"] = (s[0], 2)
    return defs


def init_params(key, size1, num):
    params = {}
    for name, (din, dout) in layer_defs(size1, num).items():
        key, kw, kb = jax.random.split(key, 3)
        bound = 1.0 / math.sqrt(din)
        w = jax.random.uniform(kw, (din, dout), jnp.float32, -bound, bound)
        b = jax.random.uniform(kb, (dout,), jnp.float32, -bound, bound)
        params[name] = (w, b)
    return params


# ---------------------------------------------------------------------------
# Pure-JAX reference.  compute_dtype mirrors the kernel's operand-dtype policy
# (cast matmul operands only; accumulate, bias-add and GELU in f32).
# ---------------------------------------------------------------------------
def reference_forward(params, x0_0, final=False, compute_dtype=jnp.float32):
    orig_shape = x0_0.shape
    x = x0_0.reshape(-1, orig_shape[-1]).astype(jnp.float32)

    acts_f32 = {"x0_0": x}
    acts_c = {"x0_0": x.astype(compute_dtype)}
    for out_name, lname, in_names in LAYER_PLAN:
        w, b = params[lname]
        wd = _w_dtype(w.shape[0], w.shape[1], compute_dtype)
        v = jnp.concatenate([acts_c[nm] for nm in in_names], axis=-1)
        y = jnp.dot(v, w.astype(wd), preferred_element_type=jnp.float32) + b
        a = _gelu_exact(y)
        acts_f32[out_name] = a
        acts_c[out_name] = a.astype(compute_dtype)

    results = [acts_f32[nm].reshape(*orig_shape[:-1], acts_f32[nm].shape[-1])
               for nm in RESULT_NAMES]
    if final:
        logits = []
        for i, nm in enumerate(RESULT_NAMES):
            w, b = params[f"final_{i}"]
            lg = jnp.dot(acts_c[nm], w.astype(compute_dtype),
                         preferred_element_type=jnp.float32) + b
            logits.append(lg.reshape(*orig_shape[:-1], 2))
        return results, logits
    return results


# ---------------------------------------------------------------------------
if __name__ == "__main__":
    # size1=64, num=6 -> feature splits [64, 32, 16, 8, 4, 2];
    # input x0_0: (batch=2, seq=8, size1=64).
    SIZE1, NUM = 64, 6
    key = jax.random.PRNGKey(0)
    key, pkey, xkey = jax.random.split(key, 3)

    params = init_params(pkey, SIZE1, NUM)
    x0_0 = jax.random.normal(xkey, (2, 8, SIZE1), dtype=jnp.float32)

    # 1) f32 operand path: validates the fused weight-row-split forward
    #    semantics against the exact reference.
    fwd_f32 = jax.jit(functools.partial(model_nest_split_forward,
                                        final=True, compute_dtype=jnp.float32))
    res32, log32 = fwd_f32(params, x0_0)
    jax.block_until_ready(res32)
    jax.block_until_ready(log32)
    ref_res32, ref_log32 = reference_forward(params, x0_0, final=True,
                                             compute_dtype=jnp.float32)
    for a, b in zip(res32, ref_res32):
        assert a.shape == (2, 8, SIZE1)
        assert jnp.allclose(a, b, rtol=1e-4, atol=1e-4), \
            float(jnp.max(jnp.abs(a - b)))
    for a, b in zip(log32, ref_log32):
        assert a.shape == (2, 8, 2)
        assert jnp.allclose(a, b, rtol=1e-4, atol=1e-4), \
            float(jnp.max(jnp.abs(a - b)))

    # 2) bf16 operand path (production default): validated against a reference
    #    using the same operand-dtype policy.
    fwd_bf16 = jax.jit(functools.partial(model_nest_split_forward,
                                         final=True,
                                         compute_dtype=jnp.bfloat16))
    res16, log16 = fwd_bf16(params, x0_0)
    jax.block_until_ready(res16)
    jax.block_until_ready(log16)
    ref_res16, ref_log16 = reference_forward(params, x0_0, final=True,
                                             compute_dtype=jnp.bfloat16)
    for a, b in zip(res16, ref_res16):
        assert a.shape == (2, 8, SIZE1)
        assert jnp.allclose(a, b, rtol=1e-2, atol=1e-2), \
            float(jnp.max(jnp.abs(a - b)))
    for a, b in zip(log16, ref_log16):
        assert a.shape == (2, 8, 2)
        assert jnp.allclose(a, b, rtol=1e-2, atol=1e-2), \
            float(jnp.max(jnp.abs(a - b)))

    print("KERNEL_OK")
</pallas_src>

<mosaic_0001>
module attributes {stable_mosaic.version = 11 : i64} {
  func.func @_fused_kernel(%arg0: i32, %arg1: memref<16x64xf32, #tpu.memory_space<vmem>>, %arg2: memref<1x578xf32, #tpu.memory_space<vmem>>, %arg3: memref<1x128xf32, #tpu.memory_space<vmem>>, %arg4: memref<64x32xf32, #tpu.memory_space<any>>, %arg5: memref<96x64xf32, #tpu.memory_space<any>>, %arg6: memref<32x16xf32, #tpu.memory_space<any>>, %arg7: memref<48x32xf32, #tpu.memory_space<any>>, %arg8: memref<160x64xf32, #tpu.memory_space<any>>, %arg9: memref<16x8xf32, #tpu.memory_space<any>>, %arg10: memref<24x16xf32, #tpu.memory_space<any>>, %arg11: memref<80x32xf32, #tpu.memory_space<any>>, %arg12: memref<224x64xf32, #tpu.memory_space<any>>, %arg13: memref<8x4xf32, #tpu.memory_space<any>>, %arg14: memref<12x8xf32, #tpu.memory_space<any>>, %arg15: memref<40x16xf32, #tpu.memory_space<any>>, %arg16: memref<112x32xf32, #tpu.memory_space<any>>, %arg17: memref<288x64xf32, #tpu.memory_space<any>>, %arg18: memref<4x2xf32, #tpu.memory_space<any>>, %arg19: memref<6x4xf32, #tpu.memory_space<any>>, %arg20: memref<20x8xf32, #tpu.memory_space<any>>, %arg21: memref<56x16xf32, #tpu.memory_space<any>>, %arg22: memref<144x32xf32, #tpu.memory_space<any>>, %arg23: memref<352x64xf32, #tpu.memory_space<any>>, %arg24: memref<256x128xf32, #tpu.memory_space<any>>, %arg25: memref<16x256xf32, #tpu.memory_space<vmem>>, %arg26: memref<16x128xf32, #tpu.memory_space<vmem>>, %arg27: memref<64x32xf32, #tpu.memory_space<vmem>>, %arg28: memref<96x64xf32, #tpu.memory_space<vmem>>, %arg29: memref<32x16xf32, #tpu.memory_space<vmem>>, %arg30: memref<48x32xf32, #tpu.memory_space<vmem>>, %arg31: memref<160x64xf32, #tpu.memory_space<vmem>>, %arg32: memref<16x8xf32, #tpu.memory_space<vmem>>, %arg33: memref<24x16xf32, #tpu.memory_space<vmem>>, %arg34: memref<80x32xf32, #tpu.memory_space<vmem>>, %arg35: memref<224x64xf32, #tpu.memory_space<vmem>>, %arg36: memref<8x4xf32, #tpu.memory_space<vmem>>, %arg37: memref<12x8xf32, #tpu.memory_space<vmem>>, %arg38: memref<40x16xf32, #tpu.memory_space<vmem>>, %arg39: memref<112x32xf32, #tpu.memory_space<vmem>>, %arg40: memref<288x64xf32, #tpu.memory_space<vmem>>, %arg41: memref<4x2xf32, #tpu.memory_space<vmem>>, %arg42: memref<6x4xf32, #tpu.memory_space<vmem>>, %arg43: memref<20x8xf32, #tpu.memory_space<vmem>>, %arg44: memref<56x16xf32, #tpu.memory_space<vmem>>, %arg45: memref<144x32xf32, #tpu.memory_space<vmem>>, %arg46: memref<352x64xf32, #tpu.memory_space<vmem>>, %arg47: memref<256x128xf32, #tpu.memory_space<vmem>>, %arg48: memref<21x!tpu.dma_semaphore, #tpu.memory_space<semaphore_mem>>) attributes {dimension_semantics = [#tpu.dimension_semantics<arbitrary>], iteration_bounds = array<i64: 1>, scalar_prefetch = 0 : i64, scratch_operands = 22 : i64, tpu.core_type = #tpu.core_type<tc>, window_params = [{transform_indices = @transform_0, window_bounds = array<i64: 16, 64>}, {pipeline_mode = #tpu.pipeline_mode<synchronous>, transform_indices = @transform_1, window_bounds = array<i64: 1, 578>}, {pipeline_mode = #tpu.pipeline_mode<synchronous>, transform_indices = @transform_2, window_bounds = array<i64: 1, 128>}, {}, {}, {}, {}, {}, {}, {}, {}, {}, {}, {}, {}, {}, {}, {}, {}, {}, {}, {}, {}, {}, {transform_indices = @transform_24, window_bounds = array<i64: 16, 256>}, {transform_indices = @transform_25, window_bounds = array<i64: 16, 128>}]} {
    %c0_i32 = arith.constant 0 : i32
    %0 = arith.cmpi eq, %arg0, %c0_i32 : i32
    %1 = arith.extui %0 : i1 to i32
    %c0_i32_0 = arith.constant 0 : i32
    %2 = arith.cmpi ne, %1, %c0_i32_0 : i32
    scf.if %2 {
      %c0_i32_189 = arith.constant 0 : i32
      %395 = tpu.memref_slice %arg48[%c0_i32_189] : memref<21x!tpu.dma_semaphore, #tpu.memory_space<semaphore_mem>> -> memref<1x!tpu.dma_semaphore, #tpu.memory_space<semaphore_mem>>
      %396 = tpu.memref_squeeze %395 : memref<1x!tpu.dma_semaphore, #tpu.memory_space<semaphore_mem>> -> memref<!tpu.dma_semaphore, #tpu.memory_space<semaphore_mem>>
      tpu.enqueue_dma source(%arg4 : memref<64x32xf32, #tpu.memory_space<any>>) target(%arg27 : memref<64x32xf32, #tpu.memory_space<vmem>>) target_semaphore(%396 : memref<!tpu.dma_semaphore, #tpu.memory_space<semaphore_mem>>)
      %c1_i32 = arith.constant 1 : i32
      %397 = tpu.memref_slice %arg48[%c1_i32] : memref<21x!tpu.dma_semaphore, #tpu.memory_space<semaphore_mem>> -> memref<1x!tpu.dma_semaphore, #tpu.memory_space<semaphore_mem>>
      %398 = tpu.memref_squeeze %397 : memref<1x!tpu.dma_semaphore, #tpu.memory_space<semaphore_mem>> -> memref<!tpu.dma_semaphore, #tpu.memory_space<semaphore_mem>>
      tpu.enqueue_dma source(%arg5 : memref<96x64xf32, #tpu.memory_space<any>>) target(%arg28 : memref<96x64xf32, #tpu.memory_space<vmem>>) target_semaphore(%398 : memref<!tpu.dma_semaphore, #tpu.memory_space<semaphore_mem>>)
      %c2_i32 = arith.constant 2 : i32
      %399 = tpu.memref_slice %arg48[%c2_i32] : memref<21x!tpu.dma_semaphore, #tpu.memory_space<semaphore_mem>> -> memref<1x!tpu.dma_semaphore, #tpu.memory_space<semaphore_mem>>
      %400 = tpu.memref_squeeze %399 : memref<1x!tpu.dma_semaphore, #tpu.memory_space<semaphore_mem>> -> memref<!tpu.dma_semaphore, #tpu.memory_space<semaphore_mem>>
      tpu.enqueue_dma source(%arg6 : memref<32x16xf32, #tpu.memory_space<any>>) target(%arg29 : memref<32x16xf32, #tpu.memory_space<vmem>>) target_semaphore(%400 : memref<!tpu.dma_semaphore, #tpu.memory_space<semaphore_mem>>)
      %c3_i32 = arith.constant 3 : i32
      %401 = tpu.memref_slice %arg48[%c3_i32] : memref<21x!tpu.dma_semaphore, #tpu.memory_space<semaphore_mem>> -> memref<1x!tpu.dma_semaphore, #tpu.memory_space<semaphore_mem>>
      %402 = tpu.memref_squeeze %401 : memref<1x!tpu.dma_semaphore, #tpu.memory_space<semaphore_mem>> -> memref<!tpu.dma_semaphore, #tpu.memory_space<semaphore_mem>>
      tpu.enqueue_dma source(%arg7 : memref<48x32xf32, #tpu.memory_space<any>>) target(%arg30 : memref<48x32xf32, #tpu.memory_space<vmem>>) target_semaphore(%402 : memref<!tpu.dma_semaphore, #tpu.memory_space<semaphore_mem>>)
      %c4_i32 = arith.constant 4 : i32
      %403 = tpu.memref_slice %arg48[%c4_i32] : memref<21x!tpu.dma_semaphore, #tpu.memory_space<semaphore_mem>> -> memref<1x!tpu.dma_semaphore, #tpu.memory_space<semaphore_mem>>
      %404 = tpu.memref_squeeze %403 : memref<1x!tpu.dma_semaphore, #tpu.memory_space<semaphore_mem>> -> memref<!tpu.dma_semaphore, #tpu.memory_space<semaphore_mem>>
      tpu.enqueue_dma source(%arg8 : memref<160x64xf32, #tpu.memory_space<any>>) target(%arg31 : memref<160x64xf32, #tpu.memory_space<vmem>>) target_semaphore(%404 : memref<!tpu.dma_semaphore, #tpu.memory_space<semaphore_mem>>)
      %c5_i32 = arith.constant 5 : i32
      %405 = tpu.memref_slice %arg48[%c5_i32] : memref<21x!tpu.dma_semaphore, #tpu.memory_space<semaphore_mem>> -> memref<1x!tpu.dma_semaphore, #tpu.memory_space<semaphore_mem>>
      %406 = tpu.memref_squeeze %405 : memref<1x!tpu.dma_semaphore, #tpu.memory_space<semaphore_mem>> -> memref<!tpu.dma_semaphore, #tpu.memory_space<semaphore_mem>>
      tpu.enqueue_dma source(%arg9 : memref<16x8xf32, #tpu.memory_space<any>>) target(%arg32 : memref<16x8xf32, #tpu.memory_space<vmem>>) target_semaphore(%406 : memref<!tpu.dma_semaphore, #tpu.memory_space<semaphore_mem>>)
      %c6_i32 = arith.constant 6 : i32
      %407 = tpu.memref_slice %arg48[%c6_i32] : memref<21x!tpu.dma_semaphore, #tpu.memory_space<semaphore_mem>> -> memref<1x!tpu.dma_semaphore, #tpu.memory_space<semaphore_mem>>
      %408 = tpu.memref_squeeze %407 : memref<1x!tpu.dma_semaphore, #tpu.memory_space<semaphore_mem>> -> memref<!tpu.dma_semaphore, #tpu.memory_space<semaphore_mem>>
      tpu.enqueue_dma source(%arg10 : memref<24x16xf32, #tpu.memory_space<any>>) target(%arg33 : memref<24x16xf32, #tpu.memory_space<vmem>>) target_semaphore(%408 : memref<!tpu.dma_semaphore, #tpu.memory_space<semaphore_mem>>)
      %c7_i32 = arith.constant 7 : i32
      %409 = tpu.memref_slice %arg48[%c7_i32] : memref<21x!tpu.dma_semaphore, #tpu.memory_space<semaphore_mem>> -> memref<1x!tpu.dma_semaphore, #tpu.memory_space<semaphore_mem>>
      %410 = tpu.memref_squeeze %409 : memref<1x!tpu.dma_semaphore, #tpu.memory_space<semaphore_mem>> -> memref<!tpu.dma_semaphore, #tpu.memory_space<semaphore_mem>>
      tpu.enqueue_dma source(%arg11 : memref<80x32xf32, #tpu.memory_space<any>>) target(%arg34 : memref<80x32xf32, #tpu.memory_space<vmem>>) target_semaphore(%410 : memref<!tpu.dma_semaphore, #tpu.memory_space<semaphore_mem>>)
      %c8_i32 = arith.constant 8 : i32
      %411 = tpu.memref_slice %arg48[%c8_i32] : memref<21x!tpu.dma_semaphore, #tpu.memory_space<semaphore_mem>> -> memref<1x!tpu.dma_semaphore, #tpu.memory_space<semaphore_mem>>
      %412 = tpu.memref_squeeze %411 : memref<1x!tpu.dma_semaphore, #tpu.memory_space<semaphore_mem>> -> memref<!tpu.dma_semaphore, #tpu.memory_space<semaphore_mem>>
      tpu.enqueue_dma source(%arg12 : memref<224x64xf32, #tpu.memory_space<any>>) target(%arg35 : memref<224x64xf32, #tpu.memory_space<vmem>>) target_semaphore(%412 : memref<!tpu.dma_semaphore, #tpu.memory_space<semaphore_mem>>)
      %c9_i32 = arith.constant 9 : i32
      %413 = tpu.memref_slice %arg48[%c9_i32] : memref<21x!tpu.dma_semaphore, #tpu.memory_space<semaphore_mem>> -> memref<1x!tpu.dma_semaphore, #tpu.memory_space<semaphore_mem>>
      %414 = tpu.memref_squeeze %413 : memref<1x!tpu.dma_semaphore, #tpu.memory_space<semaphore_mem>> -> memref<!tpu.dma_semaphore, #tpu.memory_space<semaphore_mem>>
      tpu.enqueue_dma source(%arg13 : memref<8x4xf32, #tpu.memory_space<any>>) target(%arg36 : memref<8x4xf32, #tpu.memory_space<vmem>>) target_semaphore(%414 : memref<!tpu.dma_semaphore, #tpu.memory_space<semaphore_mem>>)
      %c10_i32 = arith.constant 10 : i32
      %415 = tpu.memref_slice %arg48[%c10_i32] : memref<21x!tpu.dma_semaphore, #tpu.memory_space<semaphore_mem>> -> memref<1x!tpu.dma_semaphore, #tpu.memory_space<semaphore_mem>>
      %416 = tpu.memref_squeeze %415 : memref<1x!tpu.dma_semaphore, #tpu.memory_space<semaphore_mem>> -> memref<!tpu.dma_semaphore, #tpu.memory_space<semaphore_mem>>
      tpu.enqueue_dma source(%arg14 : memref<12x8xf32, #tpu.memory_space<any>>) target(%arg37 : memref<12x8xf32, #tpu.memory_space<vmem>>) target_semaphore(%416 : memref<!tpu.dma_semaphore, #tpu.memory_space<semaphore_mem>>)
      %c11_i32 = arith.constant 11 : i32
      %417 = tpu.memref_slice %arg48[%c11_i32] : memref<21x!tpu.dma_semaphore, #tpu.memory_space<semaphore_mem>> -> memref<1x!tpu.dma_semaphore, #tpu.memory_space<semaphore_mem>>
      %418 = tpu.memref_squeeze %417 : memref<1x!tpu.dma_semaphore, #tpu.memory_space<semaphore_mem>> -> memref<!tpu.dma_semaphore, #tpu.memory_space<semaphore_mem>>
      tpu.enqueue_dma source(%arg15 : memref<40x16xf32, #tpu.memory_space<any>>) target(%arg38 : memref<40x16xf32, #tpu.memory_space<vmem>>) target_semaphore(%418 : memref<!tpu.dma_semaphore, #tpu.memory_space<semaphore_mem>>)
      %c12_i32 = arith.constant 12 : i32
      %419 = tpu.memref_slice %arg48[%c12_i32] : memref<21x!tpu.dma_semaphore, #tpu.memory_space<semaphore_mem>> -> memref<1x!tpu.dma_semaphore, #tpu.memory_space<semaphore_mem>>
      %420 = tpu.memref_squeeze %419 : memref<1x!tpu.dma_semaphore, #tpu.memory_space<semaphore_mem>> -> memref<!tpu.dma_semaphore, #tpu.memory_space<semaphore_mem>>
      tpu.enqueue_dma source(%arg16 : memref<112x32xf32, #tpu.memory_space<any>>) target(%arg39 : memref<112x32xf32, #tpu.memory_space<vmem>>) target_semaphore(%420 : memref<!tpu.dma_semaphore, #tpu.memory_space<semaphore_mem>>)
      %c13_i32 = arith.constant 13 : i32
      %421 = tpu.memref_slice %arg48[%c13_i32] : memref<21x!tpu.dma_semaphore, #tpu.memory_space<semaphore_mem>> -> memref<1x!tpu.dma_semaphore, #tpu.memory_space<semaphore_mem>>
      %422 = tpu.memref_squeeze %421 : memref<1x!tpu.dma_semaphore, #tpu.memory_space<semaphore_mem>> -> memref<!tpu.dma_semaphore, #tpu.memory_space<semaphore_mem>>
      tpu.enqueue_dma source(%arg17 : memref<288x64xf32, #tpu.memory_space<any>>) target(%arg40 : memref<288x64xf32, #tpu.memory_space<vmem>>) target_semaphore(%422 : memref<!tpu.dma_semaphore, #tpu.memory_space<semaphore_mem>>)
      %c14_i32 = arith.constant 14 : i32
      %423 = tpu.memref_slice %arg48[%c14_i32] : memref<21x!tpu.dma_semaphore, #tpu.memory_space<semaphore_mem>> -> memref<1x!tpu.dma_semaphore, #tpu.memory_space<semaphore_mem>>
      %424 = tpu.memref_squeeze %423 : memref<1x!tpu.dma_semaphore, #tpu.memory_space<semaphore_mem>> -> memref<!tpu.dma_semaphore, #tpu.memory_space<semaphore_mem>>
      tpu.enqueue_dma source(%arg18 : memref<4x2xf32, #tpu.memory_space<any>>) target(%arg41 : memref<4x2xf32, #tpu.memory_space<vmem>>) target_semaphore(%424 : memref<!tpu.dma_semaphore, #tpu.memory_space<semaphore_mem>>)
      %c15_i32 = arith.constant 15 : i32
      %425 = tpu.memref_slice %arg48[%c15_i32] : memref<21x!tpu.dma_semaphore, #tpu.memory_space<semaphore_mem>> -> memref<1x!tpu.dma_semaphore, #tpu.memory_space<semaphore_mem>>
      %426 = tpu.memref_squeeze %425 : memref<1x!tpu.dma_semaphore, #tpu.memory_space<semaphore_mem>> -> memref<!tpu.dma_semaphore, #tpu.memory_space<semaphore_mem>>
      tpu.enqueue_dma source(%arg19 : memref<6x4xf32, #tpu.memory_space<any>>) target(%arg42 : memref<6x4xf32, #tpu.memory_space<vmem>>) target_semaphore(%426 : memref<!tpu.dma_semaphore, #tpu.memory_space<semaphore_mem>>)
      %c16_i32 = arith.constant 16 : i32
      %427 = tpu.memref_slice %arg48[%c16_i32] : memref<21x!tpu.dma_semaphore, #tpu.memory_space<semaphore_mem>> -> memref<1x!tpu.dma_semaphore, #tpu.memory_space<semaphore_mem>>
      %428 = tpu.memref_squeeze %427 : memref<1x!tpu.dma_semaphore, #tpu.memory_space<semaphore_mem>> -> memref<!tpu.dma_semaphore, #tpu.memory_space<semaphore_mem>>
      tpu.enqueue_dma source(%arg20 : memref<20x8xf32, #tpu.memory_space<any>>) target(%arg43 : memref<20x8xf32, #tpu.memory_space<vmem>>) target_semaphore(%428 : memref<!tpu.dma_semaphore, #tpu.memory_space<semaphore_mem>>)
      %c17_i32 = arith.constant 17 : i32
      %429 = tpu.memref_slice %arg48[%c17_i32] : memref<21x!tpu.dma_semaphore, #tpu.memory_space<semaphore_mem>> -> memref<1x!tpu.dma_semaphore, #tpu.memory_space<semaphore_mem>>
      %430 = tpu.memref_squeeze %429 : memref<1x!tpu.dma_semaphore, #tpu.memory_space<semaphore_mem>> -> memref<!tpu.dma_semaphore, #tpu.memory_space<semaphore_mem>>
      tpu.enqueue_dma source(%arg21 : memref<56x16xf32, #tpu.memory_space<any>>) target(%arg44 : memref<56x16xf32, #tpu.memory_space<vmem>>) target_semaphore(%430 : memref<!tpu.dma_semaphore, #tpu.memory_space<semaphore_mem>>)
      %c18_i32 = arith.constant 18 : i32
      %431 = tpu.memref_slice %arg48[%c18_i32] : memref<21x!tpu.dma_semaphore, #tpu.memory_space<semaphore_mem>> -> memref<1x!tpu.dma_semaphore, #tpu.memory_space<semaphore_mem>>
      %432 = tpu.memref_squeeze %431 : memref<1x!tpu.dma_semaphore, #tpu.memory_space<semaphore_mem>> -> memref<!tpu.dma_semaphore, #tpu.memory_space<semaphore_mem>>
      tpu.enqueue_dma source(%arg22 : memref<144x32xf32, #tpu.memory_space<any>>) target(%arg45 : memref<144x32xf32, #tpu.memory_space<vmem>>) target_semaphore(%432 : memref<!tpu.dma_semaphore, #tpu.memory_space<semaphore_mem>>)
      %c19_i32 = arith.constant 19 : i32
      %433 = tpu.memref_slice %arg48[%c19_i32] : memref<21x!tpu.dma_semaphore, #tpu.memory_space<semaphore_mem>> -> memref<1x!tpu.dma_semaphore, #tpu.memory_space<semaphore_mem>>
      %434 = tpu.memref_squeeze %433 : memref<1x!tpu.dma_semaphore, #tpu.memory_space<semaphore_mem>> -> memref<!tpu.dma_semaphore, #tpu.memory_space<semaphore_mem>>
      tpu.enqueue_dma source(%arg23 : memref<352x64xf32, #tpu.memory_space<any>>) target(%arg46 : memref<352x64xf32, #tpu.memory_space<vmem>>) target_semaphore(%434 : memref<!tpu.dma_semaphore, #tpu.memory_space<semaphore_mem>>)
      %c20_i32 = arith.constant 20 : i32
      %435 = tpu.memref_slice %arg48[%c20_i32] : memref<21x!tpu.dma_semaphore, #tpu.memory_space<semaphore_mem>> -> memref<1x!tpu.dma_semaphore, #tpu.memory_space<semaphore_mem>>
      %436 = tpu.memref_squeeze %435 : memref<1x!tpu.dma_semaphore, #tpu.memory_space<semaphore_mem>> -> memref<!tpu.dma_semaphore, #tpu.memory_space<semaphore_mem>>
      tpu.enqueue_dma source(%arg24 : memref<256x128xf32, #tpu.memory_space<any>>) target(%arg47 : memref<256x128xf32, #tpu.memory_space<vmem>>) target_semaphore(%436 : memref<!tpu.dma_semaphore, #tpu.memory_space<semaphore_mem>>)
      %c0_i32_190 = arith.constant 0 : i32
      %437 = tpu.memref_slice %arg48[%c0_i32_190] : memref<21x!tpu.dma_semaphore, #tpu.memory_space<semaphore_mem>> -> memref<1x!tpu.dma_semaphore, #tpu.memory_space<semaphore_mem>>
      %438 = tpu.memref_squeeze %437 : memref<1x!tpu.dma_semaphore, #tpu.memory_space<semaphore_mem>> -> memref<!tpu.dma_semaphore, #tpu.memory_space<semaphore_mem>>
      tpu.wait_dma2 semaphore(%438 : memref<!tpu.dma_semaphore, #tpu.memory_space<semaphore_mem>>) src(%arg4 : memref<64x32xf32, #tpu.memory_space<any>>) dst(%arg27 : memref<64x32xf32, #tpu.memory_space<vmem>>)
      %c1_i32_191 = arith.constant 1 : i32
      %439 = tpu.memref_slice %arg48[%c1_i32_191] : memref<21x!tpu.dma_semaphore, #tpu.memory_space<semaphore_mem>> -> memref<1x!tpu.dma_semaphore, #tpu.memory_space<semaphore_mem>>
      %440 = tpu.memref_squeeze %439 : memref<1x!tpu.dma_semaphore, #tpu.memory_space<semaphore_mem>> -> memref<!tpu.dma_semaphore, #tpu.memory_space<semaphore_mem>>
      tpu.wait_dma2 semaphore(%440 : memref<!tpu.dma_semaphore, #tpu.memory_space<semaphore_mem>>) src(%arg5 : memref<96x64xf32, #tpu.memory_space<any>>) dst(%arg28 : memref<96x64xf32, #tpu.memory_space<vmem>>)
      %c2_i32_192 = arith.constant 2 : i32
      %441 = tpu.memref_slice %arg48[%c2_i32_192] : memref<21x!tpu.dma_semaphore, #tpu.memory_space<semaphore_mem>> -> memref<1x!tpu.dma_semaphore, #tpu.memory_space<semaphore_mem>>
      %442 = tpu.memref_squeeze %441 : memref<1x!tpu.dma_semaphore, #tpu.memory_space<semaphore_mem>> -> memref<!tpu.dma_semaphore, #tpu.memory_space<semaphore_mem>>
      tpu.wait_dma2 semaphore(%442 : memref<!tpu.dma_semaphore, #tpu.memory_space<semaphore_mem>>) src(%arg6 : memref<32x16xf32, #tpu.memory_space<any>>) dst(%arg29 : memref<32x16xf32, #tpu.memory_space<vmem>>)
      %c3_i32_193 = arith.constant 3 : i32
      %443 = tpu.memref_slice %arg48[%c3_i32_193] : memref<21x!tpu.dma_semaphore, #tpu.memory_space<semaphore_mem>> -> memref<1x!tpu.dma_semaphore, #tpu.memory_space<semaphore_mem>>
      %444 = tpu.memref_squeeze %443 : memref<1x!tpu.dma_semaphore, #tpu.memory_space<semaphore_mem>> -> memref<!tpu.dma_semaphore, #tpu.memory_space<semaphore_mem>>
      tpu.wait_dma2 semaphore(%444 : memref<!tpu.dma_semaphore, #tpu.memory_space<semaphore_mem>>) src(%arg7 : memref<48x32xf32, #tpu.memory_space<any>>) dst(%arg30 : memref<48x32xf32, #tpu.memory_space<vmem>>)
      %c4_i32_194 = arith.constant 4 : i32
      %445 = tpu.memref_slice %arg48[%c4_i32_194] : memref<21x!tpu.dma_semaphore, #tpu.memory_space<semaphore_mem>> -> memref<1x!tpu.dma_semaphore, #tpu.memory_space<semaphore_mem>>
      %446 = tpu.memref_squeeze %445 : memref<1x!tpu.dma_semaphore, #tpu.memory_space<semaphore_mem>> -> memref<!tpu.dma_semaphore, #tpu.memory_space<semaphore_mem>>
      tpu.wait_dma2 semaphore(%446 : memref<!tpu.dma_semaphore, #tpu.memory_space<semaphore_mem>>) src(%arg8 : memref<160x64xf32, #tpu.memory_space<any>>) dst(%arg31 : memref<160x64xf32, #tpu.memory_space<vmem>>)
      %c5_i32_195 = arith.constant 5 : i32
      %447 = tpu.memref_slice %arg48[%c5_i32_195] : memref<21x!tpu.dma_semaphore, #tpu.memory_space<semaphore_mem>> -> memref<1x!tpu.dma_semaphore, #tpu.memory_space<semaphore_mem>>
      %448 = tpu.memref_squeeze %447 : memref<1x!tpu.dma_semaphore, #tpu.memory_space<semaphore_mem>> -> memref<!tpu.dma_semaphore, #tpu.memory_space<semaphore_mem>>
      tpu.wait_dma2 semaphore(%448 : memref<!tpu.dma_semaphore, #tpu.memory_space<semaphore_mem>>) src(%arg9 : memref<16x8xf32, #tpu.memory_space<any>>) dst(%arg32 : memref<16x8xf32, #tpu.memory_space<vmem>>)
      %c6_i32_196 = arith.constant 6 : i32
      %449 = tpu.memref_slice %arg48[%c6_i32_196] : memref<21x!tpu.dma_semaphore, #tpu.memory_space<semaphore_mem>> -> memref<1x!tpu.dma_semaphore, #tpu.memory_space<semaphore_mem>>
      %450 = tpu.memref_squeeze %449 : memref<1x!tpu.dma_semaphore, #tpu.memory_space<semaphore_mem>> -> memref<!tpu.dma_semaphore, #tpu.memory_space<semaphore_mem>>
      tpu.wait_dma2 semaphore(%450 : memref<!tpu.dma_semaphore, #tpu.memory_space<semaphore_mem>>) src(%arg10 : memref<24x16xf32, #tpu.memory_space<any>>) dst(%arg33 : memref<24x16xf32, #tpu.memory_space<vmem>>)
      %c7_i32_197 = arith.constant 7 : i32
      %451 = tpu.memref_slice %arg48[%c7_i32_197] : memref<21x!tpu.dma_semaphore, #tpu.memory_space<semaphore_mem>> -> memref<1x!tpu.dma_semaphore, #tpu.memory_space<semaphore_mem>>
      %452 = tpu.memref_squeeze %451 : memref<1x!tpu.dma_semaphore, #tpu.memory_space<semaphore_mem>> -> memref<!tpu.dma_semaphore, #tpu.memory_space<semaphore_mem>>
      tpu.wait_dma2 semaphore(%452 : memref<!tpu.dma_semaphore, #tpu.memory_space<semaphore_mem>>) src(%arg11 : memref<80x32xf32, #tpu.memory_space<any>>) dst(%arg34 : memref<80x32xf32, #tpu.memory_space<vmem>>)
      %c8_i32_198 = arith.constant 8 : i32
      %453 = tpu.memref_slice %arg48[%c8_i32_198] : memref<21x!tpu.dma_semaphore, #tpu.memory_space<semaphore_mem>> -> memref<1x!tpu.dma_semaphore, #tpu.memory_space<semaphore_mem>>
      %454 = tpu.memref_squeeze %453 : memref<1x!tpu.dma_semaphore, #tpu.memory_space<semaphore_mem>> -> memref<!tpu.dma_semaphore, #tpu.memory_space<semaphore_mem>>
      tpu.wait_dma2 semaphore(%454 : memref<!tpu.dma_semaphore, #tpu.memory_space<semaphore_mem>>) src(%arg12 : memref<224x64xf32, #tpu.memory_space<any>>) dst(%arg35 : memref<224x64xf32, #tpu.memory_space<vmem>>)
      %c9_i32_199 = arith.constant 9 : i32
      %455 = tpu.memref_slice %arg48[%c9_i32_199] : memref<21x!tpu.dma_semaphore, #tpu.memory_space<semaphore_mem>> -> memref<1x!tpu.dma_semaphore, #tpu.memory_space<semaphore_mem>>
      %456 = tpu.memref_squeeze %455 : memref<1x!tpu.dma_semaphore, #tpu.memory_space<semaphore_mem>> -> memref<!tpu.dma_semaphore, #tpu.memory_space<semaphore_mem>>
      tpu.wait_dma2 semaphore(%456 : memref<!tpu.dma_semaphore, #tpu.memory_space<semaphore_mem>>) src(%arg13 : memref<8x4xf32, #tpu.memory_space<any>>) dst(%arg36 : memref<8x4xf32, #tpu.memory_space<vmem>>)
      %c10_i32_200 = arith.constant 10 : i32
      %457 = tpu.memref_slice %arg48[%c10_i32_200] : memref<21x!tpu.dma_semaphore, #tpu.memory_space<semaphore_mem>> -> memref<1x!tpu.dma_semaphore, #tpu.memory_space<semaphore_mem>>
      %458 = tpu.memref_squeeze %457 : memref<1x!tpu.dma_semaphore, #tpu.memory_space<semaphore_mem>> -> memref<!tpu.dma_semaphore, #tpu.memory_space<semaphore_mem>>
      tpu.wait_dma2 semaphore(%458 : memref<!tpu.dma_semaphore, #tpu.memory_space<semaphore_mem>>) src(%arg14 : memref<12x8xf32, #tpu.memory_space<any>>) dst(%arg37 : memref<12x8xf32, #tpu.memory_space<vmem>>)
      %c11_i32_201 = arith.constant 11 : i32
      %459 = tpu.memref_slice %arg48[%c11_i32_201] : memref<21x!tpu.dma_semaphore, #tpu.memory_space<semaphore_mem>> -> memref<1x!tpu.dma_semaphore, #tpu.memory_space<semaphore_mem>>
      %460 = tpu.memref_squeeze %459 : memref<1x!tpu.dma_semaphore, #tpu.memory_space<semaphore_mem>> -> memref<!tpu.dma_semaphore, #tpu.memory_space<semaphore_mem>>
      tpu.wait_dma2 semaphore(%460 : memref<!tpu.dma_semaphore, #tpu.memory_space<semaphore_mem>>) src(%arg15 : memref<40x16xf32, #tpu.memory_space<any>>) dst(%arg38 : memref<40x16xf32, #tpu.memory_space<vmem>>)
      %c12_i32_202 = arith.constant 12 : i32
      %461 = tpu.memref_slice %arg48[%c12_i32_202] : memref<21x!tpu.dma_semaphore, #tpu.memory_space<semaphore_mem>> -> memref<1x!tpu.dma_semaphore, #tpu.memory_space<semaphore_mem>>
      %462 = tpu.memref_squeeze %461 : memref<1x!tpu.dma_semaphore, #tpu.memory_space<semaphore_mem>> -> memref<!tpu.dma_semaphore, #tpu.memory_space<semaphore_mem>>
      tpu.wait_dma2 semaphore(%462 : memref<!tpu.dma_semaphore, #tpu.memory_space<semaphore_mem>>) src(%arg16 : memref<112x32xf32, #tpu.memory_space<any>>) dst(%arg39 : memref<112x32xf32, #tpu.memory_space<vmem>>)
      %c13_i32_203 = arith.constant 13 : i32
      %463 = tpu.memref_slice %arg48[%c13_i32_203] : memref<21x!tpu.dma_semaphore, #tpu.memory_space<semaphore_mem>> -> memref<1x!tpu.dma_semaphore, #tpu.memory_space<semaphore_mem>>
      %464 = tpu.memref_squeeze %463 : memref<1x!tpu.dma_semaphore, #tpu.memory_space<semaphore_mem>> -> memref<!tpu.dma_semaphore, #tpu.memory_space<semaphore_mem>>
      tpu.wait_dma2 semaphore(%464 : memref<!tpu.dma_semaphore, #tpu.memory_space<semaphore_mem>>) src(%arg17 : memref<288x64xf32, #tpu.memory_space<any>>) dst(%arg40 : memref<288x64xf32, #tpu.memory_space<vmem>>)
      %c14_i32_204 = arith.constant 14 : i32
      %465 = tpu.memref_slice %arg48[%c14_i32_204] : memref<21x!tpu.dma_semaphore, #tpu.memory_space<semaphore_mem>> -> memref<1x!tpu.dma_semaphore, #tpu.memory_space<semaphore_mem>>
      %466 = tpu.memref_squeeze %465 : memref<1x!tpu.dma_semaphore, #tpu.memory_space<semaphore_mem>> -> memref<!tpu.dma_semaphore, #tpu.memory_space<semaphore_mem>>
      tpu.wait_dma2 semaphore(%466 : memref<!tpu.dma_semaphore, #tpu.memory_space<semaphore_mem>>) src(%arg18 : memref<4x2xf32, #tpu.memory_space<any>>) dst(%arg41 : memref<4x2xf32, #tpu.memory_space<vmem>>)
      %c15_i32_205 = arith.constant 15 : i32
      %467 = tpu.memref_slice %arg48[%c15_i32_205] : memref<21x!tpu.dma_semaphore, #tpu.memory_space<semaphore_mem>> -> memref<1x!tpu.dma_semaphore, #tpu.memory_space<semaphore_mem>>
      %468 = tpu.memref_squeeze %467 : memref<1x!tpu.dma_semaphore, #tpu.memory_space<semaphore_mem>> -> memref<!tpu.dma_semaphore, #tpu.memory_space<semaphore_mem>>
      tpu.wait_dma2 semaphore(%468 : memref<!tpu.dma_semaphore, #tpu.memory_space<semaphore_mem>>) src(%arg19 : memref<6x4xf32, #tpu.memory_space<any>>) dst(%arg42 : memref<6x4xf32, #tpu.memory_space<vmem>>)
      %c16_i32_206 = arith.constant 16 : i32
      %469 = tpu.memref_slice %arg48[%c16_i32_206] : memref<21x!tpu.dma_semaphore, #tpu.memory_space<semaphore_mem>> -> memref<1x!tpu.dma_semaphore, #tpu.memory_space<semaphore_mem>>
      %470 = tpu.memref_squeeze %469 : memref<1x!tpu.dma_semaphore, #tpu.memory_space<semaphore_mem>> -> memref<!tpu.dma_semaphore, #tpu.memory_space<semaphore_mem>>
      tpu.wait_dma2 semaphore(%470 : memref<!tpu.dma_semaphore, #tpu.memory_space<semaphore_mem>>) src(%arg20 : memref<20x8xf32, #tpu.memory_space<any>>) dst(%arg43 : memref<20x8xf32, #tpu.memory_space<vmem>>)
      %c17_i32_207 = arith.constant 17 : i32
      %471 = tpu.memref_slice %arg48[%c17_i32_207] : memref<21x!tpu.dma_semaphore, #tpu.memory_space<semaphore_mem>> -> memref<1x!tpu.dma_semaphore, #tpu.memory_space<semaphore_mem>>
      %472 = tpu.memref_squeeze %471 : memref<1x!tpu.dma_semaphore, #tpu.memory_space<semaphore_mem>> -> memref<!tpu.dma_semaphore, #tpu.memory_space<semaphore_mem>>
      tpu.wait_dma2 semaphore(%472 : memref<!tpu.dma_semaphore, #tpu.memory_space<semaphore_mem>>) src(%arg21 : memref<56x16xf32, #tpu.memory_space<any>>) dst(%arg44 : memref<56x16xf32, #tpu.memory_space<vmem>>)
      %c18_i32_208 = arith.constant 18 : i32
      %473 = tpu.memref_slice %arg48[%c18_i32_208] : memref<21x!tpu.dma_semaphore, #tpu.memory_space<semaphore_mem>> -> memref<1x!tpu.dma_semaphore, #tpu.memory_space<semaphore_mem>>
      %474 = tpu.memref_squeeze %473 : memref<1x!tpu.dma_semaphore, #tpu.memory_space<semaphore_mem>> -> memref<!tpu.dma_semaphore, #tpu.memory_space<semaphore_mem>>
      tpu.wait_dma2 semaphore(%474 : memref<!tpu.dma_semaphore, #tpu.memory_space<semaphore_mem>>) src(%arg22 : memref<144x32xf32, #tpu.memory_space<any>>) dst(%arg45 : memref<144x32xf32, #tpu.memory_space<vmem>>)
      %c19_i32_209 = arith.constant 19 : i32
      %475 = tpu.memref_slice %arg48[%c19_i32_209] : memref<21x!tpu.dma_semaphore, #tpu.memory_space<semaphore_mem>> -> memref<1x!tpu.dma_semaphore, #tpu.memory_space<semaphore_mem>>
      %476 = tpu.memref_squeeze %475 : memref<1x!tpu.dma_semaphore, #tpu.memory_space<semaphore_mem>> -> memref<!tpu.dma_semaphore, #tpu.memory_space<semaphore_mem>>
      tpu.wait_dma2 semaphore(%476 : memref<!tpu.dma_semaphore, #tpu.memory_space<semaphore_mem>>) src(%arg23 : memref<352x64xf32, #tpu.memory_space<any>>) dst(%arg46 : memref<352x64xf32, #tpu.memory_space<vmem>>)
      %c20_i32_210 = arith.constant 20 : i32
      %477 = tpu.memref_slice %arg48[%c20_i32_210] : memref<21x!tpu.dma_semaphore, #tpu.memory_space<semaphore_mem>> -> memref<1x!tpu.dma_semaphore, #tpu.memory_space<semaphore_mem>>
      %478 = tpu.memref_squeeze %477 : memref<1x!tpu.dma_semaphore, #tpu.memory_space<semaphore_mem>> -> memref<!tpu.dma_semaphore, #tpu.memory_space<semaphore_mem>>
      tpu.wait_dma2 semaphore(%478 : memref<!tpu.dma_semaphore, #tpu.memory_space<semaphore_mem>>) src(%arg24 : memref<256x128xf32, #tpu.memory_space<any>>) dst(%arg47 : memref<256x128xf32, #tpu.memory_space<vmem>>)
    } else {
    }
    %c0 = arith.constant 0 : index
    %c0_1 = arith.constant 0 : index
    %3 = vector.load %arg1[%c0, %c0_1] : memref<16x64xf32, #tpu.memory_space<vmem>>, vector<16x64xf32>
    %c0_2 = arith.constant 0 : index
    %c0_3 = arith.constant 0 : index
    %4 = vector.load %arg27[%c0_2, %c0_3] : memref<64x32xf32, #tpu.memory_space<vmem>>, vector<64x32xf32>
    %c0_4 = arith.constant 0 : index
    %c0_5 = arith.constant 0 : index
    %5 = vector.load %arg2[%c0_4, %c0_5] : memref<1x578xf32, #tpu.memory_space<vmem>>, vector<1x32xf32>
    %cst = arith.constant dense<0.000000e+00> : vector<16x32xf32>
    %6 = tpu.matmul %3, %4, %cst {dimension_numbers = #tpu.dot_dimension_numbers<[1], [0], [0], [1], [0, 0, 1, 1], [], []>} : vector<16x64xf32>, vector<64x32xf32>, vector<16x32xf32> -> vector<16x32xf32>
    %7 = vector.broadcast %5 : vector<1x32xf32> to vector<16x32xf32>
    %8 = arith.addf %7, %6 : vector<16x32xf32>
    %cst_6 = arith.constant 5.000000e-01 : f32
    %9 = vector.broadcast %cst_6 : f32 to vector<16x32xf32>
    %10 = arith.mulf %9, %8 : vector<16x32xf32>
    %cst_7 = arith.constant 0.707106769 : f32
    %11 = vector.broadcast %cst_7 : f32 to vector<16x32xf32>
    %12 = arith.mulf %8, %11 : vector<16x32xf32>
    %13 = math.erf %12 : vector<16x32xf32>
    %cst_8 = arith.constant 1.000000e+00 : f32
    %14 = vector.broadcast %cst_8 : f32 to vector<16x32xf32>
    %15 = arith.addf %14, %13 : vector<16x32xf32>
    %16 = arith.mulf %10, %15 : vector<16x32xf32>
    %c0_9 = arith.constant 0 : index
    %c0_10 = arith.constant 0 : index
    %17 = vector.load %arg28[%c0_9, %c0_10] : memref<96x64xf32, #tpu.memory_space<vmem>>, vector<96x64xf32>
    %c0_11 = arith.constant 0 : index
    %c32 = arith.constant 32 : index
    %18 = vector.load %arg2[%c0_11, %c32] : memref<1x578xf32, #tpu.memory_space<vmem>>, vector<1x64xf32>
    %19 = vector.extract_strided_slice %17 {offsets = [0, 0], sizes = [64, 64], strides = [1, 1]} : vector<96x64xf32> to vector<64x64xf32>
    %cst_12 = arith.constant dense<0.000000e+00> : vector<16x64xf32>
    %20 = tpu.matmul %3, %19, %cst_12 {dimension_numbers = #tpu.dot_dimension_numbers<[1], [0], [0], [1], [0, 0, 1, 1], [], []>} : vector<16x64xf32>, vector<64x64xf32>, vector<16x64xf32> -> vector<16x64xf32>
    %21 = vector.broadcast %18 : vector<1x64xf32> to vector<16x64xf32>
    %22 = arith.addf %21, %20 : vector<16x64xf32>
    %23 = vector.extract_strided_slice %17 {offsets = [64, 0], sizes = [32, 64], strides = [1, 1]} : vector<96x64xf32> to vector<32x64xf32>
    %cst_13 = arith.constant dense<0.000000e+00> : vector<16x64xf32>
    %24 = tpu.matmul %16, %23, %cst_13 {dimension_numbers = #tpu.dot_dimension_numbers<[1], [0], [0], [1], [0, 0, 1, 1], [], []>} : vector<16x32xf32>, vector<32x64xf32>, vector<16x64xf32> -> vector<16x64xf32>
    %25 = arith.addf %22, %24 : vector<16x64xf32>
    %cst_14 = arith.constant 5.000000e-01 : f32
    %26 = vector.broadcast %cst_14 : f32 to vector<16x64xf32>
    %27 = arith.mulf %26, %25 : vector<16x64xf32>
    %cst_15 = arith.constant 0.707106769 : f32
    %28 = vector.broadcast %cst_15 : f32 to vector<16x64xf32>
    %29 = arith.mulf %25, %28 : vector<16x64xf32>
    %30 = math.erf %29 : vector<16x64xf32>
    %cst_16 = arith.constant 1.000000e+00 : f32
    %31 = vector.broadcast %cst_16 : f32 to vector<16x64xf32>
    %32 = arith.addf %31, %30 : vector<16x64xf32>
    %33 = arith.mulf %27, %32 : vector<16x64xf32>
    %c0_17 = arith.constant 0 : index
    %c0_18 = arith.constant 0 : index
    %34 = vector.load %arg29[%c0_17, %c0_18] : memref<32x16xf32, #tpu.memory_space<vmem>>, vector<32x16xf32>
    %c0_19 = arith.constant 0 : index
    %c96 = arith.constant 96 : index
    %35 = vector.load %arg2[%c0_19, %c96] : memref<1x578xf32, #tpu.memory_space<vmem>>, vector<1x16xf32>
    %cst_20 = arith.constant dense<0.000000e+00> : vector<16x16xf32>
    %36 = tpu.matmul %16, %34, %cst_20 {dimension_numbers = #tpu.dot_dimension_numbers<[1], [0], [0], [1], [0, 0, 1, 1], [], []>} : vector<16x32xf32>, vector<32x16xf32>, vector<16x16xf32> -> vector<16x16xf32>
    %37 = vector.broadcast %35 : vector<1x16xf32> to vector<16x16xf32>
    %38 = arith.addf %37, %36 : vector<16x16xf32>
    %cst_21 = arith.constant 5.000000e-01 : f32
    %39 = vector.broadcast %cst_21 : f32 to vector<16x16xf32>
    %40 = arith.mulf %39, %38 : vector<16x16xf32>
    %cst_22 = arith.constant 0.707106769 : f32
    %41 = vector.broadcast %cst_22 : f32 to vector<16x16xf32>
    %42 = arith.mulf %38, %41 : vector<16x16xf32>
    %43 = math.erf %42 : vector<16x16xf32>
    %cst_23 = arith.constant 1.000000e+00 : f32
    %44 = vector.broadcast %cst_23 : f32 to vector<16x16xf32>
    %45 = arith.addf %44, %43 : vector<16x16xf32>
    %46 = arith.mulf %40, %45 : vector<16x16xf32>
    %c0_24 = arith.constant 0 : index
    %c0_25 = arith.constant 0 : index
    %47 = vector.load %arg30[%c0_24, %c0_25] : memref<48x32xf32, #tpu.memory_space<vmem>>, vector<48x32xf32>
    %c0_26 = arith.constant 0 : index
    %c112 = arith.constant 112 : index
    %48 = vector.load %arg2[%c0_26, %c112] : memref<1x578xf32, #tpu.memory_space<vmem>>, vector<1x32xf32>
    %49 = vector.extract_strided_slice %47 {offsets = [0, 0], sizes = [32, 32], strides = [1, 1]} : vector<48x32xf32> to vector<32x32xf32>
    %cst_27 = arith.constant dense<0.000000e+00> : vector<16x32xf32>
    %50 = tpu.matmul %16, %49, %cst_27 {dimension_numbers = #tpu.dot_dimension_numbers<[1], [0], [0], [1], [0, 0, 1, 1], [], []>} : vector<16x32xf32>, vector<32x32xf32>, vector<16x32xf32> -> vector<16x32xf32>
    %51 = vector.broadcast %48 : vector<1x32xf32> to vector<16x32xf32>
    %52 = arith.addf %51, %50 : vector<16x32xf32>
    %53 = vector.extract_strided_slice %47 {offsets = [32, 0], sizes = [16, 32], strides = [1, 1]} : vector<48x32xf32> to vector<16x32xf32>
    %cst_28 = arith.constant dense<0.000000e+00> : vector<16x32xf32>
    %54 = tpu.matmul %46, %53, %cst_28 {dimension_numbers = #tpu.dot_dimension_numbers<[1], [0], [0], [1], [0, 0, 1, 1], [], []>} : vector<16x16xf32>, vector<16x32xf32>, vector<16x32xf32> -> vector<16x32xf32>
    %55 = arith.addf %52, %54 : vector<16x32xf32>
    %cst_29 = arith.constant 5.000000e-01 : f32
    %56 = vector.broadcast %cst_29 : f32 to vector<16x32xf32>
    %57 = arith.mulf %56, %55 : vector<16x32xf32>
    %cst_30 = arith.constant 0.707106769 : f32
    %58 = vector.broadcast %cst_30 : f32 to vector<16x32xf32>
    %59 = arith.mulf %55, %58 : vector<16x32xf32>
    %60 = math.erf %59 : vector<16x32xf32>
    %cst_31 = arith.constant 1.000000e+00 : f32
    %61 = vector.broadcast %cst_31 : f32 to vector<16x32xf32>
    %62 = arith.addf %61, %60 : vector<16x32xf32>
    %63 = arith.mulf %57, %62 : vector<16x32xf32>
    %c0_32 = arith.constant 0 : index
    %c0_33 = arith.constant 0 : index
    %64 = vector.load %arg31[%c0_32, %c0_33] : memref<160x64xf32, #tpu.memory_space<vmem>>, vector<160x64xf32>
    %c0_34 = arith.constant 0 : index
    %c144 = arith.constant 144 : index
    %65 = vector.load %arg2[%c0_34, %c144] : memref<1x578xf32, #tpu.memory_space<vmem>>, vector<1x64xf32>
    %66 = vector.extract_strided_slice %64 {offsets = [0, 0], sizes = [64, 64], strides = [1, 1]} : vector<160x64xf32> to vector<64x64xf32>
    %cst_35 = arith.constant dense<0.000000e+00> : vector<16x64xf32>
    %67 = tpu.matmul %3, %66, %cst_35 {dimension_numbers = #tpu.dot_dimension_numbers<[1], [0], [0], [1], [0, 0, 1, 1], [], []>} : vector<16x64xf32>, vector<64x64xf32>, vector<16x64xf32> -> vector<16x64xf32>
    %68 = vector.broadcast %65 : vector<1x64xf32> to vector<16x64xf32>
    %69 = arith.addf %68, %67 : vector<16x64xf32>
    %70 = vector.extract_strided_slice %64 {offsets = [64, 0], sizes = [64, 64], strides = [1, 1]} : vector<160x64xf32> to vector<64x64xf32>
    %cst_36 = arith.constant dense<0.000000e+00> : vector<16x64xf32>
    %71 = tpu.matmul %33, %70, %cst_36 {dimension_numbers = #tpu.dot_dimension_numbers<[1], [0], [0], [1], [0, 0, 1, 1], [], []>} : vector<16x64xf32>, vector<64x64xf32>, vector<16x64xf32> -> vector<16x64xf32>
    %72 = arith.addf %69, %71 : vector<16x64xf32>
    %73 = vector.extract_strided_slice %64 {offsets = [128, 0], sizes = [32, 64], strides = [1, 1]} : vector<160x64xf32> to vector<32x64xf32>
    %cst_37 = arith.constant dense<0.000000e+00> : vector<16x64xf32>
    %74 = tpu.matmul %63, %73, %cst_37 {dimension_numbers = #tpu.dot_dimension_numbers<[1], [0], [0], [1], [0, 0, 1, 1], [], []>} : vector<16x32xf32>, vector<32x64xf32>, vector<16x64xf32> -> vector<16x64xf32>
    %75 = arith.addf %72, %74 : vector<16x64xf32>
    %cst_38 = arith.constant 5.000000e-01 : f32
    %76 = vector.broadcast %cst_38 : f32 to vector<16x64xf32>
    %77 = arith.mulf %76, %75 : vector<16x64xf32>
    %cst_39 = arith.constant 0.707106769 : f32
    %78 = vector.broadcast %cst_39 : f32 to vector<16x64xf32>
    %79 = arith.mulf %75, %78 : vector<16x64xf32>
    %80 = math.erf %79 : vector<16x64xf32>
    %cst_40 = arith.constant 1.000000e+00 : f32
    %81 = vector.broadcast %cst_40 : f32 to vector<16x64xf32>
    %82 = arith.addf %81, %80 : vector<16x64xf32>
    %83 = arith.mulf %77, %82 : vector<16x64xf32>
    %c0_41 = arith.constant 0 : index
    %c0_42 = arith.constant 0 : index
    %84 = vector.load %arg32[%c0_41, %c0_42] : memref<16x8xf32, #tpu.memory_space<vmem>>, vector<16x8xf32>
    %c0_43 = arith.constant 0 : index
    %c208 = arith.constant 208 : index
    %85 = vector.load %arg2[%c0_43, %c208] : memref<1x578xf32, #tpu.memory_space<vmem>>, vector<1x8xf32>
    %cst_44 = arith.constant dense<0.000000e+00> : vector<16x8xf32>
    %86 = tpu.matmul %46, %84, %cst_44 {dimension_numbers = #tpu.dot_dimension_numbers<[1], [0], [0], [1], [0, 0, 1, 1], [], []>} : vector<16x16xf32>, vector<16x8xf32>, vector<16x8xf32> -> vector<16x8xf32>
    %87 = vector.broadcast %85 : vector<1x8xf32> to vector<16x8xf32>
    %88 = arith.addf %87, %86 : vector<16x8xf32>
    %cst_45 = arith.constant 5.000000e-01 : f32
    %89 = vector.broadcast %cst_45 : f32 to vector<16x8xf32>
    %90 = arith.mulf %89, %88 : vector<16x8xf32>
    %cst_46 = arith.constant 0.707106769 : f32
    %91 = vector.broadcast %cst_46 : f32 to vector<16x8xf32>
    %92 = arith.mulf %88, %91 : vector<16x8xf32>
    %93 = math.erf %92 : vector<16x8xf32>
    %cst_47 = arith.constant 1.000000e+00 : f32
    %94 = vector.broadcast %cst_47 : f32 to vector<16x8xf32>
    %95 = arith.addf %94, %93 : vector<16x8xf32>
    %96 = arith.mulf %90, %95 : vector<16x8xf32>
    %c0_48 = arith.constant 0 : index
    %c0_49 = arith.constant 0 : index
    %97 = vector.load %arg33[%c0_48, %c0_49] : memref<24x16xf32, #tpu.memory_space<vmem>>, vector<24x16xf32>
    %c0_50 = arith.constant 0 : index
    %c216 = arith.constant 216 : index
    %98 = vector.load %arg2[%c0_50, %c216] : memref<1x578xf32, #tpu.memory_space<vmem>>, vector<1x16xf32>
    %99 = vector.extract_strided_slice %97 {offsets = [0, 0], sizes = [16, 16], strides = [1, 1]} : vector<24x16xf32> to vector<16x16xf32>
    %cst_51 = arith.constant dense<0.000000e+00> : vector<16x16xf32>
    %100 = tpu.matmul %46, %99, %cst_51 {dimension_numbers = #tpu.dot_dimension_numbers<[1], [0], [0], [1], [0, 0, 1, 1], [], []>} : vector<16x16xf32>, vector<16x16xf32>, vector<16x16xf32> -> vector<16x16xf32>
    %101 = vector.broadcast %98 : vector<1x16xf32> to vector<16x16xf32>
    %102 = arith.addf %101, %100 : vector<16x16xf32>
    %103 = vector.extract_strided_slice %97 {offsets = [16, 0], sizes = [8, 16], strides = [1, 1]} : vector<24x16xf32> to vector<8x16xf32>
    %cst_52 = arith.constant dense<0.000000e+00> : vector<16x16xf32>
    %104 = tpu.matmul %96, %103, %cst_52 {dimension_numbers = #tpu.dot_dimension_numbers<[1], [0], [0], [1], [0, 0, 1, 1], [], []>} : vector<16x8xf32>, vector<8x16xf32>, vector<16x16xf32> -> vector<16x16xf32>
    %105 = arith.addf %102, %104 : vector<16x16xf32>
    %cst_53 = arith.constant 5.000000e-01 : f32
    %106 = vector.broadcast %cst_53 : f32 to vector<16x16xf32>
    %107 = arith.mulf %106, %105 : vector<16x16xf32>
    %cst_54 = arith.constant 0.707106769 : f32
    %108 = vector.broadcast %cst_54 : f32 to vector<16x16xf32>
    %109 = arith.mulf %105, %108 : vector<16x16xf32>
    %110 = math.erf %109 : vector<16x16xf32>
    %cst_55 = arith.constant 1.000000e+00 : f32
    %111 = vector.broadcast %cst_55 : f32 to vector<16x16xf32>
    %112 = arith.addf %111, %110 : vector<16x16xf32>
    %113 = arith.mulf %107, %112 : vector<16x16xf32>
    %c0_56 = arith.constant 0 : index
    %c0_57 = arith.constant 0 : index
    %114 = vector.load %arg34[%c0_56, %c0_57] : memref<80x32xf32, #tpu.memory_space<vmem>>, vector<80x32xf32>
    %c0_58 = arith.constant 0 : index
    %c232 = arith.constant 232 : index
    %115 = vector.load %arg2[%c0_58, %c232] : memref<1x578xf32, #tpu.memory_space<vmem>>, vector<1x32xf32>
    %116 = vector.extract_strided_slice %114 {offsets = [0, 0], sizes = [32, 32], strides = [1, 1]} : vector<80x32xf32> to vector<32x32xf32>
    %cst_59 = arith.constant dense<0.000000e+00> : vector<16x32xf32>
    %117 = tpu.matmul %16, %116, %cst_59 {dimension_numbers = #tpu.dot_dimension_numbers<[1], [0], [0], [1], [0, 0, 1, 1], [], []>} : vector<16x32xf32>, vector<32x32xf32>, vector<16x32xf32> -> vector<16x32xf32>
    %118 = vector.broadcast %115 : vector<1x32xf32> to vector<16x32xf32>
    %119 = arith.addf %118, %117 : vector<16x32xf32>
    %120 = vector.extract_strided_slice %114 {offsets = [32, 0], sizes = [32, 32], strides = [1, 1]} : vector<80x32xf32> to vector<32x32xf32>
    %cst_60 = arith.constant dense<0.000000e+00> : vector<16x32xf32>
    %121 = tpu.matmul %63, %120, %cst_60 {dimension_numbers = #tpu.dot_dimension_numbers<[1], [0], [0], [1], [0, 0, 1, 1], [], []>} : vector<16x32xf32>, vector<32x32xf32>, vector<16x32xf32> -> vector<16x32xf32>
    %122 = arith.addf %119, %121 : vector<16x32xf32>
    %123 = vector.extract_strided_slice %114 {offsets = [64, 0], sizes = [16, 32], strides = [1, 1]} : vector<80x32xf32> to vector<16x32xf32>
    %cst_61 = arith.constant dense<0.000000e+00> : vector<16x32xf32>
    %124 = tpu.matmul %113, %123, %cst_61 {dimension_numbers = #tpu.dot_dimension_numbers<[1], [0], [0], [1], [0, 0, 1, 1], [], []>} : vector<16x16xf32>, vector<16x32xf32>, vector<16x32xf32> -> vector<16x32xf32>
    %125 = arith.addf %122, %124 : vector<16x32xf32>
    %cst_62 = arith.constant 5.000000e-01 : f32
    %126 = vector.broadcast %cst_62 : f32 to vector<16x32xf32>
    %127 = arith.mulf %126, %125 : vector<16x32xf32>
    %cst_63 = arith.constant 0.707106769 : f32
    %128 = vector.broadcast %cst_63 : f32 to vector<16x32xf32>
    %129 = arith.mulf %125, %128 : vector<16x32xf32>
    %130 = math.erf %129 : vector<16x32xf32>
    %cst_64 = arith.constant 1.000000e+00 : f32
    %131 = vector.broadcast %cst_64 : f32 to vector<16x32xf32>
    %132 = arith.addf %131, %130 : vector<16x32xf32>
    %133 = arith.mulf %127, %132 : vector<16x32xf32>
    %c0_65 = arith.constant 0 : index
    %c0_66 = arith.constant 0 : index
    %134 = vector.load %arg35[%c0_65, %c0_66] : memref<224x64xf32, #tpu.memory_space<vmem>>, vector<224x64xf32>
    %c0_67 = arith.constant 0 : index
    %c264 = arith.constant 264 : index
    %135 = vector.load %arg2[%c0_67, %c264] : memref<1x578xf32, #tpu.memory_space<vmem>>, vector<1x64xf32>
    %136 = vector.extract_strided_slice %134 {offsets = [0, 0], sizes = [64, 64], strides = [1, 1]} : vector<224x64xf32> to vector<64x64xf32>
    %cst_68 = arith.constant dense<0.000000e+00> : vector<16x64xf32>
    %137 = tpu.matmul %3, %136, %cst_68 {dimension_numbers = #tpu.dot_dimension_numbers<[1], [0], [0], [1], [0, 0, 1, 1], [], []>} : vector<16x64xf32>, vector<64x64xf32>, vector<16x64xf32> -> vector<16x64xf32>
    %138 = vector.broadcast %135 : vector<1x64xf32> to vector<16x64xf32>
    %139 = arith.addf %138, %137 : vector<16x64xf32>
    %140 = vector.extract_strided_slice %134 {offsets = [64, 0], sizes = [64, 64], strides = [1, 1]} : vector<224x64xf32> to vector<64x64xf32>
    %cst_69 = arith.constant dense<0.000000e+00> : vector<16x64xf32>
    %141 = tpu.matmul %33, %140, %cst_69 {dimension_numbers = #tpu.dot_dimension_numbers<[1], [0], [0], [1], [0, 0, 1, 1], [], []>} : vector<16x64xf32>, vector<64x64xf32>, vector<16x64xf32> -> vector<16x64xf32>
    %142 = arith.addf %139, %141 : vector<16x64xf32>
    %143 = vector.extract_strided_slice %134 {offsets = [128, 0], sizes = [64, 64], strides = [1, 1]} : vector<224x64xf32> to vector<64x64xf32>
    %cst_70 = arith.constant dense<0.000000e+00> : vector<16x64xf32>
    %144 = tpu.matmul %83, %143, %cst_70 {dimension_numbers = #tpu.dot_dimension_numbers<[1], [0], [0], [1], [0, 0, 1, 1], [], []>} : vector<16x64xf32>, vector<64x64xf32>, vector<16x64xf32> -> vector<16x64xf32>
    %145 = arith.addf %142, %144 : vector<16x64xf32>
    %146 = vector.extract_strided_slice %134 {offsets = [192, 0], sizes = [32, 64], strides = [1, 1]} : vector<224x64xf32> to vector<32x64xf32>
    %cst_71 = arith.constant dense<0.000000e+00> : vector<16x64xf32>
    %147 = tpu.matmul %133, %146, %cst_71 {dimension_numbers = #tpu.dot_dimension_numbers<[1], [0], [0], [1], [0, 0, 1, 1], [], []>} : vector<16x32xf32>, vector<32x64xf32>, vector<16x64xf32> -> vector<16x64xf32>
    %148 = arith.addf %145, %147 : vector<16x64xf32>
    %cst_72 = arith.constant 5.000000e-01 : f32
    %149 = vector.broadcast %cst_72 : f32 to vector<16x64xf32>
    %150 = arith.mulf %149, %148 : vector<16x64xf32>
    %cst_73 = arith.constant 0.707106769 : f32
    %151 = vector.broadcast %cst_73 : f32 to vector<16x64xf32>
    %152 = arith.mulf %148, %151 : vector<16x64xf32>
    %153 = math.erf %152 : vector<16x64xf32>
    %cst_74 = arith.constant 1.000000e+00 : f32
    %154 = vector.broadcast %cst_74 : f32 to vector<16x64xf32>
    %155 = arith.addf %154, %153 : vector<16x64xf32>
    %156 = arith.mulf %150, %155 : vector<16x64xf32>
    %c0_75 = arith.constant 0 : index
    %c0_76 = arith.constant 0 : index
    %157 = vector.load %arg36[%c0_75, %c0_76] : memref<8x4xf32, #tpu.memory_space<vmem>>, vector<8x4xf32>
    %c0_77 = arith.constant 0 : index
    %c328 = arith.constant 328 : index
    %158 = vector.load %arg2[%c0_77, %c328] : memref<1x578xf32, #tpu.memory_space<vmem>>, vector<1x4xf32>
    %cst_78 = arith.constant dense<0.000000e+00> : vector<16x4xf32>
    %159 = tpu.matmul %96, %157, %cst_78 {dimension_numbers = #tpu.dot_dimension_numbers<[1], [0], [0], [1], [0, 0, 1, 1], [], []>} : vector<16x8xf32>, vector<8x4xf32>, vector<16x4xf32> -> vector<16x4xf32>
    %160 = vector.broadcast %158 : vector<1x4xf32> to vector<16x4xf32>
    %161 = arith.addf %160, %159 : vector<16x4xf32>
    %cst_79 = arith.constant 5.000000e-01 : f32
    %162 = vector.broadcast %cst_79 : f32 to vector<16x4xf32>
    %163 = arith.mulf %162, %161 : vector<16x4xf32>
    %cst_80 = arith.constant 0.707106769 : f32
    %164 = vector.broadcast %cst_80 : f32 to vector<16x4xf32>
    %165 = arith.mulf %161, %164 : vector<16x4xf32>
    %166 = math.erf %165 : vector<16x4xf32>
    %cst_81 = arith.constant 1.000000e+00 : f32
    %167 = vector.broadcast %cst_81 : f32 to vector<16x4xf32>
    %168 = arith.addf %167, %166 : vector<16x4xf32>
    %169 = arith.mulf %163, %168 : vector<16x4xf32>
    %c0_82 = arith.constant 0 : index
    %c0_83 = arith.constant 0 : index
    %170 = vector.load %arg37[%c0_82, %c0_83] : memref<12x8xf32, #tpu.memory_space<vmem>>, vector<12x8xf32>
    %c0_84 = arith.constant 0 : index
    %c332 = arith.constant 332 : index
    %171 = vector.load %arg2[%c0_84, %c332] : memref<1x578xf32, #tpu.memory_space<vmem>>, vector<1x8xf32>
    %172 = vector.extract_strided_slice %170 {offsets = [0, 0], sizes = [8, 8], strides = [1, 1]} : vector<12x8xf32> to vector<8x8xf32>
    %cst_85 = arith.constant dense<0.000000e+00> : vector<16x8xf32>
    %173 = tpu.matmul %96, %172, %cst_85 {dimension_numbers = #tpu.dot_dimension_numbers<[1], [0], [0], [1], [0, 0, 1, 1], [], []>} : vector<16x8xf32>, vector<8x8xf32>, vector<16x8xf32> -> vector<16x8xf32>
    %174 = vector.broadcast %171 : vector<1x8xf32> to vector<16x8xf32>
    %175 = arith.addf %174, %173 : vector<16x8xf32>
    %176 = vector.extract_strided_slice %170 {offsets = [8, 0], sizes = [4, 8], strides = [1, 1]} : vector<12x8xf32> to vector<4x8xf32>
    %cst_86 = arith.constant dense<0.000000e+00> : vector<16x8xf32>
    %177 = tpu.matmul %169, %176, %cst_86 {dimension_numbers = #tpu.dot_dimension_numbers<[1], [0], [0], [1], [0, 0, 1, 1], [], []>} : vector<16x4xf32>, vector<4x8xf32>, vector<16x8xf32> -> vector<16x8xf32>
    %178 = arith.addf %175, %177 : vector<16x8xf32>
    %cst_87 = arith.constant 5.000000e-01 : f32
    %179 = vector.broadcast %cst_87 : f32 to vector<16x8xf32>
    %180 = arith.mulf %179, %178 : vector<16x8xf32>
    %cst_88 = arith.constant 0.707106769 : f32
    %181 = vector.broadcast %cst_88 : f32 to vector<16x8xf32>
    %182 = arith.mulf %178, %181 : vector<16x8xf32>
    %183 = math.erf %182 : vector<16x8xf32>
    %cst_89 = arith.constant 1.000000e+00 : f32
    %184 = vector.broadcast %cst_89 : f32 to vector<16x8xf32>
    %185 = arith.addf %184, %183 : vector<16x8xf32>
    %186 = arith.mulf %180, %185 : vector<16x8xf32>
    %c0_90 = arith.constant 0 : index
    %c0_91 = arith.constant 0 : index
    %187 = vector.load %arg38[%c0_90, %c0_91] : memref<40x16xf32, #tpu.memory_space<vmem>>, vector<40x16xf32>
    %c0_92 = arith.constant 0 : index
    %c340 = arith.constant 340 : index
    %188 = vector.load %arg2[%c0_92, %c340] : memref<1x578xf32, #tpu.memory_space<vmem>>, vector<1x16xf32>
    %189 = vector.extract_strided_slice %187 {offsets = [0, 0], sizes = [16, 16], strides = [1, 1]} : vector<40x16xf32> to vector<16x16xf32>
    %cst_93 = arith.constant dense<0.000000e+00> : vector<16x16xf32>
    %190 = tpu.matmul %46, %189, %cst_93 {dimension_numbers = #tpu.dot_dimension_numbers<[1], [0], [0], [1], [0, 0, 1, 1], [], []>} : vector<16x16xf32>, vector<16x16xf32>, vector<16x16xf32> -> vector<16x16xf32>
    %191 = vector.broadcast %188 : vector<1x16xf32> to vector<16x16xf32>
    %192 = arith.addf %191, %190 : vector<16x16xf32>
    %193 = vector.extract_strided_slice %187 {offsets = [16, 0], sizes = [16, 16], strides = [1, 1]} : vector<40x16xf32> to vector<16x16xf32>
    %cst_94 = arith.constant dense<0.000000e+00> : vector<16x16xf32>
    %194 = tpu.matmul %113, %193, %cst_94 {dimension_numbers = #tpu.dot_dimension_numbers<[1], [0], [0], [1], [0, 0, 1, 1], [], []>} : vector<16x16xf32>, vector<16x16xf32>, vector<16x16xf32> -> vector<16x16xf32>
    %195 = arith.addf %192, %194 : vector<16x16xf32>
    %196 = vector.extract_strided_slice %187 {offsets = [32, 0], sizes = [8, 16], strides = [1, 1]} : vector<40x16xf32> to vector<8x16xf32>
    %cst_95 = arith.constant dense<0.000000e+00> : vector<16x16xf32>
    %197 = tpu.matmul %186, %196, %cst_95 {dimension_numbers = #tpu.dot_dimension_numbers<[1], [0], [0], [1], [0, 0, 1, 1], [], []>} : vector<16x8xf32>, vector<8x16xf32>, vector<16x16xf32> -> vector<16x16xf32>
    %198 = arith.addf %195, %197 : vector<16x16xf32>
    %cst_96 = arith.constant 5.000000e-01 : f32
    %199 = vector.broadcast %cst_96 : f32 to vector<16x16xf32>
    %200 = arith.mulf %199, %198 : vector<16x16xf32>
    %cst_97 = arith.constant 0.707106769 : f32
    %201 = vector.broadcast %cst_97 : f32 to vector<16x16xf32>
    %202 = arith.mulf %198, %201 : vector<16x16xf32>
    %203 = math.erf %202 : vector<16x16xf32>
    %cst_98 = arith.constant 1.000000e+00 : f32
    %204 = vector.broadcast %cst_98 : f32 to vector<16x16xf32>
    %205 = arith.addf %204, %203 : vector<16x16xf32>
    %206 = arith.mulf %200, %205 : vector<16x16xf32>
    %c0_99 = arith.constant 0 : index
    %c0_100 = arith.constant 0 : index
    %207 = vector.load %arg39[%c0_99, %c0_100] : memref<112x32xf32, #tpu.memory_space<vmem>>, vector<112x32xf32>
    %c0_101 = arith.constant 0 : index
    %c356 = arith.constant 356 : index
    %208 = vector.load %arg2[%c0_101, %c356] : memref<1x578xf32, #tpu.memory_space<vmem>>, vector<1x32xf32>
    %209 = vector.extract_strided_slice %207 {offsets = [0, 0], sizes = [32, 32], strides = [1, 1]} : vector<112x32xf32> to vector<32x32xf32>
    %cst_102 = arith.constant dense<0.000000e+00> : vector<16x32xf32>
    %210 = tpu.matmul %16, %209, %cst_102 {dimension_numbers = #tpu.dot_dimension_numbers<[1], [0], [0], [1], [0, 0, 1, 1], [], []>} : vector<16x32xf32>, vector<32x32xf32>, vector<16x32xf32> -> vector<16x32xf32>
    %211 = vector.broadcast %208 : vector<1x32xf32> to vector<16x32xf32>
    %212 = arith.addf %211, %210 : vector<16x32xf32>
    %213 = vector.extract_strided_slice %207 {offsets = [32, 0], sizes = [32, 32], strides = [1, 1]} : vector<112x32xf32> to vector<32x32xf32>
    %cst_103 = arith.constant dense<0.000000e+00> : vector<16x32xf32>
    %214 = tpu.matmul %63, %213, %cst_103 {dimension_numbers = #tpu.dot_dimension_numbers<[1], [0], [0], [1], [0, 0, 1, 1], [], []>} : vector<16x32xf32>, vector<32x32xf32>, vector<16x32xf32> -> vector<16x32xf32>
    %215 = arith.addf %212, %214 : vector<16x32xf32>
    %216 = vector.extract_strided_slice %207 {offsets = [64, 0], sizes = [32, 32], strides = [1, 1]} : vector<112x32xf32> to vector<32x32xf32>
    %cst_104 = arith.constant dense<0.000000e+00> : vector<16x32xf32>
    %217 = tpu.matmul %133, %216, %cst_104 {dimension_numbers = #tpu.dot_dimension_numbers<[1], [0], [0], [1], [0, 0, 1, 1], [], []>} : vector<16x32xf32>, vector<32x32xf32>, vector<16x32xf32> -> vector<16x32xf32>
    %218 = arith.addf %215, %217 : vector<16x32xf32>
    %219 = vector.extract_strided_slice %207 {offsets = [96, 0], sizes = [16, 32], strides = [1, 1]} : vector<112x32xf32> to vector<16x32xf32>
    %cst_105 = arith.constant dense<0.000000e+00> : vector<16x32xf32>
    %220 = tpu.matmul %206, %219, %cst_105 {dimension_numbers = #tpu.dot_dimension_numbers<[1], [0], [0], [1], [0, 0, 1, 1], [], []>} : vector<16x16xf32>, vector<16x32xf32>, vector<16x32xf32> -> vector<16x32xf32>
    %221 = arith.addf %218, %220 : vector<16x32xf32>
    %cst_106 = arith.constant 5.000000e-01 : f32
    %222 = vector.broadcast %cst_106 : f32 to vector<16x32xf32>
    %223 = arith.mulf %222, %221 : vector<16x32xf32>
    %cst_107 = arith.constant 0.707106769 : f32
    %224 = vector.broadcast %cst_107 : f32 to vector<16x32xf32>
    %225 = arith.mulf %221, %224 : vector<16x32xf32>
    %226 = math.erf %225 : vector<16x32xf32>
    %cst_108 = arith.constant 1.000000e+00 : f32
    %227 = vector.broadcast %cst_108 : f32 to vector<16x32xf32>
    %228 = arith.addf %227, %226 : vector<16x32xf32>
    %229 = arith.mulf %223, %228 : vector<16x32xf32>
    %c0_109 = arith.constant 0 : index
    %c0_110 = arith.constant 0 : index
    %230 = vector.load %arg40[%c0_109, %c0_110] : memref<288x64xf32, #tpu.memory_space<vmem>>, vector<288x64xf32>
    %c0_111 = arith.constant 0 : index
    %c388 = arith.constant 388 : index
    %231 = vector.load %arg2[%c0_111, %c388] : memref<1x578xf32, #tpu.memory_space<vmem>>, vector<1x64xf32>
    %232 = vector.extract_strided_slice %230 {offsets = [0, 0], sizes = [64, 64], strides = [1, 1]} : vector<288x64xf32> to vector<64x64xf32>
    %cst_112 = arith.constant dense<0.000000e+00> : vector<16x64xf32>
    %233 = tpu.matmul %3, %232, %cst_112 {dimension_numbers = #tpu.dot_dimension_numbers<[1], [0], [0], [1], [0, 0, 1, 1], [], []>} : vector<16x64xf32>, vector<64x64xf32>, vector<16x64xf32> -> vector<16x64xf32>
    %234 = vector.broadcast %231 : vector<1x64xf32> to vector<16x64xf32>
    %235 = arith.addf %234, %233 : vector<16x64xf32>
    %236 = vector.extract_strided_slice %230 {offsets = [64, 0], sizes = [64, 64], strides = [1, 1]} : vector<288x64xf32> to vector<64x64xf32>
    %cst_113 = arith.constant dense<0.000000e+00> : vector<16x64xf32>
    %237 = tpu.matmul %33, %236, %cst_113 {dimension_numbers = #tpu.dot_dimension_numbers<[1], [0], [0], [1], [0, 0, 1, 1], [], []>} : vector<16x64xf32>, vector<64x64xf32>, vector<16x64xf32> -> vector<16x64xf32>
    %238 = arith.addf %235, %237 : vector<16x64xf32>
    %239 = vector.extract_strided_slice %230 {offsets = [128, 0], sizes = [64, 64], strides = [1, 1]} : vector<288x64xf32> to vector<64x64xf32>
    %cst_114 = arith.constant dense<0.000000e+00> : vector<16x64xf32>
    %240 = tpu.matmul %83, %239, %cst_114 {dimension_numbers = #tpu.dot_dimension_numbers<[1], [0], [0], [1], [0, 0, 1, 1], [], []>} : vector<16x64xf32>, vector<64x64xf32>, vector<16x64xf32> -> vector<16x64xf32>
    %241 = arith.addf %238, %240 : vector<16x64xf32>
    %242 = vector.extract_strided_slice %230 {offsets = [192, 0], sizes = [64, 64], strides = [1, 1]} : vector<288x64xf32> to vector<64x64xf32>
    %cst_115 = arith.constant dense<0.000000e+00> : vector<16x64xf32>
    %243 = tpu.matmul %156, %242, %cst_115 {dimension_numbers = #tpu.dot_dimension_numbers<[1], [0], [0], [1], [0, 0, 1, 1], [], []>} : vector<16x64xf32>, vector<64x64xf32>, vector<16x64xf32> -> vector<16x64xf32>
    %244 = arith.addf %241, %243 : vector<16x64xf32>
    %245 = vector.extract_strided_slice %230 {offsets = [256, 0], sizes = [32, 64], strides = [1, 1]} : vector<288x64xf32> to vector<32x64xf32>
    %cst_116 = arith.constant dense<0.000000e+00> : vector<16x64xf32>
    %246 = tpu.matmul %229, %245, %cst_116 {dimension_numbers = #tpu.dot_dimension_numbers<[1], [0], [0], [1], [0, 0, 1, 1], [], []>} : vector<16x32xf32>, vector<32x64xf32>, vector<16x64xf32> -> vector<16x64xf32>
    %247 = arith.addf %244, %246 : vector<16x64xf32>
    %cst_117 = arith.constant 5.000000e-01 : f32
    %248 = vector.broadcast %cst_117 : f32 to vector<16x64xf32>
    %249 = arith.mulf %248, %247 : vector<16x64xf32>
    %cst_118 = arith.constant 0.707106769 : f32
    %250 = vector.broadcast %cst_118 : f32 to vector<16x64xf32>
    %251 = arith.mulf %247, %250 : vector<16x64xf32>
    %252 = math.erf %251 : vector<16x64xf32>
    %cst_119 = arith.constant 1.000000e+00 : f32
    %253 = vector.broadcast %cst_119 : f32 to vector<16x64xf32>
    %254 = arith.addf %253, %252 : vector<16x64xf32>
    %255 = arith.mulf %249, %254 : vector<16x64xf32>
    %c0_120 = arith.constant 0 : index
    %c0_121 = arith.constant 0 : index
    %256 = vector.load %arg41[%c0_120, %c0_121] : memref<4x2xf32, #tpu.memory_space<vmem>>, vector<4x2xf32>
    %c0_122 = arith.constant 0 : index
    %c452 = arith.constant 452 : index
    %257 = vector.load %arg2[%c0_122, %c452] : memref<1x578xf32, #tpu.memory_space<vmem>>, vector<1x2xf32>
    %cst_123 = arith.constant dense<0.000000e+00> : vector<16x2xf32>
    %258 = tpu.matmul %169, %256, %cst_123 {dimension_numbers = #tpu.dot_dimension_numbers<[1], [0], [0], [1], [0, 0, 1, 1], [], []>} : vector<16x4xf32>, vector<4x2xf32>, vector<16x2xf32> -> vector<16x2xf32>
    %259 = vector.broadcast %257 : vector<1x2xf32> to vector<16x2xf32>
    %260 = arith.addf %259, %258 : vector<16x2xf32>
    %cst_124 = arith.constant 5.000000e-01 : f32
    %261 = vector.broadcast %cst_124 : f32 to vector<16x2xf32>
    %262 = arith.mulf %261, %260 : vector<16x2xf32>
    %cst_125 = arith.constant 0.707106769 : f32
    %263 = vector.broadcast %cst_125 : f32 to vector<16x2xf32>
    %264 = arith.mulf %260, %263 : vector<16x2xf32>
    %265 = math.erf %264 : vector<16x2xf32>
    %cst_126 = arith.constant 1.000000e+00 : f32
    %266 = vector.broadcast %cst_126 : f32 to vector<16x2xf32>
    %267 = arith.addf %266, %265 : vector<16x2xf32>
    %268 = arith.mulf %262, %267 : vector<16x2xf32>
    %c0_127 = arith.constant 0 : index
    %c0_128 = arith.constant 0 : index
    %269 = vector.load %arg42[%c0_127, %c0_128] : memref<6x4xf32, #tpu.memory_space<vmem>>, vector<6x4xf32>
    %c0_129 = arith.constant 0 : index
    %c454 = arith.constant 454 : index
    %270 = vector.load %arg2[%c0_129, %c454] : memref<1x578xf32, #tpu.memory_space<vmem>>, vector<1x4xf32>
    %271 = vector.extract_strided_slice %269 {offsets = [0, 0], sizes = [4, 4], strides = [1, 1]} : vector<6x4xf32> to vector<4x4xf32>
    %cst_130 = arith.constant dense<0.000000e+00> : vector<16x4xf32>
    %272 = tpu.matmul %169, %271, %cst_130 {dimension_numbers = #tpu.dot_dimension_numbers<[1], [0], [0], [1], [0, 0, 1, 1], [], []>} : vector<16x4xf32>, vector<4x4xf32>, vector<16x4xf32> -> vector<16x4xf32>
    %273 = vector.broadcast %270 : vector<1x4xf32> to vector<16x4xf32>
    %274 = arith.addf %273, %272 : vector<16x4xf32>
    %275 = vector.extract_strided_slice %269 {offsets = [4, 0], sizes = [2, 4], strides = [1, 1]} : vector<6x4xf32> to vector<2x4xf32>
    %cst_131 = arith.constant dense<0.000000e+00> : vector<16x4xf32>
    %276 = tpu.matmul %268, %275, %cst_131 {dimension_numbers = #tpu.dot_dimension_numbers<[1], [0], [0], [1], [0, 0, 1, 1], [], []>} : vector<16x2xf32>, vector<2x4xf32>, vector<16x4xf32> -> vector<16x4xf32>
    %277 = arith.addf %274, %276 : vector<16x4xf32>
    %cst_132 = arith.constant 5.000000e-01 : f32
    %278 = vector.broadcast %cst_132 : f32 to vector<16x4xf32>
    %279 = arith.mulf %278, %277 : vector<16x4xf32>
    %cst_133 = arith.constant 0.707106769 : f32
    %280 = vector.broadcast %cst_133 : f32 to vector<16x4xf32>
    %281 = arith.mulf %277, %280 : vector<16x4xf32>
    %282 = math.erf %281 : vector<16x4xf32>
    %cst_134 = arith.constant 1.000000e+00 : f32
    %283 = vector.broadcast %cst_134 : f32 to vector<16x4xf32>
    %284 = arith.addf %283, %282 : vector<16x4xf32>
    %285 = arith.mulf %279, %284 : vector<16x4xf32>
    %c0_135 = arith.constant 0 : index
    %c0_136 = arith.constant 0 : index
    %286 = vector.load %arg43[%c0_135, %c0_136] : memref<20x8xf32, #tpu.memory_space<vmem>>, vector<20x8xf32>
    %c0_137 = arith.constant 0 : index
    %c458 = arith.constant 458 : index
    %287 = vector.load %arg2[%c0_137, %c458] : memref<1x578xf32, #tpu.memory_space<vmem>>, vector<1x8xf32>
    %288 = vector.extract_strided_slice %286 {offsets = [0, 0], sizes = [8, 8], strides = [1, 1]} : vector<20x8xf32> to vector<8x8xf32>
    %cst_138 = arith.constant dense<0.000000e+00> : vector<16x8xf32>
    %289 = tpu.matmul %96, %288, %cst_138 {dimension_numbers = #tpu.dot_dimension_numbers<[1], [0], [0], [1], [0, 0, 1, 1], [], []>} : vector<16x8xf32>, vector<8x8xf32>, vector<16x8xf32> -> vector<16x8xf32>
    %290 = vector.broadcast %287 : vector<1x8xf32> to vector<16x8xf32>
    %291 = arith.addf %290, %289 : vector<16x8xf32>
    %292 = vector.extract_strided_slice %286 {offsets = [8, 0], sizes = [8, 8], strides = [1, 1]} : vector<20x8xf32> to vector<8x8xf32>
    %cst_139 = arith.constant dense<0.000000e+00> : vector<16x8xf32>
    %293 = tpu.matmul %186, %292, %cst_139 {dimension_numbers = #tpu.dot_dimension_numbers<[1], [0], [0], [1], [0, 0, 1, 1], [], []>} : vector<16x8xf32>, vector<8x8xf32>, vector<16x8xf32> -> vector<16x8xf32>
    %294 = arith.addf %291, %293 : vector<16x8xf32>
    %295 = vector.extract_strided_slice %286 {offsets = [16, 0], sizes = [4, 8], strides = [1, 1]} : vector<20x8xf32> to vector<4x8xf32>
    %cst_140 = arith.constant dense<0.000000e+00> : vector<16x8xf32>
    %296 = tpu.matmul %285, %295, %cst_140 {dimension_numbers = #tpu.dot_dimension_numbers<[1], [0], [0], [1], [0, 0, 1, 1], [], []>} : vector<16x4xf32>, vector<4x8xf32>, vector<16x8xf32> -> vector<16x8xf32>
    %297 = arith.addf %294, %296 : vector<16x8xf32>
    %cst_141 = arith.constant 5.000000e-01 : f32
    %298 = vector.broadcast %cst_141 : f32 to vector<16x8xf32>
    %299 = arith.mulf %298, %297 : vector<16x8xf32>
    %cst_142 = arith.constant 0.707106769 : f32
    %300 = vector.broadcast %cst_142 : f32 to vector<16x8xf32>
    %301 = arith.mulf %297, %300 : vector<16x8xf32>
    %302 = math.erf %301 : vector<16x8xf32>
    %cst_143 = arith.constant 1.000000e+00 : f32
    %303 = vector.broadcast %cst_143 : f32 to vector<16x8xf32>
    %304 = arith.addf %303, %302 : vector<16x8xf32>
    %305 = arith.mulf %299, %304 : vector<16x8xf32>
    %c0_144 = arith.constant 0 : index
    %c0_145 = arith.constant 0 : index
    %306 = vector.load %arg44[%c0_144, %c0_145] : memref<56x16xf32, #tpu.memory_space<vmem>>, vector<56x16xf32>
    %c0_146 = arith.constant 0 : index
    %c466 = arith.constant 466 : index
    %307 = vector.load %arg2[%c0_146, %c466] : memref<1x578xf32, #tpu.memory_space<vmem>>, vector<1x16xf32>
    %308 = vector.extract_strided_slice %306 {offsets = [0, 0], sizes = [16, 16], strides = [1, 1]} : vector<56x16xf32> to vector<16x16xf32>
    %cst_147 = arith.constant dense<0.000000e+00> : vector<16x16xf32>
    %309 = tpu.matmul %46, %308, %cst_147 {dimension_numbers = #tpu.dot_dimension_numbers<[1], [0], [0], [1], [0, 0, 1, 1], [], []>} : vector<16x16xf32>, vector<16x16xf32>, vector<16x16xf32> -> vector<16x16xf32>
    %310 = vector.broadcast %307 : vector<1x16xf32> to vector<16x16xf32>
    %311 = arith.addf %310, %309 : vector<16x16xf32>
    %312 = vector.extract_strided_slice %306 {offsets = [16, 0], sizes = [16, 16], strides = [1, 1]} : vector<56x16xf32> to vector<16x16xf32>
    %cst_148 = arith.constant dense<0.000000e+00> : vector<16x16xf32>
    %313 = tpu.matmul %113, %312, %cst_148 {dimension_numbers = #tpu.dot_dimension_numbers<[1], [0], [0], [1], [0, 0, 1, 1], [], []>} : vector<16x16xf32>, vector<16x16xf32>, vector<16x16xf32> -> vector<16x16xf32>
    %314 = arith.addf %311, %313 : vector<16x16xf32>
    %315 = vector.extract_strided_slice %306 {offsets = [32, 0], sizes = [16, 16], strides = [1, 1]} : vector<56x16xf32> to vector<16x16xf32>
    %cst_149 = arith.constant dense<0.000000e+00> : vector<16x16xf32>
    %316 = tpu.matmul %206, %315, %cst_149 {dimension_numbers = #tpu.dot_dimension_numbers<[1], [0], [0], [1], [0, 0, 1, 1], [], []>} : vector<16x16xf32>, vector<16x16xf32>, vector<16x16xf32> -> vector<16x16xf32>
    %317 = arith.addf %314, %316 : vector<16x16xf32>
    %318 = vector.extract_strided_slice %306 {offsets = [48, 0], sizes = [8, 16], strides = [1, 1]} : vector<56x16xf32> to vector<8x16xf32>
    %cst_150 = arith.constant dense<0.000000e+00> : vector<16x16xf32>
    %319 = tpu.matmul %305, %318, %cst_150 {dimension_numbers = #tpu.dot_dimension_numbers<[1], [0], [0], [1], [0, 0, 1, 1], [], []>} : vector<16x8xf32>, vector<8x16xf32>, vector<16x16xf32> -> vector<16x16xf32>
    %320 = arith.addf %317, %319 : vector<16x16xf32>
    %cst_151 = arith.constant 5.000000e-01 : f32
    %321 = vector.broadcast %cst_151 : f32 to vector<16x16xf32>
    %322 = arith.mulf %321, %320 : vector<16x16xf32>
    %cst_152 = arith.constant 0.707106769 : f32
    %323 = vector.broadcast %cst_152 : f32 to vector<16x16xf32>
    %324 = arith.mulf %320, %323 : vector<16x16xf32>
    %325 = math.erf %324 : vector<16x16xf32>
    %cst_153 = arith.constant 1.000000e+00 : f32
    %326 = vector.broadcast %cst_153 : f32 to vector<16x16xf32>
    %327 = arith.addf %326, %325 : vector<16x16xf32>
    %328 = arith.mulf %322, %327 : vector<16x16xf32>
    %c0_154 = arith.constant 0 : index
    %c0_155 = arith.constant 0 : index
    %329 = vector.load %arg45[%c0_154, %c0_155] : memref<144x32xf32, #tpu.memory_space<vmem>>, vector<144x32xf32>
    %c0_156 = arith.constant 0 : index
    %c482 = arith.constant 482 : index
    %330 = vector.load %arg2[%c0_156, %c482] : memref<1x578xf32, #tpu.memory_space<vmem>>, vector<1x32xf32>
    %331 = vector.extract_strided_slice %329 {offsets = [0, 0], sizes = [32, 32], strides = [1, 1]} : vector<144x32xf32> to vector<32x32xf32>
    %cst_157 = arith.constant dense<0.000000e+00> : vector<16x32xf32>
    %332 = tpu.matmul %16, %331, %cst_157 {dimension_numbers = #tpu.dot_dimension_numbers<[1], [0], [0], [1], [0, 0, 1, 1], [], []>} : vector<16x32xf32>, vector<32x32xf32>, vector<16x32xf32> -> vector<16x32xf32>
    %333 = vector.broadcast %330 : vector<1x32xf32> to vector<16x32xf32>
    %334 = arith.addf %333, %332 : vector<16x32xf32>
    %335 = vector.extract_strided_slice %329 {offsets = [32, 0], sizes = [32, 32], strides = [1, 1]} : vector<144x32xf32> to vector<32x32xf32>
    %cst_158 = arith.constant dense<0.000000e+00> : vector<16x32xf32>
    %336 = tpu.matmul %63, %335, %cst_158 {dimension_numbers = #tpu.dot_dimension_numbers<[1], [0], [0], [1], [0, 0, 1, 1], [], []>} : vector<16x32xf32>, vector<32x32xf32>, vector<16x32xf32> -> vector<16x32xf32>
    %337 = arith.addf %334, %336 : vector<16x32xf32>
    %338 = vector.extract_strided_slice %329 {offsets = [64, 0], sizes = [32, 32], strides = [1, 1]} : vector<144x32xf32> to vector<32x32xf32>
    %cst_159 = arith.constant dense<0.000000e+00> : vector<16x32xf32>
    %339 = tpu.matmul %133, %338, %cst_159 {dimension_numbers = #tpu.dot_dimension_numbers<[1], [0], [0], [1], [0, 0, 1, 1], [], []>} : vector<16x32xf32>, vector<32x32xf32>, vector<16x32xf32> -> vector<16x32xf32>
    %340 = arith.addf %337, %339 : vector<16x32xf32>
    %341 = vector.extract_strided_slice %329 {offsets = [96, 0], sizes = [32, 32], strides = [1, 1]} : vector<144x32xf32> to vector<32x32xf32>
    %cst_160 = arith.constant dense<0.000000e+00> : vector<16x32xf32>
    %342 = tpu.matmul %229, %341, %cst_160 {dimension_numbers = #tpu.dot_dimension_numbers<[1], [0], [0], [1], [0, 0, 1, 1], [], []>} : vector<16x32xf32>, vector<32x32xf32>, vector<16x32xf32> -> vector<16x32xf32>
    %343 = arith.addf %340, %342 : vector<16x32xf32>
    %344 = vector.extract_strided_slice %329 {offsets = [128, 0], sizes = [16, 32], strides = [1, 1]} : vector<144x32xf32> to vector<16x32xf32>
    %cst_161 = arith.constant dense<0.000000e+00> : vector<16x32xf32>
    %345 = tpu.matmul %328, %344, %cst_161 {dimension_numbers = #tpu.dot_dimension_numbers<[1], [0], [0], [1], [0, 0, 1, 1], [], []>} : vector<16x16xf32>, vector<16x32xf32>, vector<16x32xf32> -> vector<16x32xf32>
    %346 = arith.addf %343, %345 : vector<16x32xf32>
    %cst_162 = arith.constant 5.000000e-01 : f32
    %347 = vector.broadcast %cst_162 : f32 to vector<16x32xf32>
    %348 = arith.mulf %347, %346 : vector<16x32xf32>
    %cst_163 = arith.constant 0.707106769 : f32
    %349 = vector.broadcast %cst_163 : f32 to vector<16x32xf32>
    %350 = arith.mulf %346, %349 : vector<16x32xf32>
    %351 = math.erf %350 : vector<16x32xf32>
    %cst_164 = arith.constant 1.000000e+00 : f32
    %352 = vector.broadcast %cst_164 : f32 to vector<16x32xf32>
    %353 = arith.addf %352, %351 : vector<16x32xf32>
    %354 = arith.mulf %348, %353 : vector<16x32xf32>
    %c0_165 = arith.constant 0 : index
    %c0_166 = arith.constant 0 : index
    %355 = vector.load %arg46[%c0_165, %c0_166] : memref<352x64xf32, #tpu.memory_space<vmem>>, vector<352x64xf32>
    %c0_167 = arith.constant 0 : index
    %c514 = arith.constant 514 : index
    %356 = vector.load %arg2[%c0_167, %c514] : memref<1x578xf32, #tpu.memory_space<vmem>>, vector<1x64xf32>
    %357 = vector.extract_strided_slice %355 {offsets = [0, 0], sizes = [64, 64], strides = [1, 1]} : vector<352x64xf32> to vector<64x64xf32>
    %cst_168 = arith.constant dense<0.000000e+00> : vector<16x64xf32>
    %358 = tpu.matmul %3, %357, %cst_168 {dimension_numbers = #tpu.dot_dimension_numbers<[1], [0], [0], [1], [0, 0, 1, 1], [], []>} : vector<16x64xf32>, vector<64x64xf32>, vector<16x64xf32> -> vector<16x64xf32>
    %359 = vector.broadcast %356 : vector<1x64xf32> to vector<16x64xf32>
    %360 = arith.addf %359, %358 : vector<16x64xf32>
    %361 = vector.extract_strided_slice %355 {offsets = [64, 0], sizes = [64, 64], strides = [1, 1]} : vector<352x64xf32> to vector<64x64xf32>
    %cst_169 = arith.constant dense<0.000000e+00> : vector<16x64xf32>
    %362 = tpu.matmul %33, %361, %cst_169 {dimension_numbers = #tpu.dot_dimension_numbers<[1], [0], [0], [1], [0, 0, 1, 1], [], []>} : vector<16x64xf32>, vector<64x64xf32>, vector<16x64xf32> -> vector<16x64xf32>
    %363 = arith.addf %360, %362 : vector<16x64xf32>
    %364 = vector.extract_strided_slice %355 {offsets = [128, 0], sizes = [64, 64], strides = [1, 1]} : vector<352x64xf32> to vector<64x64xf32>
    %cst_170 = arith.constant dense<0.000000e+00> : vector<16x64xf32>
    %365 = tpu.matmul %83, %364, %cst_170 {dimension_numbers = #tpu.dot_dimension_numbers<[1], [0], [0], [1], [0, 0, 1, 1], [], []>} : vector<16x64xf32>, vector<64x64xf32>, vector<16x64xf32> -> vector<16x64xf32>
    %366 = arith.addf %363, %365 : vector<16x64xf32>
    %367 = vector.extract_strided_slice %355 {offsets = [192, 0], sizes = [64, 64], strides = [1, 1]} : vector<352x64xf32> to vector<64x64xf32>
    %cst_171 = arith.constant dense<0.000000e+00> : vector<16x64xf32>
    %368 = tpu.matmul %156, %367, %cst_171 {dimension_numbers = #tpu.dot_dimension_numbers<[1], [0], [0], [1], [0, 0, 1, 1], [], []>} : vector<16x64xf32>, vector<64x64xf32>, vector<16x64xf32> -> vector<16x64xf32>
    %369 = arith.addf %366, %368 : vector<16x64xf32>
    %370 = vector.extract_strided_slice %355 {offsets = [256, 0], sizes = [64, 64], strides = [1, 1]} : vector<352x64xf32> to vector<64x64xf32>
    %cst_172 = arith.constant dense<0.000000e+00> : vector<16x64xf32>
    %371 = tpu.matmul %255, %370, %cst_172 {dimension_numbers = #tpu.dot_dimension_numbers<[1], [0], [0], [1], [0, 0, 1, 1], [], []>} : vector<16x64xf32>, vector<64x64xf32>, vector<16x64xf32> -> vector<16x64xf32>
    %372 = arith.addf %369, %371 : vector<16x64xf32>
    %373 = vector.extract_strided_slice %355 {offsets = [320, 0], sizes = [32, 64], strides = [1, 1]} : vector<352x64xf32> to vector<32x64xf32>
    %cst_173 = arith.constant dense<0.000000e+00> : vector<16x64xf32>
    %374 = tpu.matmul %354, %373, %cst_173 {dimension_numbers = #tpu.dot_dimension_numbers<[1], [0], [0], [1], [0, 0, 1, 1], [], []>} : vector<16x32xf32>, vector<32x64xf32>, vector<16x64xf32> -> vector<16x64xf32>
    %375 = arith.addf %372, %374 : vector<16x64xf32>
    %cst_174 = arith.constant 5.000000e-01 : f32
    %376 = vector.broadcast %cst_174 : f32 to vector<16x64xf32>
    %377 = arith.mulf %376, %375 : vector<16x64xf32>
    %cst_175 = arith.constant 0.707106769 : f32
    %378 = vector.broadcast %cst_175 : f32 to vector<16x64xf32>
    %379 = arith.mulf %375, %378 : vector<16x64xf32>
    %380 = math.erf %379 : vector<16x64xf32>
    %cst_176 = arith.constant 1.000000e+00 : f32
    %381 = vector.broadcast %cst_176 : f32 to vector<16x64xf32>
    %382 = arith.addf %381, %380 : vector<16x64xf32>
    %383 = arith.mulf %377, %382 : vector<16x64xf32>
    %c0_177 = arith.constant 0 : index
    %c0_178 = arith.constant 0 : index
    %384 = vector.load %arg25[%c0_177, %c0_178] : memref<16x256xf32, #tpu.memory_space<vmem>>, vector<16x64xf32>
    tpu.vector_store %arg25[%c0_177, %c0_178], %383 {strides = array<i32>} : memref<16x256xf32, #tpu.memory_space<vmem>>, vector<16x64xf32>,
    %c0_179 = arith.constant 0 : index
    %c64 = arith.constant 64 : index
    %385 = vector.load %arg25[%c0_179, %c64] : memref<16x256xf32, #tpu.memory_space<vmem>>, vector<16x64xf32>
    tpu.vector_store %arg25[%c0_179, %c64], %255 {strides = array<i32>} : memref<16x256xf32, #tpu.memory_space<vmem>>, vector<16x64xf32>,
    %c0_180 = arith.constant 0 : index
    %c128 = arith.constant 128 : index
    %386 = vector.load %arg25[%c0_180, %c128] : memref<16x256xf32, #tpu.memory_space<vmem>>, vector<16x64xf32>
    tpu.vector_store %arg25[%c0_180, %c128], %156 {strides = array<i32>} : memref<16x256xf32, #tpu.memory_space<vmem>>, vector<16x64xf32>,
    %c0_181 = arith.constant 0 : index
    %c192 = arith.constant 192 : index
    %387 = vector.load %arg25[%c0_181, %c192] : memref<16x256xf32, #tpu.memory_space<vmem>>, vector<16x64xf32>
    tpu.vector_store %arg25[%c0_181, %c192], %83 {strides = array<i32>} : memref<16x256xf32, #tpu.memory_space<vmem>>, vector<16x64xf32>,
    %388 = tpu.concatenate %383, %255, %156, %83 in 1 : vector<16x64xf32>, vector<16x64xf32>, vector<16x64xf32>, vector<16x64xf32> -> vector<16x256xf32>
    %c0_182 = arith.constant 0 : index
    %c0_183 = arith.constant 0 : index
    %389 = vector.load %arg47[%c0_182, %c0_183] : memref<256x128xf32, #tpu.memory_space<vmem>>, vector<256x128xf32>
    %cst_184 = arith.constant dense<0.000000e+00> : vector<16x128xf32>
    %390 = tpu.matmul %388, %389, %cst_184 {dimension_numbers = #tpu.dot_dimension_numbers<[1], [0], [0], [1], [0, 0, 1, 1], [], []>} : vector<16x256xf32>, vector<256x128xf32>, vector<16x128xf32> -> vector<16x128xf32>
    %c0_185 = arith.constant 0 : index
    %c0_186 = arith.constant 0 : index
    %391 = vector.load %arg3[%c0_185, %c0_186] : memref<1x128xf32, #tpu.memory_space<vmem>>, vector<1x128xf32>
    %392 = vector.broadcast %391 : vector<1x128xf32> to vector<16x128xf32>
    %393 = arith.addf %390, %392 : vector<16x128xf32>
    %c0_187 = arith.constant 0 : index
    %c0_188 = arith.constant 0 : index
    %394 = vector.load %arg26[%c0_187, %c0_188] : memref<16x128xf32, #tpu.memory_space<vmem>>, vector<16x128xf32>
    tpu.vector_store %arg26[%c0_187, %c0_188], %393 {strides = array<i32>} : memref<16x128xf32, #tpu.memory_space<vmem>>, vector<16x128xf32>,
    return
  }
  func.func @transform_0(%arg0: i32) -> (i32, i32) {
    %c0_i32 = arith.constant 0 : i32
    %c0_i32_0 = arith.constant 0 : i32
    return %arg0, %c0_i32 : i32, i32
  }
  func.func @transform_1(%arg0: i32) -> (i32, i32) {
    %c0_i32 = arith.constant 0 : i32
    %c0_i32_0 = arith.constant 0 : i32
    %c0_i32_1 = arith.constant 0 : i32
    return %c0_i32, %c0_i32_0 : i32, i32
  }
  func.func @transform_2(%arg0: i32) -> (i32, i32) {
    %c0_i32 = arith.constant 0 : i32
    %c0_i32_0 = arith.constant 0 : i32
    %c0_i32_1 = arith.constant 0 : i32
    return %c0_i32, %c0_i32_0 : i32, i32
  }
  func.func @transform_24(%arg0: i32) -> (i32, i32) {
    %c0_i32 = arith.constant 0 : i32
    %c0_i32_0 = arith.constant 0 : i32
    return %arg0, %c0_i32 : i32, i32
  }
  func.func @transform_25(%arg0: i32) -> (i32, i32) {
    %c0_i32 = arith.constant 0 : i32
    %c0_i32_0 = arith.constant 0 : i32
    return %arg0, %c0_i32 : i32, i32
  }
}

</mosaic_0001>

<llo_original>
// kernel: model_nest_split_forward.1
$region0: #{model_nest_split_forward.1}
  #allocation0 [shape = 'u32[]', space=smem, size = 0x4, offset = 0x4, fixed_abs, tag = 'smem constant byte address 0x4 - core index']
  #allocation1 [shape = 'u32[72,128]{1,0:T(1,128)}', space=vmem, size = 0x9000, scoped, tag = 'internal scratch']
  #allocation2 [shape = 'f32[64,32]{1,0:T(8,128)}', space=vmem, size = 0x8000, scoped, tag = 'scratch operand']
  #allocation3 [shape = 'f32[96,64]{1,0:T(8,128)}', space=vmem, size = 0xc000, scoped, tag = 'scratch operand']
  #allocation4 [shape = 'f32[32,16]{1,0:T(8,128)}', space=vmem, size = 0x4000, scoped, tag = 'scratch operand']
  #allocation5 [shape = 'f32[48,32]{1,0:T(8,128)}', space=vmem, size = 0x6000, scoped, tag = 'scratch operand']
  #allocation6 [shape = 'f32[160,64]{1,0:T(8,128)}', space=vmem, size = 0x14000, scoped, tag = 'scratch operand']
  #allocation7 [shape = 'f32[16,8]{1,0:T(8,128)}', space=vmem, size = 0x2000, scoped, tag = 'scratch operand']
  #allocation8 [shape = 'f32[24,16]{1,0:T(8,128)}', space=vmem, size = 0x3000, scoped, tag = 'scratch operand']
  #allocation9 [shape = 'f32[80,32]{1,0:T(8,128)}', space=vmem, size = 0xa000, scoped, tag = 'scratch operand']
  #allocation10 [shape = 'f32[224,64]{1,0:T(8,128)}', space=vmem, size = 0x1c000, scoped, tag = 'scratch operand']
  #allocation11 [shape = 'f32[8,4]{1,0:T(8,128)}', space=vmem, size = 0x1000, scoped, tag = 'scratch operand']
  #allocation12 [shape = 'f32[12,8]{1,0:T(8,128)}', space=vmem, size = 0x2000, scoped, tag = 'scratch operand']
  #allocation13 [shape = 'f32[40,16]{1,0:T(8,128)}', space=vmem, size = 0x5000, scoped, tag = 'scratch operand']
  #allocation14 [shape = 'f32[112,32]{1,0:T(8,128)}', space=vmem, size = 0xe000, scoped, tag = 'scratch operand']
  #allocation15 [shape = 'f32[288,64]{1,0:T(8,128)}', space=vmem, size = 0x24000, scoped, tag = 'scratch operand']
  #allocation16 [shape = 'f32[4,2]{1,0:T(4,128)}', space=vmem, size = 0x800, scoped, tag = 'scratch operand']
  #allocation17 [shape = 'f32[6,4]{1,0:T(8,128)}', space=vmem, size = 0x1000, scoped, tag = 'scratch operand']
  #allocation18 [shape = 'f32[20,8]{1,0:T(8,128)}', space=vmem, size = 0x3000, scoped, tag = 'scratch operand']
  #allocation19 [shape = 'f32[56,16]{1,0:T(8,128)}', space=vmem, size = 0x7000, scoped, tag = 'scratch operand']
  #allocation20 [shape = 'f32[144,32]{1,0:T(8,128)}', space=vmem, size = 0x12000, scoped, tag = 'scratch operand']
  #allocation21 [shape = 'f32[352,64]{1,0:T(8,128)}', space=vmem, size = 0x2c000, scoped, tag = 'scratch operand']
  #allocation22 [shape = 'f32[256,128]{1,0:T(8,128)}', space=vmem, size = 0x20000, scoped, tag = 'scratch operand']
  #allocation23 [shape = 's32[21]{0}', space=sflag, size = 0x54, scoped, tag = 'scratch operand']
  #allocation24 [shape = 's32[]', space=sflag, size = 0x4, offset = 0, fixed_abs, tag = 'sflag constant byte address 0x0 - dummy sync flag']
  #allocation25 [shape = 's32[]', space=sflag, size = 0x4, offset = 0, fixed_abs, tag = 'sflag constant byte address 0x0 - dummy sync flag']
  #allocation26 [shape = 's32[]', space=sflag, size = 0x4, offset = 0, fixed_abs, tag = 'sflag constant byte address 0x0 - dummy sync flag']
  #allocation27 [shape = 's32[]', space=sflag, size = 0x4, offset = 0, fixed_abs, tag = 'sflag constant byte address 0x0 - dummy sync flag']
  #allocation28 [shape = 's32[]', space=sflag, size = 0x4, offset = 0, fixed_abs, tag = 'sflag constant byte address 0x0 - dummy sync flag']
  #allocation29 [shape = 's32[]', space=sflag, size = 0x4, offset = 0, fixed_abs, tag = 'sflag constant byte address 0x0 - dummy sync flag']
  #allocation30 [shape = 's32[]', space=sflag, size = 0x4, offset = 0, fixed_abs, tag = 'sflag constant byte address 0x0 - dummy sync flag']
  #allocation31 [shape = 's32[]', space=sflag, size = 0x4, offset = 0, fixed_abs, tag = 'sflag constant byte address 0x0 - dummy sync flag']
  #allocation32 [shape = 's32[]', space=sflag, size = 0x4, offset = 0, fixed_abs, tag = 'sflag constant byte address 0x0 - dummy sync flag']
  #allocation33 [shape = 's32[]', space=sflag, size = 0x4, offset = 0, fixed_abs, tag = 'sflag constant byte address 0x0 - dummy sync flag']
  #allocation34 [shape = 's32[]', space=sflag, size = 0x4, offset = 0, fixed_abs, tag = 'sflag constant byte address 0x0 - dummy sync flag']
  #allocation35 [shape = 's32[]', space=sflag, size = 0x4, offset = 0, fixed_abs, tag = 'sflag constant byte address 0x0 - dummy sync flag']
  #allocation36 [shape = 's32[]', space=sflag, size = 0x4, offset = 0, fixed_abs, tag = 'sflag constant byte address 0x0 - dummy sync flag']
  #allocation37 [shape = 's32[]', space=sflag, size = 0x4, offset = 0, fixed_abs, tag = 'sflag constant byte address 0x0 - dummy sync flag']
  #allocation38 [shape = 's32[]', space=sflag, size = 0x4, offset = 0, fixed_abs, tag = 'sflag constant byte address 0x0 - dummy sync flag']
  #allocation39 [shape = 's32[]', space=sflag, size = 0x4, offset = 0, fixed_abs, tag = 'sflag constant byte address 0x0 - dummy sync flag']
  #allocation40 [shape = 's32[]', space=sflag, size = 0x4, offset = 0, fixed_abs, tag = 'sflag constant byte address 0x0 - dummy sync flag']
  #allocation41 [shape = 's32[]', space=sflag, size = 0x4, offset = 0, fixed_abs, tag = 'sflag constant byte address 0x0 - dummy sync flag']
  #allocation42 [shape = 's32[]', space=sflag, size = 0x4, offset = 0, fixed_abs, tag = 'sflag constant byte address 0x0 - dummy sync flag']
  #allocation43 [shape = 's32[]', space=sflag, size = 0x4, offset = 0, fixed_abs, tag = 'sflag constant byte address 0x0 - dummy sync flag']
  #allocation44 [shape = 's32[]', space=sflag, size = 0x4, offset = 0, fixed_abs, tag = 'sflag constant byte address 0x0 - dummy sync flag']
  %s0 = inlined_call_operand.vmem [shape: f32[16,64], index: 0, kind: input, shape index: {}]
  %s1 = inlined_call_operand.vmem [shape: f32[1,578], index: 1, kind: input, shape index: {}]
  %s2 = inlined_call_operand.vmem [shape: f32[1,128], index: 2, kind: input, shape index: {}]
  %s3 = inlined_call_operand.vmem [shape: f32[64,32], index: 3, kind: input, shape index: {}]
  %s4 = inlined_call_operand.vmem [shape: f32[96,64], index: 4, kind: input, shape index: {}]
  %s5 = inlined_call_operand.vmem [shape: f32[32,16], index: 5, kind: input, shape index: {}]
  %s6 = inlined_call_operand.vmem [shape: f32[48,32], index: 6, kind: input, shape index: {}]
  %s7 = inlined_call_operand.vmem [shape: f32[160,64], index: 7, kind: input, shape index: {}]
  %s8 = inlined_call_operand.vmem [shape: f32[16,8], index: 8, kind: input, shape index: {}]
  %s9 = inlined_call_operand.vmem [shape: f32[24,16], index: 9, kind: input, shape index: {}]
  %s10 = inlined_call_operand.vmem [shape: f32[80,32], index: 10, kind: input, shape index: {}]
  %s11 = inlined_call_operand.vmem [shape: f32[224,64], index: 11, kind: input, shape index: {}]
  %s12 = inlined_call_operand.vmem [shape: f32[8,4], index: 12, kind: input, shape index: {}]
  %s13 = inlined_call_operand.vmem [shape: f32[12,8], index: 13, kind: input, shape index: {}]
  %s14 = inlined_call_operand.vmem [shape: f32[40,16], index: 14, kind: input, shape index: {}]
  %s15 = inlined_call_operand.vmem [shape: f32[112,32], index: 15, kind: input, shape index: {}]
  %s16 = inlined_call_operand.vmem [shape: f32[288,64], index: 16, kind: input, shape index: {}]
  %s17 = inlined_call_operand.vmem [shape: f32[4,2], index: 17, kind: input, shape index: {}]
  %s18 = inlined_call_operand.vmem [shape: f32[6,4], index: 18, kind: input, shape index: {}]
  %s19 = inlined_call_operand.vmem [shape: f32[20,8], index: 19, kind: input, shape index: {}]
  %s20 = inlined_call_operand.vmem [shape: f32[56,16], index: 20, kind: input, shape index: {}]
  %s21 = inlined_call_operand.vmem [shape: f32[144,32], index: 21, kind: input, shape index: {}]
  %s22 = inlined_call_operand.vmem [shape: f32[352,64], index: 22, kind: input, shape index: {}]
  %s23 = inlined_call_operand.vmem [shape: f32[256,128], index: 23, kind: input, shape index: {}]
  %s24 = inlined_call_operand.vmem [shape: f32[16,256], index: 24, kind: output, shape index: {0}]
  %s25 = inlined_call_operand.vmem [shape: f32[16,128], index: 25, kind: output, shape index: {1}]
  %26 = xla_tuple %s24, %s25
  %s27 = sld [smem:[#allocation0]]
  $region476: #{model_nest_split_forward.1} parent=0
    _
  %s29 = ssub.s32 1, %s27
  %s30 = scalar_select 0, %s29, %s27
  // Predicated region
  $region2: #{model_nest_split_forward.1} parent=0 // pred_check
    _
  $region3: #{model_nest_split_forward.1} parent=0 // pred_check_branch
    %32 = sbr.rel (0) target = $region5
  $region4: #{model_nest_split_forward.1} parent=0 // pred_region
    _
  $region5: #{model_nest_split_forward.1} parent=0 // pred_fallthru
    _
  // Predicated region
  $region6: #{model_nest_split_forward.1} parent=0 // pred_check
    _
  $region7: #{model_nest_split_forward.1} parent=0 // pred_check_branch
    %34 = sbr.rel (0) target = $region9
  $region8: #{model_nest_split_forward.1} parent=0 // pred_region
    _
  $region9: #{model_nest_split_forward.1} parent=0 // pred_fallthru
    _
  // Predicated region
  $region10: #{model_nest_split_forward.1} parent=0 // pred_check
    _
  $region11: #{model_nest_split_forward.1} parent=0 // pred_check_branch
    %36 = sbr.rel (0) target = $region13
  $region12: #{model_nest_split_forward.1} parent=0 // pred_region
    _
  $region13: #{model_nest_split_forward.1} parent=0 // pred_fallthru
    _
  %p37 = scmp.eq.s32.totalorder 0, 0
  // Predicated region
  $region14: #{model_nest_split_forward.1} parent=0 // pred_check
    %p38 = pneg %p37
  $region15: #{model_nest_split_forward.1} parent=0 // pred_check_branch
    %40 = sbr.rel (%p38) target = $region17
  $region16: #{model_nest_split_forward.1} parent=0 // pred_region
    // Predicated region
    $region18: #{model_nest_split_forward.1} parent=16 // pred_check
      _
    $region19: #{model_nest_split_forward.1} parent=16 // pred_check_branch
      %42 = sbr.rel (0) target = $region21
    $region20: #{model_nest_split_forward.1} parent=16 // pred_region
      loop: start=0, step=1, limit=1
      $region22: #{model_nest_split_forward.1} parent=20 // loop_pre_header
        _
      $region23: #{model_nest_split_forward.1} parent=20 // loop_header
        %s44 = sphi 0, %s48
        %p45 = scmp.ge.s32.totalorder %s44, 1
        %s49 = sphi %s3, %s3
        %s50 = sphi [#allocation2], [#allocation2]
      $region24: #{model_nest_split_forward.1} parent=20 // loop_header_branch
        %47 = sbr.rel (%p45) target = $region28
      $region25: #{model_nest_split_forward.1} parent=20 // loop_body
        %v51 = vld [vmem:[%s49] sm:$0xff]
        %52 = vst [vmem:[%s50] sm:$0xff] %v51
        %v53 = vld [vmem:[%s49 + $0x8] sm:$0xff]
        %54 = vst [vmem:[%s50 + $0x8] sm:$0xff] %v53
        %v55 = vld [vmem:[%s49 + $0x10] sm:$0xff]
        %56 = vst [vmem:[%s50 + $0x10] sm:$0xff] %v55
        %v57 = vld [vmem:[%s49 + $0x18] sm:$0xff]
        %58 = vst [vmem:[%s50 + $0x18] sm:$0xff] %v57
        %v59 = vld [vmem:[%s49 + $0x20] sm:$0xff]
        %60 = vst [vmem:[%s50 + $0x20] sm:$0xff] %v59
        %v61 = vld [vmem:[%s49 + $0x28] sm:$0xff]
        %62 = vst [vmem:[%s50 + $0x28] sm:$0xff] %v61
        %v63 = vld [vmem:[%s49 + $0x30] sm:$0xff]
        %64 = vst [vmem:[%s50 + $0x30] sm:$0xff] %v63
        %v65 = vld [vmem:[%s49 + $0x38] sm:$0xff]
        %66 = vst [vmem:[%s50 + $0x38] sm:$0xff] %v65
      $region26: #{model_nest_split_forward.1} parent=20 // loop_footer
        %s48 = sadd.s32 1, %s44
      $region27: #{model_nest_split_forward.1} parent=20 // loop_footer_branch
        %43 = sbr.rel target = $region23
      $region28: #{model_nest_split_forward.1} parent=20 // loop_exit
        _
    $region21: #{model_nest_split_forward.1} parent=16 // pred_fallthru
      _
    // Predicated region
    $region29: #{model_nest_split_forward.1} parent=16 // pred_check
      _
    $region30: #{model_nest_split_forward.1} parent=16 // pred_check_branch
      %68 = sbr.rel target = $region32
    $region31: #{model_nest_split_forward.1} parent=16 // pred_region
      _
    $region32: #{model_nest_split_forward.1} parent=16 // pred_fallthru
      _
    // Predicated region
    $region33: #{model_nest_split_forward.1} parent=16 // pred_check
      _
    $region34: #{model_nest_split_forward.1} parent=16 // pred_check_branch
      %71 = sbr.rel (0) target = $region36
    $region35: #{model_nest_split_forward.1} parent=16 // pred_region
      %72 = vsyncadd [#allocation23], 1024
    $region36: #{model_nest_split_forward.1} parent=16 // pred_fallthru
      _
    %s73 = scalar_lea.sflag [#allocation23], 1
    // Predicated region
    $region37: #{model_nest_split_forward.1} parent=16 // pred_check
      _
    $region38: #{model_nest_split_forward.1} parent=16 // pred_check_branch
      %75 = sbr.rel (0) target = $region40
    $region39: #{model_nest_split_forward.1} parent=16 // pred_region
      loop: start=0, step=1, limit=1
      $region41: #{model_nest_split_forward.1} parent=39 // loop_pre_header
        _
      $region42: #{model_nest_split_forward.1} parent=39 // loop_header
        %s77 = sphi 0, %s81
        %p78 = scmp.ge.s32.totalorder %s77, 1
        %s82 = sphi %s4, %s4
        %s83 = sphi [#allocation3], [#allocation3]
      $region43: #{model_nest_split_forward.1} parent=39 // loop_header_branch
        %80 = sbr.rel (%p78) target = $region47
      $region44: #{model_nest_split_forward.1} parent=39 // loop_body
        %v84 = vld [vmem:[%s82] sm:$0xff]
        %85 = vst [vmem:[%s83] sm:$0xff] %v84
        %v86 = vld [vmem:[%s82 + $0x8] sm:$0xff]
        %87 = vst [vmem:[%s83 + $0x8] sm:$0xff] %v86
        %v88 = vld [vmem:[%s82 + $0x10] sm:$0xff]
        %89 = vst [vmem:[%s83 + $0x10] sm:$0xff] %v88
        %v90 = vld [vmem:[%s82 + $0x18] sm:$0xff]
        %91 = vst [vmem:[%s83 + $0x18] sm:$0xff] %v90
        %v92 = vld [vmem:[%s82 + $0x20] sm:$0xff]
        %93 = vst [vmem:[%s83 + $0x20] sm:$0xff] %v92
        %v94 = vld [vmem:[%s82 + $0x28] sm:$0xff]
        %95 = vst [vmem:[%s83 + $0x28] sm:$0xff] %v94
        %v96 = vld [vmem:[%s82 + $0x30] sm:$0xff]
        %97 = vst [vmem:[%s83 + $0x30] sm:$0xff] %v96
        %v98 = vld [vmem:[%s82 + $0x38] sm:$0xff]
        %99 = vst [vmem:[%s83 + $0x38] sm:$0xff] %v98
        %v100 = vld [vmem:[%s82 + $0x40] sm:$0xff]
        %101 = vst [vmem:[%s83 + $0x40] sm:$0xff] %v100
        %v102 = vld [vmem:[%s82 + $0x48] sm:$0xff]
        %103 = vst [vmem:[%s83 + $0x48] sm:$0xff] %v102
        %v104 = vld [vmem:[%s82 + $0x50] sm:$0xff]
        %105 = vst [vmem:[%s83 + $0x50] sm:$0xff] %v104
        %v106 = vld [vmem:[%s82 + $0x58] sm:$0xff]
        %107 = vst [vmem:[%s83 + $0x58] sm:$0xff] %v106
      $region45: #{model_nest_split_forward.1} parent=39 // loop_footer
        %s81 = sadd.s32 1, %s77
      $region46: #{model_nest_split_forward.1} parent=39 // loop_footer_branch
        %76 = sbr.rel target = $region42
      $region47: #{model_nest_split_forward.1} parent=39 // loop_exit
        _
    $region40: #{model_nest_split_forward.1} parent=16 // pred_fallthru
      _
    // Predicated region
    $region48: #{model_nest_split_forward.1} parent=16 // pred_check
      _
    $region49: #{model_nest_split_forward.1} parent=16 // pred_check_branch
      %109 = sbr.rel target = $region51
    $region50: #{model_nest_split_forward.1} parent=16 // pred_region
      _
    $region51: #{model_nest_split_forward.1} parent=16 // pred_fallthru
      _
    // Predicated region
    $region52: #{model_nest_split_forward.1} parent=16 // pred_check
      _
    $region53: #{model_nest_split_forward.1} parent=16 // pred_check_branch
      %112 = sbr.rel (0) target = $region55
    $region54: #{model_nest_split_forward.1} parent=16 // pred_region
      %113 = vsyncadd %s73, 1536
    $region55: #{model_nest_split_forward.1} parent=16 // pred_fallthru
      _
    %s114 = scalar_lea.sflag [#allocation23], 2
    // Predicated region
    $region56: #{model_nest_split_forward.1} parent=16 // pred_check
      _
    $region57: #{model_nest_split_forward.1} parent=16 // pred_check_branch
      %116 = sbr.rel (0) target = $region59
    $region58: #{model_nest_split_forward.1} parent=16 // pred_region
      loop: start=0, step=1, limit=1
      $region60: #{model_nest_split_forward.1} parent=58 // loop_pre_header
        _
      $region61: #{model_nest_split_forward.1} parent=58 // loop_header
        %s118 = sphi 0, %s122
        %p119 = scmp.ge.s32.totalorder %s118, 1
        %s123 = sphi %s5, %s5
        %s124 = sphi [#allocation4], [#allocation4]
      $region62: #{model_nest_split_forward.1} parent=58 // loop_header_branch
        %121 = sbr.rel (%p119) target = $region66
      $region63: #{model_nest_split_forward.1} parent=58 // loop_body
        %v125 = vld [vmem:[%s123] sm:$0xff]
        %126 = vst [vmem:[%s124] sm:$0xff] %v125
        %v127 = vld [vmem:[%s123 + $0x8] sm:$0xff]
        %128 = vst [vmem:[%s124 + $0x8] sm:$0xff] %v127
        %v129 = vld [vmem:[%s123 + $0x10] sm:$0xff]
        %130 = vst [vmem:[%s124 + $0x10] sm:$0xff] %v129
        %v131 = vld [vmem:[%s123 + $0x18] sm:$0xff]
        %132 = vst [vmem:[%s124 + $0x18] sm:$0xff] %v131
      $region64: #{model_nest_split_forward.1} parent=58 // loop_footer
        %s122 = sadd.s32 1, %s118
      $region65: #{model_nest_split_forward.1} parent=58 // loop_footer_branch
        %117 = sbr.rel target = $region61
      $region66: #{model_nest_split_forward.1} parent=58 // loop_exit
        _
    $region59: #{model_nest_split_forward.1} parent=16 // pred_fallthru
      _
    // Predicated region
    $region67: #{model_nest_split_forward.1} parent=16 // pred_check
      _
    $region68: #{model_nest_split_forward.1} parent=16 // pred_check_branch
      %134 = sbr.rel target = $region70
    $region69: #{model_nest_split_forward.1} parent=16 // pred_region
      _
    $region70: #{model_nest_split_forward.1} parent=16 // pred_fallthru
      _
    // Predicated region
    $region71: #{model_nest_split_forward.1} parent=16 // pred_check
      _
    $region72: #{model_nest_split_forward.1} parent=16 // pred_check_branch
      %137 = sbr.rel (0) target = $region74
    $region73: #{model_nest_split_forward.1} parent=16 // pred_region
      %138 = vsyncadd %s114, 512
    $region74: #{model_nest_split_forward.1} parent=16 // pred_fallthru
      _
    %s139 = scalar_lea.sflag [#allocation23], 3
    // Predicated region
    $region75: #{model_nest_split_forward.1} parent=16 // pred_check
      _
    $region76: #{model_nest_split_forward.1} parent=16 // pred_check_branch
      %141 = sbr.rel (0) target = $region78
    $region77: #{model_nest_split_forward.1} parent=16 // pred_region
      loop: start=0, step=1, limit=1
      $region79: #{model_nest_split_forward.1} parent=77 // loop_pre_header
        _
      $region80: #{model_nest_split_forward.1} parent=77 // loop_header
        %s143 = sphi 0, %s147
        %p144 = scmp.ge.s32.totalorder %s143, 1
        %s148 = sphi %s6, %s6
        %s149 = sphi [#allocation5], [#allocation5]
      $region81: #{model_nest_split_forward.1} parent=77 // loop_header_branch
        %146 = sbr.rel (%p144) target = $region85
      $region82: #{model_nest_split_forward.1} parent=77 // loop_body
        %v150 = vld [vmem:[%s148] sm:$0xff]
        %151 = vst [vmem:[%s149] sm:$0xff] %v150
        %v152 = vld [vmem:[%s148 + $0x8] sm:$0xff]
        %153 = vst [vmem:[%s149 + $0x8] sm:$0xff] %v152
        %v154 = vld [vmem:[%s148 + $0x10] sm:$0xff]
        %155 = vst [vmem:[%s149 + $0x10] sm:$0xff] %v154
        %v156 = vld [vmem:[%s148 + $0x18] sm:$0xff]
        %157 = vst [vmem:[%s149 + $0x18] sm:$0xff] %v156
        %v158 = vld [vmem:[%s148 + $0x20] sm:$0xff]
        %159 = vst [vmem:[%s149 + $0x20] sm:$0xff] %v158
        %v160 = vld [vmem:[%s148 + $0x28] sm:$0xff]
        %161 = vst [vmem:[%s149 + $0x28] sm:$0xff] %v160
      $region83: #{model_nest_split_forward.1} parent=77 // loop_footer
        %s147 = sadd.s32 1, %s143
      $region84: #{model_nest_split_forward.1} parent=77 // loop_footer_branch
        %142 = sbr.rel target = $region80
      $region85: #{model_nest_split_forward.1} parent=77 // loop_exit
        _
    $region78: #{model_nest_split_forward.1} parent=16 // pred_fallthru
      _
    // Predicated region
    $region86: #{model_nest_split_forward.1} parent=16 // pred_check
      _
    $region87: #{model_nest_split_forward.1} parent=16 // pred_check_branch
      %163 = sbr.rel target = $region89
    $region88: #{model_nest_split_forward.1} parent=16 // pred_region
      _
    $region89: #{model_nest_split_forward.1} parent=16 // pred_fallthru
      _
    // Predicated region
    $region90: #{model_nest_split_forward.1} parent=16 // pred_check
      _
    $region91: #{model_nest_split_forward.1} parent=16 // pred_check_branch
      %166 = sbr.rel (0) target = $region93
    $region92: #{model_nest_split_forward.1} parent=16 // pred_region
      %167 = vsyncadd %s139, 768
    $region93: #{model_nest_split_forward.1} parent=16 // pred_fallthru
      _
    %s168 = scalar_lea.sflag [#allocation23], 4
    // Predicated region
    $region94: #{model_nest_split_forward.1} parent=16 // pred_check
      _
    $region95: #{model_nest_split_forward.1} parent=16 // pred_check_branch
      %170 = sbr.rel (0) target = $region97
    $region96: #{model_nest_split_forward.1} parent=16 // pred_region
      loop: start=0, step=1, limit=1
      $region98: #{model_nest_split_forward.1} parent=96 // loop_pre_header
        _
      $region99: #{model_nest_split_forward.1} parent=96 // loop_header
        %s172 = sphi 0, %s176
        %p173 = scmp.ge.s32.totalorder %s172, 1
        %s177 = sphi %s7, %s7
        %s178 = sphi [#allocation6], [#allocation6]
      $region100: #{model_nest_split_forward.1} parent=96 // loop_header_branch
        %175 = sbr.rel (%p173) target = $region104
      $region101: #{model_nest_split_forward.1} parent=96 // loop_body
        %v179 = vld [vmem:[%s177] sm:$0xff]
        %180 = vst [vmem:[%s178] sm:$0xff] %v179
        %v181 = vld [vmem:[%s177 + $0x8] sm:$0xff]
        %182 = vst [vmem:[%s178 + $0x8] sm:$0xff] %v181
        %v183 = vld [vmem:[%s177 + $0x10] sm:$0xff]
        %184 = vst [vmem:[%s178 + $0x10] sm:$0xff] %v183
        %v185 = vld [vmem:[%s177 + $0x18] sm:$0xff]
        %186 = vst [vmem:[%s178 + $0x18] sm:$0xff] %v185
        %v187 = vld [vmem:[%s177 + $0x20] sm:$0xff]
        %188 = vst [vmem:[%s178 + $0x20] sm:$0xff] %v187
        %v189 = vld [vmem:[%s177 + $0x28] sm:$0xff]
        %190 = vst [vmem:[%s178 + $0x28] sm:$0xff] %v189
        %v191 = vld [vmem:[%s177 + $0x30] sm:$0xff]
        %192 = vst [vmem:[%s178 + $0x30] sm:$0xff] %v191
        %v193 = vld [vmem:[%s177 + $0x38] sm:$0xff]
        %194 = vst [vmem:[%s178 + $0x38] sm:$0xff] %v193
        %v195 = vld [vmem:[%s177 + $0x40] sm:$0xff]
        %196 = vst [vmem:[%s178 + $0x40] sm:$0xff] %v195
        %v197 = vld [vmem:[%s177 + $0x48] sm:$0xff]
        %198 = vst [vmem:[%s178 + $0x48] sm:$0xff] %v197
        %v199 = vld [vmem:[%s177 + $0x50] sm:$0xff]
        %200 = vst [vmem:[%s178 + $0x50] sm:$0xff] %v199
        %v201 = vld [vmem:[%s177 + $0x58] sm:$0xff]
        %202 = vst [vmem:[%s178 + $0x58] sm:$0xff] %v201
        %v203 = vld [vmem:[%s177 + $0x60] sm:$0xff]
        %204 = vst [vmem:[%s178 + $0x60] sm:$0xff] %v203
        %v205 = vld [vmem:[%s177 + $0x68] sm:$0xff]
        %206 = vst [vmem:[%s178 + $0x68] sm:$0xff] %v205
        %v207 = vld [vmem:[%s177 + $0x70] sm:$0xff]
        %208 = vst [vmem:[%s178 + $0x70] sm:$0xff] %v207
        %v209 = vld [vmem:[%s177 + $0x78] sm:$0xff]
        %210 = vst [vmem:[%s178 + $0x78] sm:$0xff] %v209
        %v211 = vld [vmem:[%s177 + $0x80] sm:$0xff]
        %212 = vst [vmem:[%s178 + $0x80] sm:$0xff] %v211
        %v213 = vld [vmem:[%s177 + $0x88] sm:$0xff]
        %214 = vst [vmem:[%s178 + $0x88] sm:$0xff] %v213
        %v215 = vld [vmem:[%s177 + $0x90] sm:$0xff]
        %216 = vst [vmem:[%s178 + $0x90] sm:$0xff] %v215
        %v217 = vld [vmem:[%s177 + $0x98] sm:$0xff]
        %218 = vst [vmem:[%s178 + $0x98] sm:$0xff] %v217
      $region102: #{model_nest_split_forward.1} parent=96 // loop_footer
        %s176 = sadd.s32 1, %s172
      $region103: #{model_nest_split_forward.1} parent=96 // loop_footer_branch
        %171 = sbr.rel target = $region99
      $region104: #{model_nest_split_forward.1} parent=96 // loop_exit
        _
    $region97: #{model_nest_split_forward.1} parent=16 // pred_fallthru
      _
    // Predicated region
    $region105: #{model_nest_split_forward.1} parent=16 // pred_check
      _
    $region106: #{model_nest_split_forward.1} parent=16 // pred_check_branch
      %220 = sbr.rel target = $region108
    $region107: #{model_nest_split_forward.1} parent=16 // pred_region
      _
    $region108: #{model_nest_split_forward.1} parent=16 // pred_fallthru
      _
    // Predicated region
    $region109: #{model_nest_split_forward.1} parent=16 // pred_check
      _
    $region110: #{model_nest_split_forward.1} parent=16 // pred_check_branch
      %223 = sbr.rel (0) target = $region112
    $region111: #{model_nest_split_forward.1} parent=16 // pred_region
      %224 = vsyncadd %s168, 2560
    $region112: #{model_nest_split_forward.1} parent=16 // pred_fallthru
      _
    %s225 = scalar_lea.sflag [#allocation23], 5
    // Predicated region
    $region113: #{model_nest_split_forward.1} parent=16 // pred_check
      _
    $region114: #{model_nest_split_forward.1} parent=16 // pred_check_branch
      %227 = sbr.rel (0) target = $region116
    $region115: #{model_nest_split_forward.1} parent=16 // pred_region
      loop: start=0, step=1, limit=1
      $region117: #{model_nest_split_forward.1} parent=115 // loop_pre_header
        _
      $region118: #{model_nest_split_forward.1} parent=115 // loop_header
        %s229 = sphi 0, %s233
        %p230 = scmp.ge.s32.totalorder %s229, 1
        %s234 = sphi %s8, %s8
        %s235 = sphi [#allocation7], [#allocation7]
      $region119: #{model_nest_split_forward.1} parent=115 // loop_header_branch
        %232 = sbr.rel (%p230) target = $region123
      $region120: #{model_nest_split_forward.1} parent=115 // loop_body
        %v236 = vld [vmem:[%s234] sm:$0xff]
        %237 = vst [vmem:[%s235] sm:$0xff] %v236
        %v238 = vld [vmem:[%s234 + $0x8] sm:$0xff]
        %239 = vst [vmem:[%s235 + $0x8] sm:$0xff] %v238
      $region121: #{model_nest_split_forward.1} parent=115 // loop_footer
        %s233 = sadd.s32 1, %s229
      $region122: #{model_nest_split_forward.1} parent=115 // loop_footer_branch
        %228 = sbr.rel target = $region118
      $region123: #{model_nest_split_forward.1} parent=115 // loop_exit
        _
    $region116: #{model_nest_split_forward.1} parent=16 // pred_fallthru
      _
    // Predicated region
    $region124: #{model_nest_split_forward.1} parent=16 // pred_check
      _
    $region125: #{model_nest_split_forward.1} parent=16 // pred_check_branch
      %241 = sbr.rel target = $region127
    $region126: #{model_nest_split_forward.1} parent=16 // pred_region
      _
    $region127: #{model_nest_split_forward.1} parent=16 // pred_fallthru
      _
    // Predicated region
    $region128: #{model_nest_split_forward.1} parent=16 // pred_check
      _
    $region129: #{model_nest_split_forward.1} parent=16 // pred_check_branch
      %244 = sbr.rel (0) target = $region131
    $region130: #{model_nest_split_forward.1} parent=16 // pred_region
      %245 = vsyncadd %s225, 256
    $region131: #{model_nest_split_forward.1} parent=16 // pred_fallthru
      _
    %s246 = scalar_lea.sflag [#allocation23], 6
    // Predicated region
    $region132: #{model_nest_split_forward.1} parent=16 // pred_check
      _
    $region133: #{model_nest_split_forward.1} parent=16 // pred_check_branch
      %248 = sbr.rel (0) target = $region135
    $region134: #{model_nest_split_forward.1} parent=16 // pred_region
      loop: start=0, step=1, limit=1
      $region136: #{model_nest_split_forward.1} parent=134 // loop_pre_header
        _
      $region137: #{model_nest_split_forward.1} parent=134 // loop_header
        %s250 = sphi 0, %s254
        %p251 = scmp.ge.s32.totalorder %s250, 1
        %s255 = sphi %s9, %s9
        %s256 = sphi [#allocation8], [#allocation8]
      $region138: #{model_nest_split_forward.1} parent=134 // loop_header_branch
        %253 = sbr.rel (%p251) target = $region142
      $region139: #{model_nest_split_forward.1} parent=134 // loop_body
        %v257 = vld [vmem:[%s255] sm:$0xff]
        %258 = vst [vmem:[%s256] sm:$0xff] %v257
        %v259 = vld [vmem:[%s255 + $0x8] sm:$0xff]
        %260 = vst [vmem:[%s256 + $0x8] sm:$0xff] %v259
        %v261 = vld [vmem:[%s255 + $0x10] sm:$0xff]
        %262 = vst [vmem:[%s256 + $0x10] sm:$0xff] %v261
      $region140: #{model_nest_split_forward.1} parent=134 // loop_footer
        %s254 = sadd.s32 1, %s250
      $region141: #{model_nest_split_forward.1} parent=134 // loop_footer_branch
        %249 = sbr.rel target = $region137
      $region142: #{model_nest_split_forward.1} parent=134 // loop_exit
        _
    $region135: #{model_nest_split_forward.1} parent=16 // pred_fallthru
      _
    // Predicated region
    $region143: #{model_nest_split_forward.1} parent=16 // pred_check
      _
    $region144: #{model_nest_split_forward.1} parent=16 // pred_check_branch
      %264 = sbr.rel target = $region146
    $region145: #{model_nest_split_forward.1} parent=16 // pred_region
      _
    $region146: #{model_nest_split_forward.1} parent=16 // pred_fallthru
      _
    // Predicated region
    $region147: #{model_nest_split_forward.1} parent=16 // pred_check
      _
    $region148: #{model_nest_split_forward.1} parent=16 // pred_check_branch
      %267 = sbr.rel (0) target = $region150
    $region149: #{model_nest_split_forward.1} parent=16 // pred_region
      %268 = vsyncadd %s246, 384
    $region150: #{model_nest_split_forward.1} parent=16 // pred_fallthru
      _
    %s269 = scalar_lea.sflag [#allocation23], 7
    // Predicated region
    $region151: #{model_nest_split_forward.1} parent=16 // pred_check
      _
    $region152: #{model_nest_split_forward.1} parent=16 // pred_check_branch
      %271 = sbr.rel (0) target = $region154
    $region153: #{model_nest_split_forward.1} parent=16 // pred_region
      loop: start=0, step=1, limit=1
      $region155: #{model_nest_split_forward.1} parent=153 // loop_pre_header
        _
      $region156: #{model_nest_split_forward.1} parent=153 // loop_header
        %s273 = sphi 0, %s277
        %p274 = scmp.ge.s32.totalorder %s273, 1
        %s278 = sphi %s10, %s10
        %s279 = sphi [#allocation9], [#allocation9]
      $region157: #{model_nest_split_forward.1} parent=153 // loop_header_branch
        %276 = sbr.rel (%p274) target = $region161
      $region158: #{model_nest_split_forward.1} parent=153 // loop_body
        %v280 = vld [vmem:[%s278] sm:$0xff]
        %281 = vst [vmem:[%s279] sm:$0xff] %v280
        %v282 = vld [vmem:[%s278 + $0x8] sm:$0xff]
        %283 = vst [vmem:[%s279 + $0x8] sm:$0xff] %v282
        %v284 = vld [vmem:[%s278 + $0x10] sm:$0xff]
        %285 = vst [vmem:[%s279 + $0x10] sm:$0xff] %v284
        %v286 = vld [vmem:[%s278 + $0x18] sm:$0xff]
        %287 = vst [vmem:[%s279 + $0x18] sm:$0xff] %v286
        %v288 = vld [vmem:[%s278 + $0x20] sm:$0xff]
        %289 = vst [vmem:[%s279 + $0x20] sm:$0xff] %v288
        %v290 = vld [vmem:[%s278 + $0x28] sm:$0xff]
        %291 = vst [vmem:[%s279 + $0x28] sm:$0xff] %v290
        %v292 = vld [vmem:[%s278 + $0x30] sm:$0xff]
        %293 = vst [vmem:[%s279 + $0x30] sm:$0xff] %v292
        %v294 = vld [vmem:[%s278 + $0x38] sm:$0xff]
        %295 = vst [vmem:[%s279 + $0x38] sm:$0xff] %v294
        %v296 = vld [vmem:[%s278 + $0x40] sm:$0xff]
        %297 = vst [vmem:[%s279 + $0x40] sm:$0xff] %v296
        %v298 = vld [vmem:[%s278 + $0x48] sm:$0xff]
        %299 = vst [vmem:[%s279 + $0x48] sm:$0xff] %v298
      $region159: #{model_nest_split_forward.1} parent=153 // loop_footer
        %s277 = sadd.s32 1, %s273
      $region160: #{model_nest_split_forward.1} parent=153 // loop_footer_branch
        %272 = sbr.rel target = $region156
      $region161: #{model_nest_split_forward.1} parent=153 // loop_exit
        _
    $region154: #{model_nest_split_forward.1} parent=16 // pred_fallthru
      _
    // Predicated region
    $region162: #{model_nest_split_forward.1} parent=16 // pred_check
      _
    $region163: #{model_nest_split_forward.1} parent=16 // pred_check_branch
      %301 = sbr.rel target = $region165
    $region164: #{model_nest_split_forward.1} parent=16 // pred_region
      _
    $region165: #{model_nest_split_forward.1} parent=16 // pred_fallthru
      _
    // Predicated region
    $region166: #{model_nest_split_forward.1} parent=16 // pred_check
      _
    $region167: #{model_nest_split_forward.1} parent=16 // pred_check_branch
      %304 = sbr.rel (0) target = $region169
    $region168: #{model_nest_split_forward.1} parent=16 // pred_region
      %305 = vsyncadd %s269, 1280
    $region169: #{model_nest_split_forward.1} parent=16 // pred_fallthru
      _
    %s306 = scalar_lea.sflag [#allocation23], 8
    // Predicated region
    $region170: #{model_nest_split_forward.1} parent=16 // pred_check
      _
    $region171: #{model_nest_split_forward.1} parent=16 // pred_check_branch
      %308 = sbr.rel (0) target = $region173
    $region172: #{model_nest_split_forward.1} parent=16 // pred_region
      loop: start=0, step=1, limit=1
      $region174: #{model_nest_split_forward.1} parent=172 // loop_pre_header
        _
      $region175: #{model_nest_split_forward.1} parent=172 // loop_header
        %s310 = sphi 0, %s314
        %p311 = scmp.ge.s32.totalorder %s310, 1
        %s315 = sphi %s11, %s11
        %s316 = sphi [#allocation10], [#allocation10]
      $region176: #{model_nest_split_forward.1} parent=172 // loop_header_branch
        %313 = sbr.rel (%p311) target = $region180
      $region177: #{model_nest_split_forward.1} parent=172 // loop_body
        %v317 = vld [vmem:[%s315] sm:$0xff]
        %318 = vst [vmem:[%s316] sm:$0xff] %v317
        %v319 = vld [vmem:[%s315 + $0x8] sm:$0xff]
        %320 = vst [vmem:[%s316 + $0x8] sm:$0xff] %v319
        %v321 = vld [vmem:[%s315 + $0x10] sm:$0xff]
        %322 = vst [vmem:[%s316 + $0x10] sm:$0xff] %v321
        %v323 = vld [vmem:[%s315 + $0x18] sm:$0xff]
        %324 = vst [vmem:[%s316 + $0x18] sm:$0xff] %v323
        %v325 = vld [vmem:[%s315 + $0x20] sm:$0xff]
        %326 = vst [vmem:[%s316 + $0x20] sm:$0xff] %v325
        %v327 = vld [vmem:[%s315 + $0x28] sm:$0xff]
        %328 = vst [vmem:[%s316 + $0x28] sm:$0xff] %v327
        %v329 = vld [vmem:[%s315 + $0x30] sm:$0xff]
        %330 = vst [vmem:[%s316 + $0x30] sm:$0xff] %v329
        %v331 = vld [vmem:[%s315 + $0x38] sm:$0xff]
        %332 = vst [vmem:[%s316 + $0x38] sm:$0xff] %v331
        %v333 = vld [vmem:[%s315 + $0x40] sm:$0xff]
        %334 = vst [vmem:[%s316 + $0x40] sm:$0xff] %v333
        %v335 = vld [vmem:[%s315 + $0x48] sm:$0xff]
        %336 = vst [vmem:[%s316 + $0x48] sm:$0xff] %v335
        %v337 = vld [vmem:[%s315 + $0x50] sm:$0xff]
        %338 = vst [vmem:[%s316 + $0x50] sm:$0xff] %v337
        %v339 = vld [vmem:[%s315 + $0x58] sm:$0xff]
        %340 = vst [vmem:[%s316 + $0x58] sm:$0xff] %v339
        %v341 = vld [vmem:[%s315 + $0x60] sm:$0xff]
        %342 = vst [vmem:[%s316 + $0x60] sm:$0xff] %v341
        %v343 = vld [vmem:[%s315 + $0x68] sm:$0xff]
        %344 = vst [vmem:[%s316 + $0x68] sm:$0xff] %v343
        %v345 = vld [vmem:[%s315 + $0x70] sm:$0xff]
        %346 = vst [vmem:[%s316 + $0x70] sm:$0xff] %v345
        %v347 = vld [vmem:[%s315 + $0x78] sm:$0xff]
        %348 = vst [vmem:[%s316 + $0x78] sm:$0xff] %v347
        %v349 = vld [vmem:[%s315 + $0x80] sm:$0xff]
        %350 = vst [vmem:[%s316 + $0x80] sm:$0xff] %v349
        %v351 = vld [vmem:[%s315 + $0x88] sm:$0xff]
        %352 = vst [vmem:[%s316 + $0x88] sm:$0xff] %v351
        %v353 = vld [vmem:[%s315 + $0x90] sm:$0xff]
        %354 = vst [vmem:[%s316 + $0x90] sm:$0xff] %v353
        %v355 = vld [vmem:[%s315 + $0x98] sm:$0xff]
        %356 = vst [vmem:[%s316 + $0x98] sm:$0xff] %v355
        %v357 = vld [vmem:[%s315 + $0xa0] sm:$0xff]
        %358 = vst [vmem:[%s316 + $0xa0] sm:$0xff] %v357
        %v359 = vld [vmem:[%s315 + $0xa8] sm:$0xff]
        %360 = vst [vmem:[%s316 + $0xa8] sm:$0xff] %v359
        %v361 = vld [vmem:[%s315 + $0xb0] sm:$0xff]
        %362 = vst [vmem:[%s316 + $0xb0] sm:$0xff] %v361
        %v363 = vld [vmem:[%s315 + $0xb8] sm:$0xff]
        %364 = vst [vmem:[%s316 + $0xb8] sm:$0xff] %v363
        %v365 = vld [vmem:[%s315 + $0xc0] sm:$0xff]
        %366 = vst [vmem:[%s316 + $0xc0] sm:$0xff] %v365
        %v367 = vld [vmem:[%s315 + $0xc8] sm:$0xff]
        %368 = vst [vmem:[%s316 + $0xc8] sm:$0xff] %v367
        %v369 = vld [vmem:[%s315 + $0xd0] sm:$0xff]
        %370 = vst [vmem:[%s316 + $0xd0] sm:$0xff] %v369
        %v371 = vld [vmem:[%s315 + $0xd8] sm:$0xff]
        %372 = vst [vmem:[%s316 + $0xd8] sm:$0xff] %v371
      $region178: #{model_nest_split_forward.1} parent=172 // loop_footer
        %s314 = sadd.s32 1, %s310
      $region179: #{model_nest_split_forward.1} parent=172 // loop_footer_branch
        %309 = sbr.rel target = $region175
      $region180: #{model_nest_split_forward.1} parent=172 // loop_exit
        _
    $region173: #{model_nest_split_forward.1} parent=16 // pred_fallthru
      _
    // Predicated region
    $region181: #{model_nest_split_forward.1} parent=16 // pred_check
      _
    $region182: #{model_nest_split_forward.1} parent=16 // pred_check_branch
      %374 = sbr.rel target = $region184
    $region183: #{model_nest_split_forward.1} parent=16 // pred_region
      _
    $region184: #{model_nest_split_forward.1} parent=16 // pred_fallthru
      _
    // Predicated region
    $region185: #{model_nest_split_forward.1} parent=16 // pred_check
      _
    $region186: #{model_nest_split_forward.1} parent=16 // pred_check_branch
      %377 = sbr.rel (0) target = $region188
    $region187: #{model_nest_split_forward.1} parent=16 // pred_region
      %378 = vsyncadd %s306, 3584
    $region188: #{model_nest_split_forward.1} parent=16 // pred_fallthru
      _
    %s379 = scalar_lea.sflag [#allocation23], 9
    // Predicated region
    $region189: #{model_nest_split_forward.1} parent=16 // pred_check
      _
    $region190: #{model_nest_split_forward.1} parent=16 // pred_check_branch
      %381 = sbr.rel (0) target = $region192
    $region191: #{model_nest_split_forward.1} parent=16 // pred_region
      // Predicated region
      $region204: #{model_nest_split_forward.1} parent=191 // pred_check
        _
      $region205: #{model_nest_split_forward.1} parent=191 // pred_check_branch
        %397 = sbr.rel (0) target = $region207
      $region206: #{model_nest_split_forward.1} parent=191 // pred_region
        loop: start=0, step=1, limit=1
        $region208: #{model_nest_split_forward.1} parent=206 // loop_pre_header
          _
        $region209: #{model_nest_split_forward.1} parent=206 // loop_header
          %s399 = sphi 0, %s403
          %p400 = scmp.ge.s32.totalorder %s399, 1
          %s404 = sphi %s12, %s12
          %s405 = sphi [#allocation11], [#allocation11]
        $region210: #{model_nest_split_forward.1} parent=206 // loop_header_branch
          %402 = sbr.rel (%p400) target = $region214
        $region211: #{model_nest_split_forward.1} parent=206 // loop_body
          %v406 = vld [vmem:[%s404] sm:$0xff]
          %407 = vst [vmem:[%s405] sm:$0xff] %v406
        $region212: #{model_nest_split_forward.1} parent=206 // loop_footer
          %s403 = sadd.s32 1, %s399
        $region213: #{model_nest_split_forward.1} parent=206 // loop_footer_branch
          %398 = sbr.rel target = $region209
        $region214: #{model_nest_split_forward.1} parent=206 // loop_exit
          _
      $region207: #{model_nest_split_forward.1} parent=191 // pred_fallthru
        _
      // Predicated region
      $region215: #{model_nest_split_forward.1} parent=191 // pred_check
        _
      $region216: #{model_nest_split_forward.1} parent=191 // pred_check_branch
        %409 = sbr.rel target = $region218
      $region217: #{model_nest_split_forward.1} parent=191 // pred_region
        _
      $region218: #{model_nest_split_forward.1} parent=191 // pred_fallthru
        _
    $region192: #{model_nest_split_forward.1} parent=16 // pred_fallthru
      _
    // Predicated region
    $region193: #{model_nest_split_forward.1} parent=16 // pred_check
      _
    $region194: #{model_nest_split_forward.1} parent=16 // pred_check_branch
      %383 = sbr.rel target = $region196
    $region195: #{model_nest_split_forward.1} parent=16 // pred_region
      %s385 = ssub.s32 256, 1
      loop: start=0, step=1, limit=1
      $region197: #{model_nest_split_forward.1} parent=195 // loop_pre_header
        _
      $region198: #{model_nest_split_forward.1} parent=195 // loop_header
        %s387 = sphi 0, %s391
        %p388 = scmp.ge.s32.totalorder %s387, 1
        %s392 = sphi %s12, %s12
        %s393 = sphi [#allocation11], [#allocation11]
      $region199: #{model_nest_split_forward.1} parent=195 // loop_header_branch
        %390 = sbr.rel (%p388) target = $region203
      $region200: #{model_nest_split_forward.1} parent=195 // loop_body
        %v394 = vld [vmem:[%s392] sm:%s385]
        %395 = vst [vmem:[%s393] sm:%s385] %v394
      $region201: #{model_nest_split_forward.1} parent=195 // loop_footer
        %s391 = sadd.s32 1, %s387
      $region202: #{model_nest_split_forward.1} parent=195 // loop_footer_branch
        %386 = sbr.rel target = $region198
      $region203: #{model_nest_split_forward.1} parent=195 // loop_exit
        _
    $region196: #{model_nest_split_forward.1} parent=16 // pred_fallthru
      _
    // Predicated region
    $region219: #{model_nest_split_forward.1} parent=16 // pred_check
      _
    $region220: #{model_nest_split_forward.1} parent=16 // pred_check_branch
      %412 = sbr.rel (0) target = $region222
    $region221: #{model_nest_split_forward.1} parent=16 // pred_region
      %413 = vsyncadd %s379, 128
    $region222: #{model_nest_split_forward.1} parent=16 // pred_fallthru
      _
    %s414 = scalar_lea.sflag [#allocation23], 10
    // Predicated region
    $region223: #{model_nest_split_forward.1} parent=16 // pred_check
      _
    $region224: #{model_nest_split_forward.1} parent=16 // pred_check_branch
      %416 = sbr.rel (0) target = $region226
    $region225: #{model_nest_split_forward.1} parent=16 // pred_region
      %s417 = scalar_lea.vmem %s13, 8
      %s418 = scalar_lea.vmem [#allocation12], 8
      loop: start=0, step=1, limit=1
      $region227: #{model_nest_split_forward.1} parent=225 // loop_pre_header
        _
      $region228: #{model_nest_split_forward.1} parent=225 // loop_header
        %s420 = sphi 0, %s424
        %p421 = scmp.ge.s32.totalorder %s420, 1
        %s425 = sphi %s13, %s13
        %s426 = sphi [#allocation12], [#allocation12]
      $region229: #{model_nest_split_forward.1} parent=225 // loop_header_branch
        %423 = sbr.rel (%p421) target = $region233
      $region230: #{model_nest_split_forward.1} parent=225 // loop_body
        %v427 = vld [vmem:[%s425] sm:$0xff]
        %428 = vst [vmem:[%s426] sm:$0xff] %v427
      $region231: #{model_nest_split_forward.1} parent=225 // loop_footer
        %s424 = sadd.s32 1, %s420
      $region232: #{model_nest_split_forward.1} parent=225 // loop_footer_branch
        %419 = sbr.rel target = $region228
      $region233: #{model_nest_split_forward.1} parent=225 // loop_exit
        _
      %s430 = ssub.s32 16, 1
      loop: start=0, step=1, limit=1
      $region234: #{model_nest_split_forward.1} parent=225 // loop_pre_header
        _
      $region235: #{model_nest_split_forward.1} parent=225 // loop_header
        %s432 = sphi 0, %s436
        %p433 = scmp.ge.s32.totalorder %s432, 1
        %s437 = sphi %s417, %s417
        %s438 = sphi %s418, %s418
      $region236: #{model_nest_split_forward.1} parent=225 // loop_header_branch
        %435 = sbr.rel (%p433) target = $region240
      $region237: #{model_nest_split_forward.1} parent=225 // loop_body
        %v439 = vld [vmem:[%s437] sm:%s430]
        %440 = vst [vmem:[%s438] sm:%s430] %v439
      $region238: #{model_nest_split_forward.1} parent=225 // loop_footer
        %s436 = sadd.s32 1, %s432
      $region239: #{model_nest_split_forward.1} parent=225 // loop_footer_branch
        %431 = sbr.rel target = $region235
      $region240: #{model_nest_split_forward.1} parent=225 // loop_exit
        _
    $region226: #{model_nest_split_forward.1} parent=16 // pred_fallthru
      _
    // Predicated region
    $region241: #{model_nest_split_forward.1} parent=16 // pred_check
      _
    $region242: #{model_nest_split_forward.1} parent=16 // pred_check_branch
      %443 = sbr.rel (0) target = $region244
    $region243: #{model_nest_split_forward.1} parent=16 // pred_region
      %444 = vsyncadd %s414, 192
    $region244: #{model_nest_split_forward.1} parent=16 // pred_fallthru
      _
    %s445 = scalar_lea.sflag [#allocation23], 11
    // Predicated region
    $region245: #{model_nest_split_forward.1} parent=16 // pred_check
      _
    $region246: #{model_nest_split_forward.1} parent=16 // pred_check_branch
      %447 = sbr.rel (0) target = $region248
    $region247: #{model_nest_split_forward.1} parent=16 // pred_region
      loop: start=0, step=1, limit=1
      $region249: #{model_nest_split_forward.1} parent=247 // loop_pre_header
        _
      $region250: #{model_nest_split_forward.1} parent=247 // loop_header
        %s449 = sphi 0, %s453
        %p450 = scmp.ge.s32.totalorder %s449, 1
        %s454 = sphi %s14, %s14
        %s455 = sphi [#allocation13], [#allocation13]
      $region251: #{model_nest_split_forward.1} parent=247 // loop_header_branch
        %452 = sbr.rel (%p450) target = $region255
      $region252: #{model_nest_split_forward.1} parent=247 // loop_body
        %v456 = vld [vmem:[%s454] sm:$0xff]
        %457 = vst [vmem:[%s455] sm:$0xff] %v456
        %v458 = vld [vmem:[%s454 + $0x8] sm:$0xff]
        %459 = vst [vmem:[%s455 + $0x8] sm:$0xff] %v458
        %v460 = vld [vmem:[%s454 + $0x10] sm:$0xff]
        %461 = vst [vmem:[%s455 + $0x10] sm:$0xff] %v460
        %v462 = vld [vmem:[%s454 + $0x18] sm:$0xff]
        %463 = vst [vmem:[%s455 + $0x18] sm:$0xff] %v462
        %v464 = vld [vmem:[%s454 + $0x20] sm:$0xff]
        %465 = vst [vmem:[%s455 + $0x20] sm:$0xff] %v464
      $region253: #{model_nest_split_forward.1} parent=247 // loop_footer
        %s453 = sadd.s32 1, %s449
      $region254: #{model_nest_split_forward.1} parent=247 // loop_footer_branch
        %448 = sbr.rel target = $region250
      $region255: #{model_nest_split_forward.1} parent=247 // loop_exit
        _
    $region248: #{model_nest_split_forward.1} parent=16 // pred_fallthru
      _
    // Predicated region
    $region256: #{model_nest_split_forward.1} parent=16 // pred_check
      _
    $region257: #{model_nest_split_forward.1} parent=16 // pred_check_branch
      %467 = sbr.rel target = $region259
    $region258: #{model_nest_split_forward.1} parent=16 // pred_region
      _
    $region259: #{model_nest_split_forward.1} parent=16 // pred_fallthru
      _
    // Predicated region
    $region260: #{model_nest_split_forward.1} parent=16 // pred_check
      _
    $region261: #{model_nest_split_forward.1} parent=16 // pred_check_branch
      %470 = sbr.rel (0) target = $region263
    $region262: #{model_nest_split_forward.1} parent=16 // pred_region
      %471 = vsyncadd %s445, 640
    $region263: #{model_nest_split_forward.1} parent=16 // pred_fallthru
      _
    %s472 = scalar_lea.sflag [#allocation23], 12
    // Predicated region
    $region264: #{model_nest_split_forward.1} parent=16 // pred_check
      _
    $region265: #{model_nest_split_forward.1} parent=16 // pred_check_branch
      %474 = sbr.rel (0) target = $region267
    $region266: #{model_nest_split_forward.1} parent=16 // pred_region
      loop: start=0, step=1, limit=1
      $region268: #{model_nest_split_forward.1} parent=266 // loop_pre_header
        _
      $region269: #{model_nest_split_forward.1} parent=266 // loop_header
        %s476 = sphi 0, %s480
        %p477 = scmp.ge.s32.totalorder %s476, 1
        %s481 = sphi %s15, %s15
        %s482 = sphi [#allocation14], [#allocation14]
      $region270: #{model_nest_split_forward.1} parent=266 // loop_header_branch
        %479 = sbr.rel (%p477) target = $region274
      $region271: #{model_nest_split_forward.1} parent=266 // loop_body
        %v483 = vld [vmem:[%s481] sm:$0xff]
        %484 = vst [vmem:[%s482] sm:$0xff] %v483
        %v485 = vld [vmem:[%s481 + $0x8] sm:$0xff]
        %486 = vst [vmem:[%s482 + $0x8] sm:$0xff] %v485
        %v487 = vld [vmem:[%s481 + $0x10] sm:$0xff]
        %488 = vst [vmem:[%s482 + $0x10] sm:$0xff] %v487
        %v489 = vld [vmem:[%s481 + $0x18] sm:$0xff]
        %490 = vst [vmem:[%s482 + $0x18] sm:$0xff] %v489
        %v491 = vld [vmem:[%s481 + $0x20] sm:$0xff]
        %492 = vst [vmem:[%s482 + $0x20] sm:$0xff] %v491
        %v493 = vld [vmem:[%s481 + $0x28] sm:$0xff]
        %494 = vst [vmem:[%s482 + $0x28] sm:$0xff] %v493
        %v495 = vld [vmem:[%s481 + $0x30] sm:$0xff]
        %496 = vst [vmem:[%s482 + $0x30] sm:$0xff] %v495
        %v497 = vld [vmem:[%s481 + $0x38] sm:$0xff]
        %498 = vst [vmem:[%s482 + $0x38] sm:$0xff] %v497
        %v499 = vld [vmem:[%s481 + $0x40] sm:$0xff]
        %500 = vst [vmem:[%s482 + $0x40] sm:$0xff] %v499
        %v501 = vld [vmem:[%s481 + $0x48] sm:$0xff]
        %502 = vst [vmem:[%s482 + $0x48] sm:$0xff] %v501
        %v503 = vld [vmem:[%s481 + $0x50] sm:$0xff]
        %504 = vst [vmem:[%s482 + $0x50] sm:$0xff] %v503
        %v505 = vld [vmem:[%s481 + $0x58] sm:$0xff]
        %506 = vst [vmem:[%s482 + $0x58] sm:$0xff] %v505
        %v507 = vld [vmem:[%s481 + $0x60] sm:$0xff]
        %508 = vst [vmem:[%s482 + $0x60] sm:$0xff] %v507
        %v509 = vld [vmem:[%s481 + $0x68] sm:$0xff]
        %510 = vst [vmem:[%s482 + $0x68] sm:$0xff] %v509
      $region272: #{model_nest_split_forward.1} parent=266 // loop_footer
        %s480 = sadd.s32 1, %s476
      $region273: #{model_nest_split_forward.1} parent=266 // loop_footer_branch
        %475 = sbr.rel target = $region269
      $region274: #{model_nest_split_forward.1} parent=266 // loop_exit
        _
    $region267: #{model_nest_split_forward.1} parent=16 // pred_fallthru
      _
    // Predicated region
    $region275: #{model_nest_split_forward.1} parent=16 // pred_check
      _
    $region276: #{model_nest_split_forward.1} parent=16 // pred_check_branch
      %512 = sbr.rel target = $region278
    $region277: #{model_nest_split_forward.1} parent=16 // pred_region
      _
    $region278: #{model_nest_split_forward.1} parent=16 // pred_fallthru
      _
    // Predicated region
    $region279: #{model_nest_split_forward.1} parent=16 // pred_check
      _
    $region280: #{model_nest_split_forward.1} parent=16 // pred_check_branch
      %515 = sbr.rel (0) target = $region282
    $region281: #{model_nest_split_forward.1} parent=16 // pred_region
      %516 = vsyncadd %s472, 1792
    $region282: #{model_nest_split_forward.1} parent=16 // pred_fallthru
      _
    %s517 = scalar_lea.sflag [#allocation23], 13
    // Predicated region
    $region283: #{model_nest_split_forward.1} parent=16 // pred_check
      _
    $region284: #{model_nest_split_forward.1} parent=16 // pred_check_branch
      %519 = sbr.rel (0) target = $region286
    $region285: #{model_nest_split_forward.1} parent=16 // pred_region
      loop: start=0, step=1, limit=1
      $region287: #{model_nest_split_forward.1} parent=285 // loop_pre_header
        _
      $region288: #{model_nest_split_forward.1} parent=285 // loop_header
        %s521 = sphi 0, %s525
        %p522 = scmp.ge.s32.totalorder %s521, 1
        %s526 = sphi %s16, %s16
        %s527 = sphi [#allocation15], [#allocation15]
      $region289: #{model_nest_split_forward.1} parent=285 // loop_header_branch
        %524 = sbr.rel (%p522) target = $region293
      $region290: #{model_nest_split_forward.1} parent=285 // loop_body
        %v528 = vld [vmem:[%s526] sm:$0xff]
        %529 = vst [vmem:[%s527] sm:$0xff] %v528
        %v530 = vld [vmem:[%s526 + $0x8] sm:$0xff]
        %531 = vst [vmem:[%s527 + $0x8] sm:$0xff] %v530
        %v532 = vld [vmem:[%s526 + $0x10] sm:$0xff]
        %533 = vst [vmem:[%s527 + $0x10] sm:$0xff] %v532
        %v534 = vld [vmem:[%s526 + $0x18] sm:$0xff]
        %535 = vst [vmem:[%s527 + $0x18] sm:$0xff] %v534
        %v536 = vld [vmem:[%s526 + $0x20] sm:$0xff]
        %537 = vst [vmem:[%s527 + $0x20] sm:$0xff] %v536
        %v538 = vld [vmem:[%s526 + $0x28] sm:$0xff]
        %539 = vst [vmem:[%s527 + $0x28] sm:$0xff] %v538
        %v540 = vld [vmem:[%s526 + $0x30] sm:$0xff]
        %541 = vst [vmem:[%s527 + $0x30] sm:$0xff] %v540
        %v542 = vld [vmem:[%s526 + $0x38] sm:$0xff]
        %543 = vst [vmem:[%s527 + $0x38] sm:$0xff] %v542
        %v544 = vld [vmem:[%s526 + $0x40] sm:$0xff]
        %545 = vst [vmem:[%s527 + $0x40] sm:$0xff] %v544
        %v546 = vld [vmem:[%s526 + $0x48] sm:$0xff]
        %547 = vst [vmem:[%s527 + $0x48] sm:$0xff] %v546
        %v548 = vld [vmem:[%s526 + $0x50] sm:$0xff]
        %549 = vst [vmem:[%s527 + $0x50] sm:$0xff] %v548
        %v550 = vld [vmem:[%s526 + $0x58] sm:$0xff]
        %551 = vst [vmem:[%s527 + $0x58] sm:$0xff] %v550
        %v552 = vld [vmem:[%s526 + $0x60] sm:$0xff]
        %553 = vst [vmem:[%s527 + $0x60] sm:$0xff] %v552
        %v554 = vld [vmem:[%s526 + $0x68] sm:$0xff]
        %555 = vst [vmem:[%s527 + $0x68] sm:$0xff] %v554
        %v556 = vld [vmem:[%s526 + $0x70] sm:$0xff]
        %557 = vst [vmem:[%s527 + $0x70] sm:$0xff] %v556
        %v558 = vld [vmem:[%s526 + $0x78] sm:$0xff]
        %559 = vst [vmem:[%s527 + $0x78] sm:$0xff] %v558
        %v560 = vld [vmem:[%s526 + $0x80] sm:$0xff]
        %561 = vst [vmem:[%s527 + $0x80] sm:$0xff] %v560
        %v562 = vld [vmem:[%s526 + $0x88] sm:$0xff]
        %563 = vst [vmem:[%s527 + $0x88] sm:$0xff] %v562
        %v564 = vld [vmem:[%s526 + $0x90] sm:$0xff]
        %565 = vst [vmem:[%s527 + $0x90] sm:$0xff] %v564
        %v566 = vld [vmem:[%s526 + $0x98] sm:$0xff]
        %567 = vst [vmem:[%s527 + $0x98] sm:$0xff] %v566
        %v568 = vld [vmem:[%s526 + $0xa0] sm:$0xff]
        %569 = vst [vmem:[%s527 + $0xa0] sm:$0xff] %v568
        %v570 = vld [vmem:[%s526 + $0xa8] sm:$0xff]
        %571 = vst [vmem:[%s527 + $0xa8] sm:$0xff] %v570
        %v572 = vld [vmem:[%s526 + $0xb0] sm:$0xff]
        %573 = vst [vmem:[%s527 + $0xb0] sm:$0xff] %v572
        %v574 = vld [vmem:[%s526 + $0xb8] sm:$0xff]
        %575 = vst [vmem:[%s527 + $0xb8] sm:$0xff] %v574
        %v576 = vld [vmem:[%s526 + $0xc0] sm:$0xff]
        %577 = vst [vmem:[%s527 + $0xc0] sm:$0xff] %v576
        %v578 = vld [vmem:[%s526 + $0xc8] sm:$0xff]
        %579 = vst [vmem:[%s527 + $0xc8] sm:$0xff] %v578
        %v580 = vld [vmem:[%s526 + $0xd0] sm:$0xff]
        %581 = vst [vmem:[%s527 + $0xd0] sm:$0xff] %v580
        %v582 = vld [vmem:[%s526 + $0xd8] sm:$0xff]
        %583 = vst [vmem:[%s527 + $0xd8] sm:$0xff] %v582
        %v584 = vld [vmem:[%s526 + $0xe0] sm:$0xff]
        %585 = vst [vmem:[%s527 + $0xe0] sm:$0xff] %v584
        %v586 = vld [vmem:[%s526 + $0xe8] sm:$0xff]
        %587 = vst [vmem:[%s527 + $0xe8] sm:$0xff] %v586
        %v588 = vld [vmem:[%s526 + $0xf0] sm:$0xff]
        %589 = vst [vmem:[%s527 + $0xf0] sm:$0xff] %v588
        %v590 = vld [vmem:[%s526 + $0xf8] sm:$0xff]
        %591 = vst [vmem:[%s527 + $0xf8] sm:$0xff] %v590
        %v592 = vld [vmem:[%s526 + $0x100] sm:$0xff]
        %593 = vst [vmem:[%s527 + $0x100] sm:$0xff] %v592
        %v594 = vld [vmem:[%s526 + $0x108] sm:$0xff]
        %595 = vst [vmem:[%s527 + $0x108] sm:$0xff] %v594
        %v596 = vld [vmem:[%s526 + $0x110] sm:$0xff]
        %597 = vst [vmem:[%s527 + $0x110] sm:$0xff] %v596
        %v598 = vld [vmem:[%s526 + $0x118] sm:$0xff]
        %599 = vst [vmem:[%s527 + $0x118] sm:$0xff] %v598
      $region291: #{model_nest_split_forward.1} parent=285 // loop_footer
        %s525 = sadd.s32 1, %s521
      $region292: #{model_nest_split_forward.1} parent=285 // loop_footer_branch
        %520 = sbr.rel target = $region288
      $region293: #{model_nest_split_forward.1} parent=285 // loop_exit
        _
    $region286: #{model_nest_split_forward.1} parent=16 // pred_fallthru
      _
    // Predicated region
    $region294: #{model_nest_split_forward.1} parent=16 // pred_check
      _
    $region295: #{model_nest_split_forward.1} parent=16 // pred_check_branch
      %601 = sbr.rel target = $region297
    $region296: #{model_nest_split_forward.1} parent=16 // pred_region
      _
    $region297: #{model_nest_split_forward.1} parent=16 // pred_fallthru
      _
    // Predicated region
    $region298: #{model_nest_split_forward.1} parent=16 // pred_check
      _
    $region299: #{model_nest_split_forward.1} parent=16 // pred_check_branch
      %604 = sbr.rel (0) target = $region301
    $region300: #{model_nest_split_forward.1} parent=16 // pred_region
      %605 = vsyncadd %s517, 4608
    $region301: #{model_nest_split_forward.1} parent=16 // pred_fallthru
      _
    %s606 = scalar_lea.sflag [#allocation23], 14
    // Predicated region
    $region302: #{model_nest_split_forward.1} parent=16 // pred_check
      _
    $region303: #{model_nest_split_forward.1} parent=16 // pred_check_branch
      %608 = sbr.rel target = $region305
    $region304: #{model_nest_split_forward.1} parent=16 // pred_region
      // Predicated region
      $region317: #{model_nest_split_forward.1} parent=304 // pred_check
        _
      $region318: #{model_nest_split_forward.1} parent=304 // pred_check_branch
        %624 = sbr.rel (0) target = $region320
      $region319: #{model_nest_split_forward.1} parent=304 // pred_region
        %s626 = ssub.s32 16, 1
        loop: start=0, step=1, limit=1
        $region321: #{model_nest_split_forward.1} parent=319 // loop_pre_header
          _
        $region322: #{model_nest_split_forward.1} parent=319 // loop_header
          %s628 = sphi 0, %s632
          %p629 = scmp.ge.s32.totalorder %s628, 1
          %s633 = sphi %s17, %s17
          %s634 = sphi [#allocation16], [#allocation16]
        $region323: #{model_nest_split_forward.1} parent=319 // loop_header_branch
          %631 = sbr.rel (%p629) target = $region327
        $region324: #{model_nest_split_forward.1} parent=319 // loop_body
          %v635 = vld [vmem:[%s633] sm:%s626]
          %636 = vst [vmem:[%s634] sm:%s626] %v635
        $region325: #{model_nest_split_forward.1} parent=319 // loop_footer
          %s632 = sadd.s32 1, %s628
        $region326: #{model_nest_split_forward.1} parent=319 // loop_footer_branch
          %627 = sbr.rel target = $region322
        $region327: #{model_nest_split_forward.1} parent=319 // loop_exit
          _
      $region320: #{model_nest_split_forward.1} parent=304 // pred_fallthru
        _
    $region305: #{model_nest_split_forward.1} parent=16 // pred_fallthru
      _
    // Predicated region
    $region306: #{model_nest_split_forward.1} parent=16 // pred_check
      _
    $region307: #{model_nest_split_forward.1} parent=16 // pred_check_branch
      %610 = sbr.rel (0) target = $region309
    $region308: #{model_nest_split_forward.1} parent=16 // pred_region
      %s612 = ssub.s32 16, 1
      loop: start=0, step=1, limit=1
      $region310: #{model_nest_split_forward.1} parent=308 // loop_pre_header
        _
      $region311: #{model_nest_split_forward.1} parent=308 // loop_header
        %s614 = sphi 0, %s618
        %p615 = scmp.ge.s32.totalorder %s614, 1
        %s619 = sphi %s17, %s17
        %s620 = sphi [#allocation16], [#allocation16]
      $region312: #{model_nest_split_forward.1} parent=308 // loop_header_branch
        %617 = sbr.rel (%p615) target = $region316
      $region313: #{model_nest_split_forward.1} parent=308 // loop_body
        %v621 = vld [vmem:[%s619] sm:%s612]
        %622 = vst [vmem:[%s620] sm:%s612] %v621
      $region314: #{model_nest_split_forward.1} parent=308 // loop_footer
        %s618 = sadd.s32 1, %s614
      $region315: #{model_nest_split_forward.1} parent=308 // loop_footer_branch
        %613 = sbr.rel target = $region311
      $region316: #{model_nest_split_forward.1} parent=308 // loop_exit
        _
    $region309: #{model_nest_split_forward.1} parent=16 // pred_fallthru
      _
    // Predicated region
    $region328: #{model_nest_split_forward.1} parent=16 // pred_check
      _
    $region329: #{model_nest_split_forward.1} parent=16 // pred_check_branch
      %639 = sbr.rel (0) target = $region331
    $region330: #{model_nest_split_forward.1} parent=16 // pred_region
      %640 = vsyncadd %s606, 64
    $region331: #{model_nest_split_forward.1} parent=16 // pred_fallthru
      _
    %s641 = scalar_lea.sflag [#allocation23], 15
    // Predicated region
    $region332: #{model_nest_split_forward.1} parent=16 // pred_check
      _
    $region333: #{model_nest_split_forward.1} parent=16 // pred_check_branch
      %643 = sbr.rel target = $region335
    $region334: #{model_nest_split_forward.1} parent=16 // pred_region
      // Predicated region
      $region347: #{model_nest_split_forward.1} parent=334 // pred_check
        _
      $region348: #{model_nest_split_forward.1} parent=334 // pred_check_branch
        %659 = sbr.rel (0) target = $region350
      $region349: #{model_nest_split_forward.1} parent=334 // pred_region
        %s661 = ssub.s32 64, 1
        loop: start=0, step=1, limit=1
        $region351: #{model_nest_split_forward.1} parent=349 // loop_pre_header
          _
        $region352: #{model_nest_split_forward.1} parent=349 // loop_header
          %s663 = sphi 0, %s667
          %p664 = scmp.ge.s32.totalorder %s663, 1
          %s668 = sphi %s18, %s18
          %s669 = sphi [#allocation17], [#allocation17]
        $region353: #{model_nest_split_forward.1} parent=349 // loop_header_branch
          %666 = sbr.rel (%p664) target = $region357
        $region354: #{model_nest_split_forward.1} parent=349 // loop_body
          %v670 = vld [vmem:[%s668] sm:%s661]
          %671 = vst [vmem:[%s669] sm:%s661] %v670
        $region355: #{model_nest_split_forward.1} parent=349 // loop_footer
          %s667 = sadd.s32 1, %s663
        $region356: #{model_nest_split_forward.1} parent=349 // loop_footer_branch
          %662 = sbr.rel target = $region352
        $region357: #{model_nest_split_forward.1} parent=349 // loop_exit
          _
      $region350: #{model_nest_split_forward.1} parent=334 // pred_fallthru
        _
    $region335: #{model_nest_split_forward.1} parent=16 // pred_fallthru
      _
    // Predicated region
    $region336: #{model_nest_split_forward.1} parent=16 // pred_check
      _
    $region337: #{model_nest_split_forward.1} parent=16 // pred_check_branch
      %645 = sbr.rel (0) target = $region339
    $region338: #{model_nest_split_forward.1} parent=16 // pred_region
      %s647 = ssub.s32 64, 1
      loop: start=0, step=1, limit=1
      $region340: #{model_nest_split_forward.1} parent=338 // loop_pre_header
        _
      $region341: #{model_nest_split_forward.1} parent=338 // loop_header
        %s649 = sphi 0, %s653
        %p650 = scmp.ge.s32.totalorder %s649, 1
        %s654 = sphi %s18, %s18
        %s655 = sphi [#allocation17], [#allocation17]
      $region342: #{model_nest_split_forward.1} parent=338 // loop_header_branch
        %652 = sbr.rel (%p650) target = $region346
      $region343: #{model_nest_split_forward.1} parent=338 // loop_body
        %v656 = vld [vmem:[%s654] sm:%s647]
        %657 = vst [vmem:[%s655] sm:%s647] %v656
      $region344: #{model_nest_split_forward.1} parent=338 // loop_footer
        %s653 = sadd.s32 1, %s649
      $region345: #{model_nest_split_forward.1} parent=338 // loop_footer_branch
        %648 = sbr.rel target = $region341
      $region346: #{model_nest_split_forward.1} parent=338 // loop_exit
        _
    $region339: #{model_nest_split_forward.1} parent=16 // pred_fallthru
      _
    // Predicated region
    $region358: #{model_nest_split_forward.1} parent=16 // pred_check
      _
    $region359: #{model_nest_split_forward.1} parent=16 // pred_check_branch
      %674 = sbr.rel (0) target = $region361
    $region360: #{model_nest_split_forward.1} parent=16 // pred_region
      %675 = vsyncadd %s641, 96
    $region361: #{model_nest_split_forward.1} parent=16 // pred_fallthru
      _
    %s676 = scalar_lea.sflag [#allocation23], 16
    // Predicated region
    $region362: #{model_nest_split_forward.1} parent=16 // pred_check
      _
    $region363: #{model_nest_split_forward.1} parent=16 // pred_check_branch
      %678 = sbr.rel (0) target = $region365
    $region364: #{model_nest_split_forward.1} parent=16 // pred_region
      %s679 = scalar_lea.vmem %s19, 16
      %s680 = scalar_lea.vmem [#allocation18], 16
      loop: start=0, step=1, limit=1
      $region366: #{model_nest_split_forward.1} parent=364 // loop_pre_header
        _
      $region367: #{model_nest_split_forward.1} parent=364 // loop_header
        %s682 = sphi 0, %s686
        %p683 = scmp.ge.s32.totalorder %s682, 1
        %s687 = sphi %s19, %s19
        %s688 = sphi [#allocation18], [#allocation18]
      $region368: #{model_nest_split_forward.1} parent=364 // loop_header_branch
        %685 = sbr.rel (%p683) target = $region372
      $region369: #{model_nest_split_forward.1} parent=364 // loop_body
        %v689 = vld [vmem:[%s687] sm:$0xff]
        %690 = vst [vmem:[%s688] sm:$0xff] %v689
        %v691 = vld [vmem:[%s687 + $0x8] sm:$0xff]
        %692 = vst [vmem:[%s688 + $0x8] sm:$0xff] %v691
      $region370: #{model_nest_split_forward.1} parent=364 // loop_footer
        %s686 = sadd.s32 1, %s682
      $region371: #{model_nest_split_forward.1} parent=364 // loop_footer_branch
        %681 = sbr.rel target = $region367
      $region372: #{model_nest_split_forward.1} parent=364 // loop_exit
        _
      %s694 = ssub.s32 16, 1
      loop: start=0, step=1, limit=1
      $region373: #{model_nest_split_forward.1} parent=364 // loop_pre_header
        _
      $region374: #{model_nest_split_forward.1} parent=364 // loop_header
        %s696 = sphi 0, %s700
        %p697 = scmp.ge.s32.totalorder %s696, 1
        %s701 = sphi %s679, %s679
        %s702 = sphi %s680, %s680
      $region375: #{model_nest_split_forward.1} parent=364 // loop_header_branch
        %699 = sbr.rel (%p697) target = $region379
      $region376: #{model_nest_split_forward.1} parent=364 // loop_body
        %v703 = vld [vmem:[%s701] sm:%s694]
        %704 = vst [vmem:[%s702] sm:%s694] %v703
      $region377: #{model_nest_split_forward.1} parent=364 // loop_footer
        %s700 = sadd.s32 1, %s696
      $region378: #{model_nest_split_forward.1} parent=364 // loop_footer_branch
        %695 = sbr.rel target = $region374
      $region379: #{model_nest_split_forward.1} parent=364 // loop_exit
        _
    $region365: #{model_nest_split_forward.1} parent=16 // pred_fallthru
      _
    // Predicated region
    $region380: #{model_nest_split_forward.1} parent=16 // pred_check
      _
    $region381: #{model_nest_split_forward.1} parent=16 // pred_check_branch
      %707 = sbr.rel (0) target = $region383
    $region382: #{model_nest_split_forward.1} parent=16 // pred_region
      %708 = vsyncadd %s676, 320
    $region383: #{model_nest_split_forward.1} parent=16 // pred_fallthru
      _
    %s709 = scalar_lea.sflag [#allocation23], 17
    // Predicated region
    $region384: #{model_nest_split_forward.1} parent=16 // pred_check
      _
    $region385: #{model_nest_split_forward.1} parent=16 // pred_check_branch
      %711 = sbr.rel (0) target = $region387
    $region386: #{model_nest_split_forward.1} parent=16 // pred_region
      loop: start=0, step=1, limit=1
      $region388: #{model_nest_split_forward.1} parent=386 // loop_pre_header
        _
      $region389: #{model_nest_split_forward.1} parent=386 // loop_header
        %s713 = sphi 0, %s717
        %p714 = scmp.ge.s32.totalorder %s713, 1
        %s718 = sphi %s20, %s20
        %s719 = sphi [#allocation19], [#allocation19]
      $region390: #{model_nest_split_forward.1} parent=386 // loop_header_branch
        %716 = sbr.rel (%p714) target = $region394
      $region391: #{model_nest_split_forward.1} parent=386 // loop_body
        %v720 = vld [vmem:[%s718] sm:$0xff]
        %721 = vst [vmem:[%s719] sm:$0xff] %v720
        %v722 = vld [vmem:[%s718 + $0x8] sm:$0xff]
        %723 = vst [vmem:[%s719 + $0x8] sm:$0xff] %v722
        %v724 = vld [vmem:[%s718 + $0x10] sm:$0xff]
        %725 = vst [vmem:[%s719 + $0x10] sm:$0xff] %v724
        %v726 = vld [vmem:[%s718 + $0x18] sm:$0xff]
        %727 = vst [vmem:[%s719 + $0x18] sm:$0xff] %v726
        %v728 = vld [vmem:[%s718 + $0x20] sm:$0xff]
        %729 = vst [vmem:[%s719 + $0x20] sm:$0xff] %v728
        %v730 = vld [vmem:[%s718 + $0x28] sm:$0xff]
        %731 = vst [vmem:[%s719 + $0x28] sm:$0xff] %v730
        %v732 = vld [vmem:[%s718 + $0x30] sm:$0xff]
        %733 = vst [vmem:[%s719 + $0x30] sm:$0xff] %v732
      $region392: #{model_nest_split_forward.1} parent=386 // loop_footer
        %s717 = sadd.s32 1, %s713
      $region393: #{model_nest_split_forward.1} parent=386 // loop_footer_branch
        %712 = sbr.rel target = $region389
      $region394: #{model_nest_split_forward.1} parent=386 // loop_exit
        _
    $region387: #{model_nest_split_forward.1} parent=16 // pred_fallthru
      _
    // Predicated region
    $region395: #{model_nest_split_forward.1} parent=16 // pred_check
      _
    $region396: #{model_nest_split_forward.1} parent=16 // pred_check_branch
      %735 = sbr.rel target = $region398
    $region397: #{model_nest_split_forward.1} parent=16 // pred_region
      _
    $region398: #{model_nest_split_forward.1} parent=16 // pred_fallthru
      _
    // Predicated region
    $region399: #{model_nest_split_forward.1} parent=16 // pred_check
      _
    $region400: #{model_nest_split_forward.1} parent=16 // pred_check_branch
      %738 = sbr.rel (0) target = $region402
    $region401: #{model_nest_split_forward.1} parent=16 // pred_region
      %739 = vsyncadd %s709, 896
    $region402: #{model_nest_split_forward.1} parent=16 // pred_fallthru
      _
    %s740 = scalar_lea.sflag [#allocation23], 18
    // Predicated region
    $region403: #{model_nest_split_forward.1} parent=16 // pred_check
      _
    $region404: #{model_nest_split_forward.1} parent=16 // pred_check_branch
      %742 = sbr.rel (0) target = $region406
    $region405: #{model_nest_split_forward.1} parent=16 // pred_region
      loop: start=0, step=1, limit=1
      $region407: #{model_nest_split_forward.1} parent=405 // loop_pre_header
        _
      $region408: #{model_nest_split_forward.1} parent=405 // loop_header
        %s744 = sphi 0, %s748
        %p745 = scmp.ge.s32.totalorder %s744, 1
        %s749 = sphi %s21, %s21
        %s750 = sphi [#allocation20], [#allocation20]
      $region409: #{model_nest_split_forward.1} parent=405 // loop_header_branch
        %747 = sbr.rel (%p745) target = $region413
      $region410: #{model_nest_split_forward.1} parent=405 // loop_body
        %v751 = vld [vmem:[%s749] sm:$0xff]
        %752 = vst [vmem:[%s750] sm:$0xff] %v751
        %v753 = vld [vmem:[%s749 + $0x8] sm:$0xff]
        %754 = vst [vmem:[%s750 + $0x8] sm:$0xff] %v753
        %v755 = vld [vmem:[%s749 + $0x10] sm:$0xff]
        %756 = vst [vmem:[%s750 + $0x10] sm:$0xff] %v755
        %v757 = vld [vmem:[%s749 + $0x18] sm:$0xff]
        %758 = vst [vmem:[%s750 + $0x18] sm:$0xff] %v757
        %v759 = vld [vmem:[%s749 + $0x20] sm:$0xff]
        %760 = vst [vmem:[%s750 + $0x20] sm:$0xff] %v759
        %v761 = vld [vmem:[%s749 + $0x28] sm:$0xff]
        %762 = vst [vmem:[%s750 + $0x28] sm:$0xff] %v761
        %v763 = vld [vmem:[%s749 + $0x30] sm:$0xff]
        %764 = vst [vmem:[%s750 + $0x30] sm:$0xff] %v763
        %v765 = vld [vmem:[%s749 + $0x38] sm:$0xff]
        %766 = vst [vmem:[%s750 + $0x38] sm:$0xff] %v765
        %v767 = vld [vmem:[%s749 + $0x40] sm:$0xff]
        %768 = vst [vmem:[%s750 + $0x40] sm:$0xff] %v767
        %v769 = vld [vmem:[%s749 + $0x48] sm:$0xff]
        %770 = vst [vmem:[%s750 + $0x48] sm:$0xff] %v769
        %v771 = vld [vmem:[%s749 + $0x50] sm:$0xff]
        %772 = vst [vmem:[%s750 + $0x50] sm:$0xff] %v771
        %v773 = vld [vmem:[%s749 + $0x58] sm:$0xff]
        %774 = vst [vmem:[%s750 + $0x58] sm:$0xff] %v773
        %v775 = vld [vmem:[%s749 + $0x60] sm:$0xff]
        %776 = vst [vmem:[%s750 + $0x60] sm:$0xff] %v775
        %v777 = vld [vmem:[%s749 + $0x68] sm:$0xff]
        %778 = vst [vmem:[%s750 + $0x68] sm:$0xff] %v777
        %v779 = vld [vmem:[%s749 + $0x70] sm:$0xff]
        %780 = vst [vmem:[%s750 + $0x70] sm:$0xff] %v779
        %v781 = vld [vmem:[%s749 + $0x78] sm:$0xff]
        %782 = vst [vmem:[%s750 + $0x78] sm:$0xff] %v781
        %v783 = vld [vmem:[%s749 + $0x80] sm:$0xff]
        %784 = vst [vmem:[%s750 + $0x80] sm:$0xff] %v783
        %v785 = vld [vmem:[%s749 + $0x88] sm:$0xff]
        %786 = vst [vmem:[%s750 + $0x88] sm:$0xff] %v785
      $region411: #{model_nest_split_forward.1} parent=405 // loop_footer
        %s748 = sadd.s32 1, %s744
      $region412: #{model_nest_split_forward.1} parent=405 // loop_footer_branch
        %743 = sbr.rel target = $region408
      $region413: #{model_nest_split_forward.1} parent=405 // loop_exit
        _
    $region406: #{model_nest_split_forward.1} parent=16 // pred_fallthru
      _
    // Predicated region
    $region414: #{model_nest_split_forward.1} parent=16 // pred_check
      _
    $region415: #{model_nest_split_forward.1} parent=16 // pred_check_branch
      %788 = sbr.rel target = $region417
    $region416: #{model_nest_split_forward.1} parent=16 // pred_region
      _
    $region417: #{model_nest_split_forward.1} parent=16 // pred_fallthru
      _
    // Predicated region
    $region418: #{model_nest_split_forward.1} parent=16 // pred_check
      _
    $region419: #{model_nest_split_forward.1} parent=16 // pred_check_branch
      %791 = sbr.rel (0) target = $region421
    $region420: #{model_nest_split_forward.1} parent=16 // pred_region
      %792 = vsyncadd %s740, 2304
    $region421: #{model_nest_split_forward.1} parent=16 // pred_fallthru
      _
    %s793 = scalar_lea.sflag [#allocation23], 19
    // Predicated region
    $region422: #{model_nest_split_forward.1} parent=16 // pred_check
      _
    $region423: #{model_nest_split_forward.1} parent=16 // pred_check_branch
      %795 = sbr.rel (0) target = $region425
    $region424: #{model_nest_split_forward.1} parent=16 // pred_region
      loop: start=0, step=1, limit=1
      $region426: #{model_nest_split_forward.1} parent=424 // loop_pre_header
        _
      $region427: #{model_nest_split_forward.1} parent=424 // loop_header
        %s797 = sphi 0, %s801
        %p798 = scmp.ge.s32.totalorder %s797, 1
        %s802 = sphi %s22, %s22
        %s803 = sphi [#allocation21], [#allocation21]
      $region428: #{model_nest_split_forward.1} parent=424 // loop_header_branch
        %800 = sbr.rel (%p798) target = $region432
      $region429: #{model_nest_split_forward.1} parent=424 // loop_body
        %v804 = vld [vmem:[%s802] sm:$0xff]
        %805 = vst [vmem:[%s803] sm:$0xff] %v804
        %v806 = vld [vmem:[%s802 + $0x8] sm:$0xff]
        %807 = vst [vmem:[%s803 + $0x8] sm:$0xff] %v806
        %v808 = vld [vmem:[%s802 + $0x10] sm:$0xff]
        %809 = vst [vmem:[%s803 + $0x10] sm:$0xff] %v808
        %v810 = vld [vmem:[%s802 + $0x18] sm:$0xff]
        %811 = vst [vmem:[%s803 + $0x18] sm:$0xff] %v810
        %v812 = vld [vmem:[%s802 + $0x20] sm:$0xff]
        %813 = vst [vmem:[%s803 + $0x20] sm:$0xff] %v812
        %v814 = vld [vmem:[%s802 + $0x28] sm:$0xff]
        %815 = vst [vmem:[%s803 + $0x28] sm:$0xff] %v814
        %v816 = vld [vmem:[%s802 + $0x30] sm:$0xff]
        %817 = vst [vmem:[%s803 + $0x30] sm:$0xff] %v816
        %v818 = vld [vmem:[%s802 + $0x38] sm:$0xff]
        %819 = vst [vmem:[%s803 + $0x38] sm:$0xff] %v818
        %v820 = vld [vmem:[%s802 + $0x40] sm:$0xff]
        %821 = vst [vmem:[%s803 + $0x40] sm:$0xff] %v820
        %v822 = vld [vmem:[%s802 + $0x48] sm:$0xff]
        %823 = vst [vmem:[%s803 + $0x48] sm:$0xff] %v822
        %v824 = vld [vmem:[%s802 + $0x50] sm:$0xff]
        %825 = vst [vmem:[%s803 + $0x50] sm:$0xff] %v824
        %v826 = vld [vmem:[%s802 + $0x58] sm:$0xff]
        %827 = vst [vmem:[%s803 + $0x58] sm:$0xff] %v826
        %v828 = vld [vmem:[%s802 + $0x60] sm:$0xff]
        %829 = vst [vmem:[%s803 + $0x60] sm:$0xff] %v828
        %v830 = vld [vmem:[%s802 + $0x68] sm:$0xff]
        %831 = vst [vmem:[%s803 + $0x68] sm:$0xff] %v830
        %v832 = vld [vmem:[%s802 + $0x70] sm:$0xff]
        %833 = vst [vmem:[%s803 + $0x70] sm:$0xff] %v832
        %v834 = vld [vmem:[%s802 + $0x78] sm:$0xff]
        %835 = vst [vmem:[%s803 + $0x78] sm:$0xff] %v834
        %v836 = vld [vmem:[%s802 + $0x80] sm:$0xff]
        %837 = vst [vmem:[%s803 + $0x80] sm:$0xff] %v836
        %v838 = vld [vmem:[%s802 + $0x88] sm:$0xff]
        %839 = vst [vmem:[%s803 + $0x88] sm:$0xff] %v838
        %v840 = vld [vmem:[%s802 + $0x90] sm:$0xff]
        %841 = vst [vmem:[%s803 + $0x90] sm:$0xff] %v840
        %v842 = vld [vmem:[%s802 + $0x98] sm:$0xff]
        %843 = vst [vmem:[%s803 + $0x98] sm:$0xff] %v842
        %v844 = vld [vmem:[%s802 + $0xa0] sm:$0xff]
        %845 = vst [vmem:[%s803 + $0xa0] sm:$0xff] %v844
        %v846 = vld [vmem:[%s802 + $0xa8] sm:$0xff]
        %847 = vst [vmem:[%s803 + $0xa8] sm:$0xff] %v846
        %v848 = vld [vmem:[%s802 + $0xb0] sm:$0xff]
        %849 = vst [vmem:[%s803 + $0xb0] sm:$0xff] %v848
        %v850 = vld [vmem:[%s802 + $0xb8] sm:$0xff]
        %851 = vst [vmem:[%s803 + $0xb8] sm:$0xff] %v850
        %v852 = vld [vmem:[%s802 + $0xc0] sm:$0xff]
        %853 = vst [vmem:[%s803 + $0xc0] sm:$0xff] %v852
        %v854 = vld [vmem:[%s802 + $0xc8] sm:$0xff]
        %855 = vst [vmem:[%s803 + $0xc8] sm:$0xff] %v854
        %v856 = vld [vmem:[%s802 + $0xd0] sm:$0xff]
        %857 = vst [vmem:[%s803 + $0xd0] sm:$0xff] %v856
        %v858 = vld [vmem:[%s802 + $0xd8] sm:$0xff]
        %859 = vst [vmem:[%s803 + $0xd8] sm:$0xff] %v858
        %v860 = vld [vmem:[%s802 + $0xe0] sm:$0xff]
        %861 = vst [vmem:[%s803 + $0xe0] sm:$0xff] %v860
        %v862 = vld [vmem:[%s802 + $0xe8] sm:$0xff]
        %863 = vst [vmem:[%s803 + $0xe8] sm:$0xff] %v862
        %v864 = vld [vmem:[%s802 + $0xf0] sm:$0xff]
        %865 = vst [vmem:[%s803 + $0xf0] sm:$0xff] %v864
        %v866 = vld [vmem:[%s802 + $0xf8] sm:$0xff]
        %867 = vst [vmem:[%s803 + $0xf8] sm:$0xff] %v866
        %v868 = vld [vmem:[%s802 + $0x100] sm:$0xff]
        %869 = vst [vmem:[%s803 + $0x100] sm:$0xff] %v868
        %v870 = vld [vmem:[%s802 + $0x108] sm:$0xff]
        %871 = vst [vmem:[%s803 + $0x108] sm:$0xff] %v870
        %v872 = vld [vmem:[%s802 + $0x110] sm:$0xff]
        %873 = vst [vmem:[%s803 + $0x110] sm:$0xff] %v872
        %v874 = vld [vmem:[%s802 + $0x118] sm:$0xff]
        %875 = vst [vmem:[%s803 + $0x118] sm:$0xff] %v874
        %v876 = vld [vmem:[%s802 + $0x120] sm:$0xff]
        %877 = vst [vmem:[%s803 + $0x120] sm:$0xff] %v876
        %v878 = vld [vmem:[%s802 + $0x128] sm:$0xff]
        %879 = vst [vmem:[%s803 + $0x128] sm:$0xff] %v878
        %v880 = vld [vmem:[%s802 + $0x130] sm:$0xff]
        %881 = vst [vmem:[%s803 + $0x130] sm:$0xff] %v880
        %v882 = vld [vmem:[%s802 + $0x138] sm:$0xff]
        %883 = vst [vmem:[%s803 + $0x138] sm:$0xff] %v882
        %v884 = vld [vmem:[%s802 + $0x140] sm:$0xff]
        %885 = vst [vmem:[%s803 + $0x140] sm:$0xff] %v884
        %v886 = vld [vmem:[%s802 + $0x148] sm:$0xff]
        %887 = vst [vmem:[%s803 + $0x148] sm:$0xff] %v886
        %v888 = vld [vmem:[%s802 + $0x150] sm:$0xff]
        %889 = vst [vmem:[%s803 + $0x150] sm:$0xff] %v888
        %v890 = vld [vmem:[%s802 + $0x158] sm:$0xff]
        %891 = vst [vmem:[%s803 + $0x158] sm:$0xff] %v890
      $region430: #{model_nest_split_forward.1} parent=424 // loop_footer
        %s801 = sadd.s32 1, %s797
      $region431: #{model_nest_split_forward.1} parent=424 // loop_footer_branch
        %796 = sbr.rel target = $region427
      $region432: #{model_nest_split_forward.1} parent=424 // loop_exit
        _
    $region425: #{model_nest_split_forward.1} parent=16 // pred_fallthru
      _
    // Predicated region
    $region433: #{model_nest_split_forward.1} parent=16 // pred_check
      _
    $region434: #{model_nest_split_forward.1} parent=16 // pred_check_branch
      %893 = sbr.rel target = $region436
    $region435: #{model_nest_split_forward.1} parent=16 // pred_region
      _
    $region436: #{model_nest_split_forward.1} parent=16 // pred_fallthru
      _
    // Predicated region
    $region437: #{model_nest_split_forward.1} parent=16 // pred_check
      _
    $region438: #{model_nest_split_forward.1} parent=16 // pred_check_branch
      %896 = sbr.rel (0) target = $region440
    $region439: #{model_nest_split_forward.1} parent=16 // pred_region
      %897 = vsyncadd %s793, 5632
    $region440: #{model_nest_split_forward.1} parent=16 // pred_fallthru
      _
    %s898 = scalar_lea.sflag [#allocation23], 20
    // Predicated region
    $region441: #{model_nest_split_forward.1} parent=16 // pred_check
      _
    $region442: #{model_nest_split_forward.1} parent=16 // pred_check_branch
      %900 = sbr.rel (0) target = $region444
    $region443: #{model_nest_split_forward.1} parent=16 // pred_region
      loop: start=0, step=1, limit=1
      $region445: #{model_nest_split_forward.1} parent=443 // loop_pre_header
        _
      $region446: #{model_nest_split_forward.1} parent=443 // loop_header
        %s902 = sphi 0, %s906
        %p903 = scmp.ge.s32.totalorder %s902, 1
        %s907 = sphi %s23, %s23
        %s908 = sphi [#allocation22], [#allocation22]
      $region447: #{model_nest_split_forward.1} parent=443 // loop_header_branch
        %905 = sbr.rel (%p903) target = $region451
      $region448: #{model_nest_split_forward.1} parent=443 // loop_body
        %v909 = vld [vmem:[%s907] sm:$0xff]
        %910 = vst [vmem:[%s908] sm:$0xff] %v909
        %v911 = vld [vmem:[%s907 + $0x8] sm:$0xff]
        %912 = vst [vmem:[%s908 + $0x8] sm:$0xff] %v911
        %v913 = vld [vmem:[%s907 + $0x10] sm:$0xff]
        %914 = vst [vmem:[%s908 + $0x10] sm:$0xff] %v913
        %v915 = vld [vmem:[%s907 + $0x18] sm:$0xff]
        %916 = vst [vmem:[%s908 + $0x18] sm:$0xff] %v915
        %v917 = vld [vmem:[%s907 + $0x20] sm:$0xff]
        %918 = vst [vmem:[%s908 + $0x20] sm:$0xff] %v917
        %v919 = vld [vmem:[%s907 + $0x28] sm:$0xff]
        %920 = vst [vmem:[%s908 + $0x28] sm:$0xff] %v919
        %v921 = vld [vmem:[%s907 + $0x30] sm:$0xff]
        %922 = vst [vmem:[%s908 + $0x30] sm:$0xff] %v921
        %v923 = vld [vmem:[%s907 + $0x38] sm:$0xff]
        %924 = vst [vmem:[%s908 + $0x38] sm:$0xff] %v923
        %v925 = vld [vmem:[%s907 + $0x40] sm:$0xff]
        %926 = vst [vmem:[%s908 + $0x40] sm:$0xff] %v925
        %v927 = vld [vmem:[%s907 + $0x48] sm:$0xff]
        %928 = vst [vmem:[%s908 + $0x48] sm:$0xff] %v927
        %v929 = vld [vmem:[%s907 + $0x50] sm:$0xff]
        %930 = vst [vmem:[%s908 + $0x50] sm:$0xff] %v929
        %v931 = vld [vmem:[%s907 + $0x58] sm:$0xff]
        %932 = vst [vmem:[%s908 + $0x58] sm:$0xff] %v931
        %v933 = vld [vmem:[%s907 + $0x60] sm:$0xff]
        %934 = vst [vmem:[%s908 + $0x60] sm:$0xff] %v933
        %v935 = vld [vmem:[%s907 + $0x68] sm:$0xff]
        %936 = vst [vmem:[%s908 + $0x68] sm:$0xff] %v935
        %v937 = vld [vmem:[%s907 + $0x70] sm:$0xff]
        %938 = vst [vmem:[%s908 + $0x70] sm:$0xff] %v937
        %v939 = vld [vmem:[%s907 + $0x78] sm:$0xff]
        %940 = vst [vmem:[%s908 + $0x78] sm:$0xff] %v939
        %v941 = vld [vmem:[%s907 + $0x80] sm:$0xff]
        %942 = vst [vmem:[%s908 + $0x80] sm:$0xff] %v941
        %v943 = vld [vmem:[%s907 + $0x88] sm:$0xff]
        %944 = vst [vmem:[%s908 + $0x88] sm:$0xff] %v943
        %v945 = vld [vmem:[%s907 + $0x90] sm:$0xff]
        %946 = vst [vmem:[%s908 + $0x90] sm:$0xff] %v945
        %v947 = vld [vmem:[%s907 + $0x98] sm:$0xff]
        %948 = vst [vmem:[%s908 + $0x98] sm:$0xff] %v947
        %v949 = vld [vmem:[%s907 + $0xa0] sm:$0xff]
        %950 = vst [vmem:[%s908 + $0xa0] sm:$0xff] %v949
        %v951 = vld [vmem:[%s907 + $0xa8] sm:$0xff]
        %952 = vst [vmem:[%s908 + $0xa8] sm:$0xff] %v951
        %v953 = vld [vmem:[%s907 + $0xb0] sm:$0xff]
        %954 = vst [vmem:[%s908 + $0xb0] sm:$0xff] %v953
        %v955 = vld [vmem:[%s907 + $0xb8] sm:$0xff]
        %956 = vst [vmem:[%s908 + $0xb8] sm:$0xff] %v955
        %v957 = vld [vmem:[%s907 + $0xc0] sm:$0xff]
        %958 = vst [vmem:[%s908 + $0xc0] sm:$0xff] %v957
        %v959 = vld [vmem:[%s907 + $0xc8] sm:$0xff]
        %960 = vst [vmem:[%s908 + $0xc8] sm:$0xff] %v959
        %v961 = vld [vmem:[%s907 + $0xd0] sm:$0xff]
        %962 = vst [vmem:[%s908 + $0xd0] sm:$0xff] %v961
        %v963 = vld [vmem:[%s907 + $0xd8] sm:$0xff]
        %964 = vst [vmem:[%s908 + $0xd8] sm:$0xff] %v963
        %v965 = vld [vmem:[%s907 + $0xe0] sm:$0xff]
        %966 = vst [vmem:[%s908 + $0xe0] sm:$0xff] %v965
        %v967 = vld [vmem:[%s907 + $0xe8] sm:$0xff]
        %968 = vst [vmem:[%s908 + $0xe8] sm:$0xff] %v967
        %v969 = vld [vmem:[%s907 + $0xf0] sm:$0xff]
        %970 = vst [vmem:[%s908 + $0xf0] sm:$0xff] %v969
        %v971 = vld [vmem:[%s907 + $0xf8] sm:$0xff]
        %972 = vst [vmem:[%s908 + $0xf8] sm:$0xff] %v971
      $region449: #{model_nest_split_forward.1} parent=443 // loop_footer
        %s906 = sadd.s32 1, %s902
      $region450: #{model_nest_split_forward.1} parent=443 // loop_footer_branch
        %901 = sbr.rel target = $region446
      $region451: #{model_nest_split_forward.1} parent=443 // loop_exit
        _
    $region444: #{model_nest_split_forward.1} parent=16 // pred_fallthru
      _
    // Predicated region
    $region452: #{model_nest_split_forward.1} parent=16 // pred_check
      _
    $region453: #{model_nest_split_forward.1} parent=16 // pred_check_branch
      %974 = sbr.rel target = $region455
    $region454: #{model_nest_split_forward.1} parent=16 // pred_region
      _
    $region455: #{model_nest_split_forward.1} parent=16 // pred_fallthru
      _
    // Predicated region
    $region456: #{model_nest_split_forward.1} parent=16 // pred_check
      _
    $region457: #{model_nest_split_forward.1} parent=16 // pred_check_branch
      %977 = sbr.rel (0) target = $region459
    $region458: #{model_nest_split_forward.1} parent=16 // pred_region
      %978 = vsyncadd %s898, 4096
    $region459: #{model_nest_split_forward.1} parent=16 // pred_fallthru
      _
    %s979 = smul.u32 64, 1
    %s980 = sshll.u32 %s979, 4
    %981 = dma.done [#allocation23], %s980
    %s982 = smul.u32 96, 1
    %s983 = sshll.u32 %s982, 4
    %984 = dma.done %s73, %s983
    %s985 = smul.u32 32, 1
    %s986 = sshll.u32 %s985, 4
    %987 = dma.done %s114, %s986
    %s988 = smul.u32 48, 1
    %s989 = sshll.u32 %s988, 4
    %990 = dma.done %s139, %s989
    %s991 = smul.u32 160, 1
    %s992 = sshll.u32 %s991, 4
    %993 = dma.done %s168, %s992
    %s994 = smul.u32 16, 1
    %s995 = sshll.u32 %s994, 4
    %996 = dma.done %s225, %s995
    %s997 = smul.u32 24, 1
    %s998 = sshll.u32 %s997, 4
    %999 = dma.done %s246, %s998
    %s1000 = smul.u32 80, 1
    %s1001 = sshll.u32 %s1000, 4
    %1002 = dma.done %s269, %s1001
    %s1003 = smul.u32 224, 1
    %s1004 = sshll.u32 %s1003, 4
    %1005 = dma.done %s306, %s1004
    %s1006 = smul.u32 8, 1
    %s1007 = sshll.u32 %s1006, 4
    %1008 = dma.done %s379, %s1007
    %s1009 = smul.u32 12, 1
    %s1010 = sshll.u32 %s1009, 4
    %1011 = dma.done %s414, %s1010
    %s1012 = smul.u32 40, 1
    %s1013 = sshll.u32 %s1012, 4
    %1014 = dma.done %s445, %s1013
    %s1015 = smul.u32 112, 1
    %s1016 = sshll.u32 %s1015, 4
    %1017 = dma.done %s472, %s1016
    %s1018 = smul.u32 288, 1
    %s1019 = sshll.u32 %s1018, 4
    %1020 = dma.done %s517, %s1019
    %s1021 = smul.u32 4, 1
    %s1022 = sshll.u32 %s1021, 4
    %1023 = dma.done %s606, %s1022
    %s1024 = smul.u32 6, 1
    %s1025 = sshll.u32 %s1024, 4
    %1026 = dma.done %s641, %s1025
    %s1027 = smul.u32 20, 1
    %s1028 = sshll.u32 %s1027, 4
    %1029 = dma.done %s676, %s1028
    %s1030 = smul.u32 56, 1
    %s1031 = sshll.u32 %s1030, 4
    %1032 = dma.done %s709, %s1031
    %s1033 = smul.u32 144, 1
    %s1034 = sshll.u32 %s1033, 4
    %1035 = dma.done %s740, %s1034
    %s1036 = smul.u32 352, 1
    %s1037 = sshll.u32 %s1036, 4
    %1038 = dma.done %s793, %s1037
    %s1039 = smul.u32 256, 1
    %s1040 = sshll.u32 %s1039, 4
    %1041 = dma.done %s898, %s1040
  $region17: #{model_nest_split_forward.1} parent=0 // pred_fallthru
    _
  %v1042 = vld [vmem:[%s0] sm:$0xff]
  %v1043 = vld [vmem:[%s0 + $0x8] sm:$0xff]
  %v1044 = vld [vmem:[#allocation2] sm:$0xff]
  %v1045 = vld [vmem:[#allocation2 + $0x8] sm:$0xff]
  %v1046 = vld [vmem:[#allocation2 + $0x10] sm:$0xff]
  %v1047 = vld [vmem:[#allocation2 + $0x18] sm:$0xff]
  %v1048 = vld [vmem:[#allocation2 + $0x20] sm:$0xff]
  %v1049 = vld [vmem:[#allocation2 + $0x28] sm:$0xff]
  %v1050 = vld [vmem:[#allocation2 + $0x30] sm:$0xff]
  %v1051 = vld [vmem:[#allocation2 + $0x38] sm:$0xff]
  %v1052 = vld [vmem:[%s1] sm:$0x1]
  %vm1053 = vcmask 523264
  %v1055 = vsel %vm1053, %v1042, 0
  %v1058 = vsel %vm1053, %v1043, 0
  %1060 = vmatpush.msra.mxu0 0.0
  %1061 = vmatpush.msra.mxu0 0.0
  %1062 = vmatpush.msra.mxu0 0.0
  %1063 = vmatpush.msra.mxu0 0.0
  %1064 = vmatpush.msra.mxu0 0.0
  %1065 = vmatpush.msra.mxu0 0.0
  %1066 = vmatpush.msra.mxu0 0.0
  %1067 = vmatpush.msra.mxu0 0.0
  %1068 = vmatpush.msra.mxu0 %v1051
  %1069 = vmatpush.msra.mxu0 %v1050
  %1070 = vmatpush.msra.mxu0 %v1049
  %1071 = vmatpush.msra.mxu0 %v1048
  %1072 = vmatpush.msra.mxu0 %v1047
  %1073 = vmatpush.msra.mxu0 %v1046
  %1074 = vmatpush.msra.mxu0 %v1045
  %1075 = vmatpush.msra.mxu0 %v1044
  %1076 = vmatmul.f32.gmra.mxu0 %v1055
  %v1077 = vpop.f32.mrf.mxu0
  %v1078 = vadd.f32 0.0, %v1077
  %1079 = vmatmul.f32.gmra.mxu0 %v1058
  %v1080 = vpop.f32.mrf.mxu0
  %v1081 = vadd.f32 0.0, %v1080
  %1082 = vdwg.mxu0
  %v1084 = vperm.slane %v1052, 0
  %v1086 = vadd.f32 %v1084, %v1078
  %v1087 = vadd.f32 %v1084, %v1081
  %v1088 = vmul.f32 %v1086, 0.5
  %v1089 = vmul.f32 %v1087, 0.5
  %v1090 = vmul.f32 %v1086, 0.70710677
  %v1091 = vmul.f32 %v1087, 0.70710677
  %v1092 = vmul.f32 %v1090, %v1090
  %v1093 = vmin.f32 16.0, %v1092
  %v1094 = vmul.f32 %v1093, 2.1237322e-06
  %v1095 = vadd.f32 %v1094, 0.00028619796
  %v1096 = vmul.f32 %v1093, %v1095
  %v1097 = vadd.f32 %v1096, 0.0036580483
  %v1098 = vmul.f32 %v1093, %v1097
  %v1099 = vadd.f32 %v1098, 0.05243302
  %v1100 = vmul.f32 %v1093, %v1099
  %v1101 = vadd.f32 %v1100, 0.18741608
  %v1102 = vmul.f32 %v1093, %v1101
  %v1103 = vadd.f32 %v1102, 1.1283791
  %v1104 = vmul.f32 %v1090, %v1103
  %v1105 = vmul.f32 %v1093, 3.8918573e-05
  %v1106 = vadd.f32 %v1105, 0.001143296
  %v1107 = vmul.f32 %v1093, %v1106
  %v1108 = vadd.f32 %v1107, 0.014752088
  %v1109 = vmul.f32 %v1093, %v1108
  %v1110 = vadd.f32 %v1109, 0.112945676
  %v1111 = vmul.f32 %v1093, %v1110
  %v1112 = vadd.f32 %v1111, 0.4994258
  %v1113 = vmul.f32 %v1093, %v1112
  %v1114 = vadd.f32 %v1113, 1.0
  %v1115 = vrcp.pop %v1114
  %v1116 = vmul.f32 %v1114, %v1115
  %v1117 = vsub.f32 1.0, %v1116
  %v1118 = vmul.f32 %v1115, %v1117
  %v1119 = vadd.f32 %v1115, %v1118
  %vm1120 = vweird.f32 %v1114
  %vm1121 = vweird.f32 %v1115
  %vm1122 = vmor %vm1120, %vm1121
  %v1123 = vsel %vm1122, %v1115, %v1119
  %v1124 = vand.u32 2147483647, %v1114
  %vm1125 = vcmp.eq.f32.partialorder %v1124, 8.507059e+37
  %v1126 = vand.u32 %v1114, 2147483648
  %v1127 = vor.u32 1.1754944e-38, %v1126
  %v1128 = vsel %vm1125, %v1127, %v1123
  %v1129 = vmul.f32 %v1104, %v1128
  %v1130 = vmin.f32 %v1129, 1.0
  %v1131 = vmax.f32 %v1130, -1.0
  %v1132 = vmul.f32 %v1091, %v1091
  %v1133 = vmin.f32 16.0, %v1132
  %v1134 = vmul.f32 %v1133, 2.1237322e-06
  %v1135 = vadd.f32 %v1134, 0.00028619796
  %v1136 = vmul.f32 %v1133, %v1135
  %v1137 = vadd.f32 %v1136, 0.0036580483
  %v1138 = vmul.f32 %v1133, %v1137
  %v1139 = vadd.f32 %v1138, 0.05243302
  %v1140 = vmul.f32 %v1133, %v1139
  %v1141 = vadd.f32 %v1140, 0.18741608
  %v1142 = vmul.f32 %v1133, %v1141
  %v1143 = vadd.f32 %v1142, 1.1283791
  %v1144 = vmul.f32 %v1091, %v1143
  %v1145 = vmul.f32 %v1133, 3.8918573e-05
  %v1146 = vadd.f32 %v1145, 0.001143296
  %v1147 = vmul.f32 %v1133, %v1146
  %v1148 = vadd.f32 %v1147, 0.014752088
  %v1149 = vmul.f32 %v1133, %v1148
  %v1150 = vadd.f32 %v1149, 0.112945676
  %v1151 = vmul.f32 %v1133, %v1150
  %v1152 = vadd.f32 %v1151, 0.4994258
  %v1153 = vmul.f32 %v1133, %v1152
  %v1154 = vadd.f32 %v1153, 1.0
  %v1155 = vrcp.pop %v1154
  %v1156 = vmul.f32 %v1154, %v1155
  %v1157 = vsub.f32 1.0, %v1156
  %v1158 = vmul.f32 %v1155, %v1157
  %v1159 = vadd.f32 %v1155, %v1158
  %vm1160 = vweird.f32 %v1154
  %vm1161 = vweird.f32 %v1155
  %vm1162 = vmor %vm1160, %vm1161
  %v1163 = vsel %vm1162, %v1155, %v1159
  %v1164 = vand.u32 2147483647, %v1154
  %vm1165 = vcmp.eq.f32.partialorder %v1164, 8.507059e+37
  %v1166 = vand.u32 %v1154, 2147483648
  %v1167 = vor.u32 1.1754944e-38, %v1166
  %v1168 = vsel %vm1165, %v1167, %v1163
  %v1169 = vmul.f32 %v1144, %v1168
  %v1170 = vmin.f32 %v1169, 1.0
  %v1171 = vmax.f32 %v1170, -1.0
  %v1172 = vadd.f32 %v1131, 1.0
  %v1173 = vadd.f32 %v1171, 1.0
  %v1174 = vmul.f32 %v1088, %v1172
  %v1175 = vmul.f32 %v1089, %v1173
  %v1176 = vld [vmem:[#allocation3] sm:$0xff]
  %v1177 = vld [vmem:[#allocation3 + $0x8] sm:$0xff]
  %v1178 = vld [vmem:[#allocation3 + $0x10] sm:$0xff]
  %v1179 = vld [vmem:[#allocation3 + $0x18] sm:$0xff]
  %v1180 = vld [vmem:[#allocation3 + $0x20] sm:$0xff]
  %v1181 = vld [vmem:[#allocation3 + $0x28] sm:$0xff]
  %v1182 = vld [vmem:[#allocation3 + $0x30] sm:$0xff]
  %v1183 = vld [vmem:[#allocation3 + $0x38] sm:$0xff]
  %v1184 = vld [vmem:[#allocation3 + $0x40] sm:$0xff]
  %v1185 = vld [vmem:[#allocation3 + $0x48] sm:$0xff]
  %v1186 = vld [vmem:[#allocation3 + $0x50] sm:$0xff]
  %v1187 = vld [vmem:[#allocation3 + $0x58] sm:$0xff]
  %1188 = vmatpush.msra.mxu0 0.0
  %1189 = vmatpush.msra.mxu0 0.0
  %1190 = vmatpush.msra.mxu0 0.0
  %1191 = vmatpush.msra.mxu0 0.0
  %1192 = vmatpush.msra.mxu0 0.0
  %1193 = vmatpush.msra.mxu0 0.0
  %1194 = vmatpush.msra.mxu0 0.0
  %1195 = vmatpush.msra.mxu0 0.0
  %1196 = vmatpush.msra.mxu0 %v1183
  %1197 = vmatpush.msra.mxu0 %v1182
  %1198 = vmatpush.msra.mxu0 %v1181
  %1199 = vmatpush.msra.mxu0 %v1180
  %1200 = vmatpush.msra.mxu0 %v1179
  %1201 = vmatpush.msra.mxu0 %v1178
  %1202 = vmatpush.msra.mxu0 %v1177
  %1203 = vmatpush.msra.mxu0 %v1176
  %1204 = vmatmul.f32.gmra.mxu0 %v1055
  %v1205 = vpop.f32.mrf.mxu0
  %v1206 = vadd.f32 0.0, %v1205
  %1207 = vmatmul.f32.gmra.mxu0 %v1058
  %v1208 = vpop.f32.mrf.mxu0
  %v1209 = vadd.f32 0.0, %v1208
  %1210 = vdwg.mxu0
  %1213 = vrot.lane.b32.xlu0 %v1206, 32
  %v1214 = vpop.permute.xlu0 %1213
  %1215 = vrot.lane.b32.xlu0 %v1209, 32
  %v1216 = vpop.permute.xlu0 %1215
  %v1219 = vadd.f32 %v1084, %v1214
  %v1220 = vadd.f32 %v1084, %v1216
  %vm1221 = vcmask 261120
  %v1223 = vsel %vm1221, %v1174, 0
  %v1226 = vsel %vm1221, %v1175, 0
  %1228 = vmatpush.msra.mxu0 0.0
  %1229 = vmatpush.msra.mxu0 0.0
  %1230 = vmatpush.msra.mxu0 0.0
  %1231 = vmatpush.msra.mxu0 0.0
  %1232 = vmatpush.msra.mxu0 0.0
  %1233 = vmatpush.msra.mxu0 0.0
  %1234 = vmatpush.msra.mxu0 0.0
  %1235 = vmatpush.msra.mxu0 0.0
  %1236 = vmatpush.msra.mxu0 0.0
  %1237 = vmatpush.msra.mxu0 0.0
  %1238 = vmatpush.msra.mxu0 0.0
  %1239 = vmatpush.msra.mxu0 0.0
  %1240 = vmatpush.msra.mxu0 %v1187
  %1241 = vmatpush.msra.mxu0 %v1186
  %1242 = vmatpush.msra.mxu0 %v1185
  %1243 = vmatpush.msra.mxu0 %v1184
  %1244 = vmatmul.f32.gmra.mxu0 %v1223
  %v1245 = vpop.f32.mrf.mxu0
  %v1246 = vadd.f32 0.0, %v1245
  %1247 = vmatmul.f32.gmra.mxu0 %v1226
  %v1248 = vpop.f32.mrf.mxu0
  %v1249 = vadd.f32 0.0, %v1248
  %1250 = vdwg.mxu0
  %1253 = vrot.lane.b32.xlu0 %v1246, 32
  %v1254 = vpop.permute.xlu0 %1253
  %1255 = vrot.lane.b32.xlu0 %v1249, 32
  %v1256 = vpop.permute.xlu0 %1255
  %v1259 = vadd.f32 %v1219, %v1254
  %v1260 = vadd.f32 %v1220, %v1256
  %v1261 = vmul.f32 %v1259, 0.5
  %v1262 = vmul.f32 %v1260, 0.5
  %v1263 = vmul.f32 %v1259, 0.70710677
  %v1264 = vmul.f32 %v1260, 0.70710677
  %v1265 = vmul.f32 %v1263, %v1263
  %v1266 = vmin.f32 16.0, %v1265
  %v1267 = vmul.f32 %v1266, 2.1237322e-06
  %v1268 = vadd.f32 %v1267, 0.00028619796
  %v1269 = vmul.f32 %v1266, %v1268
  %v1270 = vadd.f32 %v1269, 0.0036580483
  %v1271 = vmul.f32 %v1266, %v1270
  %v1272 = vadd.f32 %v1271, 0.05243302
  %v1273 = vmul.f32 %v1266, %v1272
  %v1274 = vadd.f32 %v1273, 0.18741608
  %v1275 = vmul.f32 %v1266, %v1274
  %v1276 = vadd.f32 %v1275, 1.1283791
  %v1277 = vmul.f32 %v1263, %v1276
  %v1278 = vmul.f32 %v1266, 3.8918573e-05
  %v1279 = vadd.f32 %v1278, 0.001143296
  %v1280 = vmul.f32 %v1266, %v1279
  %v1281 = vadd.f32 %v1280, 0.014752088
  %v1282 = vmul.f32 %v1266, %v1281
  %v1283 = vadd.f32 %v1282, 0.112945676
  %v1284 = vmul.f32 %v1266, %v1283
  %v1285 = vadd.f32 %v1284, 0.4994258
  %v1286 = vmul.f32 %v1266, %v1285
  %v1287 = vadd.f32 %v1286, 1.0
  %v1288 = vrcp.pop %v1287
  %v1289 = vmul.f32 %v1287, %v1288
  %v1290 = vsub.f32 1.0, %v1289
  %v1291 = vmul.f32 %v1288, %v1290
  %v1292 = vadd.f32 %v1288, %v1291
  %vm1293 = vweird.f32 %v1287
  %vm1294 = vweird.f32 %v1288
  %vm1295 = vmor %vm1293, %vm1294
  %v1296 = vsel %vm1295, %v1288, %v1292
  %v1297 = vand.u32 2147483647, %v1287
  %vm1298 = vcmp.eq.f32.partialorder %v1297, 8.507059e+37
  %v1299 = vand.u32 %v1287, 2147483648
  %v1300 = vor.u32 1.1754944e-38, %v1299
  %v1301 = vsel %vm1298, %v1300, %v1296
  %v1302 = vmul.f32 %v1277, %v1301
  %v1303 = vmin.f32 %v1302, 1.0
  %v1304 = vmax.f32 %v1303, -1.0
  %v1305 = vmul.f32 %v1264, %v1264
  %v1306 = vmin.f32 16.0, %v1305
  %v1307 = vmul.f32 %v1306, 2.1237322e-06
  %v1308 = vadd.f32 %v1307, 0.00028619796
  %v1309 = vmul.f32 %v1306, %v1308
  %v1310 = vadd.f32 %v1309, 0.0036580483
  %v1311 = vmul.f32 %v1306, %v1310
  %v1312 = vadd.f32 %v1311, 0.05243302
  %v1313 = vmul.f32 %v1306, %v1312
  %v1314 = vadd.f32 %v1313, 0.18741608
  %v1315 = vmul.f32 %v1306, %v1314
  %v1316 = vadd.f32 %v1315, 1.1283791
  %v1317 = vmul.f32 %v1264, %v1316
  %v1318 = vmul.f32 %v1306, 3.8918573e-05
  %v1319 = vadd.f32 %v1318, 0.001143296
  %v1320 = vmul.f32 %v1306, %v1319
  %v1321 = vadd.f32 %v1320, 0.014752088
  %v1322 = vmul.f32 %v1306, %v1321
  %v1323 = vadd.f32 %v1322, 0.112945676
  %v1324 = vmul.f32 %v1306, %v1323
  %v1325 = vadd.f32 %v1324, 0.4994258
  %v1326 = vmul.f32 %v1306, %v1325
  %v1327 = vadd.f32 %v1326, 1.0
  %v1328 = vrcp.pop %v1327
  %v1329 = vmul.f32 %v1327, %v1328
  %v1330 = vsub.f32 1.0, %v1329
  %v1331 = vmul.f32 %v1328, %v1330
  %v1332 = vadd.f32 %v1328, %v1331
  %vm1333 = vweird.f32 %v1327
  %vm1334 = vweird.f32 %v1328
  %vm1335 = vmor %vm1333, %vm1334
  %v1336 = vsel %vm1335, %v1328, %v1332
  %v1337 = vand.u32 2147483647, %v1327
  %vm1338 = vcmp.eq.f32.partialorder %v1337, 8.507059e+37
  %v1339 = vand.u32 %v1327, 2147483648
  %v1340 = vor.u32 1.1754944e-38, %v1339
  %v1341 = vsel %vm1338, %v1340, %v1336
  %v1342 = vmul.f32 %v1317, %v1341
  %v1343 = vmin.f32 %v1342, 1.0
  %v1344 = vmax.f32 %v1343, -1.0
  %v1345 = vadd.f32 %v1304, 1.0
  %v1346 = vadd.f32 %v1344, 1.0
  %v1347 = vmul.f32 %v1261, %v1345
  %v1348 = vmul.f32 %v1262, %v1346
  %v1349 = vld [vmem:[#allocation4] sm:$0xff]
  %v1350 = vld [vmem:[#allocation4 + $0x8] sm:$0xff]
  %v1351 = vld [vmem:[#allocation4 + $0x10] sm:$0xff]
  %v1352 = vld [vmem:[#allocation4 + $0x18] sm:$0xff]
  %1353 = vmatpush.msra.mxu0 0.0
  %1354 = vmatpush.msra.mxu0 0.0
  %1355 = vmatpush.msra.mxu0 0.0
  %1356 = vmatpush.msra.mxu0 0.0
  %1357 = vmatpush.msra.mxu0 0.0
  %1358 = vmatpush.msra.mxu0 0.0
  %1359 = vmatpush.msra.mxu0 0.0
  %1360 = vmatpush.msra.mxu0 0.0
  %1361 = vmatpush.msra.mxu0 0.0
  %1362 = vmatpush.msra.mxu0 0.0
  %1363 = vmatpush.msra.mxu0 0.0
  %1364 = vmatpush.msra.mxu0 0.0
  %1365 = vmatpush.msra.mxu0 %v1352
  %1366 = vmatpush.msra.mxu0 %v1351
  %1367 = vmatpush.msra.mxu0 %v1350
  %1368 = vmatpush.msra.mxu0 %v1349
  %1369 = vmatmul.f32.gmra.mxu0 %v1223
  %v1370 = vpop.f32.mrf.mxu0
  %v1371 = vadd.f32 0.0, %v1370
  %1372 = vmatmul.f32.gmra.mxu0 %v1226
  %v1373 = vpop.f32.mrf.mxu0
  %v1374 = vadd.f32 0.0, %v1373
  %1375 = vdwg.mxu0
  %1378 = vrot.lane.b32.xlu0 %v1371, 96
  %v1379 = vpop.permute.xlu0 %1378
  %1380 = vrot.lane.b32.xlu0 %v1374, 96
  %v1381 = vpop.permute.xlu0 %1380
  %v1384 = vadd.f32 %v1084, %v1379
  %v1385 = vadd.f32 %v1084, %v1381
  %v1386 = vmul.f32 %v1384, 0.5
  %v1387 = vmul.f32 %v1385, 0.5
  %v1388 = vmul.f32 %v1384, 0.70710677
  %v1389 = vmul.f32 %v1385, 0.70710677
  %v1390 = vmul.f32 %v1388, %v1388
  %v1391 = vmin.f32 16.0, %v1390
  %v1392 = vmul.f32 %v1391, 2.1237322e-06
  %v1393 = vadd.f32 %v1392, 0.00028619796
  %v1394 = vmul.f32 %v1391, %v1393
  %v1395 = vadd.f32 %v1394, 0.0036580483
  %v1396 = vmul.f32 %v1391, %v1395
  %v1397 = vadd.f32 %v1396, 0.05243302
  %v1398 = vmul.f32 %v1391, %v1397
  %v1399 = vadd.f32 %v1398, 0.18741608
  %v1400 = vmul.f32 %v1391, %v1399
  %v1401 = vadd.f32 %v1400, 1.1283791
  %v1402 = vmul.f32 %v1388, %v1401
  %v1403 = vmul.f32 %v1391, 3.8918573e-05
  %v1404 = vadd.f32 %v1403, 0.001143296
  %v1405 = vmul.f32 %v1391, %v1404
  %v1406 = vadd.f32 %v1405, 0.014752088
  %v1407 = vmul.f32 %v1391, %v1406
  %v1408 = vadd.f32 %v1407, 0.112945676
  %v1409 = vmul.f32 %v1391, %v1408
  %v1410 = vadd.f32 %v1409, 0.4994258
  %v1411 = vmul.f32 %v1391, %v1410
  %v1412 = vadd.f32 %v1411, 1.0
  %v1413 = vrcp.pop %v1412
  %v1414 = vmul.f32 %v1412, %v1413
  %v1415 = vsub.f32 1.0, %v1414
  %v1416 = vmul.f32 %v1413, %v1415
  %v1417 = vadd.f32 %v1413, %v1416
  %vm1418 = vweird.f32 %v1412
  %vm1419 = vweird.f32 %v1413
  %vm1420 = vmor %vm1418, %vm1419
  %v1421 = vsel %vm1420, %v1413, %v1417
  %v1422 = vand.u32 2147483647, %v1412
  %vm1423 = vcmp.eq.f32.partialorder %v1422, 8.507059e+37
  %v1424 = vand.u32 %v1412, 2147483648
  %v1425 = vor.u32 1.1754944e-38, %v1424
  %v1426 = vsel %vm1423, %v1425, %v1421
  %v1427 = vmul.f32 %v1402, %v1426
  %v1428 = vmin.f32 %v1427, 1.0
  %v1429 = vmax.f32 %v1428, -1.0
  %v1430 = vmul.f32 %v1389, %v1389
  %v1431 = vmin.f32 16.0, %v1430
  %v1432 = vmul.f32 %v1431, 2.1237322e-06
  %v1433 = vadd.f32 %v1432, 0.00028619796
  %v1434 = vmul.f32 %v1431, %v1433
  %v1435 = vadd.f32 %v1434, 0.0036580483
  %v1436 = vmul.f32 %v1431, %v1435
  %v1437 = vadd.f32 %v1436, 0.05243302
  %v1438 = vmul.f32 %v1431, %v1437
  %v1439 = vadd.f32 %v1438, 0.18741608
  %v1440 = vmul.f32 %v1431, %v1439
  %v1441 = vadd.f32 %v1440, 1.1283791
  %v1442 = vmul.f32 %v1389, %v1441
  %v1443 = vmul.f32 %v1431, 3.8918573e-05
  %v1444 = vadd.f32 %v1443, 0.001143296
  %v1445 = vmul.f32 %v1431, %v1444
  %v1446 = vadd.f32 %v1445, 0.014752088
  %v1447 = vmul.f32 %v1431, %v1446
  %v1448 = vadd.f32 %v1447, 0.112945676
  %v1449 = vmul.f32 %v1431, %v1448
  %v1450 = vadd.f32 %v1449, 0.4994258
  %v1451 = vmul.f32 %v1431, %v1450
  %v1452 = vadd.f32 %v1451, 1.0
  %v1453 = vrcp.pop %v1452
  %v1454 = vmul.f32 %v1452, %v1453
  %v1455 = vsub.f32 1.0, %v1454
  %v1456 = vmul.f32 %v1453, %v1455
  %v1457 = vadd.f32 %v1453, %v1456
  %vm1458 = vweird.f32 %v1452
  %vm1459 = vweird.f32 %v1453
  %vm1460 = vmor %vm1458, %vm1459
  %v1461 = vsel %vm1460, %v1453, %v1457
  %v1462 = vand.u32 2147483647, %v1452
  %vm1463 = vcmp.eq.f32.partialorder %v1462, 8.507059e+37
  %v1464 = vand.u32 %v1452, 2147483648
  %v1465 = vor.u32 1.1754944e-38, %v1464
  %v1466 = vsel %vm1463, %v1465, %v1461
  %v1467 = vmul.f32 %v1442, %v1466
  %v1468 = vmin.f32 %v1467, 1.0
  %v1469 = vmax.f32 %v1468, -1.0
  %v1470 = vadd.f32 %v1429, 1.0
  %v1471 = vadd.f32 %v1469, 1.0
  %v1472 = vmul.f32 %v1386, %v1470
  %v1473 = vmul.f32 %v1387, %v1471
  %v1474 = vld [vmem:[#allocation5] sm:$0xff]
  %v1475 = vld [vmem:[#allocation5 + $0x8] sm:$0xff]
  %v1476 = vld [vmem:[#allocation5 + $0x10] sm:$0xff]
  %v1477 = vld [vmem:[#allocation5 + $0x18] sm:$0xff]
  %v1478 = vld [vmem:[#allocation5 + $0x20] sm:$0xff]
  %v1479 = vld [vmem:[#allocation5 + $0x28] sm:$0xff]
  %v1480 = vld [vmem:[%s1] sm:$0x3]
  %1481 = vmatpush.msra.mxu0 0.0
  %1482 = vmatpush.msra.mxu0 0.0
  %1483 = vmatpush.msra.mxu0 0.0
  %1484 = vmatpush.msra.mxu0 0.0
  %1485 = vmatpush.msra.mxu0 0.0
  %1486 = vmatpush.msra.mxu0 0.0
  %1487 = vmatpush.msra.mxu0 0.0
  %1488 = vmatpush.msra.mxu0 0.0
  %1489 = vmatpush.msra.mxu0 0.0
  %1490 = vmatpush.msra.mxu0 0.0
  %1491 = vmatpush.msra.mxu0 0.0
  %1492 = vmatpush.msra.mxu0 0.0
  %1493 = vmatpush.msra.mxu0 %v1477
  %1494 = vmatpush.msra.mxu0 %v1476
  %1495 = vmatpush.msra.mxu0 %v1475
  %1496 = vmatpush.msra.mxu0 %v1474
  %1497 = vmatmul.f32.gmra.mxu0 %v1223
  %v1498 = vpop.f32.mrf.mxu0
  %v1499 = vadd.f32 0.0, %v1498
  %1500 = vmatmul.f32.gmra.mxu0 %v1226
  %v1501 = vpop.f32.mrf.mxu0
  %v1502 = vadd.f32 0.0, %v1501
  %1503 = vdwg.mxu0
  %v1505 = vperm.slane %v1480, 0
  %v1506 = vperm.slane %v1480, 1
  %1511 = vrot.lane.b32.xlu0 %v1499, 112
  %v1512 = vpop.permute.xlu0 %1511
  %1513 = vrot.lane.b32.xlu0 %v1502, 112
  %v1514 = vpop.permute.xlu0 %1513
  %v1517 = vadd.f32 %v1505, %v1512
  %v1518 = vadd.f32 %v1506, %v1512
  %v1519 = vadd.f32 %v1505, %v1514
  %v1520 = vadd.f32 %v1506, %v1514
  %1523 = vrot.lane.b32.xlu0 %v1472, 32
  %v1524 = vpop.permute.xlu0 %1523
  %1525 = vrot.lane.b32.xlu0 %v1473, 32
  %v1526 = vpop.permute.xlu0 %1525
  %vm1527 = vcmask 130048
  %v1528 = vsel %vm1527, %v1524, 0
  %v1530 = vsel %vm1527, %v1526, 0
  %1532 = vmatpush.msra.mxu0 0.0
  %1533 = vmatpush.msra.mxu0 0.0
  %1534 = vmatpush.msra.mxu0 0.0
  %1535 = vmatpush.msra.mxu0 0.0
  %1536 = vmatpush.msra.mxu0 0.0
  %1537 = vmatpush.msra.mxu0 0.0
  %1538 = vmatpush.msra.mxu0 0.0
  %1539 = vmatpush.msra.mxu0 0.0
  %1540 = vmatpush.msra.mxu0 0.0
  %1541 = vmatpush.msra.mxu0 0.0
  %1542 = vmatpush.msra.mxu0 0.0
  %1543 = vmatpush.msra.mxu0 0.0
  %1544 = vmatpush.msra.mxu0 0.0
  %1545 = vmatpush.msra.mxu0 0.0
  %1546 = vmatpush.msra.mxu0 %v1479
  %1547 = vmatpush.msra.mxu0 %v1478
  %1548 = vmatmul.f32.gmra.mxu0 %v1528
  %v1549 = vpop.f32.mrf.mxu0
  %v1550 = vadd.f32 0.0, %v1549
  %1551 = vmatmul.f32.gmra.mxu0 %v1530
  %v1552 = vpop.f32.mrf.mxu0
  %v1553 = vadd.f32 0.0, %v1552
  %1554 = vdwg.mxu0
  %1557 = vrot.lane.b32.xlu0 %v1550, 112
  %v1558 = vpop.permute.xlu0 %1557
  %1559 = vrot.lane.b32.xlu0 %v1553, 112
  %v1560 = vpop.permute.xlu0 %1559
  %v1563 = vadd.f32 %v1517, %v1558
  %v1564 = vadd.f32 %v1518, %v1558
  %v1565 = vadd.f32 %v1519, %v1560
  %v1566 = vadd.f32 %v1520, %v1560
  %v1567 = vmul.f32 %v1563, 0.5
  %v1568 = vmul.f32 %v1564, 0.5
  %v1569 = vmul.f32 %v1565, 0.5
  %v1570 = vmul.f32 %v1566, 0.5
  %v1571 = vmul.f32 %v1563, 0.70710677
  %v1572 = vmul.f32 %v1564, 0.70710677
  %v1573 = vmul.f32 %v1565, 0.70710677
  %v1574 = vmul.f32 %v1566, 0.70710677
  %v1575 = vmul.f32 %v1571, %v1571
  %v1576 = vmin.f32 16.0, %v1575
  %v1577 = vmul.f32 %v1576, 2.1237322e-06
  %v1578 = vadd.f32 %v1577, 0.00028619796
  %v1579 = vmul.f32 %v1576, %v1578
  %v1580 = vadd.f32 %v1579, 0.0036580483
  %v1581 = vmul.f32 %v1576, %v1580
  %v1582 = vadd.f32 %v1581, 0.05243302
  %v1583 = vmul.f32 %v1576, %v1582
  %v1584 = vadd.f32 %v1583, 0.18741608
  %v1585 = vmul.f32 %v1576, %v1584
  %v1586 = vadd.f32 %v1585, 1.1283791
  %v1587 = vmul.f32 %v1571, %v1586
  %v1588 = vmul.f32 %v1576, 3.8918573e-05
  %v1589 = vadd.f32 %v1588, 0.001143296
  %v1590 = vmul.f32 %v1576, %v1589
  %v1591 = vadd.f32 %v1590, 0.014752088
  %v1592 = vmul.f32 %v1576, %v1591
  %v1593 = vadd.f32 %v1592, 0.112945676
  %v1594 = vmul.f32 %v1576, %v1593
  %v1595 = vadd.f32 %v1594, 0.4994258
  %v1596 = vmul.f32 %v1576, %v1595
  %v1597 = vadd.f32 %v1596, 1.0
  %v1598 = vrcp.pop %v1597
  %v1599 = vmul.f32 %v1597, %v1598
  %v1600 = vsub.f32 1.0, %v1599
  %v1601 = vmul.f32 %v1598, %v1600
  %v1602 = vadd.f32 %v1598, %v1601
  %vm1603 = vweird.f32 %v1597
  %vm1604 = vweird.f32 %v1598
  %vm1605 = vmor %vm1603, %vm1604
  %v1606 = vsel %vm1605, %v1598, %v1602
  %v1607 = vand.u32 2147483647, %v1597
  %vm1608 = vcmp.eq.f32.partialorder %v1607, 8.507059e+37
  %v1609 = vand.u32 %v1597, 2147483648
  %v1610 = vor.u32 1.1754944e-38, %v1609
  %v1611 = vsel %vm1608, %v1610, %v1606
  %v1612 = vmul.f32 %v1587, %v1611
  %v1613 = vmin.f32 %v1612, 1.0
  %v1614 = vmax.f32 %v1613, -1.0
  %v1615 = vmul.f32 %v1572, %v1572
  %v1616 = vmin.f32 16.0, %v1615
  %v1617 = vmul.f32 %v1616, 2.1237322e-06
  %v1618 = vadd.f32 %v1617, 0.00028619796
  %v1619 = vmul.f32 %v1616, %v1618
  %v1620 = vadd.f32 %v1619, 0.0036580483
  %v1621 = vmul.f32 %v1616, %v1620
  %v1622 = vadd.f32 %v1621, 0.05243302
  %v1623 = vmul.f32 %v1616, %v1622
  %v1624 = vadd.f32 %v1623, 0.18741608
  %v1625 = vmul.f32 %v1616, %v1624
  %v1626 = vadd.f32 %v1625, 1.1283791
  %v1627 = vmul.f32 %v1572, %v1626
  %v1628 = vmul.f32 %v1616, 3.8918573e-05
  %v1629 = vadd.f32 %v1628, 0.001143296
  %v1630 = vmul.f32 %v1616, %v1629
  %v1631 = vadd.f32 %v1630, 0.014752088
  %v1632 = vmul.f32 %v1616, %v1631
  %v1633 = vadd.f32 %v1632, 0.112945676
  %v1634 = vmul.f32 %v1616, %v1633
  %v1635 = vadd.f32 %v1634, 0.4994258
  %v1636 = vmul.f32 %v1616, %v1635
  %v1637 = vadd.f32 %v1636, 1.0
  %v1638 = vrcp.pop %v1637
  %v1639 = vmul.f32 %v1637, %v1638
  %v1640 = vsub.f32 1.0, %v1639
  %v1641 = vmul.f32 %v1638, %v1640
  %v1642 = vadd.f32 %v1638, %v1641
  %vm1643 = vweird.f32 %v1637
  %vm1644 = vweird.f32 %v1638
  %vm1645 = vmor %vm1643, %vm1644
  %v1646 = vsel %vm1645, %v1638, %v1642
  %v1647 = vand.u32 2147483647, %v1637
  %vm1648 = vcmp.eq.f32.partialorder %v1647, 8.507059e+37
  %v1649 = vand.u32 %v1637, 2147483648
  %v1650 = vor.u32 1.1754944e-38, %v1649
  %v1651 = vsel %vm1648, %v1650, %v1646
  %v1652 = vmul.f32 %v1627, %v1651
  %v1653 = vmin.f32 %v1652, 1.0
  %v1654 = vmax.f32 %v1653, -1.0
  %v1655 = vmul.f32 %v1573, %v1573
  %v1656 = vmin.f32 16.0, %v1655
  %v1657 = vmul.f32 %v1656, 2.1237322e-06
  %v1658 = vadd.f32 %v1657, 0.00028619796
  %v1659 = vmul.f32 %v1656, %v1658
  %v1660 = vadd.f32 %v1659, 0.0036580483
  %v1661 = vmul.f32 %v1656, %v1660
  %v1662 = vadd.f32 %v1661, 0.05243302
  %v1663 = vmul.f32 %v1656, %v1662
  %v1664 = vadd.f32 %v1663, 0.18741608
  %v1665 = vmul.f32 %v1656, %v1664
  %v1666 = vadd.f32 %v1665, 1.1283791
  %v1667 = vmul.f32 %v1573, %v1666
  %v1668 = vmul.f32 %v1656, 3.8918573e-05
  %v1669 = vadd.f32 %v1668, 0.001143296
  %v1670 = vmul.f32 %v1656, %v1669
  %v1671 = vadd.f32 %v1670, 0.014752088
  %v1672 = vmul.f32 %v1656, %v1671
  %v1673 = vadd.f32 %v1672, 0.112945676
  %v1674 = vmul.f32 %v1656, %v1673
  %v1675 = vadd.f32 %v1674, 0.4994258
  %v1676 = vmul.f32 %v1656, %v1675
  %v1677 = vadd.f32 %v1676, 1.0
  %v1678 = vrcp.pop %v1677
  %v1679 = vmul.f32 %v1677, %v1678
  %v1680 = vsub.f32 1.0, %v1679
  %v1681 = vmul.f32 %v1678, %v1680
  %v1682 = vadd.f32 %v1678, %v1681
  %vm1683 = vweird.f32 %v1677
  %vm1684 = vweird.f32 %v1678
  %vm1685 = vmor %vm1683, %vm1684
  %v1686 = vsel %vm1685, %v1678, %v1682
  %v1687 = vand.u32 2147483647, %v1677
  %vm1688 = vcmp.eq.f32.partialorder %v1687, 8.507059e+37
  %v1689 = vand.u32 %v1677, 2147483648
  %v1690 = vor.u32 1.1754944e-38, %v1689
  %v1691 = vsel %vm1688, %v1690, %v1686
  %v1692 = vmul.f32 %v1667, %v1691
  %v1693 = vmin.f32 %v1692, 1.0
  %v1694 = vmax.f32 %v1693, -1.0
  %v1695 = vmul.f32 %v1574, %v1574
  %v1696 = vmin.f32 16.0, %v1695
  %v1697 = vmul.f32 %v1696, 2.1237322e-06
  %v1698 = vadd.f32 %v1697, 0.00028619796
  %v1699 = vmul.f32 %v1696, %v1698
  %v1700 = vadd.f32 %v1699, 0.0036580483
  %v1701 = vmul.f32 %v1696, %v1700
  %v1702 = vadd.f32 %v1701, 0.05243302
  %v1703 = vmul.f32 %v1696, %v1702
  %v1704 = vadd.f32 %v1703, 0.18741608
  %v1705 = vmul.f32 %v1696, %v1704
  %v1706 = vadd.f32 %v1705, 1.1283791
  %v1707 = vmul.f32 %v1574, %v1706
  %v1708 = vmul.f32 %v1696, 3.8918573e-05
  %v1709 = vadd.f32 %v1708, 0.001143296
  %v1710 = vmul.f32 %v1696, %v1709
  %v1711 = vadd.f32 %v1710, 0.014752088
  %v1712 = vmul.f32 %v1696, %v1711
  %v1713 = vadd.f32 %v1712, 0.112945676
  %v1714 = vmul.f32 %v1696, %v1713
  %v1715 = vadd.f32 %v1714, 0.4994258
  %v1716 = vmul.f32 %v1696, %v1715
  %v1717 = vadd.f32 %v1716, 1.0
  %v1718 = vrcp.pop %v1717
  %v1719 = vmul.f32 %v1717, %v1718
  %v1720 = vsub.f32 1.0, %v1719
  %v1721 = vmul.f32 %v1718, %v1720
  %v1722 = vadd.f32 %v1718, %v1721
  %vm1723 = vweird.f32 %v1717
  %vm1724 = vweird.f32 %v1718
  %vm1725 = vmor %vm1723, %vm1724
  %v1726 = vsel %vm1725, %v1718, %v1722
  %v1727 = vand.u32 2147483647, %v1717
  %vm1728 = vcmp.eq.f32.partialorder %v1727, 8.507059e+37
  %v1729 = vand.u32 %v1717, 2147483648
  %v1730 = vor.u32 1.1754944e-38, %v1729
  %v1731 = vsel %vm1728, %v1730, %v1726
  %v1732 = vmul.f32 %v1707, %v1731
  %v1733 = vmin.f32 %v1732, 1.0
  %v1734 = vmax.f32 %v1733, -1.0
  %v1735 = vadd.f32 %v1614, 1.0
  %v1736 = vadd.f32 %v1654, 1.0
  %v1737 = vadd.f32 %v1694, 1.0
  %v1738 = vadd.f32 %v1734, 1.0
  %v1739 = vmul.f32 %v1567, %v1735
  %v1740 = vmul.f32 %v1568, %v1736
  %v1741 = vmul.f32 %v1569, %v1737
  %v1742 = vmul.f32 %v1570, %v1738
  %v1743 = vld [vmem:[#allocation6] sm:$0xff]
  %v1744 = vld [vmem:[#allocation6 + $0x8] sm:$0xff]
  %v1745 = vld [vmem:[#allocation6 + $0x10] sm:$0xff]
  %v1746 = vld [vmem:[#allocation6 + $0x18] sm:$0xff]
  %v1747 = vld [vmem:[#allocation6 + $0x20] sm:$0xff]
  %v1748 = vld [vmem:[#allocation6 + $0x28] sm:$0xff]
  %v1749 = vld [vmem:[#allocation6 + $0x30] sm:$0xff]
  %v1750 = vld [vmem:[#allocation6 + $0x38] sm:$0xff]
  %v1751 = vld [vmem:[#allocation6 + $0x40] sm:$0xff]
  %v1752 = vld [vmem:[#allocation6 + $0x48] sm:$0xff]
  %v1753 = vld [vmem:[#allocation6 + $0x50] sm:$0xff]
  %v1754 = vld [vmem:[#allocation6 + $0x58] sm:$0xff]
  %v1755 = vld [vmem:[#allocation6 + $0x60] sm:$0xff]
  %v1756 = vld [vmem:[#allocation6 + $0x68] sm:$0xff]
  %v1757 = vld [vmem:[#allocation6 + $0x70] sm:$0xff]
  %v1758 = vld [vmem:[#allocation6 + $0x78] sm:$0xff]
  %v1759 = vld [vmem:[#allocation6 + $0x80] sm:$0xff]
  %v1760 = vld [vmem:[#allocation6 + $0x88] sm:$0xff]
  %v1761 = vld [vmem:[#allocation6 + $0x90] sm:$0xff]
  %v1762 = vld [vmem:[#allocation6 + $0x98] sm:$0xff]
  %v1763 = vld [vmem:[%s1 + $0x1] sm:$0x1]
  %1764 = vmatpush.msra.mxu0 0.0
  %1765 = vmatpush.msra.mxu0 0.0
  %1766 = vmatpush.msra.mxu0 0.0
  %1767 = vmatpush.msra.mxu0 0.0
  %1768 = vmatpush.msra.mxu0 0.0
  %1769 = vmatpush.msra.mxu0 0.0
  %1770 = vmatpush.msra.mxu0 0.0
  %1771 = vmatpush.msra.mxu0 0.0
  %1772 = vmatpush.msra.mxu0 %v1750
  %1773 = vmatpush.msra.mxu0 %v1749
  %1774 = vmatpush.msra.mxu0 %v1748
  %1775 = vmatpush.msra.mxu0 %v1747
  %1776 = vmatpush.msra.mxu0 %v1746
  %1777 = vmatpush.msra.mxu0 %v1745
  %1778 = vmatpush.msra.mxu0 %v1744
  %1779 = vmatpush.msra.mxu0 %v1743
  %1780 = vmatmul.f32.gmra.mxu0 %v1055
  %v1781 = vpop.f32.mrf.mxu0
  %v1782 = vadd.f32 0.0, %v1781
  %1783 = vmatmul.f32.gmra.mxu0 %v1058
  %v1784 = vpop.f32.mrf.mxu0
  %v1785 = vadd.f32 0.0, %v1784
  %1786 = vdwg.mxu0
  %v1788 = vperm.slane %v1763, 0
  %1792 = vrot.lane.b32.xlu0 %v1782, 16
  %v1793 = vpop.permute.xlu0 %1792
  %1794 = vrot.lane.b32.xlu0 %v1785, 16
  %v1795 = vpop.permute.xlu0 %1794
  %v1798 = vadd.f32 %v1788, %v1793
  %v1799 = vadd.f32 %v1788, %v1795
  %1802 = vrot.lane.b32.xlu0 %v1347, 96
  %v1803 = vpop.permute.xlu0 %1802
  %1804 = vrot.lane.b32.xlu0 %v1348, 96
  %v1805 = vpop.permute.xlu0 %1804
  %v1806 = vsel %vm1053, %v1803, 0
  %v1808 = vsel %vm1053, %v1805, 0
  %1810 = vmatpush.msra.mxu0 0.0
  %1811 = vmatpush.msra.mxu0 0.0
  %1812 = vmatpush.msra.mxu0 0.0
  %1813 = vmatpush.msra.mxu0 0.0
  %1814 = vmatpush.msra.mxu0 0.0
  %1815 = vmatpush.msra.mxu0 0.0
  %1816 = vmatpush.msra.mxu0 0.0
  %1817 = vmatpush.msra.mxu0 0.0
  %1818 = vmatpush.msra.mxu0 %v1758
  %1819 = vmatpush.msra.mxu0 %v1757
  %1820 = vmatpush.msra.mxu0 %v1756
  %1821 = vmatpush.msra.mxu0 %v1755
  %1822 = vmatpush.msra.mxu0 %v1754
  %1823 = vmatpush.msra.mxu0 %v1753
  %1824 = vmatpush.msra.mxu0 %v1752
  %1825 = vmatpush.msra.mxu0 %v1751
  %1826 = vmatmul.f32.gmra.mxu0 %v1806
  %v1827 = vpop.f32.mrf.mxu0
  %v1828 = vadd.f32 0.0, %v1827
  %1829 = vmatmul.f32.gmra.mxu0 %v1808
  %v1830 = vpop.f32.mrf.mxu0
  %v1831 = vadd.f32 0.0, %v1830
  %1832 = vdwg.mxu0
  %1835 = vrot.lane.b32.xlu0 %v1828, 16
  %v1836 = vpop.permute.xlu0 %1835
  %1837 = vrot.lane.b32.xlu0 %v1831, 16
  %v1838 = vpop.permute.xlu0 %1837
  %v1841 = vadd.f32 %v1798, %v1836
  %v1842 = vadd.f32 %v1799, %v1838
  %1847 = vrot.lane.b32.xlu0 %v1739, 16
  %v1848 = vpop.permute.xlu0 %1847
  %1849 = vrot.lane.b32.xlu0 %v1740, 16
  %v1850 = vpop.permute.xlu0 %1849
  %1851 = vrot.lane.b32.xlu0 %v1741, 16
  %v1852 = vpop.permute.xlu0 %1851
  %1853 = vrot.lane.b32.xlu0 %v1742, 16
  %v1854 = vpop.permute.xlu0 %1853
  %v1855 = vsel %vm1527, %v1848, %v1850
  %v1856 = vsel %vm1527, %v1852, %v1854
  %v1857 = vsel %vm1221, %v1855, 0
  %v1859 = vsel %vm1221, %v1856, 0
  %1861 = vmatpush.msra.mxu0 0.0
  %1862 = vmatpush.msra.mxu0 0.0
  %1863 = vmatpush.msra.mxu0 0.0
  %1864 = vmatpush.msra.mxu0 0.0
  %1865 = vmatpush.msra.mxu0 0.0
  %1866 = vmatpush.msra.mxu0 0.0
  %1867 = vmatpush.msra.mxu0 0.0
  %1868 = vmatpush.msra.mxu0 0.0
  %1869 = vmatpush.msra.mxu0 0.0
  %1870 = vmatpush.msra.mxu0 0.0
  %1871 = vmatpush.msra.mxu0 0.0
  %1872 = vmatpush.msra.mxu0 0.0
  %1873 = vmatpush.msra.mxu0 %v1762
  %1874 = vmatpush.msra.mxu0 %v1761
  %1875 = vmatpush.msra.mxu0 %v1760
  %1876 = vmatpush.msra.mxu0 %v1759
  %1877 = vmatmul.f32.gmra.mxu0 %v1857
  %v1878 = vpop.f32.mrf.mxu0
  %v1879 = vadd.f32 0.0, %v1878
  %1880 = vmatmul.f32.gmra.mxu0 %v1859
  %v1881 = vpop.f32.mrf.mxu0
  %v1882 = vadd.f32 0.0, %v1881
  %1883 = vdwg.mxu0
  %1886 = vrot.lane.b32.xlu0 %v1879, 16
  %v1887 = vpop.permute.xlu0 %1886
  %1888 = vrot.lane.b32.xlu0 %v1882, 16
  %v1889 = vpop.permute.xlu0 %1888
  %v1892 = vadd.f32 %v1841, %v1887
  %v1893 = vadd.f32 %v1842, %v1889
  %v1894 = vmul.f32 %v1892, 0.5
  %v1895 = vmul.f32 %v1893, 0.5
  %v1896 = vmul.f32 %v1892, 0.70710677
  %v1897 = vmul.f32 %v1893, 0.70710677
  %v1898 = vmul.f32 %v1896, %v1896
  %v1899 = vmin.f32 16.0, %v1898
  %v1900 = vmul.f32 %v1899, 2.1237322e-06
  %v1901 = vadd.f32 %v1900, 0.00028619796
  %v1902 = vmul.f32 %v1899, %v1901
  %v1903 = vadd.f32 %v1902, 0.0036580483
  %v1904 = vmul.f32 %v1899, %v1903
  %v1905 = vadd.f32 %v1904, 0.05243302
  %v1906 = vmul.f32 %v1899, %v1905
  %v1907 = vadd.f32 %v1906, 0.18741608
  %v1908 = vmul.f32 %v1899, %v1907
  %v1909 = vadd.f32 %v1908, 1.1283791
  %v1910 = vmul.f32 %v1896, %v1909
  %v1911 = vmul.f32 %v1899, 3.8918573e-05
  %v1912 = vadd.f32 %v1911, 0.001143296
  %v1913 = vmul.f32 %v1899, %v1912
  %v1914 = vadd.f32 %v1913, 0.014752088
  %v1915 = vmul.f32 %v1899, %v1914
  %v1916 = vadd.f32 %v1915, 0.112945676
  %v1917 = vmul.f32 %v1899, %v1916
  %v1918 = vadd.f32 %v1917, 0.4994258
  %v1919 = vmul.f32 %v1899, %v1918
  %v1920 = vadd.f32 %v1919, 1.0
  %v1921 = vrcp.pop %v1920
  %v1922 = vmul.f32 %v1920, %v1921
  %v1923 = vsub.f32 1.0, %v1922
  %v1924 = vmul.f32 %v1921, %v1923
  %v1925 = vadd.f32 %v1921, %v1924
  %vm1926 = vweird.f32 %v1920
  %vm1927 = vweird.f32 %v1921
  %vm1928 = vmor %vm1926, %vm1927
  %v1929 = vsel %vm1928, %v1921, %v1925
  %v1930 = vand.u32 2147483647, %v1920
  %vm1931 = vcmp.eq.f32.partialorder %v1930, 8.507059e+37
  %v1932 = vand.u32 %v1920, 2147483648
  %v1933 = vor.u32 1.1754944e-38, %v1932
  %v1934 = vsel %vm1931, %v1933, %v1929
  %v1935 = vmul.f32 %v1910, %v1934
  %v1936 = vmin.f32 %v1935, 1.0
  %v1937 = vmax.f32 %v1936, -1.0
  %v1938 = vmul.f32 %v1897, %v1897
  %v1939 = vmin.f32 16.0, %v1938
  %v1940 = vmul.f32 %v1939, 2.1237322e-06
  %v1941 = vadd.f32 %v1940, 0.00028619796
  %v1942 = vmul.f32 %v1939, %v1941
  %v1943 = vadd.f32 %v1942, 0.0036580483
  %v1944 = vmul.f32 %v1939, %v1943
  %v1945 = vadd.f32 %v1944, 0.05243302
  %v1946 = vmul.f32 %v1939, %v1945
  %v1947 = vadd.f32 %v1946, 0.18741608
  %v1948 = vmul.f32 %v1939, %v1947
  %v1949 = vadd.f32 %v1948, 1.1283791
  %v1950 = vmul.f32 %v1897, %v1949
  %v1951 = vmul.f32 %v1939, 3.8918573e-05
  %v1952 = vadd.f32 %v1951, 0.001143296
  %v1953 = vmul.f32 %v1939, %v1952
  %v1954 = vadd.f32 %v1953, 0.014752088
  %v1955 = vmul.f32 %v1939, %v1954
  %v1956 = vadd.f32 %v1955, 0.112945676
  %v1957 = vmul.f32 %v1939, %v1956
  %v1958 = vadd.f32 %v1957, 0.4994258
  %v1959 = vmul.f32 %v1939, %v1958
  %v1960 = vadd.f32 %v1959, 1.0
  %v1961 = vrcp.pop %v1960
  %v1962 = vmul.f32 %v1960, %v1961
  %v1963 = vsub.f32 1.0, %v1962
  %v1964 = vmul.f32 %v1961, %v1963
  %v1965 = vadd.f32 %v1961, %v1964
  %vm1966 = vweird.f32 %v1960
  %vm1967 = vweird.f32 %v1961
  %vm1968 = vmor %vm1966, %vm1967
  %v1969 = vsel %vm1968, %v1961, %v1965
  %v1970 = vand.u32 2147483647, %v1960
  %vm1971 = vcmp.eq.f32.partialorder %v1970, 8.507059e+37
  %v1972 = vand.u32 %v1960, 2147483648
  %v1973 = vor.u32 1.1754944e-38, %v1972
  %v1974 = vsel %vm1971, %v1973, %v1969
  %v1975 = vmul.f32 %v1950, %v1974
  %v1976 = vmin.f32 %v1975, 1.0
  %v1977 = vmax.f32 %v1976, -1.0
  %v1978 = vadd.f32 %v1937, 1.0
  %v1979 = vadd.f32 %v1977, 1.0
  %v1980 = vmul.f32 %v1894, %v1978
  %v1981 = vmul.f32 %v1895, %v1979
  %v1982 = vld [vmem:[#allocation7] sm:$0xff]
  %v1983 = vld [vmem:[#allocation7 + $0x8] sm:$0xff]
  %1984 = vmatpush.msra.mxu0 0.0
  %1985 = vmatpush.msra.mxu0 0.0
  %1986 = vmatpush.msra.mxu0 0.0
  %1987 = vmatpush.msra.mxu0 0.0
  %1988 = vmatpush.msra.mxu0 0.0
  %1989 = vmatpush.msra.mxu0 0.0
  %1990 = vmatpush.msra.mxu0 0.0
  %1991 = vmatpush.msra.mxu0 0.0
  %1992 = vmatpush.msra.mxu0 0.0
  %1993 = vmatpush.msra.mxu0 0.0
  %1994 = vmatpush.msra.mxu0 0.0
  %1995 = vmatpush.msra.mxu0 0.0
  %1996 = vmatpush.msra.mxu0 0.0
  %1997 = vmatpush.msra.mxu0 0.0
  %1998 = vmatpush.msra.mxu0 %v1983
  %1999 = vmatpush.msra.mxu0 %v1982
  %2000 = vmatmul.f32.gmra.mxu0 %v1528
  %v2001 = vpop.f32.mrf.mxu0
  %v2002 = vadd.f32 0.0, %v2001
  %2003 = vmatmul.f32.gmra.mxu0 %v1530
  %v2004 = vpop.f32.mrf.mxu0
  %v2005 = vadd.f32 0.0, %v2004
  %2006 = vdwg.mxu0
  %2009 = vrot.lane.b32.xlu0 %v2002, 80
  %v2010 = vpop.permute.xlu0 %2009
  %2011 = vrot.lane.b32.xlu0 %v2005, 80
  %v2012 = vpop.permute.xlu0 %2011
  %v2015 = vadd.f32 %v1788, %v2010
  %v2016 = vadd.f32 %v1788, %v2012
  %v2017 = vmul.f32 %v2015, 0.5
  %v2018 = vmul.f32 %v2016, 0.5
  %v2019 = vmul.f32 %v2015, 0.70710677
  %v2020 = vmul.f32 %v2016, 0.70710677
  %v2021 = vmul.f32 %v2019, %v2019
  %v2022 = vmin.f32 16.0, %v2021
  %v2023 = vmul.f32 %v2022, 2.1237322e-06
  %v2024 = vadd.f32 %v2023, 0.00028619796
  %v2025 = vmul.f32 %v2022, %v2024
  %v2026 = vadd.f32 %v2025, 0.0036580483
  %v2027 = vmul.f32 %v2022, %v2026
  %v2028 = vadd.f32 %v2027, 0.05243302
  %v2029 = vmul.f32 %v2022, %v2028
  %v2030 = vadd.f32 %v2029, 0.18741608
  %v2031 = vmul.f32 %v2022, %v2030
  %v2032 = vadd.f32 %v2031, 1.1283791
  %v2033 = vmul.f32 %v2019, %v2032
  %v2034 = vmul.f32 %v2022, 3.8918573e-05
  %v2035 = vadd.f32 %v2034, 0.001143296
  %v2036 = vmul.f32 %v2022, %v2035
  %v2037 = vadd.f32 %v2036, 0.014752088
  %v2038 = vmul.f32 %v2022, %v2037
  %v2039 = vadd.f32 %v2038, 0.112945676
  %v2040 = vmul.f32 %v2022, %v2039
  %v2041 = vadd.f32 %v2040, 0.4994258
  %v2042 = vmul.f32 %v2022, %v2041
  %v2043 = vadd.f32 %v2042, 1.0
  %v2044 = vrcp.pop %v2043
  %v2045 = vmul.f32 %v2043, %v2044
  %v2046 = vsub.f32 1.0, %v2045
  %v2047 = vmul.f32 %v2044, %v2046
  %v2048 = vadd.f32 %v2044, %v2047
  %vm2049 = vweird.f32 %v2043
  %vm2050 = vweird.f32 %v2044
  %vm2051 = vmor %vm2049, %vm2050
  %v2052 = vsel %vm2051, %v2044, %v2048
  %v2053 = vand.u32 2147483647, %v2043
  %vm2054 = vcmp.eq.f32.partialorder %v2053, 8.507059e+37
  %v2055 = vand.u32 %v2043, 2147483648
  %v2056 = vor.u32 1.1754944e-38, %v2055
  %v2057 = vsel %vm2054, %v2056, %v2052
  %v2058 = vmul.f32 %v2033, %v2057
  %v2059 = vmin.f32 %v2058, 1.0
  %v2060 = vmax.f32 %v2059, -1.0
  %v2061 = vmul.f32 %v2020, %v2020
  %v2062 = vmin.f32 16.0, %v2061
  %v2063 = vmul.f32 %v2062, 2.1237322e-06
  %v2064 = vadd.f32 %v2063, 0.00028619796
  %v2065 = vmul.f32 %v2062, %v2064
  %v2066 = vadd.f32 %v2065, 0.0036580483
  %v2067 = vmul.f32 %v2062, %v2066
  %v2068 = vadd.f32 %v2067, 0.05243302
  %v2069 = vmul.f32 %v2062, %v2068
  %v2070 = vadd.f32 %v2069, 0.18741608
  %v2071 = vmul.f32 %v2062, %v2070
  %v2072 = vadd.f32 %v2071, 1.1283791
  %v2073 = vmul.f32 %v2020, %v2072
  %v2074 = vmul.f32 %v2062, 3.8918573e-05
  %v2075 = vadd.f32 %v2074, 0.001143296
  %v2076 = vmul.f32 %v2062, %v2075
  %v2077 = vadd.f32 %v2076, 0.014752088
  %v2078 = vmul.f32 %v2062, %v2077
  %v2079 = vadd.f32 %v2078, 0.112945676
  %v2080 = vmul.f32 %v2062, %v2079
  %v2081 = vadd.f32 %v2080, 0.4994258
  %v2082 = vmul.f32 %v2062, %v2081
  %v2083 = vadd.f32 %v2082, 1.0
  %v2084 = vrcp.pop %v2083
  %v2085 = vmul.f32 %v2083, %v2084
  %v2086 = vsub.f32 1.0, %v2085
  %v2087 = vmul.f32 %v2084, %v2086
  %v2088 = vadd.f32 %v2084, %v2087
  %vm2089 = vweird.f32 %v2083
  %vm2090 = vweird.f32 %v2084
  %vm2091 = vmor %vm2089, %vm2090
  %v2092 = vsel %vm2091, %v2084, %v2088
  %v2093 = vand.u32 2147483647, %v2083
  %vm2094 = vcmp.eq.f32.partialorder %v2093, 8.507059e+37
  %v2095 = vand.u32 %v2083, 2147483648
  %v2096 = vor.u32 1.1754944e-38, %v2095
  %v2097 = vsel %vm2094, %v2096, %v2092
  %v2098 = vmul.f32 %v2073, %v2097
  %v2099 = vmin.f32 %v2098, 1.0
  %v2100 = vmax.f32 %v2099, -1.0
  %v2101 = vadd.f32 %v2060, 1.0
  %v2102 = vadd.f32 %v2100, 1.0
  %v2103 = vmul.f32 %v2017, %v2101
  %v2104 = vmul.f32 %v2018, %v2102
  %v2105 = vld [vmem:[#allocation8] sm:$0xff]
  %v2106 = vld [vmem:[#allocation8 + $0x8] sm:$0xff]
  %v2107 = vld [vmem:[#allocation8 + $0x10] sm:$0xff]
  %2108 = vmatpush.msra.mxu0 0.0
  %2109 = vmatpush.msra.mxu0 0.0
  %2110 = vmatpush.msra.mxu0 0.0
  %2111 = vmatpush.msra.mxu0 0.0
  %2112 = vmatpush.msra.mxu0 0.0
  %2113 = vmatpush.msra.mxu0 0.0
  %2114 = vmatpush.msra.mxu0 0.0
  %2115 = vmatpush.msra.mxu0 0.0
  %2116 = vmatpush.msra.mxu0 0.0
  %2117 = vmatpush.msra.mxu0 0.0
  %2118 = vmatpush.msra.mxu0 0.0
  %2119 = vmatpush.msra.mxu0 0.0
  %2120 = vmatpush.msra.mxu0 0.0
  %2121 = vmatpush.msra.mxu0 0.0
  %2122 = vmatpush.msra.mxu0 %v2106
  %2123 = vmatpush.msra.mxu0 %v2105
  %2124 = vmatmul.f32.gmra.mxu0 %v1528
  %v2125 = vpop.f32.mrf.mxu0
  %v2126 = vadd.f32 0.0, %v2125
  %2127 = vmatmul.f32.gmra.mxu0 %v1530
  %v2128 = vpop.f32.mrf.mxu0
  %v2129 = vadd.f32 0.0, %v2128
  %2130 = vdwg.mxu0
  %2133 = vrot.lane.b32.xlu0 %v2126, 88
  %v2134 = vpop.permute.xlu0 %2133
  %2135 = vrot.lane.b32.xlu0 %v2129, 88
  %v2136 = vpop.permute.xlu0 %2135
  %v2139 = vadd.f32 %v1788, %v2134
  %v2140 = vadd.f32 %v1788, %v2136
  %2143 = vrot.lane.b32.xlu0 %v2103, 48
  %v2144 = vpop.permute.xlu0 %2143
  %2145 = vrot.lane.b32.xlu0 %v2104, 48
  %v2146 = vpop.permute.xlu0 %2145
  %vm2147 = vcmask 64512
  %v2148 = vsel %vm2147, %v2144, 0
  %v2150 = vsel %vm2147, %v2146, 0
  %2152 = vmatpush.msra.mxu0 0.0
  %2153 = vmatpush.msra.mxu0 0.0
  %2154 = vmatpush.msra.mxu0 0.0
  %2155 = vmatpush.msra.mxu0 0.0
  %2156 = vmatpush.msra.mxu0 0.0
  %2157 = vmatpush.msra.mxu0 0.0
  %2158 = vmatpush.msra.mxu0 0.0
  %2159 = vmatpush.msra.mxu0 0.0
  %2160 = vmatpush.msra.mxu0 0.0
  %2161 = vmatpush.msra.mxu0 0.0
  %2162 = vmatpush.msra.mxu0 0.0
  %2163 = vmatpush.msra.mxu0 0.0
  %2164 = vmatpush.msra.mxu0 0.0
  %2165 = vmatpush.msra.mxu0 0.0
  %2166 = vmatpush.msra.mxu0 0.0
  %2167 = vmatpush.msra.mxu0 %v2107
  %2168 = vmatmul.f32.gmra.mxu0 %v2148
  %v2169 = vpop.f32.mrf.mxu0
  %v2170 = vadd.f32 0.0, %v2169
  %2171 = vmatmul.f32.gmra.mxu0 %v2150
  %v2172 = vpop.f32.mrf.mxu0
  %v2173 = vadd.f32 0.0, %v2172
  %2174 = vdwg.mxu0
  %2177 = vrot.lane.b32.xlu0 %v2170, 88
  %v2178 = vpop.permute.xlu0 %2177
  %2179 = vrot.lane.b32.xlu0 %v2173, 88
  %v2180 = vpop.permute.xlu0 %2179
  %v2183 = vadd.f32 %v2139, %v2178
  %v2184 = vadd.f32 %v2140, %v2180
  %v2185 = vmul.f32 %v2183, 0.5
  %v2186 = vmul.f32 %v2184, 0.5
  %v2187 = vmul.f32 %v2183, 0.70710677
  %v2188 = vmul.f32 %v2184, 0.70710677
  %v2189 = vmul.f32 %v2187, %v2187
  %v2190 = vmin.f32 16.0, %v2189
  %v2191 = vmul.f32 %v2190, 2.1237322e-06
  %v2192 = vadd.f32 %v2191, 0.00028619796
  %v2193 = vmul.f32 %v2190, %v2192
  %v2194 = vadd.f32 %v2193, 0.0036580483
  %v2195 = vmul.f32 %v2190, %v2194
  %v2196 = vadd.f32 %v2195, 0.05243302
  %v2197 = vmul.f32 %v2190, %v2196
  %v2198 = vadd.f32 %v2197, 0.18741608
  %v2199 = vmul.f32 %v2190, %v2198
  %v2200 = vadd.f32 %v2199, 1.1283791
  %v2201 = vmul.f32 %v2187, %v2200
  %v2202 = vmul.f32 %v2190, 3.8918573e-05
  %v2203 = vadd.f32 %v2202, 0.001143296
  %v2204 = vmul.f32 %v2190, %v2203
  %v2205 = vadd.f32 %v2204, 0.014752088
  %v2206 = vmul.f32 %v2190, %v2205
  %v2207 = vadd.f32 %v2206, 0.112945676
  %v2208 = vmul.f32 %v2190, %v2207
  %v2209 = vadd.f32 %v2208, 0.4994258
  %v2210 = vmul.f32 %v2190, %v2209
  %v2211 = vadd.f32 %v2210, 1.0
  %v2212 = vrcp.pop %v2211
  %v2213 = vmul.f32 %v2211, %v2212
  %v2214 = vsub.f32 1.0, %v2213
  %v2215 = vmul.f32 %v2212, %v2214
  %v2216 = vadd.f32 %v2212, %v2215
  %vm2217 = vweird.f32 %v2211
  %vm2218 = vweird.f32 %v2212
  %vm2219 = vmor %vm2217, %vm2218
  %v2220 = vsel %vm2219, %v2212, %v2216
  %v2221 = vand.u32 2147483647, %v2211
  %vm2222 = vcmp.eq.f32.partialorder %v2221, 8.507059e+37
  %v2223 = vand.u32 %v2211, 2147483648
  %v2224 = vor.u32 1.1754944e-38, %v2223
  %v2225 = vsel %vm2222, %v2224, %v2220
  %v2226 = vmul.f32 %v2201, %v2225
  %v2227 = vmin.f32 %v2226, 1.0
  %v2228 = vmax.f32 %v2227, -1.0
  %v2229 = vmul.f32 %v2188, %v2188
  %v2230 = vmin.f32 16.0, %v2229
  %v2231 = vmul.f32 %v2230, 2.1237322e-06
  %v2232 = vadd.f32 %v2231, 0.00028619796
  %v2233 = vmul.f32 %v2230, %v2232
  %v2234 = vadd.f32 %v2233, 0.0036580483
  %v2235 = vmul.f32 %v2230, %v2234
  %v2236 = vadd.f32 %v2235, 0.05243302
  %v2237 = vmul.f32 %v2230, %v2236
  %v2238 = vadd.f32 %v2237, 0.18741608
  %v2239 = vmul.f32 %v2230, %v2238
  %v2240 = vadd.f32 %v2239, 1.1283791
  %v2241 = vmul.f32 %v2188, %v2240
  %v2242 = vmul.f32 %v2230, 3.8918573e-05
  %v2243 = vadd.f32 %v2242, 0.001143296
  %v2244 = vmul.f32 %v2230, %v2243
  %v2245 = vadd.f32 %v2244, 0.014752088
  %v2246 = vmul.f32 %v2230, %v2245
  %v2247 = vadd.f32 %v2246, 0.112945676
  %v2248 = vmul.f32 %v2230, %v2247
  %v2249 = vadd.f32 %v2248, 0.4994258
  %v2250 = vmul.f32 %v2230, %v2249
  %v2251 = vadd.f32 %v2250, 1.0
  %v2252 = vrcp.pop %v2251
  %v2253 = vmul.f32 %v2251, %v2252
  %v2254 = vsub.f32 1.0, %v2253
  %v2255 = vmul.f32 %v2252, %v2254
  %v2256 = vadd.f32 %v2252, %v2255
  %vm2257 = vweird.f32 %v2251
  %vm2258 = vweird.f32 %v2252
  %vm2259 = vmor %vm2257, %vm2258
  %v2260 = vsel %vm2259, %v2252, %v2256
  %v2261 = vand.u32 2147483647, %v2251
  %vm2262 = vcmp.eq.f32.partialorder %v2261, 8.507059e+37
  %v2263 = vand.u32 %v2251, 2147483648
  %v2264 = vor.u32 1.1754944e-38, %v2263
  %v2265 = vsel %vm2262, %v2264, %v2260
  %v2266 = vmul.f32 %v2241, %v2265
  %v2267 = vmin.f32 %v2266, 1.0
  %v2268 = vmax.f32 %v2267, -1.0
  %v2269 = vadd.f32 %v2228, 1.0
  %v2270 = vadd.f32 %v2268, 1.0
  %v2271 = vmul.f32 %v2185, %v2269
  %v2272 = vmul.f32 %v2186, %v2270
  %v2273 = vld [vmem:[#allocation9] sm:$0xff]
  %v2274 = vld [vmem:[#allocation9 + $0x8] sm:$0xff]
  %v2275 = vld [vmem:[#allocation9 + $0x10] sm:$0xff]
  %v2276 = vld [vmem:[#allocation9 + $0x18] sm:$0xff]
  %v2277 = vld [vmem:[#allocation9 + $0x20] sm:$0xff]
  %v2278 = vld [vmem:[#allocation9 + $0x28] sm:$0xff]
  %v2279 = vld [vmem:[#allocation9 + $0x30] sm:$0xff]
  %v2280 = vld [vmem:[#allocation9 + $0x38] sm:$0xff]
  %v2281 = vld [vmem:[#allocation9 + $0x40] sm:$0xff]
  %v2282 = vld [vmem:[#allocation9 + $0x48] sm:$0xff]
  %v2283 = vld [vmem:[%s1 + $0x1] sm:$0x3]
  %2284 = vmatpush.msra.mxu0 0.0
  %2285 = vmatpush.msra.mxu0 0.0
  %2286 = vmatpush.msra.mxu0 0.0
  %2287 = vmatpush.msra.mxu0 0.0
  %2288 = vmatpush.msra.mxu0 0.0
  %2289 = vmatpush.msra.mxu0 0.0
  %2290 = vmatpush.msra.mxu0 0.0
  %2291 = vmatpush.msra.mxu0 0.0
  %2292 = vmatpush.msra.mxu0 0.0
  %2293 = vmatpush.msra.mxu0 0.0
  %2294 = vmatpush.msra.mxu0 0.0
  %2295 = vmatpush.msra.mxu0 0.0
  %2296 = vmatpush.msra.mxu0 %v2276
  %2297 = vmatpush.msra.mxu0 %v2275
  %2298 = vmatpush.msra.mxu0 %v2274
  %2299 = vmatpush.msra.mxu0 %v2273
  %2300 = vmatmul.f32.gmra.mxu0 %v1223
  %v2301 = vpop.f32.mrf.mxu0
  %v2302 = vadd.f32 0.0, %v2301
  %2303 = vmatmul.f32.gmra.mxu0 %v1226
  %v2304 = vpop.f32.mrf.mxu0
  %v2305 = vadd.f32 0.0, %v2304
  %2306 = vdwg.mxu0
  %v2308 = vperm.slane %v2283, 0
  %v2309 = vperm.slane %v2283, 1
  %2314 = vrot.lane.b32.xlu0 %v2302, 104
  %v2315 = vpop.permute.xlu0 %2314
  %2316 = vrot.lane.b32.xlu0 %v2305, 104
  %v2317 = vpop.permute.xlu0 %2316
  %v2320 = vadd.f32 %v2308, %v2315
  %v2321 = vadd.f32 %v2309, %v2315
  %v2322 = vadd.f32 %v2308, %v2317
  %v2323 = vadd.f32 %v2309, %v2317
  %2324 = vmatpush.msra.mxu0 0.0
  %2325 = vmatpush.msra.mxu0 0.0
  %2326 = vmatpush.msra.mxu0 0.0
  %2327 = vmatpush.msra.mxu0 0.0
  %2328 = vmatpush.msra.mxu0 0.0
  %2329 = vmatpush.msra.mxu0 0.0
  %2330 = vmatpush.msra.mxu0 0.0
  %2331 = vmatpush.msra.mxu0 0.0
  %2332 = vmatpush.msra.mxu0 0.0
  %2333 = vmatpush.msra.mxu0 0.0
  %2334 = vmatpush.msra.mxu0 0.0
  %2335 = vmatpush.msra.mxu0 0.0
  %2336 = vmatpush.msra.mxu0 %v2280
  %2337 = vmatpush.msra.mxu0 %v2279
  %2338 = vmatpush.msra.mxu0 %v2278
  %2339 = vmatpush.msra.mxu0 %v2277
  %2340 = vmatmul.f32.gmra.mxu0 %v1857
  %v2341 = vpop.f32.mrf.mxu0
  %v2342 = vadd.f32 0.0, %v2341
  %2343 = vmatmul.f32.gmra.mxu0 %v1859
  %v2344 = vpop.f32.mrf.mxu0
  %v2345 = vadd.f32 0.0, %v2344
  %2346 = vdwg.mxu0
  %2349 = vrot.lane.b32.xlu0 %v2342, 104
  %v2350 = vpop.permute.xlu0 %2349
  %2351 = vrot.lane.b32.xlu0 %v2345, 104
  %v2352 = vpop.permute.xlu0 %2351
  %v2355 = vadd.f32 %v2320, %v2350
  %v2356 = vadd.f32 %v2321, %v2350
  %v2357 = vadd.f32 %v2322, %v2352
  %v2358 = vadd.f32 %v2323, %v2352
  %2361 = vrot.lane.b32.xlu0 %v2271, 40
  %v2362 = vpop.permute.xlu0 %2361
  %2363 = vrot.lane.b32.xlu0 %v2272, 40
  %v2364 = vpop.permute.xlu0 %2363
  %v2365 = vsel %vm1527, %v2362, 0
  %v2367 = vsel %vm1527, %v2364, 0
  %2369 = vmatpush.msra.mxu0 0.0
  %2370 = vmatpush.msra.mxu0 0.0
  %2371 = vmatpush.msra.mxu0 0.0
  %2372 = vmatpush.msra.mxu0 0.0
  %2373 = vmatpush.msra.mxu0 0.0
  %2374 = vmatpush.msra.mxu0 0.0
  %2375 = vmatpush.msra.mxu0 0.0
  %2376 = vmatpush.msra.mxu0 0.0
  %2377 = vmatpush.msra.mxu0 0.0
  %2378 = vmatpush.msra.mxu0 0.0
  %2379 = vmatpush.msra.mxu0 0.0
  %2380 = vmatpush.msra.mxu0 0.0
  %2381 = vmatpush.msra.mxu0 0.0
  %2382 = vmatpush.msra.mxu0 0.0
  %2383 = vmatpush.msra.mxu0 %v2282
  %2384 = vmatpush.msra.mxu0 %v2281
  %2385 = vmatmul.f32.gmra.mxu0 %v2365
  %v2386 = vpop.f32.mrf.mxu0
  %v2387 = vadd.f32 0.0, %v2386
  %2388 = vmatmul.f32.gmra.mxu0 %v2367
  %v2389 = vpop.f32.mrf.mxu0
  %v2390 = vadd.f32 0.0, %v2389
  %2391 = vdwg.mxu0
  %2394 = vrot.lane.b32.xlu0 %v2387, 104
  %v2395 = vpop.permute.xlu0 %2394
  %2396 = vrot.lane.b32.xlu0 %v2390, 104
  %v2397 = vpop.permute.xlu0 %2396
  %v2400 = vadd.f32 %v2355, %v2395
  %v2401 = vadd.f32 %v2356, %v2395
  %v2402 = vadd.f32 %v2357, %v2397
  %v2403 = vadd.f32 %v2358, %v2397
  %v2404 = vmul.f32 %v2400, 0.5
  %v2405 = vmul.f32 %v2401, 0.5
  %v2406 = vmul.f32 %v2402, 0.5
  %v2407 = vmul.f32 %v2403, 0.5
  %v2408 = vmul.f32 %v2400, 0.70710677
  %v2409 = vmul.f32 %v2401, 0.70710677
  %v2410 = vmul.f32 %v2402, 0.70710677
  %v2411 = vmul.f32 %v2403, 0.70710677
  %v2412 = vmul.f32 %v2408, %v2408
  %v2413 = vmin.f32 16.0, %v2412
  %v2414 = vmul.f32 %v2413, 2.1237322e-06
  %v2415 = vadd.f32 %v2414, 0.00028619796
  %v2416 = vmul.f32 %v2413, %v2415
  %v2417 = vadd.f32 %v2416, 0.0036580483
  %v2418 = vmul.f32 %v2413, %v2417
  %v2419 = vadd.f32 %v2418, 0.05243302
  %v2420 = vmul.f32 %v2413, %v2419
  %v2421 = vadd.f32 %v2420, 0.18741608
  %v2422 = vmul.f32 %v2413, %v2421
  %v2423 = vadd.f32 %v2422, 1.1283791
  %v2424 = vmul.f32 %v2408, %v2423
  %v2425 = vmul.f32 %v2413, 3.8918573e-05
  %v2426 = vadd.f32 %v2425, 0.001143296
  %v2427 = vmul.f32 %v2413, %v2426
  %v2428 = vadd.f32 %v2427, 0.014752088
  %v2429 = vmul.f32 %v2413, %v2428
  %v2430 = vadd.f32 %v2429, 0.112945676
  %v2431 = vmul.f32 %v2413, %v2430
  %v2432 = vadd.f32 %v2431, 0.4994258
  %v2433 = vmul.f32 %v2413, %v2432
  %v2434 = vadd.f32 %v2433, 1.0
  %v2435 = vrcp.pop %v2434
  %v2436 = vmul.f32 %v2434, %v2435
  %v2437 = vsub.f32 1.0, %v2436
  %v2438 = vmul.f32 %v2435, %v2437
  %v2439 = vadd.f32 %v2435, %v2438
  %vm2440 = vweird.f32 %v2434
  %vm2441 = vweird.f32 %v2435
  %vm2442 = vmor %vm2440, %vm2441
  %v2443 = vsel %vm2442, %v2435, %v2439
  %v2444 = vand.u32 2147483647, %v2434
  %vm2445 = vcmp.eq.f32.partialorder %v2444, 8.507059e+37
  %v2446 = vand.u32 %v2434, 2147483648
  %v2447 = vor.u32 1.1754944e-38, %v2446
  %v2448 = vsel %vm2445, %v2447, %v2443
  %v2449 = vmul.f32 %v2424, %v2448
  %v2450 = vmin.f32 %v2449, 1.0
  %v2451 = vmax.f32 %v2450, -1.0
  %v2452 = vmul.f32 %v2409, %v2409
  %v2453 = vmin.f32 16.0, %v2452
  %v2454 = vmul.f32 %v2453, 2.1237322e-06
  %v2455 = vadd.f32 %v2454, 0.00028619796
  %v2456 = vmul.f32 %v2453, %v2455
  %v2457 = vadd.f32 %v2456, 0.0036580483
  %v2458 = vmul.f32 %v2453, %v2457
  %v2459 = vadd.f32 %v2458, 0.05243302
  %v2460 = vmul.f32 %v2453, %v2459
  %v2461 = vadd.f32 %v2460, 0.18741608
  %v2462 = vmul.f32 %v2453, %v2461
  %v2463 = vadd.f32 %v2462, 1.1283791
  %v2464 = vmul.f32 %v2409, %v2463
  %v2465 = vmul.f32 %v2453, 3.8918573e-05
  %v2466 = vadd.f32 %v2465, 0.001143296
  %v2467 = vmul.f32 %v2453, %v2466
  %v2468 = vadd.f32 %v2467, 0.014752088
  %v2469 = vmul.f32 %v2453, %v2468
  %v2470 = vadd.f32 %v2469, 0.112945676
  %v2471 = vmul.f32 %v2453, %v2470
  %v2472 = vadd.f32 %v2471, 0.4994258
  %v2473 = vmul.f32 %v2453, %v2472
  %v2474 = vadd.f32 %v2473, 1.0
  %v2475 = vrcp.pop %v2474
  %v2476 = vmul.f32 %v2474, %v2475
  %v2477 = vsub.f32 1.0, %v2476
  %v2478 = vmul.f32 %v2475, %v2477
  %v2479 = vadd.f32 %v2475, %v2478
  %vm2480 = vweird.f32 %v2474
  %vm2481 = vweird.f32 %v2475
  %vm2482 = vmor %vm2480, %vm2481
  %v2483 = vsel %vm2482, %v2475, %v2479
  %v2484 = vand.u32 2147483647, %v2474
  %vm2485 = vcmp.eq.f32.partialorder %v2484, 8.507059e+37
  %v2486 = vand.u32 %v2474, 2147483648
  %v2487 = vor.u32 1.1754944e-38, %v2486
  %v2488 = vsel %vm2485, %v2487, %v2483
  %v2489 = vmul.f32 %v2464, %v2488
  %v2490 = vmin.f32 %v2489, 1.0
  %v2491 = vmax.f32 %v2490, -1.0
  %v2492 = vmul.f32 %v2410, %v2410
  %v2493 = vmin.f32 16.0, %v2492
  %v2494 = vmul.f32 %v2493, 2.1237322e-06
  %v2495 = vadd.f32 %v2494, 0.00028619796
  %v2496 = vmul.f32 %v2493, %v2495
  %v2497 = vadd.f32 %v2496, 0.0036580483
  %v2498 = vmul.f32 %v2493, %v2497
  %v2499 = vadd.f32 %v2498, 0.05243302
  %v2500 = vmul.f32 %v2493, %v2499
  %v2501 = vadd.f32 %v2500, 0.18741608
  %v2502 = vmul.f32 %v2493, %v2501
  %v2503 = vadd.f32 %v2502, 1.1283791
  %v2504 = vmul.f32 %v2410, %v2503
  %v2505 = vmul.f32 %v2493, 3.8918573e-05
  %v2506 = vadd.f32 %v2505, 0.001143296
  %v2507 = vmul.f32 %v2493, %v2506
  %v2508 = vadd.f32 %v2507, 0.014752088
  %v2509 = vmul.f32 %v2493, %v2508
  %v2510 = vadd.f32 %v2509, 0.112945676
  %v2511 = vmul.f32 %v2493, %v2510
  %v2512 = vadd.f32 %v2511, 0.4994258
  %v2513 = vmul.f32 %v2493, %v2512
  %v2514 = vadd.f32 %v2513, 1.0
  %v2515 = vrcp.pop %v2514
  %v2516 = vmul.f32 %v2514, %v2515
  %v2517 = vsub.f32 1.0, %v2516
  %v2518 = vmul.f32 %v2515, %v2517
  %v2519 = vadd.f32 %v2515, %v2518
  %vm2520 = vweird.f32 %v2514
  %vm2521 = vweird.f32 %v2515
  %vm2522 = vmor %vm2520, %vm2521
  %v2523 = vsel %vm2522, %v2515, %v2519
  %v2524 = vand.u32 2147483647, %v2514
  %vm2525 = vcmp.eq.f32.partialorder %v2524, 8.507059e+37
  %v2526 = vand.u32 %v2514, 2147483648
  %v2527 = vor.u32 1.1754944e-38, %v2526
  %v2528 = vsel %vm2525, %v2527, %v2523
  %v2529 = vmul.f32 %v2504, %v2528
  %v2530 = vmin.f32 %v2529, 1.0
  %v2531 = vmax.f32 %v2530, -1.0
  %v2532 = vmul.f32 %v2411, %v2411
  %v2533 = vmin.f32 16.0, %v2532
  %v2534 = vmul.f32 %v2533, 2.1237322e-06
  %v2535 = vadd.f32 %v2534, 0.00028619796
  %v2536 = vmul.f32 %v2533, %v2535
  %v2537 = vadd.f32 %v2536, 0.0036580483
  %v2538 = vmul.f32 %v2533, %v2537
  %v2539 = vadd.f32 %v2538, 0.05243302
  %v2540 = vmul.f32 %v2533, %v2539
  %v2541 = vadd.f32 %v2540, 0.18741608
  %v2542 = vmul.f32 %v2533, %v2541
  %v2543 = vadd.f32 %v2542, 1.1283791
  %v2544 = vmul.f32 %v2411, %v2543
  %v2545 = vmul.f32 %v2533, 3.8918573e-05
  %v2546 = vadd.f32 %v2545, 0.001143296
  %v2547 = vmul.f32 %v2533, %v2546
  %v2548 = vadd.f32 %v2547, 0.014752088
  %v2549 = vmul.f32 %v2533, %v2548
  %v2550 = vadd.f32 %v2549, 0.112945676
  %v2551 = vmul.f32 %v2533, %v2550
  %v2552 = vadd.f32 %v2551, 0.4994258
  %v2553 = vmul.f32 %v2533, %v2552
  %v2554 = vadd.f32 %v2553, 1.0
  %v2555 = vrcp.pop %v2554
  %v2556 = vmul.f32 %v2554, %v2555
  %v2557 = vsub.f32 1.0, %v2556
  %v2558 = vmul.f32 %v2555, %v2557
  %v2559 = vadd.f32 %v2555, %v2558
  %vm2560 = vweird.f32 %v2554
  %vm2561 = vweird.f32 %v2555
  %vm2562 = vmor %vm2560, %vm2561
  %v2563 = vsel %vm2562, %v2555, %v2559
  %v2564 = vand.u32 2147483647, %v2554
  %vm2565 = vcmp.eq.f32.partialorder %v2564, 8.507059e+37
  %v2566 = vand.u32 %v2554, 2147483648
  %v2567 = vor.u32 1.1754944e-38, %v2566
  %v2568 = vsel %vm2565, %v2567, %v2563
  %v2569 = vmul.f32 %v2544, %v2568
  %v2570 = vmin.f32 %v2569, 1.0
  %v2571 = vmax.f32 %v2570, -1.0
  %v2572 = vadd.f32 %v2451, 1.0
  %v2573 = vadd.f32 %v2491, 1.0
  %v2574 = vadd.f32 %v2531, 1.0
  %v2575 = vadd.f32 %v2571, 1.0
  %v2576 = vmul.f32 %v2404, %v2572
  %v2577 = vmul.f32 %v2405, %v2573
  %v2578 = vmul.f32 %v2406, %v2574
  %v2579 = vmul.f32 %v2407, %v2575
  %v2580 = vld [vmem:[#allocation10] sm:$0xff]
  %v2581 = vld [vmem:[#allocation10 + $0x8] sm:$0xff]
  %v2582 = vld [vmem:[#allocation10 + $0x10] sm:$0xff]
  %v2583 = vld [vmem:[#allocation10 + $0x18] sm:$0xff]
  %v2584 = vld [vmem:[#allocation10 + $0x20] sm:$0xff]
  %v2585 = vld [vmem:[#allocation10 + $0x28] sm:$0xff]
  %v2586 = vld [vmem:[#allocation10 + $0x30] sm:$0xff]
  %v2587 = vld [vmem:[#allocation10 + $0x38] sm:$0xff]
  %v2588 = vld [vmem:[#allocation10 + $0x40] sm:$0xff]
  %v2589 = vld [vmem:[#allocation10 + $0x48] sm:$0xff]
  %v2590 = vld [vmem:[#allocation10 + $0x50] sm:$0xff]
  %v2591 = vld [vmem:[#allocation10 + $0x58] sm:$0xff]
  %v2592 = vld [vmem:[#allocation10 + $0x60] sm:$0xff]
  %v2593 = vld [vmem:[#allocation10 + $0x68] sm:$0xff]
  %v2594 = vld [vmem:[#allocation10 + $0x70] sm:$0xff]
  %v2595 = vld [vmem:[#allocation10 + $0x78] sm:$0xff]
  %v2596 = vld [vmem:[#allocation10 + $0x80] sm:$0xff]
  %v2597 = vld [vmem:[#allocation10 + $0x88] sm:$0xff]
  %v2598 = vld [vmem:[#allocation10 + $0x90] sm:$0xff]
  %v2599 = vld [vmem:[#allocation10 + $0x98] sm:$0xff]
  %v2600 = vld [vmem:[#allocation10 + $0xa0] sm:$0xff]
  %v2601 = vld [vmem:[#allocation10 + $0xa8] sm:$0xff]
  %v2602 = vld [vmem:[#allocation10 + $0xb0] sm:$0xff]
  %v2603 = vld [vmem:[#allocation10 + $0xb8] sm:$0xff]
  %v2604 = vld [vmem:[#allocation10 + $0xc0] sm:$0xff]
  %v2605 = vld [vmem:[#allocation10 + $0xc8] sm:$0xff]
  %v2606 = vld [vmem:[#allocation10 + $0xd0] sm:$0xff]
  %v2607 = vld [vmem:[#allocation10 + $0xd8] sm:$0xff]
  %v2608 = vld [vmem:[%s1 + $0x2] sm:$0x1]
  %2609 = vmatpush.msra.mxu0 0.0
  %2610 = vmatpush.msra.mxu0 0.0
  %2611 = vmatpush.msra.mxu0 0.0
  %2612 = vmatpush.msra.mxu0 0.0
  %2613 = vmatpush.msra.mxu0 0.0
  %2614 = vmatpush.msra.mxu0 0.0
  %2615 = vmatpush.msra.mxu0 0.0
  %2616 = vmatpush.msra.mxu0 0.0
  %2617 = vmatpush.msra.mxu0 %v2587
  %2618 = vmatpush.msra.mxu0 %v2586
  %2619 = vmatpush.msra.mxu0 %v2585
  %2620 = vmatpush.msra.mxu0 %v2584
  %2621 = vmatpush.msra.mxu0 %v2583
  %2622 = vmatpush.msra.mxu0 %v2582
  %2623 = vmatpush.msra.mxu0 %v2581
  %2624 = vmatpush.msra.mxu0 %v2580
  %2625 = vmatmul.f32.gmra.mxu0 %v1055
  %v2626 = vpop.f32.mrf.mxu0
  %v2627 = vadd.f32 0.0, %v2626
  %2628 = vmatmul.f32.gmra.mxu0 %v1058
  %v2629 = vpop.f32.mrf.mxu0
  %v2630 = vadd.f32 0.0, %v2629
  %2631 = vdwg.mxu0
  %v2633 = vperm.slane %v2608, 0
  %2637 = vrot.lane.b32.xlu0 %v2627, 8
  %v2638 = vpop.permute.xlu0 %2637
  %2639 = vrot.lane.b32.xlu0 %v2630, 8
  %v2640 = vpop.permute.xlu0 %2639
  %v2643 = vadd.f32 %v2633, %v2638
  %v2644 = vadd.f32 %v2633, %v2640
  %2645 = vmatpush.msra.mxu0 0.0
  %2646 = vmatpush.msra.mxu0 0.0
  %2647 = vmatpush.msra.mxu0 0.0
  %2648 = vmatpush.msra.mxu0 0.0
  %2649 = vmatpush.msra.mxu0 0.0
  %2650 = vmatpush.msra.mxu0 0.0
  %2651 = vmatpush.msra.mxu0 0.0
  %2652 = vmatpush.msra.mxu0 0.0
  %2653 = vmatpush.msra.mxu0 %v2595
  %2654 = vmatpush.msra.mxu0 %v2594
  %2655 = vmatpush.msra.mxu0 %v2593
  %2656 = vmatpush.msra.mxu0 %v2592
  %2657 = vmatpush.msra.mxu0 %v2591
  %2658 = vmatpush.msra.mxu0 %v2590
  %2659 = vmatpush.msra.mxu0 %v2589
  %2660 = vmatpush.msra.mxu0 %v2588
  %2661 = vmatmul.f32.gmra.mxu0 %v1806
  %v2662 = vpop.f32.mrf.mxu0
  %v2663 = vadd.f32 0.0, %v2662
  %2664 = vmatmul.f32.gmra.mxu0 %v1808
  %v2665 = vpop.f32.mrf.mxu0
  %v2666 = vadd.f32 0.0, %v2665
  %2667 = vdwg.mxu0
  %2670 = vrot.lane.b32.xlu0 %v2663, 8
  %v2671 = vpop.permute.xlu0 %2670
  %2672 = vrot.lane.b32.xlu0 %v2666, 8
  %v2673 = vpop.permute.xlu0 %2672
  %v2676 = vadd.f32 %v2643, %v2671
  %v2677 = vadd.f32 %v2644, %v2673
  %2680 = vrot.lane.b32.xlu0 %v1980, 112
  %v2681 = vpop.permute.xlu0 %2680
  %2682 = vrot.lane.b32.xlu0 %v1981, 112
  %v2683 = vpop.permute.xlu0 %2682
  %v2684 = vsel %vm1053, %v2681, 0
  %v2686 = vsel %vm1053, %v2683, 0
  %2688 = vmatpush.msra.mxu0 0.0
  %2689 = vmatpush.msra.mxu0 0.0
  %2690 = vmatpush.msra.mxu0 0.0
  %2691 = vmatpush.msra.mxu0 0.0
  %2692 = vmatpush.msra.mxu0 0.0
  %2693 = vmatpush.msra.mxu0 0.0
  %2694 = vmatpush.msra.mxu0 0.0
  %2695 = vmatpush.msra.mxu0 0.0
  %2696 = vmatpush.msra.mxu0 %v2603
  %2697 = vmatpush.msra.mxu0 %v2602
  %2698 = vmatpush.msra.mxu0 %v2601
  %2699 = vmatpush.msra.mxu0 %v2600
  %2700 = vmatpush.msra.mxu0 %v2599
  %2701 = vmatpush.msra.mxu0 %v2598
  %2702 = vmatpush.msra.mxu0 %v2597
  %2703 = vmatpush.msra.mxu0 %v2596
  %2704 = vmatmul.f32.gmra.mxu0 %v2684
  %v2705 = vpop.f32.mrf.mxu0
  %v2706 = vadd.f32 0.0, %v2705
  %2707 = vmatmul.f32.gmra.mxu0 %v2686
  %v2708 = vpop.f32.mrf.mxu0
  %v2709 = vadd.f32 0.0, %v2708
  %2710 = vdwg.mxu0
  %2713 = vrot.lane.b32.xlu0 %v2706, 8
  %v2714 = vpop.permute.xlu0 %2713
  %2715 = vrot.lane.b32.xlu0 %v2709, 8
  %v2716 = vpop.permute.xlu0 %2715
  %v2719 = vadd.f32 %v2676, %v2714
  %v2720 = vadd.f32 %v2677, %v2716
  %2725 = vrot.lane.b32.xlu0 %v2576, 24
  %v2726 = vpop.permute.xlu0 %2725
  %2727 = vrot.lane.b32.xlu0 %v2577, 24
  %v2728 = vpop.permute.xlu0 %2727
  %2729 = vrot.lane.b32.xlu0 %v2578, 24
  %v2730 = vpop.permute.xlu0 %2729
  %2731 = vrot.lane.b32.xlu0 %v2579, 24
  %v2732 = vpop.permute.xlu0 %2731
  %vm2733 = vcmask 195584
  %v2734 = vsel %vm2733, %v2726, %v2728
  %v2735 = vsel %vm2733, %v2730, %v2732
  %v2736 = vsel %vm1221, %v2734, 0
  %v2738 = vsel %vm1221, %v2735, 0
  %2740 = vmatpush.msra.mxu0 0.0
  %2741 = vmatpush.msra.mxu0 0.0
  %2742 = vmatpush.msra.mxu0 0.0
  %2743 = vmatpush.msra.mxu0 0.0
  %2744 = vmatpush.msra.mxu0 0.0
  %2745 = vmatpush.msra.mxu0 0.0
  %2746 = vmatpush.msra.mxu0 0.0
  %2747 = vmatpush.msra.mxu0 0.0
  %2748 = vmatpush.msra.mxu0 0.0
  %2749 = vmatpush.msra.mxu0 0.0
  %2750 = vmatpush.msra.mxu0 0.0
  %2751 = vmatpush.msra.mxu0 0.0
  %2752 = vmatpush.msra.mxu0 %v2607
  %2753 = vmatpush.msra.mxu0 %v2606
  %2754 = vmatpush.msra.mxu0 %v2605
  %2755 = vmatpush.msra.mxu0 %v2604
  %2756 = vmatmul.f32.gmra.mxu0 %v2736
  %v2757 = vpop.f32.mrf.mxu0
  %v2758 = vadd.f32 0.0, %v2757
  %2759 = vmatmul.f32.gmra.mxu0 %v2738
  %v2760 = vpop.f32.mrf.mxu0
  %v2761 = vadd.f32 0.0, %v2760
  %2762 = vdwg.mxu0
  %2765 = vrot.lane.b32.xlu0 %v2758, 8
  %v2766 = vpop.permute.xlu0 %2765
  %2767 = vrot.lane.b32.xlu0 %v2761, 8
  %v2768 = vpop.permute.xlu0 %2767
  %v2771 = vadd.f32 %v2719, %v2766
  %v2772 = vadd.f32 %v2720, %v2768
  %v2773 = vmul.f32 %v2771, 0.5
  %v2774 = vmul.f32 %v2772, 0.5
  %v2775 = vmul.f32 %v2771, 0.70710677
  %v2776 = vmul.f32 %v2772, 0.70710677
  %v2777 = vmul.f32 %v2775, %v2775
  %v2778 = vmin.f32 16.0, %v2777
  %v2779 = vmul.f32 %v2778, 2.1237322e-06
  %v2780 = vadd.f32 %v2779, 0.00028619796
  %v2781 = vmul.f32 %v2778, %v2780
  %v2782 = vadd.f32 %v2781, 0.0036580483
  %v2783 = vmul.f32 %v2778, %v2782
  %v2784 = vadd.f32 %v2783, 0.05243302
  %v2785 = vmul.f32 %v2778, %v2784
  %v2786 = vadd.f32 %v2785, 0.18741608
  %v2787 = vmul.f32 %v2778, %v2786
  %v2788 = vadd.f32 %v2787, 1.1283791
  %v2789 = vmul.f32 %v2775, %v2788
  %v2790 = vmul.f32 %v2778, 3.8918573e-05
  %v2791 = vadd.f32 %v2790, 0.001143296
  %v2792 = vmul.f32 %v2778, %v2791
  %v2793 = vadd.f32 %v2792, 0.014752088
  %v2794 = vmul.f32 %v2778, %v2793
  %v2795 = vadd.f32 %v2794, 0.112945676
  %v2796 = vmul.f32 %v2778, %v2795
  %v2797 = vadd.f32 %v2796, 0.4994258
  %v2798 = vmul.f32 %v2778, %v2797
  %v2799 = vadd.f32 %v2798, 1.0
  %v2800 = vrcp.pop %v2799
  %v2801 = vmul.f32 %v2799, %v2800
  %v2802 = vsub.f32 1.0, %v2801
  %v2803 = vmul.f32 %v2800, %v2802
  %v2804 = vadd.f32 %v2800, %v2803
  %vm2805 = vweird.f32 %v2799
  %vm2806 = vweird.f32 %v2800
  %vm2807 = vmor %vm2805, %vm2806
  %v2808 = vsel %vm2807, %v2800, %v2804
  %v2809 = vand.u32 2147483647, %v2799
  %vm2810 = vcmp.eq.f32.partialorder %v2809, 8.507059e+37
  %v2811 = vand.u32 %v2799, 2147483648
  %v2812 = vor.u32 1.1754944e-38, %v2811
  %v2813 = vsel %vm2810, %v2812, %v2808
  %v2814 = vmul.f32 %v2789, %v2813
  %v2815 = vmin.f32 %v2814, 1.0
  %v2816 = vmax.f32 %v2815, -1.0
  %v2817 = vmul.f32 %v2776, %v2776
  %v2818 = vmin.f32 16.0, %v2817
  %v2819 = vmul.f32 %v2818, 2.1237322e-06
  %v2820 = vadd.f32 %v2819, 0.00028619796
  %v2821 = vmul.f32 %v2818, %v2820
  %v2822 = vadd.f32 %v2821, 0.0036580483
  %v2823 = vmul.f32 %v2818, %v2822
  %v2824 = vadd.f32 %v2823, 0.05243302
  %v2825 = vmul.f32 %v2818, %v2824
  %v2826 = vadd.f32 %v2825, 0.18741608
  %v2827 = vmul.f32 %v2818, %v2826
  %v2828 = vadd.f32 %v2827, 1.1283791
  %v2829 = vmul.f32 %v2776, %v2828
  %v2830 = vmul.f32 %v2818, 3.8918573e-05
  %v2831 = vadd.f32 %v2830, 0.001143296
  %v2832 = vmul.f32 %v2818, %v2831
  %v2833 = vadd.f32 %v2832, 0.014752088
  %v2834 = vmul.f32 %v2818, %v2833
  %v2835 = vadd.f32 %v2834, 0.112945676
  %v2836 = vmul.f32 %v2818, %v2835
  %v2837 = vadd.f32 %v2836, 0.4994258
  %v2838 = vmul.f32 %v2818, %v2837
  %v2839 = vadd.f32 %v2838, 1.0
  %v2840 = vrcp.pop %v2839
  %v2841 = vmul.f32 %v2839, %v2840
  %v2842 = vsub.f32 1.0, %v2841
  %v2843 = vmul.f32 %v2840, %v2842
  %v2844 = vadd.f32 %v2840, %v2843
  %vm2845 = vweird.f32 %v2839
  %vm2846 = vweird.f32 %v2840
  %vm2847 = vmor %vm2845, %vm2846
  %v2848 = vsel %vm2847, %v2840, %v2844
  %v2849 = vand.u32 2147483647, %v2839
  %vm2850 = vcmp.eq.f32.partialorder %v2849, 8.507059e+37
  %v2851 = vand.u32 %v2839, 2147483648
  %v2852 = vor.u32 1.1754944e-38, %v2851
  %v2853 = vsel %vm2850, %v2852, %v2848
  %v2854 = vmul.f32 %v2829, %v2853
  %v2855 = vmin.f32 %v2854, 1.0
  %v2856 = vmax.f32 %v2855, -1.0
  %v2857 = vadd.f32 %v2816, 1.0
  %v2858 = vadd.f32 %v2856, 1.0
  %v2859 = vmul.f32 %v2773, %v2857
  %v2860 = vmul.f32 %v2774, %v2858
  %v2861 = vld [vmem:[#allocation11] sm:$0xff]
  %2862 = vmatpush.msra.mxu0 0.0
  %2863 = vmatpush.msra.mxu0 0.0
  %2864 = vmatpush.msra.mxu0 0.0
  %2865 = vmatpush.msra.mxu0 0.0
  %2866 = vmatpush.msra.mxu0 0.0
  %2867 = vmatpush.msra.mxu0 0.0
  %2868 = vmatpush.msra.mxu0 0.0
  %2869 = vmatpush.msra.mxu0 0.0
  %2870 = vmatpush.msra.mxu0 0.0
  %2871 = vmatpush.msra.mxu0 0.0
  %2872 = vmatpush.msra.mxu0 0.0
  %2873 = vmatpush.msra.mxu0 0.0
  %2874 = vmatpush.msra.mxu0 0.0
  %2875 = vmatpush.msra.mxu0 0.0
  %2876 = vmatpush.msra.mxu0 0.0
  %2877 = vmatpush.msra.mxu0 %v2861
  %2878 = vmatmul.f32.gmra.mxu0 %v2148
  %v2879 = vpop.f32.mrf.mxu0
  %v2880 = vadd.f32 0.0, %v2879
  %2881 = vmatmul.f32.gmra.mxu0 %v2150
  %v2882 = vpop.f32.mrf.mxu0
  %v2883 = vadd.f32 0.0, %v2882
  %2884 = vdwg.mxu0
  %2887 = vrot.lane.b32.xlu0 %v2880, 72
  %v2888 = vpop.permute.xlu0 %2887
  %2889 = vrot.lane.b32.xlu0 %v2883, 72
  %v2890 = vpop.permute.xlu0 %2889
  %v2893 = vadd.f32 %v2633, %v2888
  %v2894 = vadd.f32 %v2633, %v2890
  %v2895 = vmul.f32 %v2893, 0.5
  %v2896 = vmul.f32 %v2894, 0.5
  %v2897 = vmul.f32 %v2893, 0.70710677
  %v2898 = vmul.f32 %v2894, 0.70710677
  %v2899 = vmul.f32 %v2897, %v2897
  %v2900 = vmin.f32 16.0, %v2899
  %v2901 = vmul.f32 %v2900, 2.1237322e-06
  %v2902 = vadd.f32 %v2901, 0.00028619796
  %v2903 = vmul.f32 %v2900, %v2902
  %v2904 = vadd.f32 %v2903, 0.0036580483
  %v2905 = vmul.f32 %v2900, %v2904
  %v2906 = vadd.f32 %v2905, 0.05243302
  %v2907 = vmul.f32 %v2900, %v2906
  %v2908 = vadd.f32 %v2907, 0.18741608
  %v2909 = vmul.f32 %v2900, %v2908
  %v2910 = vadd.f32 %v2909, 1.1283791
  %v2911 = vmul.f32 %v2897, %v2910
  %v2912 = vmul.f32 %v2900, 3.8918573e-05
  %v2913 = vadd.f32 %v2912, 0.001143296
  %v2914 = vmul.f32 %v2900, %v2913
  %v2915 = vadd.f32 %v2914, 0.014752088
  %v2916 = vmul.f32 %v2900, %v2915
  %v2917 = vadd.f32 %v2916, 0.112945676
  %v2918 = vmul.f32 %v2900, %v2917
  %v2919 = vadd.f32 %v2918, 0.4994258
  %v2920 = vmul.f32 %v2900, %v2919
  %v2921 = vadd.f32 %v2920, 1.0
  %v2922 = vrcp.pop %v2921
  %v2923 = vmul.f32 %v2921, %v2922
  %v2924 = vsub.f32 1.0, %v2923
  %v2925 = vmul.f32 %v2922, %v2924
  %v2926 = vadd.f32 %v2922, %v2925
  %vm2927 = vweird.f32 %v2921
  %vm2928 = vweird.f32 %v2922
  %vm2929 = vmor %vm2927, %vm2928
  %v2930 = vsel %vm2929, %v2922, %v2926
  %v2931 = vand.u32 2147483647, %v2921
  %vm2932 = vcmp.eq.f32.partialorder %v2931, 8.507059e+37
  %v2933 = vand.u32 %v2921, 2147483648
  %v2934 = vor.u32 1.1754944e-38, %v2933
  %v2935 = vsel %vm2932, %v2934, %v2930
  %v2936 = vmul.f32 %v2911, %v2935
  %v2937 = vmin.f32 %v2936, 1.0
  %v2938 = vmax.f32 %v2937, -1.0
  %v2939 = vmul.f32 %v2898, %v2898
  %v2940 = vmin.f32 16.0, %v2939
  %v2941 = vmul.f32 %v2940, 2.1237322e-06
  %v2942 = vadd.f32 %v2941, 0.00028619796
  %v2943 = vmul.f32 %v2940, %v2942
  %v2944 = vadd.f32 %v2943, 0.0036580483
  %v2945 = vmul.f32 %v2940, %v2944
  %v2946 = vadd.f32 %v2945, 0.05243302
  %v2947 = vmul.f32 %v2940, %v2946
  %v2948 = vadd.f32 %v2947, 0.18741608
  %v2949 = vmul.f32 %v2940, %v2948
  %v2950 = vadd.f32 %v2949, 1.1283791
  %v2951 = vmul.f32 %v2898, %v2950
  %v2952 = vmul.f32 %v2940, 3.8918573e-05
  %v2953 = vadd.f32 %v2952, 0.001143296
  %v2954 = vmul.f32 %v2940, %v2953
  %v2955 = vadd.f32 %v2954, 0.014752088
  %v2956 = vmul.f32 %v2940, %v2955
  %v2957 = vadd.f32 %v2956, 0.112945676
  %v2958 = vmul.f32 %v2940, %v2957
  %v2959 = vadd.f32 %v2958, 0.4994258
  %v2960 = vmul.f32 %v2940, %v2959
  %v2961 = vadd.f32 %v2960, 1.0
  %v2962 = vrcp.pop %v2961
  %v2963 = vmul.f32 %v2961, %v2962
  %v2964 = vsub.f32 1.0, %v2963
  %v2965 = vmul.f32 %v2962, %v2964
  %v2966 = vadd.f32 %v2962, %v2965
  %vm2967 = vweird.f32 %v2961
  %vm2968 = vweird.f32 %v2962
  %vm2969 = vmor %vm2967, %vm2968
  %v2970 = vsel %vm2969, %v2962, %v2966
  %v2971 = vand.u32 2147483647, %v2961
  %vm2972 = vcmp.eq.f32.partialorder %v2971, 8.507059e+37
  %v2973 = vand.u32 %v2961, 2147483648
  %v2974 = vor.u32 1.1754944e-38, %v2973
  %v2975 = vsel %vm2972, %v2974, %v2970
  %v2976 = vmul.f32 %v2951, %v2975
  %v2977 = vmin.f32 %v2976, 1.0
  %v2978 = vmax.f32 %v2977, -1.0
  %v2979 = vadd.f32 %v2938, 1.0
  %v2980 = vadd.f32 %v2978, 1.0
  %v2981 = vmul.f32 %v2895, %v2979
  %v2982 = vmul.f32 %v2896, %v2980
  %v2983 = vld [vmem:[#allocation12] sm:$0xff]
  %v2984 = vld [vmem:[#allocation12 + $0x8] sm:$0xf]
  %2985 = vmatpush.msra.mxu0 0.0
  %2986 = vmatpush.msra.mxu0 0.0
  %2987 = vmatpush.msra.mxu0 0.0
  %2988 = vmatpush.msra.mxu0 0.0
  %2989 = vmatpush.msra.mxu0 0.0
  %2990 = vmatpush.msra.mxu0 0.0
  %2991 = vmatpush.msra.mxu0 0.0
  %2992 = vmatpush.msra.mxu0 0.0
  %2993 = vmatpush.msra.mxu0 0.0
  %2994 = vmatpush.msra.mxu0 0.0
  %2995 = vmatpush.msra.mxu0 0.0
  %2996 = vmatpush.msra.mxu0 0.0
  %2997 = vmatpush.msra.mxu0 0.0
  %2998 = vmatpush.msra.mxu0 0.0
  %2999 = vmatpush.msra.mxu0 0.0
  %3000 = vmatpush.msra.mxu0 %v2983
  %3001 = vmatmul.f32.gmra.mxu0 %v2148
  %v3002 = vpop.f32.mrf.mxu0
  %v3003 = vadd.f32 0.0, %v3002
  %3004 = vmatmul.f32.gmra.mxu0 %v2150
  %v3005 = vpop.f32.mrf.mxu0
  %v3006 = vadd.f32 0.0, %v3005
  %3007 = vdwg.mxu0
  %3010 = vrot.lane.b32.xlu0 %v3003, 76
  %v3011 = vpop.permute.xlu0 %3010
  %3012 = vrot.lane.b32.xlu0 %v3006, 76
  %v3013 = vpop.permute.xlu0 %3012
  %v3016 = vadd.f32 %v2633, %v3011
  %v3017 = vadd.f32 %v2633, %v3013
  %3020 = vrot.lane.b32.xlu0 %v2981, 56
  %v3021 = vpop.permute.xlu0 %3020
  %3022 = vrot.lane.b32.xlu0 %v2982, 56
  %v3023 = vpop.permute.xlu0 %3022
  %vm3024 = vcmask 31744
  %v3025 = vsel %vm3024, %v3021, 0
  %v3027 = vsel %vm3024, %v3023, 0
  %vm3029 = vcmask 1043456
  %v3031 = vsel %vm3029, %v2984, 0
  %3033 = vmatpush.msra.mxu0 0.0
  %3034 = vmatpush.msra.mxu0 0.0
  %3035 = vmatpush.msra.mxu0 0.0
  %3036 = vmatpush.msra.mxu0 0.0
  %3037 = vmatpush.msra.mxu0 0.0
  %3038 = vmatpush.msra.mxu0 0.0
  %3039 = vmatpush.msra.mxu0 0.0
  %3040 = vmatpush.msra.mxu0 0.0
  %3041 = vmatpush.msra.mxu0 0.0
  %3042 = vmatpush.msra.mxu0 0.0
  %3043 = vmatpush.msra.mxu0 0.0
  %3044 = vmatpush.msra.mxu0 0.0
  %3045 = vmatpush.msra.mxu0 0.0
  %3046 = vmatpush.msra.mxu0 0.0
  %3047 = vmatpush.msra.mxu0 0.0
  %3048 = vmatpush.msra.mxu0 %v3031
  %3049 = vmatmul.f32.gmra.mxu0 %v3025
  %v3050 = vpop.f32.mrf.mxu0
  %v3051 = vadd.f32 0.0, %v3050
  %3052 = vmatmul.f32.gmra.mxu0 %v3027
  %v3053 = vpop.f32.mrf.mxu0
  %v3054 = vadd.f32 0.0, %v3053
  %3055 = vdwg.mxu0
  %3058 = vrot.lane.b32.xlu0 %v3051, 76
  %v3059 = vpop.permute.xlu0 %3058
  %3060 = vrot.lane.b32.xlu0 %v3054, 76
  %v3061 = vpop.permute.xlu0 %3060
  %v3064 = vadd.f32 %v3016, %v3059
  %v3065 = vadd.f32 %v3017, %v3061
  %v3066 = vmul.f32 %v3064, 0.5
  %v3067 = vmul.f32 %v3065, 0.5
  %v3068 = vmul.f32 %v3064, 0.70710677
  %v3069 = vmul.f32 %v3065, 0.70710677
  %v3070 = vmul.f32 %v3068, %v3068
  %v3071 = vmin.f32 16.0, %v3070
  %v3072 = vmul.f32 %v3071, 2.1237322e-06
  %v3073 = vadd.f32 %v3072, 0.00028619796
  %v3074 = vmul.f32 %v3071, %v3073
  %v3075 = vadd.f32 %v3074, 0.0036580483
  %v3076 = vmul.f32 %v3071, %v3075
  %v3077 = vadd.f32 %v3076, 0.05243302
  %v3078 = vmul.f32 %v3071, %v3077
  %v3079 = vadd.f32 %v3078, 0.18741608
  %v3080 = vmul.f32 %v3071, %v3079
  %v3081 = vadd.f32 %v3080, 1.1283791
  %v3082 = vmul.f32 %v3068, %v3081
  %v3083 = vmul.f32 %v3071, 3.8918573e-05
  %v3084 = vadd.f32 %v3083, 0.001143296
  %v3085 = vmul.f32 %v3071, %v3084
  %v3086 = vadd.f32 %v3085, 0.014752088
  %v3087 = vmul.f32 %v3071, %v3086
  %v3088 = vadd.f32 %v3087, 0.112945676
  %v3089 = vmul.f32 %v3071, %v3088
  %v3090 = vadd.f32 %v3089, 0.4994258
  %v3091 = vmul.f32 %v3071, %v3090
  %v3092 = vadd.f32 %v3091, 1.0
  %v3093 = vrcp.pop %v3092
  %v3094 = vmul.f32 %v3092, %v3093
  %v3095 = vsub.f32 1.0, %v3094
  %v3096 = vmul.f32 %v3093, %v3095
  %v3097 = vadd.f32 %v3093, %v3096
  %vm3098 = vweird.f32 %v3092
  %vm3099 = vweird.f32 %v3093
  %vm3100 = vmor %vm3098, %vm3099
  %v3101 = vsel %vm3100, %v3093, %v3097
  %v3102 = vand.u32 2147483647, %v3092
  %vm3103 = vcmp.eq.f32.partialorder %v3102, 8.507059e+37
  %v3104 = vand.u32 %v3092, 2147483648
  %v3105 = vor.u32 1.1754944e-38, %v3104
  %v3106 = vsel %vm3103, %v3105, %v3101
  %v3107 = vmul.f32 %v3082, %v3106
  %v3108 = vmin.f32 %v3107, 1.0
  %v3109 = vmax.f32 %v3108, -1.0
  %v3110 = vmul.f32 %v3069, %v3069
  %v3111 = vmin.f32 16.0, %v3110
  %v3112 = vmul.f32 %v3111, 2.1237322e-06
  %v3113 = vadd.f32 %v3112, 0.00028619796
  %v3114 = vmul.f32 %v3111, %v3113
  %v3115 = vadd.f32 %v3114, 0.0036580483
  %v3116 = vmul.f32 %v3111, %v3115
  %v3117 = vadd.f32 %v3116, 0.05243302
  %v3118 = vmul.f32 %v3111, %v3117
  %v3119 = vadd.f32 %v3118, 0.18741608
  %v3120 = vmul.f32 %v3111, %v3119
  %v3121 = vadd.f32 %v3120, 1.1283791
  %v3122 = vmul.f32 %v3069, %v3121
  %v3123 = vmul.f32 %v3111, 3.8918573e-05
  %v3124 = vadd.f32 %v3123, 0.001143296
  %v3125 = vmul.f32 %v3111, %v3124
  %v3126 = vadd.f32 %v3125, 0.014752088
  %v3127 = vmul.f32 %v3111, %v3126
  %v3128 = vadd.f32 %v3127, 0.112945676
  %v3129 = vmul.f32 %v3111, %v3128
  %v3130 = vadd.f32 %v3129, 0.4994258
  %v3131 = vmul.f32 %v3111, %v3130
  %v3132 = vadd.f32 %v3131, 1.0
  %v3133 = vrcp.pop %v3132
  %v3134 = vmul.f32 %v3132, %v3133
  %v3135 = vsub.f32 1.0, %v3134
  %v3136 = vmul.f32 %v3133, %v3135
  %v3137 = vadd.f32 %v3133, %v3136
  %vm3138 = vweird.f32 %v3132
  %vm3139 = vweird.f32 %v3133
  %vm3140 = vmor %vm3138, %vm3139
  %v3141 = vsel %vm3140, %v3133, %v3137
  %v3142 = vand.u32 2147483647, %v3132
  %vm3143 = vcmp.eq.f32.partialorder %v3142, 8.507059e+37
  %v3144 = vand.u32 %v3132, 2147483648
  %v3145 = vor.u32 1.1754944e-38, %v3144
  %v3146 = vsel %vm3143, %v3145, %v3141
  %v3147 = vmul.f32 %v3122, %v3146
  %v3148 = vmin.f32 %v3147, 1.0
  %v3149 = vmax.f32 %v3148, -1.0
  %v3150 = vadd.f32 %v3109, 1.0
  %v3151 = vadd.f32 %v3149, 1.0
  %v3152 = vmul.f32 %v3066, %v3150
  %v3153 = vmul.f32 %v3067, %v3151
  %v3154 = vld [vmem:[#allocation13] sm:$0xff]
  %v3155 = vld [vmem:[#allocation13 + $0x8] sm:$0xff]
  %v3156 = vld [vmem:[#allocation13 + $0x10] sm:$0xff]
  %v3157 = vld [vmem:[#allocation13 + $0x18] sm:$0xff]
  %v3158 = vld [vmem:[#allocation13 + $0x20] sm:$0xff]
  %3159 = vmatpush.msra.mxu0 0.0
  %3160 = vmatpush.msra.mxu0 0.0
  %3161 = vmatpush.msra.mxu0 0.0
  %3162 = vmatpush.msra.mxu0 0.0
  %3163 = vmatpush.msra.mxu0 0.0
  %3164 = vmatpush.msra.mxu0 0.0
  %3165 = vmatpush.msra.mxu0 0.0
  %3166 = vmatpush.msra.mxu0 0.0
  %3167 = vmatpush.msra.mxu0 0.0
  %3168 = vmatpush.msra.mxu0 0.0
  %3169 = vmatpush.msra.mxu0 0.0
  %3170 = vmatpush.msra.mxu0 0.0
  %3171 = vmatpush.msra.mxu0 0.0
  %3172 = vmatpush.msra.mxu0 0.0
  %3173 = vmatpush.msra.mxu0 %v3155
  %3174 = vmatpush.msra.mxu0 %v3154
  %3175 = vmatmul.f32.gmra.mxu0 %v1528
  %v3176 = vpop.f32.mrf.mxu0
  %v3177 = vadd.f32 0.0, %v3176
  %3178 = vmatmul.f32.gmra.mxu0 %v1530
  %v3179 = vpop.f32.mrf.mxu0
  %v3180 = vadd.f32 0.0, %v3179
  %3181 = vdwg.mxu0
  %3184 = vrot.lane.b32.xlu0 %v3177, 84
  %v3185 = vpop.permute.xlu0 %3184
  %3186 = vrot.lane.b32.xlu0 %v3180, 84
  %v3187 = vpop.permute.xlu0 %3186
  %v3190 = vadd.f32 %v2633, %v3185
  %v3191 = vadd.f32 %v2633, %v3187
  %3192 = vmatpush.msra.mxu0 0.0
  %3193 = vmatpush.msra.mxu0 0.0
  %3194 = vmatpush.msra.mxu0 0.0
  %3195 = vmatpush.msra.mxu0 0.0
  %3196 = vmatpush.msra.mxu0 0.0
  %3197 = vmatpush.msra.mxu0 0.0
  %3198 = vmatpush.msra.mxu0 0.0
  %3199 = vmatpush.msra.mxu0 0.0
  %3200 = vmatpush.msra.mxu0 0.0
  %3201 = vmatpush.msra.mxu0 0.0
  %3202 = vmatpush.msra.mxu0 0.0
  %3203 = vmatpush.msra.mxu0 0.0
  %3204 = vmatpush.msra.mxu0 0.0
  %3205 = vmatpush.msra.mxu0 0.0
  %3206 = vmatpush.msra.mxu0 %v3157
  %3207 = vmatpush.msra.mxu0 %v3156
  %3208 = vmatmul.f32.gmra.mxu0 %v2365
  %v3209 = vpop.f32.mrf.mxu0
  %v3210 = vadd.f32 0.0, %v3209
  %3211 = vmatmul.f32.gmra.mxu0 %v2367
  %v3212 = vpop.f32.mrf.mxu0
  %v3213 = vadd.f32 0.0, %v3212
  %3214 = vdwg.mxu0
  %3217 = vrot.lane.b32.xlu0 %v3210, 84
  %v3218 = vpop.permute.xlu0 %3217
  %3219 = vrot.lane.b32.xlu0 %v3213, 84
  %v3220 = vpop.permute.xlu0 %3219
  %v3223 = vadd.f32 %v3190, %v3218
  %v3224 = vadd.f32 %v3191, %v3220
  %3227 = vrot.lane.b32.xlu0 %v3152, 52
  %v3228 = vpop.permute.xlu0 %3227
  %3229 = vrot.lane.b32.xlu0 %v3153, 52
  %v3230 = vpop.permute.xlu0 %3229
  %v3231 = vsel %vm2147, %v3228, 0
  %v3233 = vsel %vm2147, %v3230, 0
  %3235 = vmatpush.msra.mxu0 0.0
  %3236 = vmatpush.msra.mxu0 0.0
  %3237 = vmatpush.msra.mxu0 0.0
  %3238 = vmatpush.msra.mxu0 0.0
  %3239 = vmatpush.msra.mxu0 0.0
  %3240 = vmatpush.msra.mxu0 0.0
  %3241 = vmatpush.msra.mxu0 0.0
  %3242 = vmatpush.msra.mxu0 0.0
  %3243 = vmatpush.msra.mxu0 0.0
  %3244 = vmatpush.msra.mxu0 0.0
  %3245 = vmatpush.msra.mxu0 0.0
  %3246 = vmatpush.msra.mxu0 0.0
  %3247 = vmatpush.msra.mxu0 0.0
  %3248 = vmatpush.msra.mxu0 0.0
  %3249 = vmatpush.msra.mxu0 0.0
  %3250 = vmatpush.msra.mxu0 %v3158
  %3251 = vmatmul.f32.gmra.mxu0 %v3231
  %v3252 = vpop.f32.mrf.mxu0
  %v3253 = vadd.f32 0.0, %v3252
  %3254 = vmatmul.f32.gmra.mxu0 %v3233
  %v3255 = vpop.f32.mrf.mxu0
  %v3256 = vadd.f32 0.0, %v3255
  %3257 = vdwg.mxu0
  %3260 = vrot.lane.b32.xlu0 %v3253, 84
  %v3261 = vpop.permute.xlu0 %3260
  %3262 = vrot.lane.b32.xlu0 %v3256, 84
  %v3263 = vpop.permute.xlu0 %3262
  %v3266 = vadd.f32 %v3223, %v3261
  %v3267 = vadd.f32 %v3224, %v3263
  %v3268 = vmul.f32 %v3266, 0.5
  %v3269 = vmul.f32 %v3267, 0.5
  %v3270 = vmul.f32 %v3266, 0.70710677
  %v3271 = vmul.f32 %v3267, 0.70710677
  %v3272 = vmul.f32 %v3270, %v3270
  %v3273 = vmin.f32 16.0, %v3272
  %v3274 = vmul.f32 %v3273, 2.1237322e-06
  %v3275 = vadd.f32 %v3274, 0.00028619796
  %v3276 = vmul.f32 %v3273, %v3275
  %v3277 = vadd.f32 %v3276, 0.0036580483
  %v3278 = vmul.f32 %v3273, %v3277
  %v3279 = vadd.f32 %v3278, 0.05243302
  %v3280 = vmul.f32 %v3273, %v3279
  %v3281 = vadd.f32 %v3280, 0.18741608
  %v3282 = vmul.f32 %v3273, %v3281
  %v3283 = vadd.f32 %v3282, 1.1283791
  %v3284 = vmul.f32 %v3270, %v3283
  %v3285 = vmul.f32 %v3273, 3.8918573e-05
  %v3286 = vadd.f32 %v3285, 0.001143296
  %v3287 = vmul.f32 %v3273, %v3286
  %v3288 = vadd.f32 %v3287, 0.014752088
  %v3289 = vmul.f32 %v3273, %v3288
  %v3290 = vadd.f32 %v3289, 0.112945676
  %v3291 = vmul.f32 %v3273, %v3290
  %v3292 = vadd.f32 %v3291, 0.4994258
  %v3293 = vmul.f32 %v3273, %v3292
  %v3294 = vadd.f32 %v3293, 1.0
  %v3295 = vrcp.pop %v3294
  %v3296 = vmul.f32 %v3294, %v3295
  %v3297 = vsub.f32 1.0, %v3296
  %v3298 = vmul.f32 %v3295, %v3297
  %v3299 = vadd.f32 %v3295, %v3298
  %vm3300 = vweird.f32 %v3294
  %vm3301 = vweird.f32 %v3295
  %vm3302 = vmor %vm3300, %vm3301
  %v3303 = vsel %vm3302, %v3295, %v3299
  %v3304 = vand.u32 2147483647, %v3294
  %vm3305 = vcmp.eq.f32.partialorder %v3304, 8.507059e+37
  %v3306 = vand.u32 %v3294, 2147483648
  %v3307 = vor.u32 1.1754944e-38, %v3306
  %v3308 = vsel %vm3305, %v3307, %v3303
  %v3309 = vmul.f32 %v3284, %v3308
  %v3310 = vmin.f32 %v3309, 1.0
  %v3311 = vmax.f32 %v3310, -1.0
  %v3312 = vmul.f32 %v3271, %v3271
  %v3313 = vmin.f32 16.0, %v3312
  %v3314 = vmul.f32 %v3313, 2.1237322e-06
  %v3315 = vadd.f32 %v3314, 0.00028619796
  %v3316 = vmul.f32 %v3313, %v3315
  %v3317 = vadd.f32 %v3316, 0.0036580483
  %v3318 = vmul.f32 %v3313, %v3317
  %v3319 = vadd.f32 %v3318, 0.05243302
  %v3320 = vmul.f32 %v3313, %v3319
  %v3321 = vadd.f32 %v3320, 0.18741608
  %v3322 = vmul.f32 %v3313, %v3321
  %v3323 = vadd.f32 %v3322, 1.1283791
  %v3324 = vmul.f32 %v3271, %v3323
  %v3325 = vmul.f32 %v3313, 3.8918573e-05
  %v3326 = vadd.f32 %v3325, 0.001143296
  %v3327 = vmul.f32 %v3313, %v3326
  %v3328 = vadd.f32 %v3327, 0.014752088
  %v3329 = vmul.f32 %v3313, %v3328
  %v3330 = vadd.f32 %v3329, 0.112945676
  %v3331 = vmul.f32 %v3313, %v3330
  %v3332 = vadd.f32 %v3331, 0.4994258
  %v3333 = vmul.f32 %v3313, %v3332
  %v3334 = vadd.f32 %v3333, 1.0
  %v3335 = vrcp.pop %v3334
  %v3336 = vmul.f32 %v3334, %v3335
  %v3337 = vsub.f32 1.0, %v3336
  %v3338 = vmul.f32 %v3335, %v3337
  %v3339 = vadd.f32 %v3335, %v3338
  %vm3340 = vweird.f32 %v3334
  %vm3341 = vweird.f32 %v3335
  %vm3342 = vmor %vm3340, %vm3341
  %v3343 = vsel %vm3342, %v3335, %v3339
  %v3344 = vand.u32 2147483647, %v3334
  %vm3345 = vcmp.eq.f32.partialorder %v3344, 8.507059e+37
  %v3346 = vand.u32 %v3334, 2147483648
  %v3347 = vor.u32 1.1754944e-38, %v3346
  %v3348 = vsel %vm3345, %v3347, %v3343
  %v3349 = vmul.f32 %v3324, %v3348
  %v3350 = vmin.f32 %v3349, 1.0
  %v3351 = vmax.f32 %v3350, -1.0
  %v3352 = vadd.f32 %v3311, 1.0
  %v3353 = vadd.f32 %v3351, 1.0
  %v3354 = vmul.f32 %v3268, %v3352
  %v3355 = vmul.f32 %v3269, %v3353
  %v3356 = vld [vmem:[#allocation14] sm:$0xff]
  %v3357 = vld [vmem:[#allocation14 + $0x8] sm:$0xff]
  %v3358 = vld [vmem:[#allocation14 + $0x10] sm:$0xff]
  %v3359 = vld [vmem:[#allocation14 + $0x18] sm:$0xff]
  %v3360 = vld [vmem:[#allocation14 + $0x20] sm:$0xff]
  %v3361 = vld [vmem:[#allocation14 + $0x28] sm:$0xff]
  %v3362 = vld [vmem:[#allocation14 + $0x30] sm:$0xff]
  %v3363 = vld [vmem:[#allocation14 + $0x38] sm:$0xff]
  %v3364 = vld [vmem:[#allocation14 + $0x40] sm:$0xff]
  %v3365 = vld [vmem:[#allocation14 + $0x48] sm:$0xff]
  %v3366 = vld [vmem:[#allocation14 + $0x50] sm:$0xff]
  %v3367 = vld [vmem:[#allocation14 + $0x58] sm:$0xff]
  %v3368 = vld [vmem:[#allocation14 + $0x60] sm:$0xff]
  %v3369 = vld [vmem:[#allocation14 + $0x68] sm:$0xff]
  %v3370 = vld [vmem:[%s1 + $0x2] sm:$0x3]
  %3371 = vmatpush.msra.mxu0 0.0
  %3372 = vmatpush.msra.mxu0 0.0
  %3373 = vmatpush.msra.mxu0 0.0
  %3374 = vmatpush.msra.mxu0 0.0
  %3375 = vmatpush.msra.mxu0 0.0
  %3376 = vmatpush.msra.mxu0 0.0
  %3377 = vmatpush.msra.mxu0 0.0
  %3378 = vmatpush.msra.mxu0 0.0
  %3379 = vmatpush.msra.mxu0 0.0
  %3380 = vmatpush.msra.mxu0 0.0
  %3381 = vmatpush.msra.mxu0 0.0
  %3382 = vmatpush.msra.mxu0 0.0
  %3383 = vmatpush.msra.mxu0 %v3359
  %3384 = vmatpush.msra.mxu0 %v3358
  %3385 = vmatpush.msra.mxu0 %v3357
  %3386 = vmatpush.msra.mxu0 %v3356
  %3387 = vmatmul.f32.gmra.mxu0 %v1223
  %v3388 = vpop.f32.mrf.mxu0
  %v3389 = vadd.f32 0.0, %v3388
  %3390 = vmatmul.f32.gmra.mxu0 %v1226
  %v3391 = vpop.f32.mrf.mxu0
  %v3392 = vadd.f32 0.0, %v3391
  %3393 = vdwg.mxu0
  %v3395 = vperm.slane %v3370, 0
  %v3396 = vperm.slane %v3370, 1
  %3401 = vrot.lane.b32.xlu0 %v3389, 100
  %v3402 = vpop.permute.xlu0 %3401
  %3403 = vrot.lane.b32.xlu0 %v3392, 100
  %v3404 = vpop.permute.xlu0 %3403
  %v3407 = vadd.f32 %v3395, %v3402
  %v3408 = vadd.f32 %v3396, %v3402
  %v3409 = vadd.f32 %v3395, %v3404
  %v3410 = vadd.f32 %v3396, %v3404
  %3411 = vmatpush.msra.mxu0 0.0
  %3412 = vmatpush.msra.mxu0 0.0
  %3413 = vmatpush.msra.mxu0 0.0
  %3414 = vmatpush.msra.mxu0 0.0
  %3415 = vmatpush.msra.mxu0 0.0
  %3416 = vmatpush.msra.mxu0 0.0
  %3417 = vmatpush.msra.mxu0 0.0
  %3418 = vmatpush.msra.mxu0 0.0
  %3419 = vmatpush.msra.mxu0 0.0
  %3420 = vmatpush.msra.mxu0 0.0
  %3421 = vmatpush.msra.mxu0 0.0
  %3422 = vmatpush.msra.mxu0 0.0
  %3423 = vmatpush.msra.mxu0 %v3363
  %3424 = vmatpush.msra.mxu0 %v3362
  %3425 = vmatpush.msra.mxu0 %v3361
  %3426 = vmatpush.msra.mxu0 %v3360
  %3427 = vmatmul.f32.gmra.mxu0 %v1857
  %v3428 = vpop.f32.mrf.mxu0
  %v3429 = vadd.f32 0.0, %v3428
  %3430 = vmatmul.f32.gmra.mxu0 %v1859
  %v3431 = vpop.f32.mrf.mxu0
  %v3432 = vadd.f32 0.0, %v3431
  %3433 = vdwg.mxu0
  %3436 = vrot.lane.b32.xlu0 %v3429, 100
  %v3437 = vpop.permute.xlu0 %3436
  %3438 = vrot.lane.b32.xlu0 %v3432, 100
  %v3439 = vpop.permute.xlu0 %3438
  %v3442 = vadd.f32 %v3407, %v3437
  %v3443 = vadd.f32 %v3408, %v3437
  %v3444 = vadd.f32 %v3409, %v3439
  %v3445 = vadd.f32 %v3410, %v3439
  %3446 = vmatpush.msra.mxu0 0.0
  %3447 = vmatpush.msra.mxu0 0.0
  %3448 = vmatpush.msra.mxu0 0.0
  %3449 = vmatpush.msra.mxu0 0.0
  %3450 = vmatpush.msra.mxu0 0.0
  %3451 = vmatpush.msra.mxu0 0.0
  %3452 = vmatpush.msra.mxu0 0.0
  %3453 = vmatpush.msra.mxu0 0.0
  %3454 = vmatpush.msra.mxu0 0.0
  %3455 = vmatpush.msra.mxu0 0.0
  %3456 = vmatpush.msra.mxu0 0.0
  %3457 = vmatpush.msra.mxu0 0.0
  %3458 = vmatpush.msra.mxu0 %v3367
  %3459 = vmatpush.msra.mxu0 %v3366
  %3460 = vmatpush.msra.mxu0 %v3365
  %3461 = vmatpush.msra.mxu0 %v3364
  %3462 = vmatmul.f32.gmra.mxu0 %v2736
  %v3463 = vpop.f32.mrf.mxu0
  %v3464 = vadd.f32 0.0, %v3463
  %3465 = vmatmul.f32.gmra.mxu0 %v2738
  %v3466 = vpop.f32.mrf.mxu0
  %v3467 = vadd.f32 0.0, %v3466
  %3468 = vdwg.mxu0
  %3471 = vrot.lane.b32.xlu0 %v3464, 100
  %v3472 = vpop.permute.xlu0 %3471
  %3473 = vrot.lane.b32.xlu0 %v3467, 100
  %v3474 = vpop.permute.xlu0 %3473
  %v3477 = vadd.f32 %v3442, %v3472
  %v3478 = vadd.f32 %v3443, %v3472
  %v3479 = vadd.f32 %v3444, %v3474
  %v3480 = vadd.f32 %v3445, %v3474
  %3483 = vrot.lane.b32.xlu0 %v3354, 44
  %v3484 = vpop.permute.xlu0 %3483
  %3485 = vrot.lane.b32.xlu0 %v3355, 44
  %v3486 = vpop.permute.xlu0 %3485
  %v3487 = vsel %vm1527, %v3484, 0
  %v3489 = vsel %vm1527, %v3486, 0
  %3491 = vmatpush.msra.mxu0 0.0
  %3492 = vmatpush.msra.mxu0 0.0
  %3493 = vmatpush.msra.mxu0 0.0
  %3494 = vmatpush.msra.mxu0 0.0
  %3495 = vmatpush.msra.mxu0 0.0
  %3496 = vmatpush.msra.mxu0 0.0
  %3497 = vmatpush.msra.mxu0 0.0
  %3498 = vmatpush.msra.mxu0 0.0
  %3499 = vmatpush.msra.mxu0 0.0
  %3500 = vmatpush.msra.mxu0 0.0
  %3501 = vmatpush.msra.mxu0 0.0
  %3502 = vmatpush.msra.mxu0 0.0
  %3503 = vmatpush.msra.mxu0 0.0
  %3504 = vmatpush.msra.mxu0 0.0
  %3505 = vmatpush.msra.mxu0 %v3369
  %3506 = vmatpush.msra.mxu0 %v3368
  %3507 = vmatmul.f32.gmra.mxu0 %v3487
  %v3508 = vpop.f32.mrf.mxu0
  %v3509 = vadd.f32 0.0, %v3508
  %3510 = vmatmul.f32.gmra.mxu0 %v3489
  %v3511 = vpop.f32.mrf.mxu0
  %v3512 = vadd.f32 0.0, %v3511
  %3513 = vdwg.mxu0
  %3516 = vrot.lane.b32.xlu0 %v3509, 100
  %v3517 = vpop.permute.xlu0 %3516
  %3518 = vrot.lane.b32.xlu0 %v3512, 100
  %v3519 = vpop.permute.xlu0 %3518
  %v3522 = vadd.f32 %v3477, %v3517
  %v3523 = vadd.f32 %v3478, %v3517
  %v3524 = vadd.f32 %v3479, %v3519
  %v3525 = vadd.f32 %v3480, %v3519
  %v3526 = vmul.f32 %v3522, 0.5
  %v3527 = vmul.f32 %v3523, 0.5
  %v3528 = vmul.f32 %v3524, 0.5
  %v3529 = vmul.f32 %v3525, 0.5
  %v3530 = vmul.f32 %v3522, 0.70710677
  %v3531 = vmul.f32 %v3523, 0.70710677
  %v3532 = vmul.f32 %v3524, 0.70710677
  %v3533 = vmul.f32 %v3525, 0.70710677
  %v3534 = vmul.f32 %v3530, %v3530
  %v3535 = vmin.f32 16.0, %v3534
  %v3536 = vmul.f32 %v3535, 2.1237322e-06
  %v3537 = vadd.f32 %v3536, 0.00028619796
  %v3538 = vmul.f32 %v3535, %v3537
  %v3539 = vadd.f32 %v3538, 0.0036580483
  %v3540 = vmul.f32 %v3535, %v3539
  %v3541 = vadd.f32 %v3540, 0.05243302
  %v3542 = vmul.f32 %v3535, %v3541
  %v3543 = vadd.f32 %v3542, 0.18741608
  %v3544 = vmul.f32 %v3535, %v3543
  %v3545 = vadd.f32 %v3544, 1.1283791
  %v3546 = vmul.f32 %v3530, %v3545
  %v3547 = vmul.f32 %v3535, 3.8918573e-05
  %v3548 = vadd.f32 %v3547, 0.001143296
  %v3549 = vmul.f32 %v3535, %v3548
  %v3550 = vadd.f32 %v3549, 0.014752088
  %v3551 = vmul.f32 %v3535, %v3550
  %v3552 = vadd.f32 %v3551, 0.112945676
  %v3553 = vmul.f32 %v3535, %v3552
  %v3554 = vadd.f32 %v3553, 0.4994258
  %v3555 = vmul.f32 %v3535, %v3554
  %v3556 = vadd.f32 %v3555, 1.0
  %v3557 = vrcp.pop %v3556
  %v3558 = vmul.f32 %v3556, %v3557
  %v3559 = vsub.f32 1.0, %v3558
  %v3560 = vmul.f32 %v3557, %v3559
  %v3561 = vadd.f32 %v3557, %v3560
  %vm3562 = vweird.f32 %v3556
  %vm3563 = vweird.f32 %v3557
  %vm3564 = vmor %vm3562, %vm3563
  %v3565 = vsel %vm3564, %v3557, %v3561
  %v3566 = vand.u32 2147483647, %v3556
  %vm3567 = vcmp.eq.f32.partialorder %v3566, 8.507059e+37
  %v3568 = vand.u32 %v3556, 2147483648
  %v3569 = vor.u32 1.1754944e-38, %v3568
  %v3570 = vsel %vm3567, %v3569, %v3565
  %v3571 = vmul.f32 %v3546, %v3570
  %v3572 = vmin.f32 %v3571, 1.0
  %v3573 = vmax.f32 %v3572, -1.0
  %v3574 = vmul.f32 %v3531, %v3531
  %v3575 = vmin.f32 16.0, %v3574
  %v3576 = vmul.f32 %v3575, 2.1237322e-06
  %v3577 = vadd.f32 %v3576, 0.00028619796
  %v3578 = vmul.f32 %v3575, %v3577
  %v3579 = vadd.f32 %v3578, 0.0036580483
  %v3580 = vmul.f32 %v3575, %v3579
  %v3581 = vadd.f32 %v3580, 0.05243302
  %v3582 = vmul.f32 %v3575, %v3581
  %v3583 = vadd.f32 %v3582, 0.18741608
  %v3584 = vmul.f32 %v3575, %v3583
  %v3585 = vadd.f32 %v3584, 1.1283791
  %v3586 = vmul.f32 %v3531, %v3585
  %v3587 = vmul.f32 %v3575, 3.8918573e-05
  %v3588 = vadd.f32 %v3587, 0.001143296
  %v3589 = vmul.f32 %v3575, %v3588
  %v3590 = vadd.f32 %v3589, 0.014752088
  %v3591 = vmul.f32 %v3575, %v3590
  %v3592 = vadd.f32 %v3591, 0.112945676
  %v3593 = vmul.f32 %v3575, %v3592
  %v3594 = vadd.f32 %v3593, 0.4994258
  %v3595 = vmul.f32 %v3575, %v3594
  %v3596 = vadd.f32 %v3595, 1.0
  %v3597 = vrcp.pop %v3596
  %v3598 = vmul.f32 %v3596, %v3597
  %v3599 = vsub.f32 1.0, %v3598
  %v3600 = vmul.f32 %v3597, %v3599
  %v3601 = vadd.f32 %v3597, %v3600
  %vm3602 = vweird.f32 %v3596
  %vm3603 = vweird.f32 %v3597
  %vm3604 = vmor %vm3602, %vm3603
  %v3605 = vsel %vm3604, %v3597, %v3601
  %v3606 = vand.u32 2147483647, %v3596
  %vm3607 = vcmp.eq.f32.partialorder %v3606, 8.507059e+37
  %v3608 = vand.u32 %v3596, 2147483648
  %v3609 = vor.u32 1.1754944e-38, %v3608
  %v3610 = vsel %vm3607, %v3609, %v3605
  %v3611 = vmul.f32 %v3586, %v3610
  %v3612 = vmin.f32 %v3611, 1.0
  %v3613 = vmax.f32 %v3612, -1.0
  %v3614 = vmul.f32 %v3532, %v3532
  %v3615 = vmin.f32 16.0, %v3614
  %v3616 = vmul.f32 %v3615, 2.1237322e-06
  %v3617 = vadd.f32 %v3616, 0.00028619796
  %v3618 = vmul.f32 %v3615, %v3617
  %v3619 = vadd.f32 %v3618, 0.0036580483
  %v3620 = vmul.f32 %v3615, %v3619
  %v3621 = vadd.f32 %v3620, 0.05243302
  %v3622 = vmul.f32 %v3615, %v3621
  %v3623 = vadd.f32 %v3622, 0.18741608
  %v3624 = vmul.f32 %v3615, %v3623
  %v3625 = vadd.f32 %v3624, 1.1283791
  %v3626 = vmul.f32 %v3532, %v3625
  %v3627 = vmul.f32 %v3615, 3.8918573e-05
  %v3628 = vadd.f32 %v3627, 0.001143296
  %v3629 = vmul.f32 %v3615, %v3628
  %v3630 = vadd.f32 %v3629, 0.014752088
  %v3631 = vmul.f32 %v3615, %v3630
  %v3632 = vadd.f32 %v3631, 0.112945676
  %v3633 = vmul.f32 %v3615, %v3632
  %v3634 = vadd.f32 %v3633, 0.4994258
  %v3635 = vmul.f32 %v3615, %v3634
  %v3636 = vadd.f32 %v3635, 1.0
  %v3637 = vrcp.pop %v3636
  %v3638 = vmul.f32 %v3636, %v3637
  %v3639 = vsub.f32 1.0, %v3638
  %v3640 = vmul.f32 %v3637, %v3639
  %v3641 = vadd.f32 %v3637, %v3640
  %vm3642 = vweird.f32 %v3636
  %vm3643 = vweird.f32 %v3637
  %vm3644 = vmor %vm3642, %vm3643
  %v3645 = vsel %vm3644, %v3637, %v3641
  %v3646 = vand.u32 2147483647, %v3636
  %vm3647 = vcmp.eq.f32.partialorder %v3646, 8.507059e+37
  %v3648 = vand.u32 %v3636, 2147483648
  %v3649 = vor.u32 1.1754944e-38, %v3648
  %v3650 = vsel %vm3647, %v3649, %v3645
  %v3651 = vmul.f32 %v3626, %v3650
  %v3652 = vmin.f32 %v3651, 1.0
  %v3653 = vmax.f32 %v3652, -1.0
  %v3654 = vmul.f32 %v3533, %v3533
  %v3655 = vmin.f32 16.0, %v3654
  %v3656 = vmul.f32 %v3655, 2.1237322e-06
  %v3657 = vadd.f32 %v3656, 0.00028619796
  %v3658 = vmul.f32 %v3655, %v3657
  %v3659 = vadd.f32 %v3658, 0.0036580483
  %v3660 = vmul.f32 %v3655, %v3659
  %v3661 = vadd.f32 %v3660, 0.05243302
  %v3662 = vmul.f32 %v3655, %v3661
  %v3663 = vadd.f32 %v3662, 0.18741608
  %v3664 = vmul.f32 %v3655, %v3663
  %v3665 = vadd.f32 %v3664, 1.1283791
  %v3666 = vmul.f32 %v3533, %v3665
  %v3667 = vmul.f32 %v3655, 3.8918573e-05
  %v3668 = vadd.f32 %v3667, 0.001143296
  %v3669 = vmul.f32 %v3655, %v3668
  %v3670 = vadd.f32 %v3669, 0.014752088
  %v3671 = vmul.f32 %v3655, %v3670
  %v3672 = vadd.f32 %v3671, 0.112945676
  %v3673 = vmul.f32 %v3655, %v3672
  %v3674 = vadd.f32 %v3673, 0.4994258
  %v3675 = vmul.f32 %v3655, %v3674
  %v3676 = vadd.f32 %v3675, 1.0
  %v3677 = vrcp.pop %v3676
  %v3678 = vmul.f32 %v3676, %v3677
  %v3679 = vsub.f32 1.0, %v3678
  %v3680 = vmul.f32 %v3677, %v3679
  %v3681 = vadd.f32 %v3677, %v3680
  %vm3682 = vweird.f32 %v3676
  %vm3683 = vweird.f32 %v3677
  %vm3684 = vmor %vm3682, %vm3683
  %v3685 = vsel %vm3684, %v3677, %v3681
  %v3686 = vand.u32 2147483647, %v3676
  %vm3687 = vcmp.eq.f32.partialorder %v3686, 8.507059e+37
  %v3688 = vand.u32 %v3676, 2147483648
  %v3689 = vor.u32 1.1754944e-38, %v3688
  %v3690 = vsel %vm3687, %v3689, %v3685
  %v3691 = vmul.f32 %v3666, %v3690
  %v3692 = vmin.f32 %v3691, 1.0
  %v3693 = vmax.f32 %v3692, -1.0
  %v3694 = vadd.f32 %v3573, 1.0
  %v3695 = vadd.f32 %v3613, 1.0
  %v3696 = vadd.f32 %v3653, 1.0
  %v3697 = vadd.f32 %v3693, 1.0
  %v3698 = vmul.f32 %v3526, %v3694
  %v3699 = vmul.f32 %v3527, %v3695
  %v3700 = vmul.f32 %v3528, %v3696
  %v3701 = vmul.f32 %v3529, %v3697
  %v3702 = vld [vmem:[#allocation15] sm:$0xff]
  %v3703 = vld [vmem:[#allocation15 + $0x8] sm:$0xff]
  %v3704 = vld [vmem:[#allocation15 + $0x10] sm:$0xff]
  %v3705 = vld [vmem:[#allocation15 + $0x18] sm:$0xff]
  %v3706 = vld [vmem:[#allocation15 + $0x20] sm:$0xff]
  %v3707 = vld [vmem:[#allocation15 + $0x28] sm:$0xff]
  %v3708 = vld [vmem:[#allocation15 + $0x30] sm:$0xff]
  %v3709 = vld [vmem:[#allocation15 + $0x38] sm:$0xff]
  %v3710 = vld [vmem:[#allocation15 + $0x40] sm:$0xff]
  %v3711 = vld [vmem:[#allocation15 + $0x48] sm:$0xff]
  %v3712 = vld [vmem:[#allocation15 + $0x50] sm:$0xff]
  %v3713 = vld [vmem:[#allocation15 + $0x58] sm:$0xff]
  %v3714 = vld [vmem:[#allocation15 + $0x60] sm:$0xff]
  %v3715 = vld [vmem:[#allocation15 + $0x68] sm:$0xff]
  %v3716 = vld [vmem:[#allocation15 + $0x70] sm:$0xff]
  %v3717 = vld [vmem:[#allocation15 + $0x78] sm:$0xff]
  %v3718 = vld [vmem:[#allocation15 + $0x80] sm:$0xff]
  %v3719 = vld [vmem:[#allocation15 + $0x88] sm:$0xff]
  %v3720 = vld [vmem:[#allocation15 + $0x90] sm:$0xff]
  %v3721 = vld [vmem:[#allocation15 + $0x98] sm:$0xff]
  %v3722 = vld [vmem:[#allocation15 + $0xa0] sm:$0xff]
  %v3723 = vld [vmem:[#allocation15 + $0xa8] sm:$0xff]
  %v3724 = vld [vmem:[#allocation15 + $0xb0] sm:$0xff]
  %v3725 = vld [vmem:[#allocation15 + $0xb8] sm:$0xff]
  %v3726 = vld [vmem:[#allocation15 + $0xc0] sm:$0xff]
  %v3727 = vld [vmem:[#allocation15 + $0xc8] sm:$0xff]
  %v3728 = vld [vmem:[#allocation15 + $0xd0] sm:$0xff]
  %v3729 = vld [vmem:[#allocation15 + $0xd8] sm:$0xff]
  %v3730 = vld [vmem:[#allocation15 + $0xe0] sm:$0xff]
  %v3731 = vld [vmem:[#allocation15 + $0xe8] sm:$0xff]
  %v3732 = vld [vmem:[#allocation15 + $0xf0] sm:$0xff]
  %v3733 = vld [vmem:[#allocation15 + $0xf8] sm:$0xff]
  %v3734 = vld [vmem:[#allocation15 + $0x100] sm:$0xff]
  %v3735 = vld [vmem:[#allocation15 + $0x108] sm:$0xff]
  %v3736 = vld [vmem:[#allocation15 + $0x110] sm:$0xff]
  %v3737 = vld [vmem:[#allocation15 + $0x118] sm:$0xff]
  %v3738 = vld [vmem:[%s1 + $0x3] sm:$0x1]
  %3739 = vmatpush.msra.mxu0 0.0
  %3740 = vmatpush.msra.mxu0 0.0
  %3741 = vmatpush.msra.mxu0 0.0
  %3742 = vmatpush.msra.mxu0 0.0
  %3743 = vmatpush.msra.mxu0 0.0
  %3744 = vmatpush.msra.mxu0 0.0
  %3745 = vmatpush.msra.mxu0 0.0
  %3746 = vmatpush.msra.mxu0 0.0
  %3747 = vmatpush.msra.mxu0 %v3709
  %3748 = vmatpush.msra.mxu0 %v3708
  %3749 = vmatpush.msra.mxu0 %v3707
  %3750 = vmatpush.msra.mxu0 %v3706
  %3751 = vmatpush.msra.mxu0 %v3705
  %3752 = vmatpush.msra.mxu0 %v3704
  %3753 = vmatpush.msra.mxu0 %v3703
  %3754 = vmatpush.msra.mxu0 %v3702
  %3755 = vmatmul.f32.gmra.mxu0 %v1055
  %v3756 = vpop.f32.mrf.mxu0
  %v3757 = vadd.f32 0.0, %v3756
  %3758 = vmatmul.f32.gmra.mxu0 %v1058
  %v3759 = vpop.f32.mrf.mxu0
  %v3760 = vadd.f32 0.0, %v3759
  %3761 = vdwg.mxu0
  %v3763 = vperm.slane %v3738, 0
  %3767 = vrot.lane.b32.xlu0 %v3757, 4
  %v3768 = vpop.permute.xlu0 %3767
  %3769 = vrot.lane.b32.xlu0 %v3760, 4
  %v3770 = vpop.permute.xlu0 %3769
  %v3773 = vadd.f32 %v3763, %v3768
  %v3774 = vadd.f32 %v3763, %v3770
  %3775 = vmatpush.msra.mxu0 0.0
  %3776 = vmatpush.msra.mxu0 0.0
  %3777 = vmatpush.msra.mxu0 0.0
  %3778 = vmatpush.msra.mxu0 0.0
  %3779 = vmatpush.msra.mxu0 0.0
  %3780 = vmatpush.msra.mxu0 0.0
  %3781 = vmatpush.msra.mxu0 0.0
  %3782 = vmatpush.msra.mxu0 0.0
  %3783 = vmatpush.msra.mxu0 %v3717
  %3784 = vmatpush.msra.mxu0 %v3716
  %3785 = vmatpush.msra.mxu0 %v3715
  %3786 = vmatpush.msra.mxu0 %v3714
  %3787 = vmatpush.msra.mxu0 %v3713
  %3788 = vmatpush.msra.mxu0 %v3712
  %3789 = vmatpush.msra.mxu0 %v3711
  %3790 = vmatpush.msra.mxu0 %v3710
  %3791 = vmatmul.f32.gmra.mxu0 %v1806
  %v3792 = vpop.f32.mrf.mxu0
  %v3793 = vadd.f32 0.0, %v3792
  %3794 = vmatmul.f32.gmra.mxu0 %v1808
  %v3795 = vpop.f32.mrf.mxu0
  %v3796 = vadd.f32 0.0, %v3795
  %3797 = vdwg.mxu0
  %3800 = vrot.lane.b32.xlu0 %v3793, 4
  %v3801 = vpop.permute.xlu0 %3800
  %3802 = vrot.lane.b32.xlu0 %v3796, 4
  %v3803 = vpop.permute.xlu0 %3802
  %v3806 = vadd.f32 %v3773, %v3801
  %v3807 = vadd.f32 %v3774, %v3803
  %3808 = vmatpush.msra.mxu0 0.0
  %3809 = vmatpush.msra.mxu0 0.0
  %3810 = vmatpush.msra.mxu0 0.0
  %3811 = vmatpush.msra.mxu0 0.0
  %3812 = vmatpush.msra.mxu0 0.0
  %3813 = vmatpush.msra.mxu0 0.0
  %3814 = vmatpush.msra.mxu0 0.0
  %3815 = vmatpush.msra.mxu0 0.0
  %3816 = vmatpush.msra.mxu0 %v3725
  %3817 = vmatpush.msra.mxu0 %v3724
  %3818 = vmatpush.msra.mxu0 %v3723
  %3819 = vmatpush.msra.mxu0 %v3722
  %3820 = vmatpush.msra.mxu0 %v3721
  %3821 = vmatpush.msra.mxu0 %v3720
  %3822 = vmatpush.msra.mxu0 %v3719
  %3823 = vmatpush.msra.mxu0 %v3718
  %3824 = vmatmul.f32.gmra.mxu0 %v2684
  %v3825 = vpop.f32.mrf.mxu0
  %v3826 = vadd.f32 0.0, %v3825
  %3827 = vmatmul.f32.gmra.mxu0 %v2686
  %v3828 = vpop.f32.mrf.mxu0
  %v3829 = vadd.f32 0.0, %v3828
  %3830 = vdwg.mxu0
  %3833 = vrot.lane.b32.xlu0 %v3826, 4
  %v3834 = vpop.permute.xlu0 %3833
  %3835 = vrot.lane.b32.xlu0 %v3829, 4
  %v3836 = vpop.permute.xlu0 %3835
  %v3839 = vadd.f32 %v3806, %v3834
  %v3840 = vadd.f32 %v3807, %v3836
  %3843 = vrot.lane.b32.xlu0 %v2859, 120
  %v3844 = vpop.permute.xlu0 %3843
  %3845 = vrot.lane.b32.xlu0 %v2860, 120
  %v3846 = vpop.permute.xlu0 %3845
  %v3847 = vsel %vm1053, %v3844, 0
  %v3849 = vsel %vm1053, %v3846, 0
  %3851 = vmatpush.msra.mxu0 0.0
  %3852 = vmatpush.msra.mxu0 0.0
  %3853 = vmatpush.msra.mxu0 0.0
  %3854 = vmatpush.msra.mxu0 0.0
  %3855 = vmatpush.msra.mxu0 0.0
  %3856 = vmatpush.msra.mxu0 0.0
  %3857 = vmatpush.msra.mxu0 0.0
  %3858 = vmatpush.msra.mxu0 0.0
  %3859 = vmatpush.msra.mxu0 %v3733
  %3860 = vmatpush.msra.mxu0 %v3732
  %3861 = vmatpush.msra.mxu0 %v3731
  %3862 = vmatpush.msra.mxu0 %v3730
  %3863 = vmatpush.msra.mxu0 %v3729
  %3864 = vmatpush.msra.mxu0 %v3728
  %3865 = vmatpush.msra.mxu0 %v3727
  %3866 = vmatpush.msra.mxu0 %v3726
  %3867 = vmatmul.f32.gmra.mxu0 %v3847
  %v3868 = vpop.f32.mrf.mxu0
  %v3869 = vadd.f32 0.0, %v3868
  %3870 = vmatmul.f32.gmra.mxu0 %v3849
  %v3871 = vpop.f32.mrf.mxu0
  %v3872 = vadd.f32 0.0, %v3871
  %3873 = vdwg.mxu0
  %3876 = vrot.lane.b32.xlu0 %v3869, 4
  %v3877 = vpop.permute.xlu0 %3876
  %3878 = vrot.lane.b32.xlu0 %v3872, 4
  %v3879 = vpop.permute.xlu0 %3878
  %v3882 = vadd.f32 %v3839, %v3877
  %v3883 = vadd.f32 %v3840, %v3879
  %3888 = vrot.lane.b32.xlu0 %v3698, 28
  %v3889 = vpop.permute.xlu0 %3888
  %3890 = vrot.lane.b32.xlu0 %v3699, 28
  %v3891 = vpop.permute.xlu0 %3890
  %3892 = vrot.lane.b32.xlu0 %v3700, 28
  %v3893 = vpop.permute.xlu0 %3892
  %3894 = vrot.lane.b32.xlu0 %v3701, 28
  %v3895 = vpop.permute.xlu0 %3894
  %vm3896 = vcmask 228352
  %v3897 = vsel %vm3896, %v3889, %v3891
  %v3898 = vsel %vm3896, %v3893, %v3895
  %v3899 = vsel %vm1221, %v3897, 0
  %v3901 = vsel %vm1221, %v3898, 0
  %3903 = vmatpush.msra.mxu0 0.0
  %3904 = vmatpush.msra.mxu0 0.0
  %3905 = vmatpush.msra.mxu0 0.0
  %3906 = vmatpush.msra.mxu0 0.0
  %3907 = vmatpush.msra.mxu0 0.0
  %3908 = vmatpush.msra.mxu0 0.0
  %3909 = vmatpush.msra.mxu0 0.0
  %3910 = vmatpush.msra.mxu0 0.0
  %3911 = vmatpush.msra.mxu0 0.0
  %3912 = vmatpush.msra.mxu0 0.0
  %3913 = vmatpush.msra.mxu0 0.0
  %3914 = vmatpush.msra.mxu0 0.0
  %3915 = vmatpush.msra.mxu0 %v3737
  %3916 = vmatpush.msra.mxu0 %v3736
  %3917 = vmatpush.msra.mxu0 %v3735
  %3918 = vmatpush.msra.mxu0 %v3734
  %3919 = vmatmul.f32.gmra.mxu0 %v3899
  %v3920 = vpop.f32.mrf.mxu0
  %v3921 = vadd.f32 0.0, %v3920
  %3922 = vmatmul.f32.gmra.mxu0 %v3901
  %v3923 = vpop.f32.mrf.mxu0
  %v3924 = vadd.f32 0.0, %v3923
  %3925 = vdwg.mxu0
  %3928 = vrot.lane.b32.xlu0 %v3921, 4
  %v3929 = vpop.permute.xlu0 %3928
  %3930 = vrot.lane.b32.xlu0 %v3924, 4
  %v3931 = vpop.permute.xlu0 %3930
  %v3934 = vadd.f32 %v3882, %v3929
  %v3935 = vadd.f32 %v3883, %v3931
  %v3936 = vmul.f32 %v3934, 0.5
  %v3937 = vmul.f32 %v3935, 0.5
  %v3938 = vmul.f32 %v3934, 0.70710677
  %v3939 = vmul.f32 %v3935, 0.70710677
  %v3940 = vmul.f32 %v3938, %v3938
  %v3941 = vmin.f32 16.0, %v3940
  %v3942 = vmul.f32 %v3941, 2.1237322e-06
  %v3943 = vadd.f32 %v3942, 0.00028619796
  %v3944 = vmul.f32 %v3941, %v3943
  %v3945 = vadd.f32 %v3944, 0.0036580483
  %v3946 = vmul.f32 %v3941, %v3945
  %v3947 = vadd.f32 %v3946, 0.05243302
  %v3948 = vmul.f32 %v3941, %v3947
  %v3949 = vadd.f32 %v3948, 0.18741608
  %v3950 = vmul.f32 %v3941, %v3949
  %v3951 = vadd.f32 %v3950, 1.1283791
  %v3952 = vmul.f32 %v3938, %v3951
  %v3953 = vmul.f32 %v3941, 3.8918573e-05
  %v3954 = vadd.f32 %v3953, 0.001143296
  %v3955 = vmul.f32 %v3941, %v3954
  %v3956 = vadd.f32 %v3955, 0.014752088
  %v3957 = vmul.f32 %v3941, %v3956
  %v3958 = vadd.f32 %v3957, 0.112945676
  %v3959 = vmul.f32 %v3941, %v3958
  %v3960 = vadd.f32 %v3959, 0.4994258
  %v3961 = vmul.f32 %v3941, %v3960
  %v3962 = vadd.f32 %v3961, 1.0
  %v3963 = vrcp.pop %v3962
  %v3964 = vmul.f32 %v3962, %v3963
  %v3965 = vsub.f32 1.0, %v3964
  %v3966 = vmul.f32 %v3963, %v3965
  %v3967 = vadd.f32 %v3963, %v3966
  %vm3968 = vweird.f32 %v3962
  %vm3969 = vweird.f32 %v3963
  %vm3970 = vmor %vm3968, %vm3969
  %v3971 = vsel %vm3970, %v3963, %v3967
  %v3972 = vand.u32 2147483647, %v3962
  %vm3973 = vcmp.eq.f32.partialorder %v3972, 8.507059e+37
  %v3974 = vand.u32 %v3962, 2147483648
  %v3975 = vor.u32 1.1754944e-38, %v3974
  %v3976 = vsel %vm3973, %v3975, %v3971
  %v3977 = vmul.f32 %v3952, %v3976
  %v3978 = vmin.f32 %v3977, 1.0
  %v3979 = vmax.f32 %v3978, -1.0
  %v3980 = vmul.f32 %v3939, %v3939
  %v3981 = vmin.f32 16.0, %v3980
  %v3982 = vmul.f32 %v3981, 2.1237322e-06
  %v3983 = vadd.f32 %v3982, 0.00028619796
  %v3984 = vmul.f32 %v3981, %v3983
  %v3985 = vadd.f32 %v3984, 0.0036580483
  %v3986 = vmul.f32 %v3981, %v3985
  %v3987 = vadd.f32 %v3986, 0.05243302
  %v3988 = vmul.f32 %v3981, %v3987
  %v3989 = vadd.f32 %v3988, 0.18741608
  %v3990 = vmul.f32 %v3981, %v3989
  %v3991 = vadd.f32 %v3990, 1.1283791
  %v3992 = vmul.f32 %v3939, %v3991
  %v3993 = vmul.f32 %v3981, 3.8918573e-05
  %v3994 = vadd.f32 %v3993, 0.001143296
  %v3995 = vmul.f32 %v3981, %v3994
  %v3996 = vadd.f32 %v3995, 0.014752088
  %v3997 = vmul.f32 %v3981, %v3996
  %v3998 = vadd.f32 %v3997, 0.112945676
  %v3999 = vmul.f32 %v3981, %v3998
  %v4000 = vadd.f32 %v3999, 0.4994258
  %v4001 = vmul.f32 %v3981, %v4000
  %v4002 = vadd.f32 %v4001, 1.0
  %v4003 = vrcp.pop %v4002
  %v4004 = vmul.f32 %v4002, %v4003
  %v4005 = vsub.f32 1.0, %v4004
  %v4006 = vmul.f32 %v4003, %v4005
  %v4007 = vadd.f32 %v4003, %v4006
  %vm4008 = vweird.f32 %v4002
  %vm4009 = vweird.f32 %v4003
  %vm4010 = vmor %vm4008, %vm4009
  %v4011 = vsel %vm4010, %v4003, %v4007
  %v4012 = vand.u32 2147483647, %v4002
  %vm4013 = vcmp.eq.f32.partialorder %v4012, 8.507059e+37
  %v4014 = vand.u32 %v4002, 2147483648
  %v4015 = vor.u32 1.1754944e-38, %v4014
  %v4016 = vsel %vm4013, %v4015, %v4011
  %v4017 = vmul.f32 %v3992, %v4016
  %v4018 = vmin.f32 %v4017, 1.0
  %v4019 = vmax.f32 %v4018, -1.0
  %v4020 = vadd.f32 %v3979, 1.0
  %v4021 = vadd.f32 %v4019, 1.0
  %v4022 = vmul.f32 %v3936, %v4020
  %v4023 = vmul.f32 %v3937, %v4021
  %v4024 = vld [vmem:[#allocation16] sm:$0xf]
  %v4026 = vsel %vm3029, %v4024, 0
  %4028 = vmatpush.msra.mxu0 0.0
  %4029 = vmatpush.msra.mxu0 0.0
  %4030 = vmatpush.msra.mxu0 0.0
  %4031 = vmatpush.msra.mxu0 0.0
  %4032 = vmatpush.msra.mxu0 0.0
  %4033 = vmatpush.msra.mxu0 0.0
  %4034 = vmatpush.msra.mxu0 0.0
  %4035 = vmatpush.msra.mxu0 0.0
  %4036 = vmatpush.msra.mxu0 0.0
  %4037 = vmatpush.msra.mxu0 0.0
  %4038 = vmatpush.msra.mxu0 0.0
  %4039 = vmatpush.msra.mxu0 0.0
  %4040 = vmatpush.msra.mxu0 0.0
  %4041 = vmatpush.msra.mxu0 0.0
  %4042 = vmatpush.msra.mxu0 0.0
  %4043 = vmatpush.msra.mxu0 %v4026
  %4044 = vmatmul.f32.gmra.mxu0 %v3025
  %v4045 = vpop.f32.mrf.mxu0
  %v4046 = vadd.f32 0.0, %v4045
  %4047 = vmatmul.f32.gmra.mxu0 %v3027
  %v4048 = vpop.f32.mrf.mxu0
  %v4049 = vadd.f32 0.0, %v4048
  %4050 = vdwg.mxu0
  %4053 = vrot.lane.b32.xlu0 %v4046, 68
  %v4054 = vpop.permute.xlu0 %4053
  %4055 = vrot.lane.b32.xlu0 %v4049, 68
  %v4056 = vpop.permute.xlu0 %4055
  %v4059 = vadd.f32 %v3763, %v4054
  %v4060 = vadd.f32 %v3763, %v4056
  %v4061 = vmul.f32 %v4059, 0.5
  %v4062 = vmul.f32 %v4060, 0.5
  %v4063 = vmul.f32 %v4059, 0.70710677
  %v4064 = vmul.f32 %v4060, 0.70710677
  %v4065 = vmul.f32 %v4063, %v4063
  %v4066 = vmin.f32 16.0, %v4065
  %v4067 = vmul.f32 %v4066, 2.1237322e-06
  %v4068 = vadd.f32 %v4067, 0.00028619796
  %v4069 = vmul.f32 %v4066, %v4068
  %v4070 = vadd.f32 %v4069, 0.0036580483
  %v4071 = vmul.f32 %v4066, %v4070
  %v4072 = vadd.f32 %v4071, 0.05243302
  %v4073 = vmul.f32 %v4066, %v4072
  %v4074 = vadd.f32 %v4073, 0.18741608
  %v4075 = vmul.f32 %v4066, %v4074
  %v4076 = vadd.f32 %v4075, 1.1283791
  %v4077 = vmul.f32 %v4063, %v4076
  %v4078 = vmul.f32 %v4066, 3.8918573e-05
  %v4079 = vadd.f32 %v4078, 0.001143296
  %v4080 = vmul.f32 %v4066, %v4079
  %v4081 = vadd.f32 %v4080, 0.014752088
  %v4082 = vmul.f32 %v4066, %v4081
  %v4083 = vadd.f32 %v4082, 0.112945676
  %v4084 = vmul.f32 %v4066, %v4083
  %v4085 = vadd.f32 %v4084, 0.4994258
  %v4086 = vmul.f32 %v4066, %v4085
  %v4087 = vadd.f32 %v4086, 1.0
  %v4088 = vrcp.pop %v4087
  %v4089 = vmul.f32 %v4087, %v4088
  %v4090 = vsub.f32 1.0, %v4089
  %v4091 = vmul.f32 %v4088, %v4090
  %v4092 = vadd.f32 %v4088, %v4091
  %vm4093 = vweird.f32 %v4087
  %vm4094 = vweird.f32 %v4088
  %vm4095 = vmor %vm4093, %vm4094
  %v4096 = vsel %vm4095, %v4088, %v4092
  %v4097 = vand.u32 2147483647, %v4087
  %vm4098 = vcmp.eq.f32.partialorder %v4097, 8.507059e+37
  %v4099 = vand.u32 %v4087, 2147483648
  %v4100 = vor.u32 1.1754944e-38, %v4099
  %v4101 = vsel %vm4098, %v4100, %v4096
  %v4102 = vmul.f32 %v4077, %v4101
  %v4103 = vmin.f32 %v4102, 1.0
  %v4104 = vmax.f32 %v4103, -1.0
  %v4105 = vmul.f32 %v4064, %v4064
  %v4106 = vmin.f32 16.0, %v4105
  %v4107 = vmul.f32 %v4106, 2.1237322e-06
  %v4108 = vadd.f32 %v4107, 0.00028619796
  %v4109 = vmul.f32 %v4106, %v4108
  %v4110 = vadd.f32 %v4109, 0.0036580483
  %v4111 = vmul.f32 %v4106, %v4110
  %v4112 = vadd.f32 %v4111, 0.05243302
  %v4113 = vmul.f32 %v4106, %v4112
  %v4114 = vadd.f32 %v4113, 0.18741608
  %v4115 = vmul.f32 %v4106, %v4114
  %v4116 = vadd.f32 %v4115, 1.1283791
  %v4117 = vmul.f32 %v4064, %v4116
  %v4118 = vmul.f32 %v4106, 3.8918573e-05
  %v4119 = vadd.f32 %v4118, 0.001143296
  %v4120 = vmul.f32 %v4106, %v4119
  %v4121 = vadd.f32 %v4120, 0.014752088
  %v4122 = vmul.f32 %v4106, %v4121
  %v4123 = vadd.f32 %v4122, 0.112945676
  %v4124 = vmul.f32 %v4106, %v4123
  %v4125 = vadd.f32 %v4124, 0.4994258
  %v4126 = vmul.f32 %v4106, %v4125
  %v4127 = vadd.f32 %v4126, 1.0
  %v4128 = vrcp.pop %v4127
  %v4129 = vmul.f32 %v4127, %v4128
  %v4130 = vsub.f32 1.0, %v4129
  %v4131 = vmul.f32 %v4128, %v4130
  %v4132 = vadd.f32 %v4128, %v4131
  %vm4133 = vweird.f32 %v4127
  %vm4134 = vweird.f32 %v4128
  %vm4135 = vmor %vm4133, %vm4134
  %v4136 = vsel %vm4135, %v4128, %v4132
  %v4137 = vand.u32 2147483647, %v4127
  %vm4138 = vcmp.eq.f32.partialorder %v4137, 8.507059e+37
  %v4139 = vand.u32 %v4127, 2147483648
  %v4140 = vor.u32 1.1754944e-38, %v4139
  %v4141 = vsel %vm4138, %v4140, %v4136
  %v4142 = vmul.f32 %v4117, %v4141
  %v4143 = vmin.f32 %v4142, 1.0
  %v4144 = vmax.f32 %v4143, -1.0
  %v4145 = vadd.f32 %v4104, 1.0
  %v4146 = vadd.f32 %v4144, 1.0
  %v4147 = vmul.f32 %v4061, %v4145
  %v4148 = vmul.f32 %v4062, %v4146
  %v4149 = vld [vmem:[#allocation17] sm:$0x3f]
  %v4151 = vsel %vm3029, %v4149, 0
  %4153 = vmatpush.msra.mxu0 0.0
  %4154 = vmatpush.msra.mxu0 0.0
  %4155 = vmatpush.msra.mxu0 0.0
  %4156 = vmatpush.msra.mxu0 0.0
  %4157 = vmatpush.msra.mxu0 0.0
  %4158 = vmatpush.msra.mxu0 0.0
  %4159 = vmatpush.msra.mxu0 0.0
  %4160 = vmatpush.msra.mxu0 0.0
  %4161 = vmatpush.msra.mxu0 0.0
  %4162 = vmatpush.msra.mxu0 0.0
  %4163 = vmatpush.msra.mxu0 0.0
  %4164 = vmatpush.msra.mxu0 0.0
  %4165 = vmatpush.msra.mxu0 0.0
  %4166 = vmatpush.msra.mxu0 0.0
  %4167 = vmatpush.msra.mxu0 0.0
  %4168 = vmatpush.msra.mxu0 %v4151
  %4169 = vmatmul.f32.gmra.mxu0 %v3025
  %v4170 = vpop.f32.mrf.mxu0
  %v4171 = vadd.f32 0.0, %v4170
  %4172 = vmatmul.f32.gmra.mxu0 %v3027
  %v4173 = vpop.f32.mrf.mxu0
  %v4174 = vadd.f32 0.0, %v4173
  %4175 = vdwg.mxu0
  %4178 = vrot.lane.b32.xlu0 %v4171, 70
  %v4179 = vpop.permute.xlu0 %4178
  %4180 = vrot.lane.b32.xlu0 %v4174, 70
  %v4181 = vpop.permute.xlu0 %4180
  %v4184 = vadd.f32 %v3763, %v4179
  %v4185 = vadd.f32 %v3763, %v4181
  %4188 = vrot.lane.b32.xlu0 %v4147, 60
  %v4189 = vpop.permute.xlu0 %4188
  %4190 = vrot.lane.b32.xlu0 %v4148, 60
  %v4191 = vpop.permute.xlu0 %4190
  %v4192 = vrot.slane %v4149, 4
  %vm4193 = vcmask 15360
  %v4194 = vsel %vm4193, %v4189, 0
  %v4196 = vsel %vm4193, %v4191, 0
  %vm4198 = vcmask 1041408
  %v4199 = vsel %vm4198, %v4192, 0
  %4201 = vmatpush.msra.mxu0 0.0
  %4202 = vmatpush.msra.mxu0 0.0
  %4203 = vmatpush.msra.mxu0 0.0
  %4204 = vmatpush.msra.mxu0 0.0
  %4205 = vmatpush.msra.mxu0 0.0
  %4206 = vmatpush.msra.mxu0 0.0
  %4207 = vmatpush.msra.mxu0 0.0
  %4208 = vmatpush.msra.mxu0 0.0
  %4209 = vmatpush.msra.mxu0 0.0
  %4210 = vmatpush.msra.mxu0 0.0
  %4211 = vmatpush.msra.mxu0 0.0
  %4212 = vmatpush.msra.mxu0 0.0
  %4213 = vmatpush.msra.mxu0 0.0
  %4214 = vmatpush.msra.mxu0 0.0
  %4215 = vmatpush.msra.mxu0 0.0
  %4216 = vmatpush.msra.mxu0 %v4199
  %4217 = vmatmul.f32.gmra.mxu0 %v4194
  %v4218 = vpop.f32.mrf.mxu0
  %v4219 = vadd.f32 0.0, %v4218
  %4220 = vmatmul.f32.gmra.mxu0 %v4196
  %v4221 = vpop.f32.mrf.mxu0
  %v4222 = vadd.f32 0.0, %v4221
  %4223 = vdwg.mxu0
  %4226 = vrot.lane.b32.xlu0 %v4219, 70
  %v4227 = vpop.permute.xlu0 %4226
  %4228 = vrot.lane.b32.xlu0 %v4222, 70
  %v4229 = vpop.permute.xlu0 %4228
  %v4232 = vadd.f32 %v4184, %v4227
  %v4233 = vadd.f32 %v4185, %v4229
  %v4234 = vmul.f32 %v4232, 0.5
  %v4235 = vmul.f32 %v4233, 0.5
  %v4236 = vmul.f32 %v4232, 0.70710677
  %v4237 = vmul.f32 %v4233, 0.70710677
  %v4238 = vmul.f32 %v4236, %v4236
  %v4239 = vmin.f32 16.0, %v4238
  %v4240 = vmul.f32 %v4239, 2.1237322e-06
  %v4241 = vadd.f32 %v4240, 0.00028619796
  %v4242 = vmul.f32 %v4239, %v4241
  %v4243 = vadd.f32 %v4242, 0.0036580483
  %v4244 = vmul.f32 %v4239, %v4243
  %v4245 = vadd.f32 %v4244, 0.05243302
  %v4246 = vmul.f32 %v4239, %v4245
  %v4247 = vadd.f32 %v4246, 0.18741608
  %v4248 = vmul.f32 %v4239, %v4247
  %v4249 = vadd.f32 %v4248, 1.1283791
  %v4250 = vmul.f32 %v4236, %v4249
  %v4251 = vmul.f32 %v4239, 3.8918573e-05
  %v4252 = vadd.f32 %v4251, 0.001143296
  %v4253 = vmul.f32 %v4239, %v4252
  %v4254 = vadd.f32 %v4253, 0.014752088
  %v4255 = vmul.f32 %v4239, %v4254
  %v4256 = vadd.f32 %v4255, 0.112945676
  %v4257 = vmul.f32 %v4239, %v4256
  %v4258 = vadd.f32 %v4257, 0.4994258
  %v4259 = vmul.f32 %v4239, %v4258
  %v4260 = vadd.f32 %v4259, 1.0
  %v4261 = vrcp.pop %v4260
  %v4262 = vmul.f32 %v4260, %v4261
  %v4263 = vsub.f32 1.0, %v4262
  %v4264 = vmul.f32 %v4261, %v4263
  %v4265 = vadd.f32 %v4261, %v4264
  %vm4266 = vweird.f32 %v4260
  %vm4267 = vweird.f32 %v4261
  %vm4268 = vmor %vm4266, %vm4267
  %v4269 = vsel %vm4268, %v4261, %v4265
  %v4270 = vand.u32 2147483647, %v4260
  %vm4271 = vcmp.eq.f32.partialorder %v4270, 8.507059e+37
  %v4272 = vand.u32 %v4260, 2147483648
  %v4273 = vor.u32 1.1754944e-38, %v4272
  %v4274 = vsel %vm4271, %v4273, %v4269
  %v4275 = vmul.f32 %v4250, %v4274
  %v4276 = vmin.f32 %v4275, 1.0
  %v4277 = vmax.f32 %v4276, -1.0
  %v4278 = vmul.f32 %v4237, %v4237
  %v4279 = vmin.f32 16.0, %v4278
  %v4280 = vmul.f32 %v4279, 2.1237322e-06
  %v4281 = vadd.f32 %v4280, 0.00028619796
  %v4282 = vmul.f32 %v4279, %v4281
  %v4283 = vadd.f32 %v4282, 0.0036580483
  %v4284 = vmul.f32 %v4279, %v4283
  %v4285 = vadd.f32 %v4284, 0.05243302
  %v4286 = vmul.f32 %v4279, %v4285
  %v4287 = vadd.f32 %v4286, 0.18741608
  %v4288 = vmul.f32 %v4279, %v4287
  %v4289 = vadd.f32 %v4288, 1.1283791
  %v4290 = vmul.f32 %v4237, %v4289
  %v4291 = vmul.f32 %v4279, 3.8918573e-05
  %v4292 = vadd.f32 %v4291, 0.001143296
  %v4293 = vmul.f32 %v4279, %v4292
  %v4294 = vadd.f32 %v4293, 0.014752088
  %v4295 = vmul.f32 %v4279, %v4294
  %v4296 = vadd.f32 %v4295, 0.112945676
  %v4297 = vmul.f32 %v4279, %v4296
  %v4298 = vadd.f32 %v4297, 0.4994258
  %v4299 = vmul.f32 %v4279, %v4298
  %v4300 = vadd.f32 %v4299, 1.0
  %v4301 = vrcp.pop %v4300
  %v4302 = vmul.f32 %v4300, %v4301
  %v4303 = vsub.f32 1.0, %v4302
  %v4304 = vmul.f32 %v4301, %v4303
  %v4305 = vadd.f32 %v4301, %v4304
  %vm4306 = vweird.f32 %v4300
  %vm4307 = vweird.f32 %v4301
  %vm4308 = vmor %vm4306, %vm4307
  %v4309 = vsel %vm4308, %v4301, %v4305
  %v4310 = vand.u32 2147483647, %v4300
  %vm4311 = vcmp.eq.f32.partialorder %v4310, 8.507059e+37
  %v4312 = vand.u32 %v4300, 2147483648
  %v4313 = vor.u32 1.1754944e-38, %v4312
  %v4314 = vsel %vm4311, %v4313, %v4309
  %v4315 = vmul.f32 %v4290, %v4314
  %v4316 = vmin.f32 %v4315, 1.0
  %v4317 = vmax.f32 %v4316, -1.0
  %v4318 = vadd.f32 %v4277, 1.0
  %v4319 = vadd.f32 %v4317, 1.0
  %v4320 = vmul.f32 %v4234, %v4318
  %v4321 = vmul.f32 %v4235, %v4319
  %v4322 = vld [vmem:[#allocation18] sm:$0xff]
  %v4323 = vld [vmem:[#allocation18 + $0x8] sm:$0xff]
  %v4324 = vld [vmem:[#allocation18 + $0x10] sm:$0xf]
  %4325 = vmatpush.msra.mxu0 0.0
  %4326 = vmatpush.msra.mxu0 0.0
  %4327 = vmatpush.msra.mxu0 0.0
  %4328 = vmatpush.msra.mxu0 0.0
  %4329 = vmatpush.msra.mxu0 0.0
  %4330 = vmatpush.msra.mxu0 0.0
  %4331 = vmatpush.msra.mxu0 0.0
  %4332 = vmatpush.msra.mxu0 0.0
  %4333 = vmatpush.msra.mxu0 0.0
  %4334 = vmatpush.msra.mxu0 0.0
  %4335 = vmatpush.msra.mxu0 0.0
  %4336 = vmatpush.msra.mxu0 0.0
  %4337 = vmatpush.msra.mxu0 0.0
  %4338 = vmatpush.msra.mxu0 0.0
  %4339 = vmatpush.msra.mxu0 0.0
  %4340 = vmatpush.msra.mxu0 %v4322
  %4341 = vmatmul.f32.gmra.mxu0 %v2148
  %v4342 = vpop.f32.mrf.mxu0
  %v4343 = vadd.f32 0.0, %v4342
  %4344 = vmatmul.f32.gmra.mxu0 %v2150
  %v4345 = vpop.f32.mrf.mxu0
  %v4346 = vadd.f32 0.0, %v4345
  %4347 = vdwg.mxu0
  %4350 = vrot.lane.b32.xlu0 %v4343, 74
  %v4351 = vpop.permute.xlu0 %4350
  %4352 = vrot.lane.b32.xlu0 %v4346, 74
  %v4353 = vpop.permute.xlu0 %4352
  %v4356 = vadd.f32 %v3763, %v4351
  %v4357 = vadd.f32 %v3763, %v4353
  %4358 = vmatpush.msra.mxu0 0.0
  %4359 = vmatpush.msra.mxu0 0.0
  %4360 = vmatpush.msra.mxu0 0.0
  %4361 = vmatpush.msra.mxu0 0.0
  %4362 = vmatpush.msra.mxu0 0.0
  %4363 = vmatpush.msra.mxu0 0.0
  %4364 = vmatpush.msra.mxu0 0.0
  %4365 = vmatpush.msra.mxu0 0.0
  %4366 = vmatpush.msra.mxu0 0.0
  %4367 = vmatpush.msra.mxu0 0.0
  %4368 = vmatpush.msra.mxu0 0.0
  %4369 = vmatpush.msra.mxu0 0.0
  %4370 = vmatpush.msra.mxu0 0.0
  %4371 = vmatpush.msra.mxu0 0.0
  %4372 = vmatpush.msra.mxu0 0.0
  %4373 = vmatpush.msra.mxu0 %v4323
  %4374 = vmatmul.f32.gmra.mxu0 %v3231
  %v4375 = vpop.f32.mrf.mxu0
  %v4376 = vadd.f32 0.0, %v4375
  %4377 = vmatmul.f32.gmra.mxu0 %v3233
  %v4378 = vpop.f32.mrf.mxu0
  %v4379 = vadd.f32 0.0, %v4378
  %4380 = vdwg.mxu0
  %4383 = vrot.lane.b32.xlu0 %v4376, 74
  %v4384 = vpop.permute.xlu0 %4383
  %4385 = vrot.lane.b32.xlu0 %v4379, 74
  %v4386 = vpop.permute.xlu0 %4385
  %v4389 = vadd.f32 %v4356, %v4384
  %v4390 = vadd.f32 %v4357, %v4386
  %4393 = vrot.lane.b32.xlu0 %v4320, 58
  %v4394 = vpop.permute.xlu0 %4393
  %4395 = vrot.lane.b32.xlu0 %v4321, 58
  %v4396 = vpop.permute.xlu0 %4395
  %v4397 = vsel %vm3024, %v4394, 0
  %v4399 = vsel %vm3024, %v4396, 0
  %v4402 = vsel %vm3029, %v4324, 0
  %4404 = vmatpush.msra.mxu0 0.0
  %4405 = vmatpush.msra.mxu0 0.0
  %4406 = vmatpush.msra.mxu0 0.0
  %4407 = vmatpush.msra.mxu0 0.0
  %4408 = vmatpush.msra.mxu0 0.0
  %4409 = vmatpush.msra.mxu0 0.0
  %4410 = vmatpush.msra.mxu0 0.0
  %4411 = vmatpush.msra.mxu0 0.0
  %4412 = vmatpush.msra.mxu0 0.0
  %4413 = vmatpush.msra.mxu0 0.0
  %4414 = vmatpush.msra.mxu0 0.0
  %4415 = vmatpush.msra.mxu0 0.0
  %4416 = vmatpush.msra.mxu0 0.0
  %4417 = vmatpush.msra.mxu0 0.0
  %4418 = vmatpush.msra.mxu0 0.0
  %4419 = vmatpush.msra.mxu0 %v4402
  %4420 = vmatmul.f32.gmra.mxu0 %v4397
  %v4421 = vpop.f32.mrf.mxu0
  %v4422 = vadd.f32 0.0, %v4421
  %4423 = vmatmul.f32.gmra.mxu0 %v4399
  %v4424 = vpop.f32.mrf.mxu0
  %v4425 = vadd.f32 0.0, %v4424
  %4426 = vdwg.mxu0
  %4429 = vrot.lane.b32.xlu0 %v4422, 74
  %v4430 = vpop.permute.xlu0 %4429
  %4431 = vrot.lane.b32.xlu0 %v4425, 74
  %v4432 = vpop.permute.xlu0 %4431
  %v4435 = vadd.f32 %v4389, %v4430
  %v4436 = vadd.f32 %v4390, %v4432
  %v4437 = vmul.f32 %v4435, 0.5
  %v4438 = vmul.f32 %v4436, 0.5
  %v4439 = vmul.f32 %v4435, 0.70710677
  %v4440 = vmul.f32 %v4436, 0.70710677
  %v4441 = vmul.f32 %v4439, %v4439
  %v4442 = vmin.f32 16.0, %v4441
  %v4443 = vmul.f32 %v4442, 2.1237322e-06
  %v4444 = vadd.f32 %v4443, 0.00028619796
  %v4445 = vmul.f32 %v4442, %v4444
  %v4446 = vadd.f32 %v4445, 0.0036580483
  %v4447 = vmul.f32 %v4442, %v4446
  %v4448 = vadd.f32 %v4447, 0.05243302
  %v4449 = vmul.f32 %v4442, %v4448
  %v4450 = vadd.f32 %v4449, 0.18741608
  %v4451 = vmul.f32 %v4442, %v4450
  %v4452 = vadd.f32 %v4451, 1.1283791
  %v4453 = vmul.f32 %v4439, %v4452
  %v4454 = vmul.f32 %v4442, 3.8918573e-05
  %v4455 = vadd.f32 %v4454, 0.001143296
  %v4456 = vmul.f32 %v4442, %v4455
  %v4457 = vadd.f32 %v4456, 0.014752088
  %v4458 = vmul.f32 %v4442, %v4457
  %v4459 = vadd.f32 %v4458, 0.112945676
  %v4460 = vmul.f32 %v4442, %v4459
  %v4461 = vadd.f32 %v4460, 0.4994258
  %v4462 = vmul.f32 %v4442, %v4461
  %v4463 = vadd.f32 %v4462, 1.0
  %v4464 = vrcp.pop %v4463
  %v4465 = vmul.f32 %v4463, %v4464
  %v4466 = vsub.f32 1.0, %v4465
  %v4467 = vmul.f32 %v4464, %v4466
  %v4468 = vadd.f32 %v4464, %v4467
  %vm4469 = vweird.f32 %v4463
  %vm4470 = vweird.f32 %v4464
  %vm4471 = vmor %vm4469, %vm4470
  %v4472 = vsel %vm4471, %v4464, %v4468
  %v4473 = vand.u32 2147483647, %v4463
  %vm4474 = vcmp.eq.f32.partialorder %v4473, 8.507059e+37
  %v4475 = vand.u32 %v4463, 2147483648
  %v4476 = vor.u32 1.1754944e-38, %v4475
  %v4477 = vsel %vm4474, %v4476, %v4472
  %v4478 = vmul.f32 %v4453, %v4477
  %v4479 = vmin.f32 %v4478, 1.0
  %v4480 = vmax.f32 %v4479, -1.0
  %v4481 = vmul.f32 %v4440, %v4440
  %v4482 = vmin.f32 16.0, %v4481
  %v4483 = vmul.f32 %v4482, 2.1237322e-06
  %v4484 = vadd.f32 %v4483, 0.00028619796
  %v4485 = vmul.f32 %v4482, %v4484
  %v4486 = vadd.f32 %v4485, 0.0036580483
  %v4487 = vmul.f32 %v4482, %v4486
  %v4488 = vadd.f32 %v4487, 0.05243302
  %v4489 = vmul.f32 %v4482, %v4488
  %v4490 = vadd.f32 %v4489, 0.18741608
  %v4491 = vmul.f32 %v4482, %v4490
  %v4492 = vadd.f32 %v4491, 1.1283791
  %v4493 = vmul.f32 %v4440, %v4492
  %v4494 = vmul.f32 %v4482, 3.8918573e-05
  %v4495 = vadd.f32 %v4494, 0.001143296
  %v4496 = vmul.f32 %v4482, %v4495
  %v4497 = vadd.f32 %v4496, 0.014752088
  %v4498 = vmul.f32 %v4482, %v4497
  %v4499 = vadd.f32 %v4498, 0.112945676
  %v4500 = vmul.f32 %v4482, %v4499
  %v4501 = vadd.f32 %v4500, 0.4994258
  %v4502 = vmul.f32 %v4482, %v4501
  %v4503 = vadd.f32 %v4502, 1.0
  %v4504 = vrcp.pop %v4503
  %v4505 = vmul.f32 %v4503, %v4504
  %v4506 = vsub.f32 1.0, %v4505
  %v4507 = vmul.f32 %v4504, %v4506
  %v4508 = vadd.f32 %v4504, %v4507
  %vm4509 = vweird.f32 %v4503
  %vm4510 = vweird.f32 %v4504
  %vm4511 = vmor %vm4509, %vm4510
  %v4512 = vsel %vm4511, %v4504, %v4508
  %v4513 = vand.u32 2147483647, %v4503
  %vm4514 = vcmp.eq.f32.partialorder %v4513, 8.507059e+37
  %v4515 = vand.u32 %v4503, 2147483648
  %v4516 = vor.u32 1.1754944e-38, %v4515
  %v4517 = vsel %vm4514, %v4516, %v4512
  %v4518 = vmul.f32 %v4493, %v4517
  %v4519 = vmin.f32 %v4518, 1.0
  %v4520 = vmax.f32 %v4519, -1.0
  %v4521 = vadd.f32 %v4480, 1.0
  %v4522 = vadd.f32 %v4520, 1.0
  %v4523 = vmul.f32 %v4437, %v4521
  %v4524 = vmul.f32 %v4438, %v4522
  %v4525 = vld [vmem:[#allocation19] sm:$0xff]
  %v4526 = vld [vmem:[#allocation19 + $0x8] sm:$0xff]
  %v4527 = vld [vmem:[#allocation19 + $0x10] sm:$0xff]
  %v4528 = vld [vmem:[#allocation19 + $0x18] sm:$0xff]
  %v4529 = vld [vmem:[#allocation19 + $0x20] sm:$0xff]
  %v4530 = vld [vmem:[#allocation19 + $0x28] sm:$0xff]
  %v4531 = vld [vmem:[#allocation19 + $0x30] sm:$0xff]
  %4532 = vmatpush.msra.mxu0 0.0
  %4533 = vmatpush.msra.mxu0 0.0
  %4534 = vmatpush.msra.mxu0 0.0
  %4535 = vmatpush.msra.mxu0 0.0
  %4536 = vmatpush.msra.mxu0 0.0
  %4537 = vmatpush.msra.mxu0 0.0
  %4538 = vmatpush.msra.mxu0 0.0
  %4539 = vmatpush.msra.mxu0 0.0
  %4540 = vmatpush.msra.mxu0 0.0
  %4541 = vmatpush.msra.mxu0 0.0
  %4542 = vmatpush.msra.mxu0 0.0
  %4543 = vmatpush.msra.mxu0 0.0
  %4544 = vmatpush.msra.mxu0 0.0
  %4545 = vmatpush.msra.mxu0 0.0
  %4546 = vmatpush.msra.mxu0 %v4526
  %4547 = vmatpush.msra.mxu0 %v4525
  %4548 = vmatmul.f32.gmra.mxu0 %v1528
  %v4549 = vpop.f32.mrf.mxu0
  %v4550 = vadd.f32 0.0, %v4549
  %4551 = vmatmul.f32.gmra.mxu0 %v1530
  %v4552 = vpop.f32.mrf.mxu0
  %v4553 = vadd.f32 0.0, %v4552
  %4554 = vdwg.mxu0
  %4557 = vrot.lane.b32.xlu0 %v4550, 82
  %v4558 = vpop.permute.xlu0 %4557
  %4559 = vrot.lane.b32.xlu0 %v4553, 82
  %v4560 = vpop.permute.xlu0 %4559
  %v4563 = vadd.f32 %v3763, %v4558
  %v4564 = vadd.f32 %v3763, %v4560
  %4565 = vmatpush.msra.mxu0 0.0
  %4566 = vmatpush.msra.mxu0 0.0
  %4567 = vmatpush.msra.mxu0 0.0
  %4568 = vmatpush.msra.mxu0 0.0
  %4569 = vmatpush.msra.mxu0 0.0
  %4570 = vmatpush.msra.mxu0 0.0
  %4571 = vmatpush.msra.mxu0 0.0
  %4572 = vmatpush.msra.mxu0 0.0
  %4573 = vmatpush.msra.mxu0 0.0
  %4574 = vmatpush.msra.mxu0 0.0
  %4575 = vmatpush.msra.mxu0 0.0
  %4576 = vmatpush.msra.mxu0 0.0
  %4577 = vmatpush.msra.mxu0 0.0
  %4578 = vmatpush.msra.mxu0 0.0
  %4579 = vmatpush.msra.mxu0 %v4528
  %4580 = vmatpush.msra.mxu0 %v4527
  %4581 = vmatmul.f32.gmra.mxu0 %v2365
  %v4582 = vpop.f32.mrf.mxu0
  %v4583 = vadd.f32 0.0, %v4582
  %4584 = vmatmul.f32.gmra.mxu0 %v2367
  %v4585 = vpop.f32.mrf.mxu0
  %v4586 = vadd.f32 0.0, %v4585
  %4587 = vdwg.mxu0
  %4590 = vrot.lane.b32.xlu0 %v4583, 82
  %v4591 = vpop.permute.xlu0 %4590
  %4592 = vrot.lane.b32.xlu0 %v4586, 82
  %v4593 = vpop.permute.xlu0 %4592
  %v4596 = vadd.f32 %v4563, %v4591
  %v4597 = vadd.f32 %v4564, %v4593
  %4598 = vmatpush.msra.mxu0 0.0
  %4599 = vmatpush.msra.mxu0 0.0
  %4600 = vmatpush.msra.mxu0 0.0
  %4601 = vmatpush.msra.mxu0 0.0
  %4602 = vmatpush.msra.mxu0 0.0
  %4603 = vmatpush.msra.mxu0 0.0
  %4604 = vmatpush.msra.mxu0 0.0
  %4605 = vmatpush.msra.mxu0 0.0
  %4606 = vmatpush.msra.mxu0 0.0
  %4607 = vmatpush.msra.mxu0 0.0
  %4608 = vmatpush.msra.mxu0 0.0
  %4609 = vmatpush.msra.mxu0 0.0
  %4610 = vmatpush.msra.mxu0 0.0
  %4611 = vmatpush.msra.mxu0 0.0
  %4612 = vmatpush.msra.mxu0 %v4530
  %4613 = vmatpush.msra.mxu0 %v4529
  %4614 = vmatmul.f32.gmra.mxu0 %v3487
  %v4615 = vpop.f32.mrf.mxu0
  %v4616 = vadd.f32 0.0, %v4615
  %4617 = vmatmul.f32.gmra.mxu0 %v3489
  %v4618 = vpop.f32.mrf.mxu0
  %v4619 = vadd.f32 0.0, %v4618
  %4620 = vdwg.mxu0
  %4623 = vrot.lane.b32.xlu0 %v4616, 82
  %v4624 = vpop.permute.xlu0 %4623
  %4625 = vrot.lane.b32.xlu0 %v4619, 82
  %v4626 = vpop.permute.xlu0 %4625
  %v4629 = vadd.f32 %v4596, %v4624
  %v4630 = vadd.f32 %v4597, %v4626
  %4633 = vrot.lane.b32.xlu0 %v4523, 54
  %v4634 = vpop.permute.xlu0 %4633
  %4635 = vrot.lane.b32.xlu0 %v4524, 54
  %v4636 = vpop.permute.xlu0 %4635
  %v4637 = vsel %vm2147, %v4634, 0
  %v4639 = vsel %vm2147, %v4636, 0
  %4641 = vmatpush.msra.mxu0 0.0
  %4642 = vmatpush.msra.mxu0 0.0
  %4643 = vmatpush.msra.mxu0 0.0
  %4644 = vmatpush.msra.mxu0 0.0
  %4645 = vmatpush.msra.mxu0 0.0
  %4646 = vmatpush.msra.mxu0 0.0
  %4647 = vmatpush.msra.mxu0 0.0
  %4648 = vmatpush.msra.mxu0 0.0
  %4649 = vmatpush.msra.mxu0 0.0
  %4650 = vmatpush.msra.mxu0 0.0
  %4651 = vmatpush.msra.mxu0 0.0
  %4652 = vmatpush.msra.mxu0 0.0
  %4653 = vmatpush.msra.mxu0 0.0
  %4654 = vmatpush.msra.mxu0 0.0
  %4655 = vmatpush.msra.mxu0 0.0
  %4656 = vmatpush.msra.mxu0 %v4531
  %4657 = vmatmul.f32.gmra.mxu0 %v4637
  %v4658 = vpop.f32.mrf.mxu0
  %v4659 = vadd.f32 0.0, %v4658
  %4660 = vmatmul.f32.gmra.mxu0 %v4639
  %v4661 = vpop.f32.mrf.mxu0
  %v4662 = vadd.f32 0.0, %v4661
  %4663 = vdwg.mxu0
  %4666 = vrot.lane.b32.xlu0 %v4659, 82
  %v4667 = vpop.permute.xlu0 %4666
  %4668 = vrot.lane.b32.xlu0 %v4662, 82
  %v4669 = vpop.permute.xlu0 %4668
  %v4672 = vadd.f32 %v4629, %v4667
  %v4673 = vadd.f32 %v4630, %v4669
  %v4674 = vmul.f32 %v4672, 0.5
  %v4675 = vmul.f32 %v4673, 0.5
  %v4676 = vmul.f32 %v4672, 0.70710677
  %v4677 = vmul.f32 %v4673, 0.70710677
  %v4678 = vmul.f32 %v4676, %v4676
  %v4679 = vmin.f32 16.0, %v4678
  %v4680 = vmul.f32 %v4679, 2.1237322e-06
  %v4681 = vadd.f32 %v4680, 0.00028619796
  %v4682 = vmul.f32 %v4679, %v4681
  %v4683 = vadd.f32 %v4682, 0.0036580483
  %v4684 = vmul.f32 %v4679, %v4683
  %v4685 = vadd.f32 %v4684, 0.05243302
  %v4686 = vmul.f32 %v4679, %v4685
  %v4687 = vadd.f32 %v4686, 0.18741608
  %v4688 = vmul.f32 %v4679, %v4687
  %v4689 = vadd.f32 %v4688, 1.1283791
  %v4690 = vmul.f32 %v4676, %v4689
  %v4691 = vmul.f32 %v4679, 3.8918573e-05
  %v4692 = vadd.f32 %v4691, 0.001143296
  %v4693 = vmul.f32 %v4679, %v4692
  %v4694 = vadd.f32 %v4693, 0.014752088
  %v4695 = vmul.f32 %v4679, %v4694
  %v4696 = vadd.f32 %v4695, 0.112945676
  %v4697 = vmul.f32 %v4679, %v4696
  %v4698 = vadd.f32 %v4697, 0.4994258
  %v4699 = vmul.f32 %v4679, %v4698
  %v4700 = vadd.f32 %v4699, 1.0
  %v4701 = vrcp.pop %v4700
  %v4702 = vmul.f32 %v4700, %v4701
  %v4703 = vsub.f32 1.0, %v4702
  %v4704 = vmul.f32 %v4701, %v4703
  %v4705 = vadd.f32 %v4701, %v4704
  %vm4706 = vweird.f32 %v4700
  %vm4707 = vweird.f32 %v4701
  %vm4708 = vmor %vm4706, %vm4707
  %v4709 = vsel %vm4708, %v4701, %v4705
  %v4710 = vand.u32 2147483647, %v4700
  %vm4711 = vcmp.eq.f32.partialorder %v4710, 8.507059e+37
  %v4712 = vand.u32 %v4700, 2147483648
  %v4713 = vor.u32 1.1754944e-38, %v4712
  %v4714 = vsel %vm4711, %v4713, %v4709
  %v4715 = vmul.f32 %v4690, %v4714
  %v4716 = vmin.f32 %v4715, 1.0
  %v4717 = vmax.f32 %v4716, -1.0
  %v4718 = vmul.f32 %v4677, %v4677
  %v4719 = vmin.f32 16.0, %v4718
  %v4720 = vmul.f32 %v4719, 2.1237322e-06
  %v4721 = vadd.f32 %v4720, 0.00028619796
  %v4722 = vmul.f32 %v4719, %v4721
  %v4723 = vadd.f32 %v4722, 0.0036580483
  %v4724 = vmul.f32 %v4719, %v4723
  %v4725 = vadd.f32 %v4724, 0.05243302
  %v4726 = vmul.f32 %v4719, %v4725
  %v4727 = vadd.f32 %v4726, 0.18741608
  %v4728 = vmul.f32 %v4719, %v4727
  %v4729 = vadd.f32 %v4728, 1.1283791
  %v4730 = vmul.f32 %v4677, %v4729
  %v4731 = vmul.f32 %v4719, 3.8918573e-05
  %v4732 = vadd.f32 %v4731, 0.001143296
  %v4733 = vmul.f32 %v4719, %v4732
  %v4734 = vadd.f32 %v4733, 0.014752088
  %v4735 = vmul.f32 %v4719, %v4734
  %v4736 = vadd.f32 %v4735, 0.112945676
  %v4737 = vmul.f32 %v4719, %v4736
  %v4738 = vadd.f32 %v4737, 0.4994258
  %v4739 = vmul.f32 %v4719, %v4738
  %v4740 = vadd.f32 %v4739, 1.0
  %v4741 = vrcp.pop %v4740
  %v4742 = vmul.f32 %v4740, %v4741
  %v4743 = vsub.f32 1.0, %v4742
  %v4744 = vmul.f32 %v4741, %v4743
  %v4745 = vadd.f32 %v4741, %v4744
  %vm4746 = vweird.f32 %v4740
  %vm4747 = vweird.f32 %v4741
  %vm4748 = vmor %vm4746, %vm4747
  %v4749 = vsel %vm4748, %v4741, %v4745
  %v4750 = vand.u32 2147483647, %v4740
  %vm4751 = vcmp.eq.f32.partialorder %v4750, 8.507059e+37
  %v4752 = vand.u32 %v4740, 2147483648
  %v4753 = vor.u32 1.1754944e-38, %v4752
  %v4754 = vsel %vm4751, %v4753, %v4749
  %v4755 = vmul.f32 %v4730, %v4754
  %v4756 = vmin.f32 %v4755, 1.0
  %v4757 = vmax.f32 %v4756, -1.0
  %v4758 = vadd.f32 %v4717, 1.0
  %v4759 = vadd.f32 %v4757, 1.0
  %v4760 = vmul.f32 %v4674, %v4758
  %v4761 = vmul.f32 %v4675, %v4759
  %v4762 = vld [vmem:[#allocation20] sm:$0xff]
  %v4763 = vld [vmem:[#allocation20 + $0x8] sm:$0xff]
  %v4764 = vld [vmem:[#allocation20 + $0x10] sm:$0xff]
  %v4765 = vld [vmem:[#allocation20 + $0x18] sm:$0xff]
  %v4766 = vld [vmem:[#allocation20 + $0x20] sm:$0xff]
  %v4767 = vld [vmem:[#allocation20 + $0x28] sm:$0xff]
  %v4768 = vld [vmem:[#allocation20 + $0x30] sm:$0xff]
  %v4769 = vld [vmem:[#allocation20 + $0x38] sm:$0xff]
  %v4770 = vld [vmem:[#allocation20 + $0x40] sm:$0xff]
  %v4771 = vld [vmem:[#allocation20 + $0x48] sm:$0xff]
  %v4772 = vld [vmem:[#allocation20 + $0x50] sm:$0xff]
  %v4773 = vld [vmem:[#allocation20 + $0x58] sm:$0xff]
  %v4774 = vld [vmem:[#allocation20 + $0x60] sm:$0xff]
  %v4775 = vld [vmem:[#allocation20 + $0x68] sm:$0xff]
  %v4776 = vld [vmem:[#allocation20 + $0x70] sm:$0xff]
  %v4777 = vld [vmem:[#allocation20 + $0x78] sm:$0xff]
  %v4778 = vld [vmem:[#allocation20 + $0x80] sm:$0xff]
  %v4779 = vld [vmem:[#allocation20 + $0x88] sm:$0xff]
  %v4780 = vld [vmem:[%s1 + $0x3] sm:$0x3]
  %4781 = vmatpush.msra.mxu0 0.0
  %4782 = vmatpush.msra.mxu0 0.0
  %4783 = vmatpush.msra.mxu0 0.0
  %4784 = vmatpush.msra.mxu0 0.0
  %4785 = vmatpush.msra.mxu0 0.0
  %4786 = vmatpush.msra.mxu0 0.0
  %4787 = vmatpush.msra.mxu0 0.0
  %4788 = vmatpush.msra.mxu0 0.0
  %4789 = vmatpush.msra.mxu0 0.0
  %4790 = vmatpush.msra.mxu0 0.0
  %4791 = vmatpush.msra.mxu0 0.0
  %4792 = vmatpush.msra.mxu0 0.0
  %4793 = vmatpush.msra.mxu0 %v4765
  %4794 = vmatpush.msra.mxu0 %v4764
  %4795 = vmatpush.msra.mxu0 %v4763
  %4796 = vmatpush.msra.mxu0 %v4762
  %4797 = vmatmul.f32.gmra.mxu0 %v1223
  %v4798 = vpop.f32.mrf.mxu0
  %v4799 = vadd.f32 0.0, %v4798
  %4800 = vmatmul.f32.gmra.mxu0 %v1226
  %v4801 = vpop.f32.mrf.mxu0
  %v4802 = vadd.f32 0.0, %v4801
  %4803 = vdwg.mxu0
  %v4805 = vperm.slane %v4780, 0
  %v4806 = vperm.slane %v4780, 1
  %4811 = vrot.lane.b32.xlu0 %v4799, 98
  %v4812 = vpop.permute.xlu0 %4811
  %4813 = vrot.lane.b32.xlu0 %v4802, 98
  %v4814 = vpop.permute.xlu0 %4813
  %v4817 = vadd.f32 %v4805, %v4812
  %v4818 = vadd.f32 %v4806, %v4812
  %v4819 = vadd.f32 %v4805, %v4814
  %v4820 = vadd.f32 %v4806, %v4814
  %4821 = vmatpush.msra.mxu0 0.0
  %4822 = vmatpush.msra.mxu0 0.0
  %4823 = vmatpush.msra.mxu0 0.0
  %4824 = vmatpush.msra.mxu0 0.0
  %4825 = vmatpush.msra.mxu0 0.0
  %4826 = vmatpush.msra.mxu0 0.0
  %4827 = vmatpush.msra.mxu0 0.0
  %4828 = vmatpush.msra.mxu0 0.0
  %4829 = vmatpush.msra.mxu0 0.0
  %4830 = vmatpush.msra.mxu0 0.0
  %4831 = vmatpush.msra.mxu0 0.0
  %4832 = vmatpush.msra.mxu0 0.0
  %4833 = vmatpush.msra.mxu0 %v4769
  %4834 = vmatpush.msra.mxu0 %v4768
  %4835 = vmatpush.msra.mxu0 %v4767
  %4836 = vmatpush.msra.mxu0 %v4766
  %4837 = vmatmul.f32.gmra.mxu0 %v1857
  %v4838 = vpop.f32.mrf.mxu0
  %v4839 = vadd.f32 0.0, %v4838
  %4840 = vmatmul.f32.gmra.mxu0 %v1859
  %v4841 = vpop.f32.mrf.mxu0
  %v4842 = vadd.f32 0.0, %v4841
  %4843 = vdwg.mxu0
  %4846 = vrot.lane.b32.xlu0 %v4839, 98
  %v4847 = vpop.permute.xlu0 %4846
  %4848 = vrot.lane.b32.xlu0 %v4842, 98
  %v4849 = vpop.permute.xlu0 %4848
  %v4852 = vadd.f32 %v4817, %v4847
  %v4853 = vadd.f32 %v4818, %v4847
  %v4854 = vadd.f32 %v4819, %v4849
  %v4855 = vadd.f32 %v4820, %v4849
  %4856 = vmatpush.msra.mxu0 0.0
  %4857 = vmatpush.msra.mxu0 0.0
  %4858 = vmatpush.msra.mxu0 0.0
  %4859 = vmatpush.msra.mxu0 0.0
  %4860 = vmatpush.msra.mxu0 0.0
  %4861 = vmatpush.msra.mxu0 0.0
  %4862 = vmatpush.msra.mxu0 0.0
  %4863 = vmatpush.msra.mxu0 0.0
  %4864 = vmatpush.msra.mxu0 0.0
  %4865 = vmatpush.msra.mxu0 0.0
  %4866 = vmatpush.msra.mxu0 0.0
  %4867 = vmatpush.msra.mxu0 0.0
  %4868 = vmatpush.msra.mxu0 %v4773
  %4869 = vmatpush.msra.mxu0 %v4772
  %4870 = vmatpush.msra.mxu0 %v4771
  %4871 = vmatpush.msra.mxu0 %v4770
  %4872 = vmatmul.f32.gmra.mxu0 %v2736
  %v4873 = vpop.f32.mrf.mxu0
  %v4874 = vadd.f32 0.0, %v4873
  %4875 = vmatmul.f32.gmra.mxu0 %v2738
  %v4876 = vpop.f32.mrf.mxu0
  %v4877 = vadd.f32 0.0, %v4876
  %4878 = vdwg.mxu0
  %4881 = vrot.lane.b32.xlu0 %v4874, 98
  %v4882 = vpop.permute.xlu0 %4881
  %4883 = vrot.lane.b32.xlu0 %v4877, 98
  %v4884 = vpop.permute.xlu0 %4883
  %v4887 = vadd.f32 %v4852, %v4882
  %v4888 = vadd.f32 %v4853, %v4882
  %v4889 = vadd.f32 %v4854, %v4884
  %v4890 = vadd.f32 %v4855, %v4884
  %4891 = vmatpush.msra.mxu0 0.0
  %4892 = vmatpush.msra.mxu0 0.0
  %4893 = vmatpush.msra.mxu0 0.0
  %4894 = vmatpush.msra.mxu0 0.0
  %4895 = vmatpush.msra.mxu0 0.0
  %4896 = vmatpush.msra.mxu0 0.0
  %4897 = vmatpush.msra.mxu0 0.0
  %4898 = vmatpush.msra.mxu0 0.0
  %4899 = vmatpush.msra.mxu0 0.0
  %4900 = vmatpush.msra.mxu0 0.0
  %4901 = vmatpush.msra.mxu0 0.0
  %4902 = vmatpush.msra.mxu0 0.0
  %4903 = vmatpush.msra.mxu0 %v4777
  %4904 = vmatpush.msra.mxu0 %v4776
  %4905 = vmatpush.msra.mxu0 %v4775
  %4906 = vmatpush.msra.mxu0 %v4774
  %4907 = vmatmul.f32.gmra.mxu0 %v3899
  %v4908 = vpop.f32.mrf.mxu0
  %v4909 = vadd.f32 0.0, %v4908
  %4910 = vmatmul.f32.gmra.mxu0 %v3901
  %v4911 = vpop.f32.mrf.mxu0
  %v4912 = vadd.f32 0.0, %v4911
  %4913 = vdwg.mxu0
  %4916 = vrot.lane.b32.xlu0 %v4909, 98
  %v4917 = vpop.permute.xlu0 %4916
  %4918 = vrot.lane.b32.xlu0 %v4912, 98
  %v4919 = vpop.permute.xlu0 %4918
  %v4922 = vadd.f32 %v4887, %v4917
  %v4923 = vadd.f32 %v4888, %v4917
  %v4924 = vadd.f32 %v4889, %v4919
  %v4925 = vadd.f32 %v4890, %v4919
  %4928 = vrot.lane.b32.xlu0 %v4760, 46
  %v4929 = vpop.permute.xlu0 %4928
  %4930 = vrot.lane.b32.xlu0 %v4761, 46
  %v4931 = vpop.permute.xlu0 %4930
  %v4932 = vsel %vm1527, %v4929, 0
  %v4934 = vsel %vm1527, %v4931, 0
  %4936 = vmatpush.msra.mxu0 0.0
  %4937 = vmatpush.msra.mxu0 0.0
  %4938 = vmatpush.msra.mxu0 0.0
  %4939 = vmatpush.msra.mxu0 0.0
  %4940 = vmatpush.msra.mxu0 0.0
  %4941 = vmatpush.msra.mxu0 0.0
  %4942 = vmatpush.msra.mxu0 0.0
  %4943 = vmatpush.msra.mxu0 0.0
  %4944 = vmatpush.msra.mxu0 0.0
  %4945 = vmatpush.msra.mxu0 0.0
  %4946 = vmatpush.msra.mxu0 0.0
  %4947 = vmatpush.msra.mxu0 0.0
  %4948 = vmatpush.msra.mxu0 0.0
  %4949 = vmatpush.msra.mxu0 0.0
  %4950 = vmatpush.msra.mxu0 %v4779
  %4951 = vmatpush.msra.mxu0 %v4778
  %4952 = vmatmul.f32.gmra.mxu0 %v4932
  %v4953 = vpop.f32.mrf.mxu0
  %v4954 = vadd.f32 0.0, %v4953
  %4955 = vmatmul.f32.gmra.mxu0 %v4934
  %v4956 = vpop.f32.mrf.mxu0
  %v4957 = vadd.f32 0.0, %v4956
  %4958 = vdwg.mxu0
  %4961 = vrot.lane.b32.xlu0 %v4954, 98
  %v4962 = vpop.permute.xlu0 %4961
  %4963 = vrot.lane.b32.xlu0 %v4957, 98
  %v4964 = vpop.permute.xlu0 %4963
  %v4967 = vadd.f32 %v4922, %v4962
  %v4968 = vadd.f32 %v4923, %v4962
  %v4969 = vadd.f32 %v4924, %v4964
  %v4970 = vadd.f32 %v4925, %v4964
  %v4971 = vmul.f32 %v4967, 0.5
  %v4972 = vmul.f32 %v4968, 0.5
  %v4973 = vmul.f32 %v4969, 0.5
  %v4974 = vmul.f32 %v4970, 0.5
  %v4975 = vmul.f32 %v4967, 0.70710677
  %v4976 = vmul.f32 %v4968, 0.70710677
  %v4977 = vmul.f32 %v4969, 0.70710677
  %v4978 = vmul.f32 %v4970, 0.70710677
  %v4979 = vmul.f32 %v4975, %v4975
  %v4980 = vmin.f32 16.0, %v4979
  %v4981 = vmul.f32 %v4980, 2.1237322e-06
  %v4982 = vadd.f32 %v4981, 0.00028619796
  %v4983 = vmul.f32 %v4980, %v4982
  %v4984 = vadd.f32 %v4983, 0.0036580483
  %v4985 = vmul.f32 %v4980, %v4984
  %v4986 = vadd.f32 %v4985, 0.05243302
  %v4987 = vmul.f32 %v4980, %v4986
  %v4988 = vadd.f32 %v4987, 0.18741608
  %v4989 = vmul.f32 %v4980, %v4988
  %v4990 = vadd.f32 %v4989, 1.1283791
  %v4991 = vmul.f32 %v4975, %v4990
  %v4992 = vmul.f32 %v4980, 3.8918573e-05
  %v4993 = vadd.f32 %v4992, 0.001143296
  %v4994 = vmul.f32 %v4980, %v4993
  %v4995 = vadd.f32 %v4994, 0.014752088
  %v4996 = vmul.f32 %v4980, %v4995
  %v4997 = vadd.f32 %v4996, 0.112945676
  %v4998 = vmul.f32 %v4980, %v4997
  %v4999 = vadd.f32 %v4998, 0.4994258
  %v5000 = vmul.f32 %v4980, %v4999
  %v5001 = vadd.f32 %v5000, 1.0
  %v5002 = vrcp.pop %v5001
  %v5003 = vmul.f32 %v5001, %v5002
  %v5004 = vsub.f32 1.0, %v5003
  %v5005 = vmul.f32 %v5002, %v5004
  %v5006 = vadd.f32 %v5002, %v5005
  %vm5007 = vweird.f32 %v5001
  %vm5008 = vweird.f32 %v5002
  %vm5009 = vmor %vm5007, %vm5008
  %v5010 = vsel %vm5009, %v5002, %v5006
  %v5011 = vand.u32 2147483647, %v5001
  %vm5012 = vcmp.eq.f32.partialorder %v5011, 8.507059e+37
  %v5013 = vand.u32 %v5001, 2147483648
  %v5014 = vor.u32 1.1754944e-38, %v5013
  %v5015 = vsel %vm5012, %v5014, %v5010
  %v5016 = vmul.f32 %v4991, %v5015
  %v5017 = vmin.f32 %v5016, 1.0
  %v5018 = vmax.f32 %v5017, -1.0
  %v5019 = vmul.f32 %v4976, %v4976
  %v5020 = vmin.f32 16.0, %v5019
  %v5021 = vmul.f32 %v5020, 2.1237322e-06
  %v5022 = vadd.f32 %v5021, 0.00028619796
  %v5023 = vmul.f32 %v5020, %v5022
  %v5024 = vadd.f32 %v5023, 0.0036580483
  %v5025 = vmul.f32 %v5020, %v5024
  %v5026 = vadd.f32 %v5025, 0.05243302
  %v5027 = vmul.f32 %v5020, %v5026
  %v5028 = vadd.f32 %v5027, 0.18741608
  %v5029 = vmul.f32 %v5020, %v5028
  %v5030 = vadd.f32 %v5029, 1.1283791
  %v5031 = vmul.f32 %v4976, %v5030
  %v5032 = vmul.f32 %v5020, 3.8918573e-05
  %v5033 = vadd.f32 %v5032, 0.001143296
  %v5034 = vmul.f32 %v5020, %v5033
  %v5035 = vadd.f32 %v5034, 0.014752088
  %v5036 = vmul.f32 %v5020, %v5035
  %v5037 = vadd.f32 %v5036, 0.112945676
  %v5038 = vmul.f32 %v5020, %v5037
  %v5039 = vadd.f32 %v5038, 0.4994258
  %v5040 = vmul.f32 %v5020, %v5039
  %v5041 = vadd.f32 %v5040, 1.0
  %v5042 = vrcp.pop %v5041
  %v5043 = vmul.f32 %v5041, %v5042
  %v5044 = vsub.f32 1.0, %v5043
  %v5045 = vmul.f32 %v5042, %v5044
  %v5046 = vadd.f32 %v5042, %v5045
  %vm5047 = vweird.f32 %v5041
  %vm5048 = vweird.f32 %v5042
  %vm5049 = vmor %vm5047, %vm5048
  %v5050 = vsel %vm5049, %v5042, %v5046
  %v5051 = vand.u32 2147483647, %v5041
  %vm5052 = vcmp.eq.f32.partialorder %v5051, 8.507059e+37
  %v5053 = vand.u32 %v5041, 2147483648
  %v5054 = vor.u32 1.1754944e-38, %v5053
  %v5055 = vsel %vm5052, %v5054, %v5050
  %v5056 = vmul.f32 %v5031, %v5055
  %v5057 = vmin.f32 %v5056, 1.0
  %v5058 = vmax.f32 %v5057, -1.0
  %v5059 = vmul.f32 %v4977, %v4977
  %v5060 = vmin.f32 16.0, %v5059
  %v5061 = vmul.f32 %v5060, 2.1237322e-06
  %v5062 = vadd.f32 %v5061, 0.00028619796
  %v5063 = vmul.f32 %v5060, %v5062
  %v5064 = vadd.f32 %v5063, 0.0036580483
  %v5065 = vmul.f32 %v5060, %v5064
  %v5066 = vadd.f32 %v5065, 0.05243302
  %v5067 = vmul.f32 %v5060, %v5066
  %v5068 = vadd.f32 %v5067, 0.18741608
  %v5069 = vmul.f32 %v5060, %v5068
  %v5070 = vadd.f32 %v5069, 1.1283791
  %v5071 = vmul.f32 %v4977, %v5070
  %v5072 = vmul.f32 %v5060, 3.8918573e-05
  %v5073 = vadd.f32 %v5072, 0.001143296
  %v5074 = vmul.f32 %v5060, %v5073
  %v5075 = vadd.f32 %v5074, 0.014752088
  %v5076 = vmul.f32 %v5060, %v5075
  %v5077 = vadd.f32 %v5076, 0.112945676
  %v5078 = vmul.f32 %v5060, %v5077
  %v5079 = vadd.f32 %v5078, 0.4994258
  %v5080 = vmul.f32 %v5060, %v5079
  %v5081 = vadd.f32 %v5080, 1.0
  %v5082 = vrcp.pop %v5081
  %v5083 = vmul.f32 %v5081, %v5082
  %v5084 = vsub.f32 1.0, %v5083
  %v5085 = vmul.f32 %v5082, %v5084
  %v5086 = vadd.f32 %v5082, %v5085
  %vm5087 = vweird.f32 %v5081
  %vm5088 = vweird.f32 %v5082
  %vm5089 = vmor %vm5087, %vm5088
  %v5090 = vsel %vm5089, %v5082, %v5086
  %v5091 = vand.u32 2147483647, %v5081
  %vm5092 = vcmp.eq.f32.partialorder %v5091, 8.507059e+37
  %v5093 = vand.u32 %v5081, 2147483648
  %v5094 = vor.u32 1.1754944e-38, %v5093
  %v5095 = vsel %vm5092, %v5094, %v5090
  %v5096 = vmul.f32 %v5071, %v5095
  %v5097 = vmin.f32 %v5096, 1.0
  %v5098 = vmax.f32 %v5097, -1.0
  %v5099 = vmul.f32 %v4978, %v4978
  %v5100 = vmin.f32 16.0, %v5099
  %v5101 = vmul.f32 %v5100, 2.1237322e-06
  %v5102 = vadd.f32 %v5101, 0.00028619796
  %v5103 = vmul.f32 %v5100, %v5102
  %v5104 = vadd.f32 %v5103, 0.0036580483
  %v5105 = vmul.f32 %v5100, %v5104
  %v5106 = vadd.f32 %v5105, 0.05243302
  %v5107 = vmul.f32 %v5100, %v5106
  %v5108 = vadd.f32 %v5107, 0.18741608
  %v5109 = vmul.f32 %v5100, %v5108
  %v5110 = vadd.f32 %v5109, 1.1283791
  %v5111 = vmul.f32 %v4978, %v5110
  %v5112 = vmul.f32 %v5100, 3.8918573e-05
  %v5113 = vadd.f32 %v5112, 0.001143296
  %v5114 = vmul.f32 %v5100, %v5113
  %v5115 = vadd.f32 %v5114, 0.014752088
  %v5116 = vmul.f32 %v5100, %v5115
  %v5117 = vadd.f32 %v5116, 0.112945676
  %v5118 = vmul.f32 %v5100, %v5117
  %v5119 = vadd.f32 %v5118, 0.4994258
  %v5120 = vmul.f32 %v5100, %v5119
  %v5121 = vadd.f32 %v5120, 1.0
  %v5122 = vrcp.pop %v5121
  %v5123 = vmul.f32 %v5121, %v5122
  %v5124 = vsub.f32 1.0, %v5123
  %v5125 = vmul.f32 %v5122, %v5124
  %v5126 = vadd.f32 %v5122, %v5125
  %vm5127 = vweird.f32 %v5121
  %vm5128 = vweird.f32 %v5122
  %vm5129 = vmor %vm5127, %vm5128
  %v5130 = vsel %vm5129, %v5122, %v5126
  %v5131 = vand.u32 2147483647, %v5121
  %vm5132 = vcmp.eq.f32.partialorder %v5131, 8.507059e+37
  %v5133 = vand.u32 %v5121, 2147483648
  %v5134 = vor.u32 1.1754944e-38, %v5133
  %v5135 = vsel %vm5132, %v5134, %v5130
  %v5136 = vmul.f32 %v5111, %v5135
  %v5137 = vmin.f32 %v5136, 1.0
  %v5138 = vmax.f32 %v5137, -1.0
  %v5139 = vadd.f32 %v5018, 1.0
  %v5140 = vadd.f32 %v5058, 1.0
  %v5141 = vadd.f32 %v5098, 1.0
  %v5142 = vadd.f32 %v5138, 1.0
  %v5143 = vmul.f32 %v4971, %v5139
  %v5144 = vmul.f32 %v4972, %v5140
  %v5145 = vmul.f32 %v4973, %v5141
  %v5146 = vmul.f32 %v4974, %v5142
  %v5147 = vld [vmem:[#allocation21] sm:$0xff]
  %v5148 = vld [vmem:[#allocation21 + $0x8] sm:$0xff]
  %v5149 = vld [vmem:[#allocation21 + $0x10] sm:$0xff]
  %v5150 = vld [vmem:[#allocation21 + $0x18] sm:$0xff]
  %v5151 = vld [vmem:[#allocation21 + $0x20] sm:$0xff]
  %v5152 = vld [vmem:[#allocation21 + $0x28] sm:$0xff]
  %v5153 = vld [vmem:[#allocation21 + $0x30] sm:$0xff]
  %v5154 = vld [vmem:[#allocation21 + $0x38] sm:$0xff]
  %v5155 = vld [vmem:[#allocation21 + $0x40] sm:$0xff]
  %v5156 = vld [vmem:[#allocation21 + $0x48] sm:$0xff]
  %v5157 = vld [vmem:[#allocation21 + $0x50] sm:$0xff]
  %v5158 = vld [vmem:[#allocation21 + $0x58] sm:$0xff]
  %v5159 = vld [vmem:[#allocation21 + $0x60] sm:$0xff]
  %v5160 = vld [vmem:[#allocation21 + $0x68] sm:$0xff]
  %v5161 = vld [vmem:[#allocation21 + $0x70] sm:$0xff]
  %v5162 = vld [vmem:[#allocation21 + $0x78] sm:$0xff]
  %v5163 = vld [vmem:[#allocation21 + $0x80] sm:$0xff]
  %v5164 = vld [vmem:[#allocation21 + $0x88] sm:$0xff]
  %v5165 = vld [vmem:[#allocation21 + $0x90] sm:$0xff]
  %v5166 = vld [vmem:[#allocation21 + $0x98] sm:$0xff]
  %v5167 = vld [vmem:[#allocation21 + $0xa0] sm:$0xff]
  %v5168 = vld [vmem:[#allocation21 + $0xa8] sm:$0xff]
  %v5169 = vld [vmem:[#allocation21 + $0xb0] sm:$0xff]
  %v5170 = vld [vmem:[#allocation21 + $0xb8] sm:$0xff]
  %v5171 = vld [vmem:[#allocation21 + $0xc0] sm:$0xff]
  %v5172 = vld [vmem:[#allocation21 + $0xc8] sm:$0xff]
  %v5173 = vld [vmem:[#allocation21 + $0xd0] sm:$0xff]
  %v5174 = vld [vmem:[#allocation21 + $0xd8] sm:$0xff]
  %v5175 = vld [vmem:[#allocation21 + $0xe0] sm:$0xff]
  %v5176 = vld [vmem:[#allocation21 + $0xe8] sm:$0xff]
  %v5177 = vld [vmem:[#allocation21 + $0xf0] sm:$0xff]
  %v5178 = vld [vmem:[#allocation21 + $0xf8] sm:$0xff]
  %v5179 = vld [vmem:[#allocation21 + $0x100] sm:$0xff]
  %v5180 = vld [vmem:[#allocation21 + $0x108] sm:$0xff]
  %v5181 = vld [vmem:[#allocation21 + $0x110] sm:$0xff]
  %v5182 = vld [vmem:[#allocation21 + $0x118] sm:$0xff]
  %v5183 = vld [vmem:[#allocation21 + $0x120] sm:$0xff]
  %v5184 = vld [vmem:[#allocation21 + $0x128] sm:$0xff]
  %v5185 = vld [vmem:[#allocation21 + $0x130] sm:$0xff]
  %v5186 = vld [vmem:[#allocation21 + $0x138] sm:$0xff]
  %v5187 = vld [vmem:[#allocation21 + $0x140] sm:$0xff]
  %v5188 = vld [vmem:[#allocation21 + $0x148] sm:$0xff]
  %v5189 = vld [vmem:[#allocation21 + $0x150] sm:$0xff]
  %v5190 = vld [vmem:[#allocation21 + $0x158] sm:$0xff]
  %v5191 = vld [vmem:[%s1 + $0x4] sm:$0x1]
  %5192 = vmatpush.msra.mxu0 0.0
  %5193 = vmatpush.msra.mxu0 0.0
  %5194 = vmatpush.msra.mxu0 0.0
  %5195 = vmatpush.msra.mxu0 0.0
  %5196 = vmatpush.msra.mxu0 0.0
  %5197 = vmatpush.msra.mxu0 0.0
  %5198 = vmatpush.msra.mxu0 0.0
  %5199 = vmatpush.msra.mxu0 0.0
  %5200 = vmatpush.msra.mxu0 %v5154
  %5201 = vmatpush.msra.mxu0 %v5153
  %5202 = vmatpush.msra.mxu0 %v5152
  %5203 = vmatpush.msra.mxu0 %v5151
  %5204 = vmatpush.msra.mxu0 %v5150
  %5205 = vmatpush.msra.mxu0 %v5149
  %5206 = vmatpush.msra.mxu0 %v5148
  %5207 = vmatpush.msra.mxu0 %v5147
  %5208 = vmatmul.f32.gmra.mxu0 %v1055
  %v5209 = vpop.f32.mrf.mxu0
  %v5210 = vadd.f32 0.0, %v5209
  %5211 = vmatmul.f32.gmra.mxu0 %v1058
  %v5212 = vpop.f32.mrf.mxu0
  %v5213 = vadd.f32 0.0, %v5212
  %5214 = vdwg.mxu0
  %v5216 = vperm.slane %v5191, 0
  %5220 = vrot.lane.b32.xlu0 %v5210, 2
  %v5221 = vpop.permute.xlu0 %5220
  %5222 = vrot.lane.b32.xlu0 %v5213, 2
  %v5223 = vpop.permute.xlu0 %5222
  %v5226 = vadd.f32 %v5216, %v5221
  %v5227 = vadd.f32 %v5216, %v5223
  %5228 = vmatpush.msra.mxu0 0.0
  %5229 = vmatpush.msra.mxu0 0.0
  %5230 = vmatpush.msra.mxu0 0.0
  %5231 = vmatpush.msra.mxu0 0.0
  %5232 = vmatpush.msra.mxu0 0.0
  %5233 = vmatpush.msra.mxu0 0.0
  %5234 = vmatpush.msra.mxu0 0.0
  %5235 = vmatpush.msra.mxu0 0.0
  %5236 = vmatpush.msra.mxu0 %v5162
  %5237 = vmatpush.msra.mxu0 %v5161
  %5238 = vmatpush.msra.mxu0 %v5160
  %5239 = vmatpush.msra.mxu0 %v5159
  %5240 = vmatpush.msra.mxu0 %v5158
  %5241 = vmatpush.msra.mxu0 %v5157
  %5242 = vmatpush.msra.mxu0 %v5156
  %5243 = vmatpush.msra.mxu0 %v5155
  %5244 = vmatmul.f32.gmra.mxu0 %v1806
  %v5245 = vpop.f32.mrf.mxu0
  %v5246 = vadd.f32 0.0, %v5245
  %5247 = vmatmul.f32.gmra.mxu0 %v1808
  %v5248 = vpop.f32.mrf.mxu0
  %v5249 = vadd.f32 0.0, %v5248
  %5250 = vdwg.mxu0
  %5253 = vrot.lane.b32.xlu0 %v5246, 2
  %v5254 = vpop.permute.xlu0 %5253
  %5255 = vrot.lane.b32.xlu0 %v5249, 2
  %v5256 = vpop.permute.xlu0 %5255
  %v5259 = vadd.f32 %v5226, %v5254
  %v5260 = vadd.f32 %v5227, %v5256
  %5261 = vmatpush.msra.mxu0 0.0
  %5262 = vmatpush.msra.mxu0 0.0
  %5263 = vmatpush.msra.mxu0 0.0
  %5264 = vmatpush.msra.mxu0 0.0
  %5265 = vmatpush.msra.mxu0 0.0
  %5266 = vmatpush.msra.mxu0 0.0
  %5267 = vmatpush.msra.mxu0 0.0
  %5268 = vmatpush.msra.mxu0 0.0
  %5269 = vmatpush.msra.mxu0 %v5170
  %5270 = vmatpush.msra.mxu0 %v5169
  %5271 = vmatpush.msra.mxu0 %v5168
  %5272 = vmatpush.msra.mxu0 %v5167
  %5273 = vmatpush.msra.mxu0 %v5166
  %5274 = vmatpush.msra.mxu0 %v5165
  %5275 = vmatpush.msra.mxu0 %v5164
  %5276 = vmatpush.msra.mxu0 %v5163
  %5277 = vmatmul.f32.gmra.mxu0 %v2684
  %v5278 = vpop.f32.mrf.mxu0
  %v5279 = vadd.f32 0.0, %v5278
  %5280 = vmatmul.f32.gmra.mxu0 %v2686
  %v5281 = vpop.f32.mrf.mxu0
  %v5282 = vadd.f32 0.0, %v5281
  %5283 = vdwg.mxu0
  %5286 = vrot.lane.b32.xlu0 %v5279, 2
  %v5287 = vpop.permute.xlu0 %5286
  %5288 = vrot.lane.b32.xlu0 %v5282, 2
  %v5289 = vpop.permute.xlu0 %5288
  %v5292 = vadd.f32 %v5259, %v5287
  %v5293 = vadd.f32 %v5260, %v5289
  %5294 = vmatpush.msra.mxu0 0.0
  %5295 = vmatpush.msra.mxu0 0.0
  %5296 = vmatpush.msra.mxu0 0.0
  %5297 = vmatpush.msra.mxu0 0.0
  %5298 = vmatpush.msra.mxu0 0.0
  %5299 = vmatpush.msra.mxu0 0.0
  %5300 = vmatpush.msra.mxu0 0.0
  %5301 = vmatpush.msra.mxu0 0.0
  %5302 = vmatpush.msra.mxu0 %v5178
  %5303 = vmatpush.msra.mxu0 %v5177
  %5304 = vmatpush.msra.mxu0 %v5176
  %5305 = vmatpush.msra.mxu0 %v5175
  %5306 = vmatpush.msra.mxu0 %v5174
  %5307 = vmatpush.msra.mxu0 %v5173
  %5308 = vmatpush.msra.mxu0 %v5172
  %5309 = vmatpush.msra.mxu0 %v5171
  %5310 = vmatmul.f32.gmra.mxu0 %v3847
  %v5311 = vpop.f32.mrf.mxu0
  %v5312 = vadd.f32 0.0, %v5311
  %5313 = vmatmul.f32.gmra.mxu0 %v3849
  %v5314 = vpop.f32.mrf.mxu0
  %v5315 = vadd.f32 0.0, %v5314
  %5316 = vdwg.mxu0
  %5319 = vrot.lane.b32.xlu0 %v5312, 2
  %v5320 = vpop.permute.xlu0 %5319
  %5321 = vrot.lane.b32.xlu0 %v5315, 2
  %v5322 = vpop.permute.xlu0 %5321
  %v5325 = vadd.f32 %v5292, %v5320
  %v5326 = vadd.f32 %v5293, %v5322
  %5329 = vrot.lane.b32.xlu0 %v4022, 124
  %v5330 = vpop.permute.xlu0 %5329
  %5331 = vrot.lane.b32.xlu0 %v4023, 124
  %v5332 = vpop.permute.xlu0 %5331
  %v5333 = vsel %vm1053, %v5330, 0
  %v5335 = vsel %vm1053, %v5332, 0
  %5337 = vmatpush.msra.mxu0 0.0
  %5338 = vmatpush.msra.mxu0 0.0
  %5339 = vmatpush.msra.mxu0 0.0
  %5340 = vmatpush.msra.mxu0 0.0
  %5341 = vmatpush.msra.mxu0 0.0
  %5342 = vmatpush.msra.mxu0 0.0
  %5343 = vmatpush.msra.mxu0 0.0
  %5344 = vmatpush.msra.mxu0 0.0
  %5345 = vmatpush.msra.mxu0 %v5186
  %5346 = vmatpush.msra.mxu0 %v5185
  %5347 = vmatpush.msra.mxu0 %v5184
  %5348 = vmatpush.msra.mxu0 %v5183
  %5349 = vmatpush.msra.mxu0 %v5182
  %5350 = vmatpush.msra.mxu0 %v5181
  %5351 = vmatpush.msra.mxu0 %v5180
  %5352 = vmatpush.msra.mxu0 %v5179
  %5353 = vmatmul.f32.gmra.mxu0 %v5333
  %v5354 = vpop.f32.mrf.mxu0
  %v5355 = vadd.f32 0.0, %v5354
  %5356 = vmatmul.f32.gmra.mxu0 %v5335
  %v5357 = vpop.f32.mrf.mxu0
  %v5358 = vadd.f32 0.0, %v5357
  %5359 = vdwg.mxu0
  %5362 = vrot.lane.b32.xlu0 %v5355, 2
  %v5363 = vpop.permute.xlu0 %5362
  %5364 = vrot.lane.b32.xlu0 %v5358, 2
  %v5365 = vpop.permute.xlu0 %5364
  %v5368 = vadd.f32 %v5325, %v5363
  %v5369 = vadd.f32 %v5326, %v5365
  %5374 = vrot.lane.b32.xlu0 %v5143, 30
  %v5375 = vpop.permute.xlu0 %5374
  %5376 = vrot.lane.b32.xlu0 %v5144, 30
  %v5377 = vpop.permute.xlu0 %5376
  %5378 = vrot.lane.b32.xlu0 %v5145, 30
  %v5379 = vpop.permute.xlu0 %5378
  %5380 = vrot.lane.b32.xlu0 %v5146, 30
  %v5381 = vpop.permute.xlu0 %5380
  %vm5382 = vcmask 244736
  %v5383 = vsel %vm5382, %v5375, %v5377
  %v5384 = vsel %vm5382, %v5379, %v5381
  %v5385 = vsel %vm1221, %v5383, 0
  %v5387 = vsel %vm1221, %v5384, 0
  %5389 = vmatpush.msra.mxu0 0.0
  %5390 = vmatpush.msra.mxu0 0.0
  %5391 = vmatpush.msra.mxu0 0.0
  %5392 = vmatpush.msra.mxu0 0.0
  %5393 = vmatpush.msra.mxu0 0.0
  %5394 = vmatpush.msra.mxu0 0.0
  %5395 = vmatpush.msra.mxu0 0.0
  %5396 = vmatpush.msra.mxu0 0.0
  %5397 = vmatpush.msra.mxu0 0.0
  %5398 = vmatpush.msra.mxu0 0.0
  %5399 = vmatpush.msra.mxu0 0.0
  %5400 = vmatpush.msra.mxu0 0.0
  %5401 = vmatpush.msra.mxu0 %v5190
  %5402 = vmatpush.msra.mxu0 %v5189
  %5403 = vmatpush.msra.mxu0 %v5188
  %5404 = vmatpush.msra.mxu0 %v5187
  %5405 = vmatmul.f32.gmra.mxu0 %v5385
  %v5406 = vpop.f32.mrf.mxu0
  %v5407 = vadd.f32 0.0, %v5406
  %5408 = vmatmul.f32.gmra.mxu0 %v5387
  %v5409 = vpop.f32.mrf.mxu0
  %v5410 = vadd.f32 0.0, %v5409
  %5411 = vdwg.mxu0
  %5414 = vrot.lane.b32.xlu0 %v5407, 2
  %v5415 = vpop.permute.xlu0 %5414
  %5416 = vrot.lane.b32.xlu0 %v5410, 2
  %v5417 = vpop.permute.xlu0 %5416
  %v5420 = vadd.f32 %v5368, %v5415
  %v5421 = vadd.f32 %v5369, %v5417
  %v5422 = vmul.f32 %v5420, 0.5
  %v5423 = vmul.f32 %v5421, 0.5
  %v5424 = vmul.f32 %v5420, 0.70710677
  %v5425 = vmul.f32 %v5421, 0.70710677
  %v5426 = vmul.f32 %v5424, %v5424
  %v5427 = vmin.f32 16.0, %v5426
  %v5428 = vmul.f32 %v5427, 2.1237322e-06
  %v5429 = vadd.f32 %v5428, 0.00028619796
  %v5430 = vmul.f32 %v5427, %v5429
  %v5431 = vadd.f32 %v5430, 0.0036580483
  %v5432 = vmul.f32 %v5427, %v5431
  %v5433 = vadd.f32 %v5432, 0.05243302
  %v5434 = vmul.f32 %v5427, %v5433
  %v5435 = vadd.f32 %v5434, 0.18741608
  %v5436 = vmul.f32 %v5427, %v5435
  %v5437 = vadd.f32 %v5436, 1.1283791
  %v5438 = vmul.f32 %v5424, %v5437
  %v5439 = vmul.f32 %v5427, 3.8918573e-05
  %v5440 = vadd.f32 %v5439, 0.001143296
  %v5441 = vmul.f32 %v5427, %v5440
  %v5442 = vadd.f32 %v5441, 0.014752088
  %v5443 = vmul.f32 %v5427, %v5442
  %v5444 = vadd.f32 %v5443, 0.112945676
  %v5445 = vmul.f32 %v5427, %v5444
  %v5446 = vadd.f32 %v5445, 0.4994258
  %v5447 = vmul.f32 %v5427, %v5446
  %v5448 = vadd.f32 %v5447, 1.0
  %v5449 = vrcp.pop %v5448
  %v5450 = vmul.f32 %v5448, %v5449
  %v5451 = vsub.f32 1.0, %v5450
  %v5452 = vmul.f32 %v5449, %v5451
  %v5453 = vadd.f32 %v5449, %v5452
  %vm5454 = vweird.f32 %v5448
  %vm5455 = vweird.f32 %v5449
  %vm5456 = vmor %vm5454, %vm5455
  %v5457 = vsel %vm5456, %v5449, %v5453
  %v5458 = vand.u32 2147483647, %v5448
  %vm5459 = vcmp.eq.f32.partialorder %v5458, 8.507059e+37
  %v5460 = vand.u32 %v5448, 2147483648
  %v5461 = vor.u32 1.1754944e-38, %v5460
  %v5462 = vsel %vm5459, %v5461, %v5457
  %v5463 = vmul.f32 %v5438, %v5462
  %v5464 = vmin.f32 %v5463, 1.0
  %v5465 = vmax.f32 %v5464, -1.0
  %v5466 = vmul.f32 %v5425, %v5425
  %v5467 = vmin.f32 16.0, %v5466
  %v5468 = vmul.f32 %v5467, 2.1237322e-06
  %v5469 = vadd.f32 %v5468, 0.00028619796
  %v5470 = vmul.f32 %v5467, %v5469
  %v5471 = vadd.f32 %v5470, 0.0036580483
  %v5472 = vmul.f32 %v5467, %v5471
  %v5473 = vadd.f32 %v5472, 0.05243302
  %v5474 = vmul.f32 %v5467, %v5473
  %v5475 = vadd.f32 %v5474, 0.18741608
  %v5476 = vmul.f32 %v5467, %v5475
  %v5477 = vadd.f32 %v5476, 1.1283791
  %v5478 = vmul.f32 %v5425, %v5477
  %v5479 = vmul.f32 %v5467, 3.8918573e-05
  %v5480 = vadd.f32 %v5479, 0.001143296
  %v5481 = vmul.f32 %v5467, %v5480
  %v5482 = vadd.f32 %v5481, 0.014752088
  %v5483 = vmul.f32 %v5467, %v5482
  %v5484 = vadd.f32 %v5483, 0.112945676
  %v5485 = vmul.f32 %v5467, %v5484
  %v5486 = vadd.f32 %v5485, 0.4994258
  %v5487 = vmul.f32 %v5467, %v5486
  %v5488 = vadd.f32 %v5487, 1.0
  %v5489 = vrcp.pop %v5488
  %v5490 = vmul.f32 %v5488, %v5489
  %v5491 = vsub.f32 1.0, %v5490
  %v5492 = vmul.f32 %v5489, %v5491
  %v5493 = vadd.f32 %v5489, %v5492
  %vm5494 = vweird.f32 %v5488
  %vm5495 = vweird.f32 %v5489
  %vm5496 = vmor %vm5494, %vm5495
  %v5497 = vsel %vm5496, %v5489, %v5493
  %v5498 = vand.u32 2147483647, %v5488
  %vm5499 = vcmp.eq.f32.partialorder %v5498, 8.507059e+37
  %v5500 = vand.u32 %v5488, 2147483648
  %v5501 = vor.u32 1.1754944e-38, %v5500
  %v5502 = vsel %vm5499, %v5501, %v5497
  %v5503 = vmul.f32 %v5478, %v5502
  %v5504 = vmin.f32 %v5503, 1.0
  %v5505 = vmax.f32 %v5504, -1.0
  %v5506 = vadd.f32 %v5465, 1.0
  %v5507 = vadd.f32 %v5505, 1.0
  %v5508 = vmul.f32 %v5422, %v5506
  %v5509 = vmul.f32 %v5423, %v5507
  %5512 = vrot.lane.b32.xlu0 %v5508, 126
  %v5513 = vpop.permute.xlu0 %5512
  %5514 = vrot.lane.b32.xlu0 %v5509, 126
  %v5515 = vpop.permute.xlu0 %5514
  %5518 = vst.msk [vmem:[%s24] sm:$0xff] %vm1053, %v5513
  %5519 = vst.msk [vmem:[%s24 + $0x10] sm:$0xff] %vm1053, %v5515
  %5520 = vrot.lane.b32.xlu0 %v4022, 60
  %v5521 = vpop.permute.xlu0 %5520
  %5522 = vrot.lane.b32.xlu0 %v4023, 60
  %v5523 = vpop.permute.xlu0 %5522
  %vm5526 = vcmask 1048064
  %5527 = vst.msk [vmem:[%s24] sm:$0xff] %vm5526, %v5521
  %5528 = vst.msk [vmem:[%s24 + $0x10] sm:$0xff] %vm5526, %v5523
  %5531 = vst.msk [vmem:[%s24 + $0x8] sm:$0xff] %vm1053, %v3844
  %5532 = vst.msk [vmem:[%s24 + $0x18] sm:$0xff] %vm1053, %v3846
  %5533 = vrot.lane.b32.xlu0 %v1980, 48
  %v5534 = vpop.permute.xlu0 %5533
  %5535 = vrot.lane.b32.xlu0 %v1981, 48
  %v5536 = vpop.permute.xlu0 %5535
  %5539 = vst.msk [vmem:[%s24 + $0x8] sm:$0xff] %vm5526, %v5534
  %5540 = vst.msk [vmem:[%s24 + $0x18] sm:$0xff] %vm5526, %v5536
  %v5541 = vsel %vm1053, %v5513, %v5521
  %v5542 = vsel %vm1053, %v5515, %v5523
  %v5543 = vsel %vm1053, %v3844, %v5534
  %v5544 = vsel %vm1053, %v3846, %v5536
  %v5545 = vld [vmem:[#allocation22] sm:$0xff]
  %v5546 = vld [vmem:[#allocation22 + $0x8] sm:$0xff]
  %v5547 = vld [vmem:[#allocation22 + $0x10] sm:$0xff]
  %v5548 = vld [vmem:[#allocation22 + $0x18] sm:$0xff]
  %v5549 = vld [vmem:[#allocation22 + $0x20] sm:$0xff]
  %v5550 = vld [vmem:[#allocation22 + $0x28] sm:$0xff]
  %v5551 = vld [vmem:[#allocation22 + $0x30] sm:$0xff]
  %v5552 = vld [vmem:[#allocation22 + $0x38] sm:$0xff]
  %v5553 = vld [vmem:[#allocation22 + $0x40] sm:$0xff]
  %v5554 = vld [vmem:[#allocation22 + $0x48] sm:$0xff]
  %v5555 = vld [vmem:[#allocation22 + $0x50] sm:$0xff]
  %v5556 = vld [vmem:[#allocation22 + $0x58] sm:$0xff]
  %v5557 = vld [vmem:[#allocation22 + $0x60] sm:$0xff]
  %v5558 = vld [vmem:[#allocation22 + $0x68] sm:$0xff]
  %v5559 = vld [vmem:[#allocation22 + $0x70] sm:$0xff]
  %v5560 = vld [vmem:[#allocation22 + $0x78] sm:$0xff]
  %v5561 = vld [vmem:[#allocation22 + $0x80] sm:$0xff]
  %v5562 = vld [vmem:[#allocation22 + $0x88] sm:$0xff]
  %v5563 = vld [vmem:[#allocation22 + $0x90] sm:$0xff]
  %v5564 = vld [vmem:[#allocation22 + $0x98] sm:$0xff]
  %v5565 = vld [vmem:[#allocation22 + $0xa0] sm:$0xff]
  %v5566 = vld [vmem:[#allocation22 + $0xa8] sm:$0xff]
  %v5567 = vld [vmem:[#allocation22 + $0xb0] sm:$0xff]
  %v5568 = vld [vmem:[#allocation22 + $0xb8] sm:$0xff]
  %v5569 = vld [vmem:[#allocation22 + $0xc0] sm:$0xff]
  %v5570 = vld [vmem:[#allocation22 + $0xc8] sm:$0xff]
  %v5571 = vld [vmem:[#allocation22 + $0xd0] sm:$0xff]
  %v5572 = vld [vmem:[#allocation22 + $0xd8] sm:$0xff]
  %v5573 = vld [vmem:[#allocation22 + $0xe0] sm:$0xff]
  %v5574 = vld [vmem:[#allocation22 + $0xe8] sm:$0xff]
  %v5575 = vld [vmem:[#allocation22 + $0xf0] sm:$0xff]
  %v5576 = vld [vmem:[#allocation22 + $0xf8] sm:$0xff]
  %v5577 = vld [vmem:[%s2] sm:$0x1]
  %v5579 = vperm.slane %v5577, 0
  %5581 = vmatpush.msra.mxu0 %v5560
  %5582 = vmatpush.msra.mxu0 %v5559
  %5583 = vmatpush.msra.mxu0 %v5558
  %5584 = vmatpush.msra.mxu0 %v5557
  %5585 = vmatpush.msra.mxu0 %v5556
  %5586 = vmatpush.msra.mxu0 %v5555
  %5587 = vmatpush.msra.mxu0 %v5554
  %5588 = vmatpush.msra.mxu0 %v5553
  %5589 = vmatpush.msra.mxu0 %v5552
  %5590 = vmatpush.msra.mxu0 %v5551
  %5591 = vmatpush.msra.mxu0 %v5550
  %5592 = vmatpush.msra.mxu0 %v5549
  %5593 = vmatpush.msra.mxu0 %v5548
  %5594 = vmatpush.msra.mxu0 %v5547
  %5595 = vmatpush.msra.mxu0 %v5546
  %5596 = vmatpush.msra.mxu0 %v5545
  %5597 = vmatmul.f32.gmra.mxu0 %v5541
  %v5598 = vpop.f32.mrf.mxu0
  %v5599 = vadd.f32 %v5579, %v5598
  %5600 = vmatmul.f32.gmra.mxu0 %v5542
  %v5601 = vpop.f32.mrf.mxu0
  %v5602 = vadd.f32 %v5579, %v5601
  %5603 = vdwg.mxu0
  %5604 = vmatpush.msra.mxu0 %v5576
  %5605 = vmatpush.msra.mxu0 %v5575
  %5606 = vmatpush.msra.mxu0 %v5574
  %5607 = vmatpush.msra.mxu0 %v5573
  %5608 = vmatpush.msra.mxu0 %v5572
  %5609 = vmatpush.msra.mxu0 %v5571
  %5610 = vmatpush.msra.mxu0 %v5570
  %5611 = vmatpush.msra.mxu0 %v5569
  %5612 = vmatpush.msra.mxu0 %v5568
  %5613 = vmatpush.msra.mxu0 %v5567
  %5614 = vmatpush.msra.mxu0 %v5566
  %5615 = vmatpush.msra.mxu0 %v5565
  %5616 = vmatpush.msra.mxu0 %v5564
  %5617 = vmatpush.msra.mxu0 %v5563
  %5618 = vmatpush.msra.mxu0 %v5562
  %5619 = vmatpush.msra.mxu0 %v5561
  %5620 = vmatmul.f32.gmra.mxu0 %v5543
  %v5621 = vpop.f32.mrf.mxu0
  %v5622 = vadd.f32 %v5599, %v5621
  %5623 = vmatmul.f32.gmra.mxu0 %v5544
  %v5624 = vpop.f32.mrf.mxu0
  %v5625 = vadd.f32 %v5602, %v5624
  %5626 = vdwg.mxu0
  %5627 = vst [vmem:[%s25] sm:$0xff] %v5622
  %5628 = vst [vmem:[%s25 + $0x8] sm:$0xff] %v5625
  // Predicated region
  $region460: #{model_nest_split_forward.1} parent=0 // pred_check
    _
  $region461: #{model_nest_split_forward.1} parent=0 // pred_check_branch
    %5630 = sbr.rel (0) target = $region463
  $region462: #{model_nest_split_forward.1} parent=0 // pred_region
    _
  $region463: #{model_nest_split_forward.1} parent=0 // pred_fallthru
    _
  // Predicated region
  $region464: #{model_nest_split_forward.1} parent=0 // pred_check
    _
  $region465: #{model_nest_split_forward.1} parent=0 // pred_check_branch
    %5632 = sbr.rel (0) target = $region467
  $region466: #{model_nest_split_forward.1} parent=0 // pred_region
    _
  $region467: #{model_nest_split_forward.1} parent=0 // pred_fallthru
    _
  // Predicated region
  $region468: #{model_nest_split_forward.1} parent=0 // pred_check
    _
  $region469: #{model_nest_split_forward.1} parent=0 // pred_check_branch
    %5634 = sbr.rel (0) target = $region471
  $region470: #{model_nest_split_forward.1} parent=0 // pred_region
    _
  $region471: #{model_nest_split_forward.1} parent=0 // pred_fallthru
    _
  // Predicated region
  $region472: #{model_nest_split_forward.1} parent=0 // pred_check
    _
  $region473: #{model_nest_split_forward.1} parent=0 // pred_check_branch
    %5636 = sbr.rel (0) target = $region475
  $region474: #{model_nest_split_forward.1} parent=0 // pred_region
    _
  $region475: #{model_nest_split_forward.1} parent=0 // pred_fallthru
    _
  %5637 = vsyncmov [#allocation23]
  %s5638 = vpop.sfrf %5637
  %p5639 = scmp.eq.s32.totalorder %s5638, 0
  %p5640 = pneg %p5639
  %5642 = shalt.err (%p5640)
  %s5643 = scalar_lea.sflag [#allocation23], 1
  %5644 = vsyncmov %s5643
  %s5645 = vpop.sfrf %5644
  %p5646 = scmp.eq.s32.totalorder %s5645, 0
  %p5647 = pneg %p5646
  %5649 = shalt.err (%p5647)
  %s5650 = scalar_lea.sflag [#allocation23], 2
  %5651 = vsyncmov %s5650
  %s5652 = vpop.sfrf %5651
  %p5653 = scmp.eq.s32.totalorder %s5652, 0
  %p5654 = pneg %p5653
  %5656 = shalt.err (%p5654)
  %s5657 = scalar_lea.sflag [#allocation23], 3
  %5658 = vsyncmov %s5657
  %s5659 = vpop.sfrf %5658
  %p5660 = scmp.eq.s32.totalorder %s5659, 0
  %p5661 = pneg %p5660
  %5663 = shalt.err (%p5661)
  %s5664 = scalar_lea.sflag [#allocation23], 4
  %5665 = vsyncmov %s5664
  %s5666 = vpop.sfrf %5665
  %p5667 = scmp.eq.s32.totalorder %s5666, 0
  %p5668 = pneg %p5667
  %5670 = shalt.err (%p5668)
  %s5671 = scalar_lea.sflag [#allocation23], 5
  %5672 = vsyncmov %s5671
  %s5673 = vpop.sfrf %5672
  %p5674 = scmp.eq.s32.totalorder %s5673, 0
  %p5675 = pneg %p5674
  %5677 = shalt.err (%p5675)
  %s5678 = scalar_lea.sflag [#allocation23], 6
  %5679 = vsyncmov %s5678
  %s5680 = vpop.sfrf %5679
  %p5681 = scmp.eq.s32.totalorder %s5680, 0
  %p5682 = pneg %p5681
  %5684 = shalt.err (%p5682)
  %s5685 = scalar_lea.sflag [#allocation23], 7
  %5686 = vsyncmov %s5685
  %s5687 = vpop.sfrf %5686
  %p5688 = scmp.eq.s32.totalorder %s5687, 0
  %p5689 = pneg %p5688
  %5691 = shalt.err (%p5689)
  %s5692 = scalar_lea.sflag [#allocation23], 8
  %5693 = vsyncmov %s5692
  %s5694 = vpop.sfrf %5693
  %p5695 = scmp.eq.s32.totalorder %s5694, 0
  %p5696 = pneg %p5695
  %5698 = shalt.err (%p5696)
  %s5699 = scalar_lea.sflag [#allocation23], 9
  %5700 = vsyncmov %s5699
  %s5701 = vpop.sfrf %5700
  %p5702 = scmp.eq.s32.totalorder %s5701, 0
  %p5703 = pneg %p5702
  %5705 = shalt.err (%p5703)
  %s5706 = scalar_lea.sflag [#allocation23], 10
  %5707 = vsyncmov %s5706
  %s5708 = vpop.sfrf %5707
  %p5709 = scmp.eq.s32.totalorder %s5708, 0
  %p5710 = pneg %p5709
  %5712 = shalt.err (%p5710)
  %s5713 = scalar_lea.sflag [#allocation23], 11
  %5714 = vsyncmov %s5713
  %s5715 = vpop.sfrf %5714
  %p5716 = scmp.eq.s32.totalorder %s5715, 0
  %p5717 = pneg %p5716
  %5719 = shalt.err (%p5717)
  %s5720 = scalar_lea.sflag [#allocation23], 12
  %5721 = vsyncmov %s5720
  %s5722 = vpop.sfrf %5721
  %p5723 = scmp.eq.s32.totalorder %s5722, 0
  %p5724 = pneg %p5723
  %5726 = shalt.err (%p5724)
  %s5727 = scalar_lea.sflag [#allocation23], 13
  %5728 = vsyncmov %s5727
  %s5729 = vpop.sfrf %5728
  %p5730 = scmp.eq.s32.totalorder %s5729, 0
  %p5731 = pneg %p5730
  %5733 = shalt.err (%p5731)
  %s5734 = scalar_lea.sflag [#allocation23], 14
  %5735 = vsyncmov %s5734
  %s5736 = vpop.sfrf %5735
  %p5737 = scmp.eq.s32.totalorder %s5736, 0
  %p5738 = pneg %p5737
  %5740 = shalt.err (%p5738)
  %s5741 = scalar_lea.sflag [#allocation23], 15
  %5742 = vsyncmov %s5741
  %s5743 = vpop.sfrf %5742
  %p5744 = scmp.eq.s32.totalorder %s5743, 0
  %p5745 = pneg %p5744
  %5747 = shalt.err (%p5745)
  %s5748 = scalar_lea.sflag [#allocation23], 16
  %5749 = vsyncmov %s5748
  %s5750 = vpop.sfrf %5749
  %p5751 = scmp.eq.s32.totalorder %s5750, 0
  %p5752 = pneg %p5751
  %5754 = shalt.err (%p5752)
  %s5755 = scalar_lea.sflag [#allocation23], 17
  %5756 = vsyncmov %s5755
  %s5757 = vpop.sfrf %5756
  %p5758 = scmp.eq.s32.totalorder %s5757, 0
  %p5759 = pneg %p5758
  %5761 = shalt.err (%p5759)
  %s5762 = scalar_lea.sflag [#allocation23], 18
  %5763 = vsyncmov %s5762
  %s5764 = vpop.sfrf %5763
  %p5765 = scmp.eq.s32.totalorder %s5764, 0
  %p5766 = pneg %p5765
  %5768 = shalt.err (%p5766)
  %s5769 = scalar_lea.sflag [#allocation23], 19
  %5770 = vsyncmov %s5769
  %s5771 = vpop.sfrf %5770
  %p5772 = scmp.eq.s32.totalorder %s5771, 0
  %p5773 = pneg %p5772
  %5775 = shalt.err (%p5773)
  %s5776 = scalar_lea.sflag [#allocation23], 20
  %5777 = vsyncmov %s5776
  %s5778 = vpop.sfrf %5777
  %p5779 = scmp.eq.s32.totalorder %s5778, 0
  %p5780 = pneg %p5779
  %5782 = shalt.err (%p5780)

</llo_original>
